<compile_context>
chip_gen: v7x
topology: tpu7x:2x2x1
jax: 0.10.0
libtpu: 0.0.40
codegen_flags: <defaults>
</compile_context>

<pallas_src>
import jax
import jax.numpy as jnp
import numpy as np
from jax import lax
from jax.experimental import pallas as pl
from jax.experimental.pallas import tpu as pltpu

n_classes = 10

FC1_K = 9233                                    # 9105 coeffs + 32*2*2 image
TK = 4864                                       # fc1 K-tile (38 * 128), nk = 2
FC1_KP = ((FC1_K + TK - 1) // TK) * TK          # 9728, padded once at init
_VMEM_LIMIT = 32 * 1024 * 1024


# ----------------------------------------------------------------------------
# Fused FC head Pallas kernel: fc1 (int8-weight, bf16 dequant, f32 acc) over a
# K grid, then fc2 + fc3 + softmax fused into the last-step epilogue.
# ----------------------------------------------------------------------------
def _fc_head_fused_kernel(z_ref, w1_ref, s1_ref, b1_ref, w2_ref, b2_ref,
                          w3_ref, b3_ref, o_ref, acc_ref):
    k = pl.program_id(0)

    @pl.when(k == 0)
    def _():
        acc_ref[...] = jnp.zeros_like(acc_ref)

    # Weight-only int8 -> bf16 dequant (scale applied once in the epilogue:
    # acc = z @ q, and (z @ (q*s)) == (z @ q) * s for a per-column scale s).
    w1 = w1_ref[...].astype(jnp.bfloat16)
    acc_ref[...] += jnp.dot(z_ref[...], w1,
                            preferred_element_type=jnp.float32)

    @pl.when(k == pl.num_programs(0) - 1)
    def _():
        h1 = jnp.maximum(acc_ref[...] * s1_ref[...] + b1_ref[...], 0.0)  # (M,1024)
        h2 = jnp.dot(h1.astype(w2_ref.dtype), w2_ref[...],
                     preferred_element_type=jnp.float32) + b2_ref[...]
        h2 = jnp.maximum(h2, 0.0)                                        # (M, 128)
        logits = jnp.dot(h2, w3_ref[...],
                         preferred_element_type=jnp.float32) + b3_ref[...]
        logits = logits - jnp.max(logits, axis=-1, keepdims=True)
        e = jnp.exp(logits)
        o_ref[...] = (e / jnp.sum(e, axis=-1, keepdims=True)).astype(o_ref.dtype)


def fc_head_fused(z_bf16, p):
    M = z_bf16.shape[0]
    nk = FC1_KP // TK
    probs = pl.pallas_call(
        _fc_head_fused_kernel,
        out_shape=jax.ShapeDtypeStruct((M, 128), jnp.float32),
        grid_spec=pltpu.PrefetchScalarGridSpec(
            num_scalar_prefetch=0,
            grid=(nk,),
            in_specs=[
                pl.BlockSpec((M, TK), lambda k: (0, k)),        # z (bf16)
                pl.BlockSpec((TK, 1024), lambda k: (k, 0)),     # fc1 weight (int8)
                pl.BlockSpec((1, 1024), lambda k: (0, 0)),      # fc1 scale (f32)
                pl.BlockSpec((1, 1024), lambda k: (0, 0)),      # fc1 bias
                pl.BlockSpec((1024, 128), lambda k: (0, 0)),    # fc2 weight (bf16)
                pl.BlockSpec((1, 128), lambda k: (0, 0)),       # fc2 bias
                pl.BlockSpec((128, 128), lambda k: (0, 0)),     # fc3 weight (padded)
                pl.BlockSpec((1, 128), lambda k: (0, 0)),       # fc3 bias (padded)
            ],
            out_specs=pl.BlockSpec((M, 128), lambda k: (0, 0)),
            scratch_shapes=[pltpu.VMEM((M, 1024), jnp.float32)],
        ),
        compiler_params=pltpu.CompilerParams(
            dimension_semantics=("arbitrary",),
            vmem_limit_bytes=_VMEM_LIMIT,
        ),
    )(z_bf16, p["fc1_wq"], p["fc1_s"], p["fc1_b"],
      p["fc2_wT"], p["fc2_b"], p["fc3_wT"], p["fc3_b"])
    return probs[:, :n_classes]


# ----------------------------------------------------------------------------
# Conv / pool path: plain fused XLA ops (no Pallas launches, no relayout glue)
# ----------------------------------------------------------------------------
def conv_path(p, x_img_nchw):
    """conv1 -> ReLU -> pool1 -> conv2 -> ReLU -> pool2 -> flatten (NCHW)."""
    y = lax.conv_general_dilated(
        x_img_nchw, p["conv1_w"], window_strides=(2, 2), padding="VALID",
        dimension_numbers=("NCHW", "OIHW", "NCHW"))
    y = jnp.maximum(y + p["conv1_b"][None, :, None, None], 0.0)
    y = lax.reduce_window(y, -jnp.inf, lax.max,
                          (1, 1, 3, 3), (1, 1, 3, 3), "VALID")
    y = lax.conv_general_dilated(
        y, p["conv2_w"], window_strides=(1, 1), padding="VALID",
        dimension_numbers=("NCHW", "OIHW", "NCHW"))
    y = jnp.maximum(y + p["conv2_b"][None, :, None, None], 0.0)
    y = lax.reduce_window(y, -jnp.inf, lax.max,
                          (1, 1, 3, 3), (1, 1, 3, 3), "VALID")
    # F.relu(pool2(...)) in the reference is a no-op: inputs already >= 0.
    return y.reshape(y.shape[0], -1)            # PyTorch .view order (B, C*H*W)


# ----------------------------------------------------------------------------
# Parameters (one-time kernel-friendly preparation at init)
# ----------------------------------------------------------------------------
def prepare_params(raw):
    p = {
        "conv1_w": raw["conv1_w"], "conv1_b": raw["conv1_b"],
        "conv2_w": raw["conv2_w"], "conv2_b": raw["conv2_b"],
    }
    # fc1: transpose to (K, N), pad K once to FC1_KP, weight-only int8 quant
    # with per-output-channel (per-N-column) symmetric scales.
    w1t = jnp.pad(raw["fc1_w"].T, ((0, FC1_KP - FC1_K), (0, 0)))   # (9728, 1024)
    amax = jnp.max(jnp.abs(w1t), axis=0, keepdims=True)            # (1, 1024)
    scale = jnp.maximum(amax, 1e-30) / 127.0
    p["fc1_wq"] = jnp.clip(jnp.round(w1t / scale), -127, 127).astype(jnp.int8)
    p["fc1_s"] = scale.astype(jnp.float32)
    p["fc1_b"] = raw["fc1_b"].reshape(1, 1024).astype(jnp.float32)
    # fc2: transpose, bf16 (tiny, resident in VMEM for the whole grid)
    p["fc2_wT"] = raw["fc2_w"].T.astype(jnp.bfloat16)
    p["fc2_b"] = raw["fc2_b"].reshape(1, 128).astype(jnp.float32)
    # fc3: transpose and pad the class axis to a lane-dense 128; padded classes
    # get zero weights and a -1e30 bias so softmax assigns them probability 0.
    w3t = jnp.zeros((128, 128), jnp.float32).at[:, :n_classes].set(raw["fc3_w"].T)
    b3 = jnp.full((1, 128), -1e30, jnp.float32).at[0, :n_classes].set(raw["fc3_b"])
    p["fc3_wT"] = w3t
    p["fc3_b"] = b3
    return p


def init_params(key):
    ks = jax.random.split(key, 10)
    s = 0.05
    raw = {
        "conv1_w": jax.random.normal(ks[0], (8, 3, 5, 5), jnp.float32) * s,
        "conv1_b": jax.random.normal(ks[1], (8,), jnp.float32) * s,
        "conv2_w": jax.random.normal(ks[2], (32, 8, 3, 3), jnp.float32) * s,
        "conv2_b": jax.random.normal(ks[3], (32,), jnp.float32) * s,
        # PyTorch nn.Linear stores weight as (out_features, in_features)
        "fc1_w": jax.random.normal(ks[4], (1024, FC1_K), jnp.float32) * 0.01,
        "fc1_b": jax.random.normal(ks[5], (1024,), jnp.float32) * s,
        "fc2_w": jax.random.normal(ks[6], (128, 1024), jnp.float32) * s,
        "fc2_b": jax.random.normal(ks[7], (128,), jnp.float32) * s,
        "fc3_w": jax.random.normal(ks[8], (n_classes, 128), jnp.float32) * s,
        "fc3_b": jax.random.normal(ks[9], (n_classes,), jnp.float32) * s,
    }
    return prepare_params(raw)


# ----------------------------------------------------------------------------
# Forward
# ----------------------------------------------------------------------------
def wavimg_forward(params, coeffs, x_img_nchw):
    """coeffs: (B, ...), x_img: (B, 3, H, W) NCHW."""
    B = x_img_nchw.shape[0]
    img_feat = conv_path(params, x_img_nchw)               # (B, 128)
    coeffs_flat = coeffs.reshape(B, -1)
    assert coeffs_flat.shape[1] + img_feat.shape[1] == FC1_K
    z = jnp.concatenate(
        [coeffs_flat, img_feat,
         jnp.zeros((B, FC1_KP - FC1_K), coeffs_flat.dtype)], axis=1)
    z = z.astype(jnp.bfloat16)                             # bf16 activation stream
    return fc_head_fused(z, params)                        # single fused head kernel


if __name__ == "__main__":
    key = jax.random.PRNGKey(0)
    k_params, k_coeffs, k_img = jax.random.split(key, 3)

    params = init_params(k_params)

    B, H, W = 2, 64, 64  # 64x64 -> conv1 30 -> pool 10 -> conv2 8 -> pool 2
    coeffs = jax.random.normal(k_coeffs, (B, 9105), jnp.float32)  # 9105 + 128 = 9233
    x_img = jax.random.normal(k_img, (B, 3, H, W), jnp.float32)

    fwd = jax.jit(wavimg_forward)
    out = jax.block_until_ready(fwd(params, coeffs, x_img))

    out_np = np.asarray(out)
    assert out_np.shape == (B, n_classes), out_np.shape
    assert np.all(np.isfinite(out_np))
    assert np.allclose(out_np.sum(axis=1), 1.0, atol=1e-5)  # softmax rows sum to 1
    print("KERNEL_OK")
</pallas_src>

<mosaic_0001>
module attributes {stable_mosaic.version = 11 : i64} {
  func.func @_fc_head_fused_kernel(%arg0: i32, %arg1: memref<2x4864xbf16, #tpu.memory_space<vmem>>, %arg2: memref<4864x1024xi8, #tpu.memory_space<vmem>>, %arg3: memref<1x1024xf32, #tpu.memory_space<vmem>>, %arg4: memref<1x1024xf32, #tpu.memory_space<vmem>>, %arg5: memref<1024x128xbf16, #tpu.memory_space<vmem>>, %arg6: memref<1x128xf32, #tpu.memory_space<vmem>>, %arg7: memref<128x128xf32, #tpu.memory_space<vmem>>, %arg8: memref<1x128xf32, #tpu.memory_space<vmem>>, %arg9: memref<2x128xf32, #tpu.memory_space<vmem>>, %arg10: memref<2x1024xf32, #tpu.memory_space<vmem>>) attributes {dimension_semantics = [#tpu.dimension_semantics<arbitrary>], iteration_bounds = array<i64: 2>, scalar_prefetch = 0 : i64, scratch_operands = 1 : i64, tpu.core_type = #tpu.core_type<tc>, window_params = [{transform_indices = @transform_0, window_bounds = array<i64: 2, 4864>}, {transform_indices = @transform_1, window_bounds = array<i64: 4864, 1024>}, {pipeline_mode = #tpu.pipeline_mode<synchronous>, transform_indices = @transform_2, window_bounds = array<i64: 1, 1024>}, {pipeline_mode = #tpu.pipeline_mode<synchronous>, transform_indices = @transform_3, window_bounds = array<i64: 1, 1024>}, {pipeline_mode = #tpu.pipeline_mode<synchronous>, transform_indices = @transform_4, window_bounds = array<i64: 1024, 128>}, {pipeline_mode = #tpu.pipeline_mode<synchronous>, transform_indices = @transform_5, window_bounds = array<i64: 1, 128>}, {pipeline_mode = #tpu.pipeline_mode<synchronous>, transform_indices = @transform_6, window_bounds = array<i64: 128, 128>}, {pipeline_mode = #tpu.pipeline_mode<synchronous>, transform_indices = @transform_7, window_bounds = array<i64: 1, 128>}, {pipeline_mode = #tpu.pipeline_mode<synchronous>, transform_indices = @transform_8, window_bounds = array<i64: 2, 128>}]} {
    %c0_i32 = arith.constant 0 : i32
    %0 = arith.cmpi eq, %arg0, %c0_i32 : i32
    %1 = arith.extui %0 : i1 to i32
    %c0_i32_0 = arith.constant 0 : i32
    %2 = arith.cmpi ne, %1, %c0_i32_0 : i32
    scf.if %2 {
      %cst_9 = arith.constant 0.000000e+00 : f32
      %13 = vector.broadcast %cst_9 : f32 to vector<2x1024xf32>
      %c0_10 = arith.constant 0 : index
      %c0_11 = arith.constant 0 : index
      %14 = vector.load %arg10[%c0_10, %c0_11] : memref<2x1024xf32, #tpu.memory_space<vmem>>, vector<2x1024xf32>
      tpu.vector_store %arg10[%c0_10, %c0_11], %13 {strides = array<i32>} : memref<2x1024xf32, #tpu.memory_space<vmem>>, vector<2x1024xf32>,
    } else {
    }
    %c0 = arith.constant 0 : index
    %c0_1 = arith.constant 0 : index
    %3 = vector.load %arg2[%c0, %c0_1] : memref<4864x1024xi8, #tpu.memory_space<vmem>>, vector<4864x1024xi8>
    %4 = arith.sitofp %3 : vector<4864x1024xi8> to vector<4864x1024xbf16>
    %c0_2 = arith.constant 0 : index
    %c0_3 = arith.constant 0 : index
    %5 = vector.load %arg10[%c0_2, %c0_3] : memref<2x1024xf32, #tpu.memory_space<vmem>>, vector<2x1024xf32>
    %c0_4 = arith.constant 0 : index
    %c0_5 = arith.constant 0 : index
    %6 = vector.load %arg1[%c0_4, %c0_5] : memref<2x4864xbf16, #tpu.memory_space<vmem>>, vector<2x4864xbf16>
    %cst = arith.constant dense<0.000000e+00> : vector<2x1024xf32>
    %7 = tpu.matmul %6, %4, %cst {dimension_numbers = #tpu.dot_dimension_numbers<[1], [0], [0], [1], [0, 0, 1, 1], [], []>} : vector<2x4864xbf16>, vector<4864x1024xbf16>, vector<2x1024xf32> -> vector<2x1024xf32>
    %8 = arith.addf %5, %7 : vector<2x1024xf32>
    %c0_6 = arith.constant 0 : index
    %c0_7 = arith.constant 0 : index
    %9 = vector.load %arg10[%c0_6, %c0_7] : memref<2x1024xf32, #tpu.memory_space<vmem>>, vector<2x1024xf32>
    tpu.vector_store %arg10[%c0_6, %c0_7], %8 {strides = array<i32>} : memref<2x1024xf32, #tpu.memory_space<vmem>>, vector<2x1024xf32>,
    %c1_i32 = arith.constant 1 : i32
    %10 = arith.cmpi eq, %arg0, %c1_i32 : i32
    %11 = arith.extui %10 : i1 to i32
    %c0_i32_8 = arith.constant 0 : i32
    %12 = arith.cmpi ne, %11, %c0_i32_8 : i32
    scf.if %12 {
      %c0_9 = arith.constant 0 : index
      %c0_10 = arith.constant 0 : index
      %13 = vector.load %arg10[%c0_9, %c0_10] : memref<2x1024xf32, #tpu.memory_space<vmem>>, vector<2x1024xf32>
      %c0_11 = arith.constant 0 : index
      %c0_12 = arith.constant 0 : index
      %14 = vector.load %arg3[%c0_11, %c0_12] : memref<1x1024xf32, #tpu.memory_space<vmem>>, vector<1x1024xf32>
      %15 = vector.broadcast %14 : vector<1x1024xf32> to vector<2x1024xf32>
      %16 = arith.mulf %13, %15 : vector<2x1024xf32>
      %c0_13 = arith.constant 0 : index
      %c0_14 = arith.constant 0 : index
      %17 = vector.load %arg4[%c0_13, %c0_14] : memref<1x1024xf32, #tpu.memory_space<vmem>>, vector<1x1024xf32>
      %18 = vector.broadcast %17 : vector<1x1024xf32> to vector<2x1024xf32>
      %19 = arith.addf %16, %18 : vector<2x1024xf32>
      %cst_15 = arith.constant 0.000000e+00 : f32
      %20 = vector.broadcast %cst_15 : f32 to vector<2x1024xf32>
      %21 = arith.maximumf %19, %20 : vector<2x1024xf32>
      %22 = arith.truncf %21 : vector<2x1024xf32> to vector<2x1024xbf16>
      %c0_16 = arith.constant 0 : index
      %c0_17 = arith.constant 0 : index
      %23 = vector.load %arg5[%c0_16, %c0_17] : memref<1024x128xbf16, #tpu.memory_space<vmem>>, vector<1024x128xbf16>
      %cst_18 = arith.constant dense<0.000000e+00> : vector<2x128xf32>
      %24 = tpu.matmul %22, %23, %cst_18 {dimension_numbers = #tpu.dot_dimension_numbers<[1], [0], [0], [1], [0, 0, 1, 1], [], []>} : vector<2x1024xbf16>, vector<1024x128xbf16>, vector<2x128xf32> -> vector<2x128xf32>
      %c0_19 = arith.constant 0 : index
      %c0_20 = arith.constant 0 : index
      %25 = vector.load %arg6[%c0_19, %c0_20] : memref<1x128xf32, #tpu.memory_space<vmem>>, vector<1x128xf32>
      %26 = vector.broadcast %25 : vector<1x128xf32> to vector<2x128xf32>
      %27 = arith.addf %24, %26 : vector<2x128xf32>
      %cst_21 = arith.constant 0.000000e+00 : f32
      %28 = vector.broadcast %cst_21 : f32 to vector<2x128xf32>
      %29 = arith.maximumf %27, %28 : vector<2x128xf32>
      %c0_22 = arith.constant 0 : index
      %c0_23 = arith.constant 0 : index
      %30 = vector.load %arg7[%c0_22, %c0_23] : memref<128x128xf32, #tpu.memory_space<vmem>>, vector<128x128xf32>
      %cst_24 = arith.constant dense<0.000000e+00> : vector<2x128xf32>
      %31 = tpu.matmul %29, %30, %cst_24 {dimension_numbers = #tpu.dot_dimension_numbers<[1], [0], [0], [1], [0, 0, 1, 1], [], []>} : vector<2x128xf32>, vector<128x128xf32>, vector<2x128xf32> -> vector<2x128xf32>
      %c0_25 = arith.constant 0 : index
      %c0_26 = arith.constant 0 : index
      %32 = vector.load %arg8[%c0_25, %c0_26] : memref<1x128xf32, #tpu.memory_space<vmem>>, vector<1x128xf32>
      %33 = vector.broadcast %32 : vector<1x128xf32> to vector<2x128xf32>
      %34 = arith.addf %31, %33 : vector<2x128xf32>
      %cst_27 = arith.constant dense<0xFF800000> : vector<2xf32>
      %35 = vector.multi_reduction <maximumf>, %34, %cst_27 [1] : vector<2x128xf32> to vector<2xf32>
      %36 = vector.shape_cast %35 : vector<2xf32> to vector<2x1xf32>
      %37 = vector.broadcast %36 : vector<2x1xf32> to vector<2x128xf32>
      %38 = arith.subf %34, %37 : vector<2x128xf32>
      %39 = math.exp %38 : vector<2x128xf32>
      %cst_28 = arith.constant dense<0.000000e+00> : vector<2xf32>
      %40 = vector.multi_reduction <add>, %39, %cst_28 [1] : vector<2x128xf32> to vector<2xf32>
      %41 = vector.shape_cast %40 : vector<2xf32> to vector<2x1xf32>
      %42 = vector.broadcast %41 : vector<2x1xf32> to vector<2x128xf32>
      %43 = arith.divf %39, %42 : vector<2x128xf32>
      %c0_29 = arith.constant 0 : index
      %c0_30 = arith.constant 0 : index
      %44 = vector.load %arg9[%c0_29, %c0_30] : memref<2x128xf32, #tpu.memory_space<vmem>>, vector<2x128xf32>
      tpu.vector_store %arg9[%c0_29, %c0_30], %43 {strides = array<i32>} : memref<2x128xf32, #tpu.memory_space<vmem>>, vector<2x128xf32>,
    } else {
    }
    return
  }
  func.func @transform_0(%arg0: i32) -> (i32, i32) {
    %c0_i32 = arith.constant 0 : i32
    %c0_i32_0 = arith.constant 0 : i32
    return %c0_i32, %arg0 : i32, i32
  }
  func.func @transform_1(%arg0: i32) -> (i32, i32) {
    %c0_i32 = arith.constant 0 : i32
    %c0_i32_0 = arith.constant 0 : i32
    return %arg0, %c0_i32 : i32, i32
  }
  func.func @transform_2(%arg0: i32) -> (i32, i32) {
    %c0_i32 = arith.constant 0 : i32
    %c0_i32_0 = arith.constant 0 : i32
    %c0_i32_1 = arith.constant 0 : i32
    return %c0_i32, %c0_i32_0 : i32, i32
  }
  func.func @transform_3(%arg0: i32) -> (i32, i32) {
    %c0_i32 = arith.constant 0 : i32
    %c0_i32_0 = arith.constant 0 : i32
    %c0_i32_1 = arith.constant 0 : i32
    return %c0_i32, %c0_i32_0 : i32, i32
  }
  func.func @transform_4(%arg0: i32) -> (i32, i32) {
    %c0_i32 = arith.constant 0 : i32
    %c0_i32_0 = arith.constant 0 : i32
    %c0_i32_1 = arith.constant 0 : i32
    return %c0_i32, %c0_i32_0 : i32, i32
  }
  func.func @transform_5(%arg0: i32) -> (i32, i32) {
    %c0_i32 = arith.constant 0 : i32
    %c0_i32_0 = arith.constant 0 : i32
    %c0_i32_1 = arith.constant 0 : i32
    return %c0_i32, %c0_i32_0 : i32, i32
  }
  func.func @transform_6(%arg0: i32) -> (i32, i32) {
    %c0_i32 = arith.constant 0 : i32
    %c0_i32_0 = arith.constant 0 : i32
    %c0_i32_1 = arith.constant 0 : i32
    return %c0_i32, %c0_i32_0 : i32, i32
  }
  func.func @transform_7(%arg0: i32) -> (i32, i32) {
    %c0_i32 = arith.constant 0 : i32
    %c0_i32_0 = arith.constant 0 : i32
    %c0_i32_1 = arith.constant 0 : i32
    return %c0_i32, %c0_i32_0 : i32, i32
  }
  func.func @transform_8(%arg0: i32) -> (i32, i32) {
    %c0_i32 = arith.constant 0 : i32
    %c0_i32_0 = arith.constant 0 : i32
    %c0_i32_1 = arith.constant 0 : i32
    return %c0_i32, %c0_i32_0 : i32, i32
  }
}

</mosaic_0001>

<llo_original>
// kernel: wavimg_forward.1
$region0: #{wavimg_forward.1}
  #allocation0 [shape = 'u32[]', space=smem, size = 0x4, offset = 0x4, fixed_abs, tag = 'smem constant byte address 0x4 - core index']
  #allocation1 [shape = 'u32[144,128]{1,0:T(1,128)}', space=vmem, size = 0x12000, scoped, tag = 'internal scratch']
  #allocation2 [shape = 'f32[2,1024]{1,0:T(2,128)}', space=vmem, size = 0x2000, scoped, tag = 'scratch operand']
  %s0 = inlined_call_operand.vmem [shape: bf16[2,9728], index: 0, kind: input, shape index: {}]
  %s1 = inlined_call_operand.vmem [shape: s8[9728,1024], index: 1, kind: input, shape index: {}]
  %s2 = inlined_call_operand.vmem [shape: f32[1,1024], index: 2, kind: input, shape index: {}]
  %s3 = inlined_call_operand.vmem [shape: f32[1,1024], index: 3, kind: input, shape index: {}]
  %s4 = inlined_call_operand.vmem [shape: bf16[1024,128], index: 4, kind: input, shape index: {}]
  %s5 = inlined_call_operand.vmem [shape: f32[1,128], index: 5, kind: input, shape index: {}]
  %s6 = inlined_call_operand.vmem [shape: f32[128,128], index: 6, kind: input, shape index: {}]
  %s7 = inlined_call_operand.vmem [shape: f32[1,128], index: 7, kind: input, shape index: {}]
  %s8 = inlined_call_operand.hbm [shape: f32[2,128], index: 8, kind: output, shape index: {}]
  %s9 = sld [smem:[#allocation0]]
  $region73: #{wavimg_forward.1} parent=0
    _
  %s11 = ssub.s32 1, %s9
  %s12 = scalar_select 0, %s11, %s9
  $region1: #{wavimg_forward.1} parent=0
    #allocation3 [shape = 'u8[1024]{0}', space=vmem, size = 0x400, scoped, tag = 'output window, operand 0, single buffered']
    #allocation4 [shape = 's32[2]{0}', space=sflag, size = 0x8, scoped, tag = 'scoped memory for wavimg_forward.1']
    %13 = vsyncpa [#allocation4], 0
    loop: start=0, step=1, limit=4
    $region2: #{wavimg_forward.1} parent=1 // loop_pre_header
      _
    $region3: #{wavimg_forward.1} parent=1 // loop_header
      %s15 = sphi 0, %s19
      %p16 = scmp.ge.s32.totalorder %s15, 4
      %s25 = sphi 0, %s27
      %s28 = sphi 0, %s25
      %s29 = sphi 0, %s28
      %s45 = sphi 0, %s29
      %s51 = sphi 0, %s53
      %s54 = sphi 0, %s51
      %s55 = sphi 0, %s54
      %s71 = sphi 0, %s55
      %s75 = sphi 0, %s75
      %s77 = sphi 0, %s75
      %s78 = sphi 0, %s77
      %s92 = sphi 0, %s78
      %s96 = sphi 0, %s96
      %s98 = sphi 0, %s96
      %s99 = sphi 0, %s98
      %s113 = sphi 0, %s99
      %s117 = sphi 0, %s117
      %s119 = sphi 0, %s117
      %s120 = sphi 0, %s119
      %s134 = sphi 0, %s120
      %s138 = sphi 0, %s138
      %s140 = sphi 0, %s138
      %s141 = sphi 0, %s140
      %s155 = sphi 0, %s141
      %s159 = sphi 0, %s159
      %s161 = sphi 0, %s159
      %s162 = sphi 0, %s161
      %s176 = sphi 0, %s162
      %s180 = sphi 0, %s180
      %s182 = sphi 0, %s180
      %s183 = sphi 0, %s182
      %s197 = sphi 0, %s183
      %s201 = sphi 0, %s201
      %s203 = sphi 0, %s201
      %s204 = sphi 0, %s203
      %s218 = sphi 0, %s204
    $region4: #{wavimg_forward.1} parent=1 // loop_header_branch
      %18 = sbr.rel (%p16) target = $region8
    $region5: #{wavimg_forward.1} parent=1 // loop_body
      %s20 = ssub.s32 %s15, 1
      %s21 = ssub.s32 %s15, 2
      %s22 = sadd.s32 %s15, 1
      %s23 = ssub.s32 %s15, %s22
      %p24 = scmp.eq.s32.totalorder %s23, 0
      %s26 = sadd.s32 %s25, 1
      %s27 = scalar_select %p24, %s25, %s26
      %p30 = pneg %p24
      %p31 = scmp.eq.s32.totalorder %s15, 1
      %p32 = por %p30, %p31
      %p33 = scmp.ne.s32.totalorder %s25, %s28
      %p34 = scmp.eq.s32.totalorder %s15, 0
      %p35 = por %p33, %p34
      %p36 = scmp.ne.s32.totalorder %s25, %s28
      %p37 = scmp.eq.s32.totalorder %s20, 1
      %p38 = por %p36, %p37
      %p39 = scmp.ne.s32.totalorder %s28, %s29
      %p40 = scmp.eq.s32.totalorder %s20, 0
      %p41 = por %p39, %p40
      %p42 = scmp.ne.s32.totalorder %s28, %s29
      %p43 = scmp.eq.s32.totalorder %s21, 1
      %p44 = por %p42, %p43
      %p46 = scmp.ne.s32.totalorder %s29, %s45
      %p47 = scmp.eq.s32.totalorder %s21, 0
      %p48 = por %p46, %p47
      %s49 = ssub.s32 %s15, %s22
      %p50 = scmp.eq.s32.totalorder %s49, 0
      %s52 = sadd.s32 %s51, 1
      %s53 = scalar_select %p50, %s51, %s52
      %p56 = pneg %p50
      %p57 = scmp.eq.s32.totalorder %s15, 1
      %p58 = por %p56, %p57
      %p59 = scmp.ne.s32.totalorder %s51, %s54
      %p60 = scmp.eq.s32.totalorder %s15, 0
      %p61 = por %p59, %p60
      %p62 = scmp.ne.s32.totalorder %s51, %s54
      %p63 = scmp.eq.s32.totalorder %s20, 1
      %p64 = por %p62, %p63
      %p65 = scmp.ne.s32.totalorder %s54, %s55
      %p66 = scmp.eq.s32.totalorder %s20, 0
      %p67 = por %p65, %p66
      %p68 = scmp.ne.s32.totalorder %s54, %s55
      %p69 = scmp.eq.s32.totalorder %s21, 1
      %p70 = por %p68, %p69
      %p72 = scmp.ne.s32.totalorder %s55, %s71
      %p73 = scmp.eq.s32.totalorder %s21, 0
      %p74 = por %p72, %p73
      %s76 = sadd.s32 %s75, 1
      %p79 = scmp.eq.s32.totalorder %s15, 1
      %p80 = scmp.ne.s32.totalorder %s75, %s77
      %p81 = scmp.eq.s32.totalorder %s15, 0
      %p82 = por %p80, %p81
      %p83 = scmp.ne.s32.totalorder %s75, %s77
      %p84 = scmp.eq.s32.totalorder %s20, 1
      %p85 = por %p83, %p84
      %p86 = scmp.ne.s32.totalorder %s77, %s78
      %p87 = scmp.eq.s32.totalorder %s20, 0
      %p88 = por %p86, %p87
      %p89 = scmp.ne.s32.totalorder %s77, %s78
      %p90 = scmp.eq.s32.totalorder %s21, 1
      %p91 = por %p89, %p90
      %p93 = scmp.ne.s32.totalorder %s78, %s92
      %p94 = scmp.eq.s32.totalorder %s21, 0
      %p95 = por %p93, %p94
      %s97 = sadd.s32 %s96, 1
      %p100 = scmp.eq.s32.totalorder %s15, 1
      %p101 = scmp.ne.s32.totalorder %s96, %s98
      %p102 = scmp.eq.s32.totalorder %s15, 0
      %p103 = por %p101, %p102
      %p104 = scmp.ne.s32.totalorder %s96, %s98
      %p105 = scmp.eq.s32.totalorder %s20, 1
      %p106 = por %p104, %p105
      %p107 = scmp.ne.s32.totalorder %s98, %s99
      %p108 = scmp.eq.s32.totalorder %s20, 0
      %p109 = por %p107, %p108
      %p110 = scmp.ne.s32.totalorder %s98, %s99
      %p111 = scmp.eq.s32.totalorder %s21, 1
      %p112 = por %p110, %p111
      %p114 = scmp.ne.s32.totalorder %s99, %s113
      %p115 = scmp.eq.s32.totalorder %s21, 0
      %p116 = por %p114, %p115
      %s118 = sadd.s32 %s117, 1
      %p121 = scmp.eq.s32.totalorder %s15, 1
      %p122 = scmp.ne.s32.totalorder %s117, %s119
      %p123 = scmp.eq.s32.totalorder %s15, 0
      %p124 = por %p122, %p123
      %p125 = scmp.ne.s32.totalorder %s117, %s119
      %p126 = scmp.eq.s32.totalorder %s20, 1
      %p127 = por %p125, %p126
      %p128 = scmp.ne.s32.totalorder %s119, %s120
      %p129 = scmp.eq.s32.totalorder %s20, 0
      %p130 = por %p128, %p129
      %p131 = scmp.ne.s32.totalorder %s119, %s120
      %p132 = scmp.eq.s32.totalorder %s21, 1
      %p133 = por %p131, %p132
      %p135 = scmp.ne.s32.totalorder %s120, %s134
      %p136 = scmp.eq.s32.totalorder %s21, 0
      %p137 = por %p135, %p136
      %s139 = sadd.s32 %s138, 1
      %p142 = scmp.eq.s32.totalorder %s15, 1
      %p143 = scmp.ne.s32.totalorder %s138, %s140
      %p144 = scmp.eq.s32.totalorder %s15, 0
      %p145 = por %p143, %p144
      %p146 = scmp.ne.s32.totalorder %s138, %s140
      %p147 = scmp.eq.s32.totalorder %s20, 1
      %p148 = por %p146, %p147
      %p149 = scmp.ne.s32.totalorder %s140, %s141
      %p150 = scmp.eq.s32.totalorder %s20, 0
      %p151 = por %p149, %p150
      %p152 = scmp.ne.s32.totalorder %s140, %s141
      %p153 = scmp.eq.s32.totalorder %s21, 1
      %p154 = por %p152, %p153
      %p156 = scmp.ne.s32.totalorder %s141, %s155
      %p157 = scmp.eq.s32.totalorder %s21, 0
      %p158 = por %p156, %p157
      %s160 = sadd.s32 %s159, 1
      %p163 = scmp.eq.s32.totalorder %s15, 1
      %p164 = scmp.ne.s32.totalorder %s159, %s161
      %p165 = scmp.eq.s32.totalorder %s15, 0
      %p166 = por %p164, %p165
      %p167 = scmp.ne.s32.totalorder %s159, %s161
      %p168 = scmp.eq.s32.totalorder %s20, 1
      %p169 = por %p167, %p168
      %p170 = scmp.ne.s32.totalorder %s161, %s162
      %p171 = scmp.eq.s32.totalorder %s20, 0
      %p172 = por %p170, %p171
      %p173 = scmp.ne.s32.totalorder %s161, %s162
      %p174 = scmp.eq.s32.totalorder %s21, 1
      %p175 = por %p173, %p174
      %p177 = scmp.ne.s32.totalorder %s162, %s176
      %p178 = scmp.eq.s32.totalorder %s21, 0
      %p179 = por %p177, %p178
      %s181 = sadd.s32 %s180, 1
      %p184 = scmp.eq.s32.totalorder %s15, 1
      %p185 = scmp.ne.s32.totalorder %s180, %s182
      %p186 = scmp.eq.s32.totalorder %s15, 0
      %p187 = por %p185, %p186
      %p188 = scmp.ne.s32.totalorder %s180, %s182
      %p189 = scmp.eq.s32.totalorder %s20, 1
      %p190 = por %p188, %p189
      %p191 = scmp.ne.s32.totalorder %s182, %s183
      %p192 = scmp.eq.s32.totalorder %s20, 0
      %p193 = por %p191, %p192
      %p194 = scmp.ne.s32.totalorder %s182, %s183
      %p195 = scmp.eq.s32.totalorder %s21, 1
      %p196 = por %p194, %p195
      %p198 = scmp.ne.s32.totalorder %s183, %s197
      %p199 = scmp.eq.s32.totalorder %s21, 0
      %p200 = por %p198, %p199
      %s202 = sadd.s32 %s201, 1
      %p205 = scmp.eq.s32.totalorder %s15, 1
      %p206 = scmp.ne.s32.totalorder %s201, %s203
      %p207 = scmp.eq.s32.totalorder %s15, 0
      %p208 = por %p206, %p207
      %p209 = scmp.ne.s32.totalorder %s201, %s203
      %p210 = scmp.eq.s32.totalorder %s20, 1
      %p211 = por %p209, %p210
      %p212 = scmp.ne.s32.totalorder %s203, %s204
      %p213 = scmp.eq.s32.totalorder %s20, 0
      %p214 = por %p212, %p213
      %p215 = scmp.ne.s32.totalorder %s203, %s204
      %p216 = scmp.eq.s32.totalorder %s21, 1
      %p217 = por %p215, %p216
      %p219 = scmp.ne.s32.totalorder %s204, %s218
      %p220 = scmp.eq.s32.totalorder %s21, 0
      %p221 = por %p219, %p220
      %p222 = scmp.le.s32.totalorder 1, %s15
      %p223 = scmp.lt.s32.totalorder %s15, 3
      %p224 = pnand %p222, %p223
      %p225 = pneg %p224
      // Predicated region
      $region9: #{wavimg_forward.1} parent=5 // pred_check
        _
      $region10: #{wavimg_forward.1} parent=5 // pred_check_branch
        %227 = sbr.rel (%p224) target = $region12
      $region11: #{wavimg_forward.1} parent=5 // pred_region
        %s228 = ssub.s32 %s15, 1
        // Predicated region
        $region13: #{wavimg_forward.1} parent=11 // pred_check
          %p229 = pneg %p88
        $region14: #{wavimg_forward.1} parent=11 // pred_check_branch
          %231 = sbr.rel (%p229) target = $region16
        $region15: #{wavimg_forward.1} parent=11 // pred_region
          _
        $region16: #{wavimg_forward.1} parent=11 // pred_fallthru
          _
        // Predicated region
        $region17: #{wavimg_forward.1} parent=11 // pred_check
          %p232 = pneg %p109
        $region18: #{wavimg_forward.1} parent=11 // pred_check_branch
          %234 = sbr.rel (%p232) target = $region20
        $region19: #{wavimg_forward.1} parent=11 // pred_region
          _
        $region20: #{wavimg_forward.1} parent=11 // pred_fallthru
          _
        // Predicated region
        $region21: #{wavimg_forward.1} parent=11 // pred_check
          %p235 = pneg %p130
        $region22: #{wavimg_forward.1} parent=11 // pred_check_branch
          %237 = sbr.rel (%p235) target = $region24
        $region23: #{wavimg_forward.1} parent=11 // pred_region
          _
        $region24: #{wavimg_forward.1} parent=11 // pred_fallthru
          _
        // Predicated region
        $region25: #{wavimg_forward.1} parent=11 // pred_check
          %p238 = pneg %p151
        $region26: #{wavimg_forward.1} parent=11 // pred_check_branch
          %240 = sbr.rel (%p238) target = $region28
        $region27: #{wavimg_forward.1} parent=11 // pred_region
          _
        $region28: #{wavimg_forward.1} parent=11 // pred_fallthru
          _
        // Predicated region
        $region29: #{wavimg_forward.1} parent=11 // pred_check
          %p241 = pneg %p172
        $region30: #{wavimg_forward.1} parent=11 // pred_check_branch
          %243 = sbr.rel (%p241) target = $region32
        $region31: #{wavimg_forward.1} parent=11 // pred_region
          _
        $region32: #{wavimg_forward.1} parent=11 // pred_fallthru
          _
        // Predicated region
        $region33: #{wavimg_forward.1} parent=11 // pred_check
          %p244 = pneg %p193
        $region34: #{wavimg_forward.1} parent=11 // pred_check_branch
          %246 = sbr.rel (%p244) target = $region36
        $region35: #{wavimg_forward.1} parent=11 // pred_region
          _
        $region36: #{wavimg_forward.1} parent=11 // pred_fallthru
          _
      $region12: #{wavimg_forward.1} parent=5 // pred_fallthru
        _
      %p247 = scmp.lt.s32.totalorder %s15, 2
      // Predicated region
      $region37: #{wavimg_forward.1} parent=5 // pred_check
        %p248 = pneg %p247
      $region38: #{wavimg_forward.1} parent=5 // pred_check_branch
        %250 = sbr.rel (%p248) target = $region40
      $region39: #{wavimg_forward.1} parent=5 // pred_region
        // Predicated region
        $region41: #{wavimg_forward.1} parent=39 // pred_check
          %p251 = pneg %p35
        $region42: #{wavimg_forward.1} parent=39 // pred_check_branch
          %253 = sbr.rel (%p251) target = $region44
        $region43: #{wavimg_forward.1} parent=39 // pred_region
          %s254 = smul.u32 38, %s15
          %p255 = scmp.lt.s32.totalorder %s254, 75
          %s256 = scalar_select %p255, %s254, 75
          %s257 = scalar_lea.vmem %s0, %s256
          %s258 = smul.u32 38, %s15
        $region44: #{wavimg_forward.1} parent=39 // pred_fallthru
          _
        // Predicated region
        $region45: #{wavimg_forward.1} parent=39 // pred_check
          %p259 = pneg %p61
        $region46: #{wavimg_forward.1} parent=39 // pred_check_branch
          %261 = sbr.rel (%p259) target = $region48
        $region47: #{wavimg_forward.1} parent=39 // pred_region
          %s262 = smul.u32 152, %s15
          %p263 = scmp.lt.s32.totalorder %s262, 303
          %s264 = scalar_select %p263, %s262, 303
          %s265 = smul.addr %s264, 8
          %s266 = smul.addr %s265, 8
          %s267 = scalar_lea.vmem %s1, %s266
          %s268 = smul.u32 152, %s15
        $region48: #{wavimg_forward.1} parent=39 // pred_fallthru
          _
      $region40: #{wavimg_forward.1} parent=5 // pred_fallthru
        _
      %p269 = scmp.le.s32.totalorder 1, %s15
      %p270 = scmp.lt.s32.totalorder %s15, 3
      %p271 = pnand %p269, %p270
      %p272 = pneg %p271
      // Predicated region
      $region49: #{wavimg_forward.1} parent=5 // pred_check
        _
      $region50: #{wavimg_forward.1} parent=5 // pred_check_branch
        %274 = sbr.rel (%p271) target = $region52
      $region51: #{wavimg_forward.1} parent=5 // pred_region
        %s275 = ssub.s32 %s15, 1
        %s276 = smul.u32 38, %s20
        %p277 = scmp.lt.s32.totalorder %s276, 75
        %s278 = scalar_select %p277, %s276, 75
        %s279 = scalar_lea.vmem %s0, %s278
        %p280 = pneg %p41
        %p281 = pneg %p38
        %s282 = smul.u32 152, %s20
        %p283 = scmp.lt.s32.totalorder %s282, 303
        %s284 = scalar_select %p283, %s282, 303
        %s285 = smul.addr %s284, 8
        %s286 = smul.addr %s285, 8
        %s287 = scalar_lea.vmem %s1, %s286
        %p288 = pneg %p67
        %p289 = pneg %p64
        %p290 = pneg %p88
        %p291 = pneg %p85
        %p292 = pneg %p109
        %p293 = pneg %p106
        %p294 = pneg %p130
        %p295 = pneg %p127
        %p296 = pneg %p151
        %p297 = pneg %p148
        %p298 = pneg %p172
        %p299 = pneg %p169
        %p300 = pneg %p193
        %p301 = pneg %p190
        %p302 = pneg %p214
        %p303 = pneg %p211
        %s304 = smul.u32 38, %s20
        %p305 = scmp.lt.s32.totalorder %s304, 75
        %s306 = scalar_select %p305, %s304, 75
        %s307 = scalar_lea.vmem %s0, %s306
        %s308 = smul.u32 38, %s20
        %s309 = smul.u32 152, %s20
        %p310 = scmp.lt.s32.totalorder %s309, 303
        %s311 = scalar_select %p310, %s309, 303
        %s312 = smul.addr %s311, 8
        %s313 = smul.addr %s312, 8
        %s314 = scalar_lea.vmem %s1, %s313
        %s315 = smul.u32 152, %s20
        %p317 = scmp.eq.s32.totalorder %s20, 0
        // Predicated region
        $region53: #{wavimg_forward.1} parent=51 // pred_check
          %p318 = pneg %p317
        $region54: #{wavimg_forward.1} parent=51 // pred_check_branch
          %320 = sbr.rel (%p318) target = $region56
        $region55: #{wavimg_forward.1} parent=51 // pred_region
          %321 = vst [vmem:[#allocation2] sm:$0xff] 0.0
          %322 = vst [vmem:[#allocation2 + $0x8] sm:$0xff] 0.0
        $region56: #{wavimg_forward.1} parent=51 // pred_fallthru
          _
        %v323 = vld [vmem:[%s314] sm:$0xff]
        %v324 = vld [vmem:[%s314 + $0x8] sm:$0xff]
        %v325 = vld [vmem:[%s314 + $0x10] sm:$0xff]
        %v326 = vld [vmem:[%s314 + $0x18] sm:$0xff]
        %v327 = vld [vmem:[%s314 + $0x20] sm:$0xff]
        %v328 = vld [vmem:[%s314 + $0x28] sm:$0xff]
        %v329 = vld [vmem:[%s314 + $0x30] sm:$0xff]
        %v330 = vld [vmem:[%s314 + $0x38] sm:$0xff]
        %v331 = vld [vmem:[%s314 + $0x40] sm:$0xff]
        %v332 = vld [vmem:[%s314 + $0x48] sm:$0xff]
        %v333 = vld [vmem:[%s314 + $0x50] sm:$0xff]
        %v334 = vld [vmem:[%s314 + $0x58] sm:$0xff]
        %v335 = vld [vmem:[%s314 + $0x60] sm:$0xff]
        %v336 = vld [vmem:[%s314 + $0x68] sm:$0xff]
        %v337 = vld [vmem:[%s314 + $0x70] sm:$0xff]
        %v338 = vld [vmem:[%s314 + $0x78] sm:$0xff]
        %v339 = vld [vmem:[%s314 + $0x80] sm:$0xff]
        %v340 = vld [vmem:[%s314 + $0x88] sm:$0xff]
        %v341 = vld [vmem:[%s314 + $0x90] sm:$0xff]
        %v342 = vld [vmem:[%s314 + $0x98] sm:$0xff]
        %v343 = vld [vmem:[%s314 + $0xa0] sm:$0xff]
        %v344 = vld [vmem:[%s314 + $0xa8] sm:$0xff]
        %v345 = vld [vmem:[%s314 + $0xb0] sm:$0xff]
        %v346 = vld [vmem:[%s314 + $0xb8] sm:$0xff]
        %v347 = vld [vmem:[%s314 + $0xc0] sm:$0xff]
        %v348 = vld [vmem:[%s314 + $0xc8] sm:$0xff]
        %v349 = vld [vmem:[%s314 + $0xd0] sm:$0xff]
        %v350 = vld [vmem:[%s314 + $0xd8] sm:$0xff]
        %v351 = vld [vmem:[%s314 + $0xe0] sm:$0xff]
        %v352 = vld [vmem:[%s314 + $0xe8] sm:$0xff]
        %v353 = vld [vmem:[%s314 + $0xf0] sm:$0xff]
        %v354 = vld [vmem:[%s314 + $0xf8] sm:$0xff]
        %v355 = vld [vmem:[%s314 + $0x100] sm:$0xff]
        %v356 = vld [vmem:[%s314 + $0x108] sm:$0xff]
        %v357 = vld [vmem:[%s314 + $0x110] sm:$0xff]
        %v358 = vld [vmem:[%s314 + $0x118] sm:$0xff]
        %v359 = vld [vmem:[%s314 + $0x120] sm:$0xff]
        %v360 = vld [vmem:[%s314 + $0x128] sm:$0xff]
        %v361 = vld [vmem:[%s314 + $0x130] sm:$0xff]
        %v362 = vld [vmem:[%s314 + $0x138] sm:$0xff]
        %v363 = vld [vmem:[%s314 + $0x140] sm:$0xff]
        %v364 = vld [vmem:[%s314 + $0x148] sm:$0xff]
        %v365 = vld [vmem:[%s314 + $0x150] sm:$0xff]
        %v366 = vld [vmem:[%s314 + $0x158] sm:$0xff]
        %v367 = vld [vmem:[%s314 + $0x160] sm:$0xff]
        %v368 = vld [vmem:[%s314 + $0x168] sm:$0xff]
        %v369 = vld [vmem:[%s314 + $0x170] sm:$0xff]
        %v370 = vld [vmem:[%s314 + $0x178] sm:$0xff]
        %v371 = vld [vmem:[%s314 + $0x180] sm:$0xff]
        %v372 = vld [vmem:[%s314 + $0x188] sm:$0xff]
        %v373 = vld [vmem:[%s314 + $0x190] sm:$0xff]
        %v374 = vld [vmem:[%s314 + $0x198] sm:$0xff]
        %v375 = vld [vmem:[%s314 + $0x1a0] sm:$0xff]
        %v376 = vld [vmem:[%s314 + $0x1a8] sm:$0xff]
        %v377 = vld [vmem:[%s314 + $0x1b0] sm:$0xff]
        %v378 = vld [vmem:[%s314 + $0x1b8] sm:$0xff]
        %v379 = vld [vmem:[%s314 + $0x1c0] sm:$0xff]
        %v380 = vld [vmem:[%s314 + $0x1c8] sm:$0xff]
        %v381 = vld [vmem:[%s314 + $0x1d0] sm:$0xff]
        %v382 = vld [vmem:[%s314 + $0x1d8] sm:$0xff]
        %v383 = vld [vmem:[%s314 + $0x1e0] sm:$0xff]
        %v384 = vld [vmem:[%s314 + $0x1e8] sm:$0xff]
        %v385 = vld [vmem:[%s314 + $0x1f0] sm:$0xff]
        %v386 = vld [vmem:[%s314 + $0x1f8] sm:$0xff]
        %v387 = vld [vmem:[%s314 + $0x200] sm:$0xff]
        %v388 = vld [vmem:[%s314 + $0x208] sm:$0xff]
        %v389 = vld [vmem:[%s314 + $0x210] sm:$0xff]
        %v390 = vld [vmem:[%s314 + $0x218] sm:$0xff]
        %v391 = vld [vmem:[%s314 + $0x220] sm:$0xff]
        %v392 = vld [vmem:[%s314 + $0x228] sm:$0xff]
        %v393 = vld [vmem:[%s314 + $0x230] sm:$0xff]
        %v394 = vld [vmem:[%s314 + $0x238] sm:$0xff]
        %v395 = vld [vmem:[%s314 + $0x240] sm:$0xff]
        %v396 = vld [vmem:[%s314 + $0x248] sm:$0xff]
        %v397 = vld [vmem:[%s314 + $0x250] sm:$0xff]
        %v398 = vld [vmem:[%s314 + $0x258] sm:$0xff]
        %v399 = vld [vmem:[%s314 + $0x260] sm:$0xff]
        %v400 = vld [vmem:[%s314 + $0x268] sm:$0xff]
        %v401 = vld [vmem:[%s314 + $0x270] sm:$0xff]
        %v402 = vld [vmem:[%s314 + $0x278] sm:$0xff]
        %v403 = vld [vmem:[%s314 + $0x280] sm:$0xff]
        %v404 = vld [vmem:[%s314 + $0x288] sm:$0xff]
        %v405 = vld [vmem:[%s314 + $0x290] sm:$0xff]
        %v406 = vld [vmem:[%s314 + $0x298] sm:$0xff]
        %v407 = vld [vmem:[%s314 + $0x2a0] sm:$0xff]
        %v408 = vld [vmem:[%s314 + $0x2a8] sm:$0xff]
        %v409 = vld [vmem:[%s314 + $0x2b0] sm:$0xff]
        %v410 = vld [vmem:[%s314 + $0x2b8] sm:$0xff]
        %v411 = vld [vmem:[%s314 + $0x2c0] sm:$0xff]
        %v412 = vld [vmem:[%s314 + $0x2c8] sm:$0xff]
        %v413 = vld [vmem:[%s314 + $0x2d0] sm:$0xff]
        %v414 = vld [vmem:[%s314 + $0x2d8] sm:$0xff]
        %v415 = vld [vmem:[%s314 + $0x2e0] sm:$0xff]
        %v416 = vld [vmem:[%s314 + $0x2e8] sm:$0xff]
        %v417 = vld [vmem:[%s314 + $0x2f0] sm:$0xff]
        %v418 = vld [vmem:[%s314 + $0x2f8] sm:$0xff]
        %v419 = vld [vmem:[%s314 + $0x300] sm:$0xff]
        %v420 = vld [vmem:[%s314 + $0x308] sm:$0xff]
        %v421 = vld [vmem:[%s314 + $0x310] sm:$0xff]
        %v422 = vld [vmem:[%s314 + $0x318] sm:$0xff]
        %v423 = vld [vmem:[%s314 + $0x320] sm:$0xff]
        %v424 = vld [vmem:[%s314 + $0x328] sm:$0xff]
        %v425 = vld [vmem:[%s314 + $0x330] sm:$0xff]
        %v426 = vld [vmem:[%s314 + $0x338] sm:$0xff]
        %v427 = vld [vmem:[%s314 + $0x340] sm:$0xff]
        %v428 = vld [vmem:[%s314 + $0x348] sm:$0xff]
        %v429 = vld [vmem:[%s314 + $0x350] sm:$0xff]
        %v430 = vld [vmem:[%s314 + $0x358] sm:$0xff]
        %v431 = vld [vmem:[%s314 + $0x360] sm:$0xff]
        %v432 = vld [vmem:[%s314 + $0x368] sm:$0xff]
        %v433 = vld [vmem:[%s314 + $0x370] sm:$0xff]
        %v434 = vld [vmem:[%s314 + $0x378] sm:$0xff]
        %v435 = vld [vmem:[%s314 + $0x380] sm:$0xff]
        %v436 = vld [vmem:[%s314 + $0x388] sm:$0xff]
        %v437 = vld [vmem:[%s314 + $0x390] sm:$0xff]
        %v438 = vld [vmem:[%s314 + $0x398] sm:$0xff]
        %v439 = vld [vmem:[%s314 + $0x3a0] sm:$0xff]
        %v440 = vld [vmem:[%s314 + $0x3a8] sm:$0xff]
        %v441 = vld [vmem:[%s314 + $0x3b0] sm:$0xff]
        %v442 = vld [vmem:[%s314 + $0x3b8] sm:$0xff]
        %v443 = vld [vmem:[%s314 + $0x3c0] sm:$0xff]
        %v444 = vld [vmem:[%s314 + $0x3c8] sm:$0xff]
        %v445 = vld [vmem:[%s314 + $0x3d0] sm:$0xff]
        %v446 = vld [vmem:[%s314 + $0x3d8] sm:$0xff]
        %v447 = vld [vmem:[%s314 + $0x3e0] sm:$0xff]
        %v448 = vld [vmem:[%s314 + $0x3e8] sm:$0xff]
        %v449 = vld [vmem:[%s314 + $0x3f0] sm:$0xff]
        %v450 = vld [vmem:[%s314 + $0x3f8] sm:$0xff]
        %v451 = vld [vmem:[%s314 + $0x400] sm:$0xff]
        %v452 = vld [vmem:[%s314 + $0x408] sm:$0xff]
        %v453 = vld [vmem:[%s314 + $0x410] sm:$0xff]
        %v454 = vld [vmem:[%s314 + $0x418] sm:$0xff]
        %v455 = vld [vmem:[%s314 + $0x420] sm:$0xff]
        %v456 = vld [vmem:[%s314 + $0x428] sm:$0xff]
        %v457 = vld [vmem:[%s314 + $0x430] sm:$0xff]
        %v458 = vld [vmem:[%s314 + $0x438] sm:$0xff]
        %v459 = vld [vmem:[%s314 + $0x440] sm:$0xff]
        %v460 = vld [vmem:[%s314 + $0x448] sm:$0xff]
        %v461 = vld [vmem:[%s314 + $0x450] sm:$0xff]
        %v462 = vld [vmem:[%s314 + $0x458] sm:$0xff]
        %v463 = vld [vmem:[%s314 + $0x460] sm:$0xff]
        %v464 = vld [vmem:[%s314 + $0x468] sm:$0xff]
        %v465 = vld [vmem:[%s314 + $0x470] sm:$0xff]
        %v466 = vld [vmem:[%s314 + $0x478] sm:$0xff]
        %v467 = vld [vmem:[%s314 + $0x480] sm:$0xff]
        %v468 = vld [vmem:[%s314 + $0x488] sm:$0xff]
        %v469 = vld [vmem:[%s314 + $0x490] sm:$0xff]
        %v470 = vld [vmem:[%s314 + $0x498] sm:$0xff]
        %v471 = vld [vmem:[%s314 + $0x4a0] sm:$0xff]
        %v472 = vld [vmem:[%s314 + $0x4a8] sm:$0xff]
        %v473 = vld [vmem:[%s314 + $0x4b0] sm:$0xff]
        %v474 = vld [vmem:[%s314 + $0x4b8] sm:$0xff]
        %v475 = vld [vmem:[%s314 + $0x4c0] sm:$0xff]
        %v476 = vld [vmem:[%s314 + $0x4c8] sm:$0xff]
        %v477 = vld [vmem:[%s314 + $0x4d0] sm:$0xff]
        %v478 = vld [vmem:[%s314 + $0x4d8] sm:$0xff]
        %v479 = vld [vmem:[%s314 + $0x4e0] sm:$0xff]
        %v480 = vld [vmem:[%s314 + $0x4e8] sm:$0xff]
        %v481 = vld [vmem:[%s314 + $0x4f0] sm:$0xff]
        %v482 = vld [vmem:[%s314 + $0x4f8] sm:$0xff]
        %v483 = vld [vmem:[%s314 + $0x500] sm:$0xff]
        %v484 = vld [vmem:[%s314 + $0x508] sm:$0xff]
        %v485 = vld [vmem:[%s314 + $0x510] sm:$0xff]
        %v486 = vld [vmem:[%s314 + $0x518] sm:$0xff]
        %v487 = vld [vmem:[%s314 + $0x520] sm:$0xff]
        %v488 = vld [vmem:[%s314 + $0x528] sm:$0xff]
        %v489 = vld [vmem:[%s314 + $0x530] sm:$0xff]
        %v490 = vld [vmem:[%s314 + $0x538] sm:$0xff]
        %v491 = vld [vmem:[%s314 + $0x540] sm:$0xff]
        %v492 = vld [vmem:[%s314 + $0x548] sm:$0xff]
        %v493 = vld [vmem:[%s314 + $0x550] sm:$0xff]
        %v494 = vld [vmem:[%s314 + $0x558] sm:$0xff]
        %v495 = vld [vmem:[%s314 + $0x560] sm:$0xff]
        %v496 = vld [vmem:[%s314 + $0x568] sm:$0xff]
        %v497 = vld [vmem:[%s314 + $0x570] sm:$0xff]
        %v498 = vld [vmem:[%s314 + $0x578] sm:$0xff]
        %v499 = vld [vmem:[%s314 + $0x580] sm:$0xff]
        %v500 = vld [vmem:[%s314 + $0x588] sm:$0xff]
        %v501 = vld [vmem:[%s314 + $0x590] sm:$0xff]
        %v502 = vld [vmem:[%s314 + $0x598] sm:$0xff]
        %v503 = vld [vmem:[%s314 + $0x5a0] sm:$0xff]
        %v504 = vld [vmem:[%s314 + $0x5a8] sm:$0xff]
        %v505 = vld [vmem:[%s314 + $0x5b0] sm:$0xff]
        %v506 = vld [vmem:[%s314 + $0x5b8] sm:$0xff]
        %v507 = vld [vmem:[%s314 + $0x5c0] sm:$0xff]
        %v508 = vld [vmem:[%s314 + $0x5c8] sm:$0xff]
        %v509 = vld [vmem:[%s314 + $0x5d0] sm:$0xff]
        %v510 = vld [vmem:[%s314 + $0x5d8] sm:$0xff]
        %v511 = vld [vmem:[%s314 + $0x5e0] sm:$0xff]
        %v512 = vld [vmem:[%s314 + $0x5e8] sm:$0xff]
        %v513 = vld [vmem:[%s314 + $0x5f0] sm:$0xff]
        %v514 = vld [vmem:[%s314 + $0x5f8] sm:$0xff]
        %v515 = vld [vmem:[%s314 + $0x600] sm:$0xff]
        %v516 = vld [vmem:[%s314 + $0x608] sm:$0xff]
        %v517 = vld [vmem:[%s314 + $0x610] sm:$0xff]
        %v518 = vld [vmem:[%s314 + $0x618] sm:$0xff]
        %v519 = vld [vmem:[%s314 + $0x620] sm:$0xff]
        %v520 = vld [vmem:[%s314 + $0x628] sm:$0xff]
        %v521 = vld [vmem:[%s314 + $0x630] sm:$0xff]
        %v522 = vld [vmem:[%s314 + $0x638] sm:$0xff]
        %v523 = vld [vmem:[%s314 + $0x640] sm:$0xff]
        %v524 = vld [vmem:[%s314 + $0x648] sm:$0xff]
        %v525 = vld [vmem:[%s314 + $0x650] sm:$0xff]
        %v526 = vld [vmem:[%s314 + $0x658] sm:$0xff]
        %v527 = vld [vmem:[%s314 + $0x660] sm:$0xff]
        %v528 = vld [vmem:[%s314 + $0x668] sm:$0xff]
        %v529 = vld [vmem:[%s314 + $0x670] sm:$0xff]
        %v530 = vld [vmem:[%s314 + $0x678] sm:$0xff]
        %v531 = vld [vmem:[%s314 + $0x680] sm:$0xff]
        %v532 = vld [vmem:[%s314 + $0x688] sm:$0xff]
        %v533 = vld [vmem:[%s314 + $0x690] sm:$0xff]
        %v534 = vld [vmem:[%s314 + $0x698] sm:$0xff]
        %v535 = vld [vmem:[%s314 + $0x6a0] sm:$0xff]
        %v536 = vld [vmem:[%s314 + $0x6a8] sm:$0xff]
        %v537 = vld [vmem:[%s314 + $0x6b0] sm:$0xff]
        %v538 = vld [vmem:[%s314 + $0x6b8] sm:$0xff]
        %v539 = vld [vmem:[%s314 + $0x6c0] sm:$0xff]
        %v540 = vld [vmem:[%s314 + $0x6c8] sm:$0xff]
        %v541 = vld [vmem:[%s314 + $0x6d0] sm:$0xff]
        %v542 = vld [vmem:[%s314 + $0x6d8] sm:$0xff]
        %v543 = vld [vmem:[%s314 + $0x6e0] sm:$0xff]
        %v544 = vld [vmem:[%s314 + $0x6e8] sm:$0xff]
        %v545 = vld [vmem:[%s314 + $0x6f0] sm:$0xff]
        %v546 = vld [vmem:[%s314 + $0x6f8] sm:$0xff]
        %v547 = vld [vmem:[%s314 + $0x700] sm:$0xff]
        %v548 = vld [vmem:[%s314 + $0x708] sm:$0xff]
        %v549 = vld [vmem:[%s314 + $0x710] sm:$0xff]
        %v550 = vld [vmem:[%s314 + $0x718] sm:$0xff]
        %v551 = vld [vmem:[%s314 + $0x720] sm:$0xff]
        %v552 = vld [vmem:[%s314 + $0x728] sm:$0xff]
        %v553 = vld [vmem:[%s314 + $0x730] sm:$0xff]
        %v554 = vld [vmem:[%s314 + $0x738] sm:$0xff]
        %v555 = vld [vmem:[%s314 + $0x740] sm:$0xff]
        %v556 = vld [vmem:[%s314 + $0x748] sm:$0xff]
        %v557 = vld [vmem:[%s314 + $0x750] sm:$0xff]
        %v558 = vld [vmem:[%s314 + $0x758] sm:$0xff]
        %v559 = vld [vmem:[%s314 + $0x760] sm:$0xff]
        %v560 = vld [vmem:[%s314 + $0x768] sm:$0xff]
        %v561 = vld [vmem:[%s314 + $0x770] sm:$0xff]
        %v562 = vld [vmem:[%s314 + $0x778] sm:$0xff]
        %v563 = vld [vmem:[%s314 + $0x780] sm:$0xff]
        %v564 = vld [vmem:[%s314 + $0x788] sm:$0xff]
        %v565 = vld [vmem:[%s314 + $0x790] sm:$0xff]
        %v566 = vld [vmem:[%s314 + $0x798] sm:$0xff]
        %v567 = vld [vmem:[%s314 + $0x7a0] sm:$0xff]
        %v568 = vld [vmem:[%s314 + $0x7a8] sm:$0xff]
        %v569 = vld [vmem:[%s314 + $0x7b0] sm:$0xff]
        %v570 = vld [vmem:[%s314 + $0x7b8] sm:$0xff]
        %v571 = vld [vmem:[%s314 + $0x7c0] sm:$0xff]
        %v572 = vld [vmem:[%s314 + $0x7c8] sm:$0xff]
        %v573 = vld [vmem:[%s314 + $0x7d0] sm:$0xff]
        %v574 = vld [vmem:[%s314 + $0x7d8] sm:$0xff]
        %v575 = vld [vmem:[%s314 + $0x7e0] sm:$0xff]
        %v576 = vld [vmem:[%s314 + $0x7e8] sm:$0xff]
        %v577 = vld [vmem:[%s314 + $0x7f0] sm:$0xff]
        %v578 = vld [vmem:[%s314 + $0x7f8] sm:$0xff]
        %v579 = vld [vmem:[%s314 + $0x800] sm:$0xff]
        %v580 = vld [vmem:[%s314 + $0x808] sm:$0xff]
        %v581 = vld [vmem:[%s314 + $0x810] sm:$0xff]
        %v582 = vld [vmem:[%s314 + $0x818] sm:$0xff]
        %v583 = vld [vmem:[%s314 + $0x820] sm:$0xff]
        %v584 = vld [vmem:[%s314 + $0x828] sm:$0xff]
        %v585 = vld [vmem:[%s314 + $0x830] sm:$0xff]
        %v586 = vld [vmem:[%s314 + $0x838] sm:$0xff]
        %v587 = vld [vmem:[%s314 + $0x840] sm:$0xff]
        %v588 = vld [vmem:[%s314 + $0x848] sm:$0xff]
        %v589 = vld [vmem:[%s314 + $0x850] sm:$0xff]
        %v590 = vld [vmem:[%s314 + $0x858] sm:$0xff]
        %v591 = vld [vmem:[%s314 + $0x860] sm:$0xff]
        %v592 = vld [vmem:[%s314 + $0x868] sm:$0xff]
        %v593 = vld [vmem:[%s314 + $0x870] sm:$0xff]
        %v594 = vld [vmem:[%s314 + $0x878] sm:$0xff]
        %v595 = vld [vmem:[%s314 + $0x880] sm:$0xff]
        %v596 = vld [vmem:[%s314 + $0x888] sm:$0xff]
        %v597 = vld [vmem:[%s314 + $0x890] sm:$0xff]
        %v598 = vld [vmem:[%s314 + $0x898] sm:$0xff]
        %v599 = vld [vmem:[%s314 + $0x8a0] sm:$0xff]
        %v600 = vld [vmem:[%s314 + $0x8a8] sm:$0xff]
        %v601 = vld [vmem:[%s314 + $0x8b0] sm:$0xff]
        %v602 = vld [vmem:[%s314 + $0x8b8] sm:$0xff]
        %v603 = vld [vmem:[%s314 + $0x8c0] sm:$0xff]
        %v604 = vld [vmem:[%s314 + $0x8c8] sm:$0xff]
        %v605 = vld [vmem:[%s314 + $0x8d0] sm:$0xff]
        %v606 = vld [vmem:[%s314 + $0x8d8] sm:$0xff]
        %v607 = vld [vmem:[%s314 + $0x8e0] sm:$0xff]
        %v608 = vld [vmem:[%s314 + $0x8e8] sm:$0xff]
        %v609 = vld [vmem:[%s314 + $0x8f0] sm:$0xff]
        %v610 = vld [vmem:[%s314 + $0x8f8] sm:$0xff]
        %v611 = vld [vmem:[%s314 + $0x900] sm:$0xff]
        %v612 = vld [vmem:[%s314 + $0x908] sm:$0xff]
        %v613 = vld [vmem:[%s314 + $0x910] sm:$0xff]
        %v614 = vld [vmem:[%s314 + $0x918] sm:$0xff]
        %v615 = vld [vmem:[%s314 + $0x920] sm:$0xff]
        %v616 = vld [vmem:[%s314 + $0x928] sm:$0xff]
        %v617 = vld [vmem:[%s314 + $0x930] sm:$0xff]
        %v618 = vld [vmem:[%s314 + $0x938] sm:$0xff]
        %v619 = vld [vmem:[%s314 + $0x940] sm:$0xff]
        %v620 = vld [vmem:[%s314 + $0x948] sm:$0xff]
        %v621 = vld [vmem:[%s314 + $0x950] sm:$0xff]
        %v622 = vld [vmem:[%s314 + $0x958] sm:$0xff]
        %v623 = vld [vmem:[%s314 + $0x960] sm:$0xff]
        %v624 = vld [vmem:[%s314 + $0x968] sm:$0xff]
        %v625 = vld [vmem:[%s314 + $0x970] sm:$0xff]
        %v626 = vld [vmem:[%s314 + $0x978] sm:$0xff]
        %v627 = vld [vmem:[%s314 + $0x980] sm:$0xff]
        %v628 = vld [vmem:[%s314 + $0x988] sm:$0xff]
        %v629 = vld [vmem:[%s314 + $0x990] sm:$0xff]
        %v630 = vld [vmem:[%s314 + $0x998] sm:$0xff]
        %v631 = vld [vmem:[%s314 + $0x9a0] sm:$0xff]
        %v632 = vld [vmem:[%s314 + $0x9a8] sm:$0xff]
        %v633 = vld [vmem:[%s314 + $0x9b0] sm:$0xff]
        %v634 = vld [vmem:[%s314 + $0x9b8] sm:$0xff]
        %v635 = vld [vmem:[%s314 + $0x9c0] sm:$0xff]
        %v636 = vld [vmem:[%s314 + $0x9c8] sm:$0xff]
        %v637 = vld [vmem:[%s314 + $0x9d0] sm:$0xff]
        %v638 = vld [vmem:[%s314 + $0x9d8] sm:$0xff]
        %v639 = vld [vmem:[%s314 + $0x9e0] sm:$0xff]
        %v640 = vld [vmem:[%s314 + $0x9e8] sm:$0xff]
        %v641 = vld [vmem:[%s314 + $0x9f0] sm:$0xff]
        %v642 = vld [vmem:[%s314 + $0x9f8] sm:$0xff]
        %v643 = vld [vmem:[%s314 + $0xa00] sm:$0xff]
        %v644 = vld [vmem:[%s314 + $0xa08] sm:$0xff]
        %v645 = vld [vmem:[%s314 + $0xa10] sm:$0xff]
        %v646 = vld [vmem:[%s314 + $0xa18] sm:$0xff]
        %v647 = vld [vmem:[%s314 + $0xa20] sm:$0xff]
        %v648 = vld [vmem:[%s314 + $0xa28] sm:$0xff]
        %v649 = vld [vmem:[%s314 + $0xa30] sm:$0xff]
        %v650 = vld [vmem:[%s314 + $0xa38] sm:$0xff]
        %v651 = vld [vmem:[%s314 + $0xa40] sm:$0xff]
        %v652 = vld [vmem:[%s314 + $0xa48] sm:$0xff]
        %v653 = vld [vmem:[%s314 + $0xa50] sm:$0xff]
        %v654 = vld [vmem:[%s314 + $0xa58] sm:$0xff]
        %v655 = vld [vmem:[%s314 + $0xa60] sm:$0xff]
        %v656 = vld [vmem:[%s314 + $0xa68] sm:$0xff]
        %v657 = vld [vmem:[%s314 + $0xa70] sm:$0xff]
        %v658 = vld [vmem:[%s314 + $0xa78] sm:$0xff]
        %v659 = vld [vmem:[%s314 + $0xa80] sm:$0xff]
        %v660 = vld [vmem:[%s314 + $0xa88] sm:$0xff]
        %v661 = vld [vmem:[%s314 + $0xa90] sm:$0xff]
        %v662 = vld [vmem:[%s314 + $0xa98] sm:$0xff]
        %v663 = vld [vmem:[%s314 + $0xaa0] sm:$0xff]
        %v664 = vld [vmem:[%s314 + $0xaa8] sm:$0xff]
        %v665 = vld [vmem:[%s314 + $0xab0] sm:$0xff]
        %v666 = vld [vmem:[%s314 + $0xab8] sm:$0xff]
        %v667 = vld [vmem:[%s314 + $0xac0] sm:$0xff]
        %v668 = vld [vmem:[%s314 + $0xac8] sm:$0xff]
        %v669 = vld [vmem:[%s314 + $0xad0] sm:$0xff]
        %v670 = vld [vmem:[%s314 + $0xad8] sm:$0xff]
        %v671 = vld [vmem:[%s314 + $0xae0] sm:$0xff]
        %v672 = vld [vmem:[%s314 + $0xae8] sm:$0xff]
        %v673 = vld [vmem:[%s314 + $0xaf0] sm:$0xff]
        %v674 = vld [vmem:[%s314 + $0xaf8] sm:$0xff]
        %v675 = vld [vmem:[%s314 + $0xb00] sm:$0xff]
        %v676 = vld [vmem:[%s314 + $0xb08] sm:$0xff]
        %v677 = vld [vmem:[%s314 + $0xb10] sm:$0xff]
        %v678 = vld [vmem:[%s314 + $0xb18] sm:$0xff]
        %v679 = vld [vmem:[%s314 + $0xb20] sm:$0xff]
        %v680 = vld [vmem:[%s314 + $0xb28] sm:$0xff]
        %v681 = vld [vmem:[%s314 + $0xb30] sm:$0xff]
        %v682 = vld [vmem:[%s314 + $0xb38] sm:$0xff]
        %v683 = vld [vmem:[%s314 + $0xb40] sm:$0xff]
        %v684 = vld [vmem:[%s314 + $0xb48] sm:$0xff]
        %v685 = vld [vmem:[%s314 + $0xb50] sm:$0xff]
        %v686 = vld [vmem:[%s314 + $0xb58] sm:$0xff]
        %v687 = vld [vmem:[%s314 + $0xb60] sm:$0xff]
        %v688 = vld [vmem:[%s314 + $0xb68] sm:$0xff]
        %v689 = vld [vmem:[%s314 + $0xb70] sm:$0xff]
        %v690 = vld [vmem:[%s314 + $0xb78] sm:$0xff]
        %v691 = vld [vmem:[%s314 + $0xb80] sm:$0xff]
        %v692 = vld [vmem:[%s314 + $0xb88] sm:$0xff]
        %v693 = vld [vmem:[%s314 + $0xb90] sm:$0xff]
        %v694 = vld [vmem:[%s314 + $0xb98] sm:$0xff]
        %v695 = vld [vmem:[%s314 + $0xba0] sm:$0xff]
        %v696 = vld [vmem:[%s314 + $0xba8] sm:$0xff]
        %v697 = vld [vmem:[%s314 + $0xbb0] sm:$0xff]
        %v698 = vld [vmem:[%s314 + $0xbb8] sm:$0xff]
        %v699 = vld [vmem:[%s314 + $0xbc0] sm:$0xff]
        %v700 = vld [vmem:[%s314 + $0xbc8] sm:$0xff]
        %v701 = vld [vmem:[%s314 + $0xbd0] sm:$0xff]
        %v702 = vld [vmem:[%s314 + $0xbd8] sm:$0xff]
        %v703 = vld [vmem:[%s314 + $0xbe0] sm:$0xff]
        %v704 = vld [vmem:[%s314 + $0xbe8] sm:$0xff]
        %v705 = vld [vmem:[%s314 + $0xbf0] sm:$0xff]
        %v706 = vld [vmem:[%s314 + $0xbf8] sm:$0xff]
        %v707 = vld [vmem:[%s314 + $0xc00] sm:$0xff]
        %v708 = vld [vmem:[%s314 + $0xc08] sm:$0xff]
        %v709 = vld [vmem:[%s314 + $0xc10] sm:$0xff]
        %v710 = vld [vmem:[%s314 + $0xc18] sm:$0xff]
        %v711 = vld [vmem:[%s314 + $0xc20] sm:$0xff]
        %v712 = vld [vmem:[%s314 + $0xc28] sm:$0xff]
        %v713 = vld [vmem:[%s314 + $0xc30] sm:$0xff]
        %v714 = vld [vmem:[%s314 + $0xc38] sm:$0xff]
        %v715 = vld [vmem:[%s314 + $0xc40] sm:$0xff]
        %v716 = vld [vmem:[%s314 + $0xc48] sm:$0xff]
        %v717 = vld [vmem:[%s314 + $0xc50] sm:$0xff]
        %v718 = vld [vmem:[%s314 + $0xc58] sm:$0xff]
        %v719 = vld [vmem:[%s314 + $0xc60] sm:$0xff]
        %v720 = vld [vmem:[%s314 + $0xc68] sm:$0xff]
        %v721 = vld [vmem:[%s314 + $0xc70] sm:$0xff]
        %v722 = vld [vmem:[%s314 + $0xc78] sm:$0xff]
        %v723 = vld [vmem:[%s314 + $0xc80] sm:$0xff]
        %v724 = vld [vmem:[%s314 + $0xc88] sm:$0xff]
        %v725 = vld [vmem:[%s314 + $0xc90] sm:$0xff]
        %v726 = vld [vmem:[%s314 + $0xc98] sm:$0xff]
        %v727 = vld [vmem:[%s314 + $0xca0] sm:$0xff]
        %v728 = vld [vmem:[%s314 + $0xca8] sm:$0xff]
        %v729 = vld [vmem:[%s314 + $0xcb0] sm:$0xff]
        %v730 = vld [vmem:[%s314 + $0xcb8] sm:$0xff]
        %v731 = vld [vmem:[%s314 + $0xcc0] sm:$0xff]
        %v732 = vld [vmem:[%s314 + $0xcc8] sm:$0xff]
        %v733 = vld [vmem:[%s314 + $0xcd0] sm:$0xff]
        %v734 = vld [vmem:[%s314 + $0xcd8] sm:$0xff]
        %v735 = vld [vmem:[%s314 + $0xce0] sm:$0xff]
        %v736 = vld [vmem:[%s314 + $0xce8] sm:$0xff]
        %v737 = vld [vmem:[%s314 + $0xcf0] sm:$0xff]
        %v738 = vld [vmem:[%s314 + $0xcf8] sm:$0xff]
        %v739 = vld [vmem:[%s314 + $0xd00] sm:$0xff]
        %v740 = vld [vmem:[%s314 + $0xd08] sm:$0xff]
        %v741 = vld [vmem:[%s314 + $0xd10] sm:$0xff]
        %v742 = vld [vmem:[%s314 + $0xd18] sm:$0xff]
        %v743 = vld [vmem:[%s314 + $0xd20] sm:$0xff]
        %v744 = vld [vmem:[%s314 + $0xd28] sm:$0xff]
        %v745 = vld [vmem:[%s314 + $0xd30] sm:$0xff]
        %v746 = vld [vmem:[%s314 + $0xd38] sm:$0xff]
        %v747 = vld [vmem:[%s314 + $0xd40] sm:$0xff]
        %v748 = vld [vmem:[%s314 + $0xd48] sm:$0xff]
        %v749 = vld [vmem:[%s314 + $0xd50] sm:$0xff]
        %v750 = vld [vmem:[%s314 + $0xd58] sm:$0xff]
        %v751 = vld [vmem:[%s314 + $0xd60] sm:$0xff]
        %v752 = vld [vmem:[%s314 + $0xd68] sm:$0xff]
        %v753 = vld [vmem:[%s314 + $0xd70] sm:$0xff]
        %v754 = vld [vmem:[%s314 + $0xd78] sm:$0xff]
        %v755 = vld [vmem:[%s314 + $0xd80] sm:$0xff]
        %v756 = vld [vmem:[%s314 + $0xd88] sm:$0xff]
        %v757 = vld [vmem:[%s314 + $0xd90] sm:$0xff]
        %v758 = vld [vmem:[%s314 + $0xd98] sm:$0xff]
        %v759 = vld [vmem:[%s314 + $0xda0] sm:$0xff]
        %v760 = vld [vmem:[%s314 + $0xda8] sm:$0xff]
        %v761 = vld [vmem:[%s314 + $0xdb0] sm:$0xff]
        %v762 = vld [vmem:[%s314 + $0xdb8] sm:$0xff]
        %v763 = vld [vmem:[%s314 + $0xdc0] sm:$0xff]
        %v764 = vld [vmem:[%s314 + $0xdc8] sm:$0xff]
        %v765 = vld [vmem:[%s314 + $0xdd0] sm:$0xff]
        %v766 = vld [vmem:[%s314 + $0xdd8] sm:$0xff]
        %v767 = vld [vmem:[%s314 + $0xde0] sm:$0xff]
        %v768 = vld [vmem:[%s314 + $0xde8] sm:$0xff]
        %v769 = vld [vmem:[%s314 + $0xdf0] sm:$0xff]
        %v770 = vld [vmem:[%s314 + $0xdf8] sm:$0xff]
        %v771 = vld [vmem:[%s314 + $0xe00] sm:$0xff]
        %v772 = vld [vmem:[%s314 + $0xe08] sm:$0xff]
        %v773 = vld [vmem:[%s314 + $0xe10] sm:$0xff]
        %v774 = vld [vmem:[%s314 + $0xe18] sm:$0xff]
        %v775 = vld [vmem:[%s314 + $0xe20] sm:$0xff]
        %v776 = vld [vmem:[%s314 + $0xe28] sm:$0xff]
        %v777 = vld [vmem:[%s314 + $0xe30] sm:$0xff]
        %v778 = vld [vmem:[%s314 + $0xe38] sm:$0xff]
        %v779 = vld [vmem:[%s314 + $0xe40] sm:$0xff]
        %v780 = vld [vmem:[%s314 + $0xe48] sm:$0xff]
        %v781 = vld [vmem:[%s314 + $0xe50] sm:$0xff]
        %v782 = vld [vmem:[%s314 + $0xe58] sm:$0xff]
        %v783 = vld [vmem:[%s314 + $0xe60] sm:$0xff]
        %v784 = vld [vmem:[%s314 + $0xe68] sm:$0xff]
        %v785 = vld [vmem:[%s314 + $0xe70] sm:$0xff]
        %v786 = vld [vmem:[%s314 + $0xe78] sm:$0xff]
        %v787 = vld [vmem:[%s314 + $0xe80] sm:$0xff]
        %v788 = vld [vmem:[%s314 + $0xe88] sm:$0xff]
        %v789 = vld [vmem:[%s314 + $0xe90] sm:$0xff]
        %v790 = vld [vmem:[%s314 + $0xe98] sm:$0xff]
        %v791 = vld [vmem:[%s314 + $0xea0] sm:$0xff]
        %v792 = vld [vmem:[%s314 + $0xea8] sm:$0xff]
        %v793 = vld [vmem:[%s314 + $0xeb0] sm:$0xff]
        %v794 = vld [vmem:[%s314 + $0xeb8] sm:$0xff]
        %v795 = vld [vmem:[%s314 + $0xec0] sm:$0xff]
        %v796 = vld [vmem:[%s314 + $0xec8] sm:$0xff]
        %v797 = vld [vmem:[%s314 + $0xed0] sm:$0xff]
        %v798 = vld [vmem:[%s314 + $0xed8] sm:$0xff]
        %v799 = vld [vmem:[%s314 + $0xee0] sm:$0xff]
        %v800 = vld [vmem:[%s314 + $0xee8] sm:$0xff]
        %v801 = vld [vmem:[%s314 + $0xef0] sm:$0xff]
        %v802 = vld [vmem:[%s314 + $0xef8] sm:$0xff]
        %v803 = vld [vmem:[%s314 + $0xf00] sm:$0xff]
        %v804 = vld [vmem:[%s314 + $0xf08] sm:$0xff]
        %v805 = vld [vmem:[%s314 + $0xf10] sm:$0xff]
        %v806 = vld [vmem:[%s314 + $0xf18] sm:$0xff]
        %v807 = vld [vmem:[%s314 + $0xf20] sm:$0xff]
        %v808 = vld [vmem:[%s314 + $0xf28] sm:$0xff]
        %v809 = vld [vmem:[%s314 + $0xf30] sm:$0xff]
        %v810 = vld [vmem:[%s314 + $0xf38] sm:$0xff]
        %v811 = vld [vmem:[%s314 + $0xf40] sm:$0xff]
        %v812 = vld [vmem:[%s314 + $0xf48] sm:$0xff]
        %v813 = vld [vmem:[%s314 + $0xf50] sm:$0xff]
        %v814 = vld [vmem:[%s314 + $0xf58] sm:$0xff]
        %v815 = vld [vmem:[%s314 + $0xf60] sm:$0xff]
        %v816 = vld [vmem:[%s314 + $0xf68] sm:$0xff]
        %v817 = vld [vmem:[%s314 + $0xf70] sm:$0xff]
        %v818 = vld [vmem:[%s314 + $0xf78] sm:$0xff]
        %v819 = vld [vmem:[%s314 + $0xf80] sm:$0xff]
        %v820 = vld [vmem:[%s314 + $0xf88] sm:$0xff]
        %v821 = vld [vmem:[%s314 + $0xf90] sm:$0xff]
        %v822 = vld [vmem:[%s314 + $0xf98] sm:$0xff]
        %v823 = vld [vmem:[%s314 + $0xfa0] sm:$0xff]
        %v824 = vld [vmem:[%s314 + $0xfa8] sm:$0xff]
        %v825 = vld [vmem:[%s314 + $0xfb0] sm:$0xff]
        %v826 = vld [vmem:[%s314 + $0xfb8] sm:$0xff]
        %v827 = vld [vmem:[%s314 + $0xfc0] sm:$0xff]
        %v828 = vld [vmem:[%s314 + $0xfc8] sm:$0xff]
        %v829 = vld [vmem:[%s314 + $0xfd0] sm:$0xff]
        %v830 = vld [vmem:[%s314 + $0xfd8] sm:$0xff]
        %v831 = vld [vmem:[%s314 + $0xfe0] sm:$0xff]
        %v832 = vld [vmem:[%s314 + $0xfe8] sm:$0xff]
        %v833 = vld [vmem:[%s314 + $0xff0] sm:$0xff]
        %v834 = vld [vmem:[%s314 + $0xff8] sm:$0xff]
        %v835 = vld [vmem:[%s314 + $0x1000] sm:$0xff]
        %v836 = vld [vmem:[%s314 + $0x1008] sm:$0xff]
        %v837 = vld [vmem:[%s314 + $0x1010] sm:$0xff]
        %v838 = vld [vmem:[%s314 + $0x1018] sm:$0xff]
        %v839 = vld [vmem:[%s314 + $0x1020] sm:$0xff]
        %v840 = vld [vmem:[%s314 + $0x1028] sm:$0xff]
        %v841 = vld [vmem:[%s314 + $0x1030] sm:$0xff]
        %v842 = vld [vmem:[%s314 + $0x1038] sm:$0xff]
        %v843 = vld [vmem:[%s314 + $0x1040] sm:$0xff]
        %v844 = vld [vmem:[%s314 + $0x1048] sm:$0xff]
        %v845 = vld [vmem:[%s314 + $0x1050] sm:$0xff]
        %v846 = vld [vmem:[%s314 + $0x1058] sm:$0xff]
        %v847 = vld [vmem:[%s314 + $0x1060] sm:$0xff]
        %v848 = vld [vmem:[%s314 + $0x1068] sm:$0xff]
        %v849 = vld [vmem:[%s314 + $0x1070] sm:$0xff]
        %v850 = vld [vmem:[%s314 + $0x1078] sm:$0xff]
        %v851 = vld [vmem:[%s314 + $0x1080] sm:$0xff]
        %v852 = vld [vmem:[%s314 + $0x1088] sm:$0xff]
        %v853 = vld [vmem:[%s314 + $0x1090] sm:$0xff]
        %v854 = vld [vmem:[%s314 + $0x1098] sm:$0xff]
        %v855 = vld [vmem:[%s314 + $0x10a0] sm:$0xff]
        %v856 = vld [vmem:[%s314 + $0x10a8] sm:$0xff]
        %v857 = vld [vmem:[%s314 + $0x10b0] sm:$0xff]
        %v858 = vld [vmem:[%s314 + $0x10b8] sm:$0xff]
        %v859 = vld [vmem:[%s314 + $0x10c0] sm:$0xff]
        %v860 = vld [vmem:[%s314 + $0x10c8] sm:$0xff]
        %v861 = vld [vmem:[%s314 + $0x10d0] sm:$0xff]
        %v862 = vld [vmem:[%s314 + $0x10d8] sm:$0xff]
        %v863 = vld [vmem:[%s314 + $0x10e0] sm:$0xff]
        %v864 = vld [vmem:[%s314 + $0x10e8] sm:$0xff]
        %v865 = vld [vmem:[%s314 + $0x10f0] sm:$0xff]
        %v866 = vld [vmem:[%s314 + $0x10f8] sm:$0xff]
        %v867 = vld [vmem:[%s314 + $0x1100] sm:$0xff]
        %v868 = vld [vmem:[%s314 + $0x1108] sm:$0xff]
        %v869 = vld [vmem:[%s314 + $0x1110] sm:$0xff]
        %v870 = vld [vmem:[%s314 + $0x1118] sm:$0xff]
        %v871 = vld [vmem:[%s314 + $0x1120] sm:$0xff]
        %v872 = vld [vmem:[%s314 + $0x1128] sm:$0xff]
        %v873 = vld [vmem:[%s314 + $0x1130] sm:$0xff]
        %v874 = vld [vmem:[%s314 + $0x1138] sm:$0xff]
        %v875 = vld [vmem:[%s314 + $0x1140] sm:$0xff]
        %v876 = vld [vmem:[%s314 + $0x1148] sm:$0xff]
        %v877 = vld [vmem:[%s314 + $0x1150] sm:$0xff]
        %v878 = vld [vmem:[%s314 + $0x1158] sm:$0xff]
        %v879 = vld [vmem:[%s314 + $0x1160] sm:$0xff]
        %v880 = vld [vmem:[%s314 + $0x1168] sm:$0xff]
        %v881 = vld [vmem:[%s314 + $0x1170] sm:$0xff]
        %v882 = vld [vmem:[%s314 + $0x1178] sm:$0xff]
        %v883 = vld [vmem:[%s314 + $0x1180] sm:$0xff]
        %v884 = vld [vmem:[%s314 + $0x1188] sm:$0xff]
        %v885 = vld [vmem:[%s314 + $0x1190] sm:$0xff]
        %v886 = vld [vmem:[%s314 + $0x1198] sm:$0xff]
        %v887 = vld [vmem:[%s314 + $0x11a0] sm:$0xff]
        %v888 = vld [vmem:[%s314 + $0x11a8] sm:$0xff]
        %v889 = vld [vmem:[%s314 + $0x11b0] sm:$0xff]
        %v890 = vld [vmem:[%s314 + $0x11b8] sm:$0xff]
        %v891 = vld [vmem:[%s314 + $0x11c0] sm:$0xff]
        %v892 = vld [vmem:[%s314 + $0x11c8] sm:$0xff]
        %v893 = vld [vmem:[%s314 + $0x11d0] sm:$0xff]
        %v894 = vld [vmem:[%s314 + $0x11d8] sm:$0xff]
        %v895 = vld [vmem:[%s314 + $0x11e0] sm:$0xff]
        %v896 = vld [vmem:[%s314 + $0x11e8] sm:$0xff]
        %v897 = vld [vmem:[%s314 + $0x11f0] sm:$0xff]
        %v898 = vld [vmem:[%s314 + $0x11f8] sm:$0xff]
        %v899 = vld [vmem:[%s314 + $0x1200] sm:$0xff]
        %v900 = vld [vmem:[%s314 + $0x1208] sm:$0xff]
        %v901 = vld [vmem:[%s314 + $0x1210] sm:$0xff]
        %v902 = vld [vmem:[%s314 + $0x1218] sm:$0xff]
        %v903 = vld [vmem:[%s314 + $0x1220] sm:$0xff]
        %v904 = vld [vmem:[%s314 + $0x1228] sm:$0xff]
        %v905 = vld [vmem:[%s314 + $0x1230] sm:$0xff]
        %v906 = vld [vmem:[%s314 + $0x1238] sm:$0xff]
        %v907 = vld [vmem:[%s314 + $0x1240] sm:$0xff]
        %v908 = vld [vmem:[%s314 + $0x1248] sm:$0xff]
        %v909 = vld [vmem:[%s314 + $0x1250] sm:$0xff]
        %v910 = vld [vmem:[%s314 + $0x1258] sm:$0xff]
        %v911 = vld [vmem:[%s314 + $0x1260] sm:$0xff]
        %v912 = vld [vmem:[%s314 + $0x1268] sm:$0xff]
        %v913 = vld [vmem:[%s314 + $0x1270] sm:$0xff]
        %v914 = vld [vmem:[%s314 + $0x1278] sm:$0xff]
        %v915 = vld [vmem:[%s314 + $0x1280] sm:$0xff]
        %v916 = vld [vmem:[%s314 + $0x1288] sm:$0xff]
        %v917 = vld [vmem:[%s314 + $0x1290] sm:$0xff]
        %v918 = vld [vmem:[%s314 + $0x1298] sm:$0xff]
        %v919 = vld [vmem:[%s314 + $0x12a0] sm:$0xff]
        %v920 = vld [vmem:[%s314 + $0x12a8] sm:$0xff]
        %v921 = vld [vmem:[%s314 + $0x12b0] sm:$0xff]
        %v922 = vld [vmem:[%s314 + $0x12b8] sm:$0xff]
        %v923 = vld [vmem:[%s314 + $0x12c0] sm:$0xff]
        %v924 = vld [vmem:[%s314 + $0x12c8] sm:$0xff]
        %v925 = vld [vmem:[%s314 + $0x12d0] sm:$0xff]
        %v926 = vld [vmem:[%s314 + $0x12d8] sm:$0xff]
        %v927 = vld [vmem:[%s314 + $0x12e0] sm:$0xff]
        %v928 = vld [vmem:[%s314 + $0x12e8] sm:$0xff]
        %v929 = vld [vmem:[%s314 + $0x12f0] sm:$0xff]
        %v930 = vld [vmem:[%s314 + $0x12f8] sm:$0xff]
        %v931 = vld [vmem:[%s314 + $0x1300] sm:$0xff]
        %v932 = vld [vmem:[%s314 + $0x1308] sm:$0xff]
        %v933 = vld [vmem:[%s314 + $0x1310] sm:$0xff]
        %v934 = vld [vmem:[%s314 + $0x1318] sm:$0xff]
        %v935 = vld [vmem:[%s314 + $0x1320] sm:$0xff]
        %v936 = vld [vmem:[%s314 + $0x1328] sm:$0xff]
        %v937 = vld [vmem:[%s314 + $0x1330] sm:$0xff]
        %v938 = vld [vmem:[%s314 + $0x1338] sm:$0xff]
        %v939 = vld [vmem:[%s314 + $0x1340] sm:$0xff]
        %v940 = vld [vmem:[%s314 + $0x1348] sm:$0xff]
        %v941 = vld [vmem:[%s314 + $0x1350] sm:$0xff]
        %v942 = vld [vmem:[%s314 + $0x1358] sm:$0xff]
        %v943 = vld [vmem:[%s314 + $0x1360] sm:$0xff]
        %v944 = vld [vmem:[%s314 + $0x1368] sm:$0xff]
        %v945 = vld [vmem:[%s314 + $0x1370] sm:$0xff]
        %v946 = vld [vmem:[%s314 + $0x1378] sm:$0xff]
        %v947 = vld [vmem:[%s314 + $0x1380] sm:$0xff]
        %v948 = vld [vmem:[%s314 + $0x1388] sm:$0xff]
        %v949 = vld [vmem:[%s314 + $0x1390] sm:$0xff]
        %v950 = vld [vmem:[%s314 + $0x1398] sm:$0xff]
        %v951 = vld [vmem:[%s314 + $0x13a0] sm:$0xff]
        %v952 = vld [vmem:[%s314 + $0x13a8] sm:$0xff]
        %v953 = vld [vmem:[%s314 + $0x13b0] sm:$0xff]
        %v954 = vld [vmem:[%s314 + $0x13b8] sm:$0xff]
        %v955 = vld [vmem:[%s314 + $0x13c0] sm:$0xff]
        %v956 = vld [vmem:[%s314 + $0x13c8] sm:$0xff]
        %v957 = vld [vmem:[%s314 + $0x13d0] sm:$0xff]
        %v958 = vld [vmem:[%s314 + $0x13d8] sm:$0xff]
        %v959 = vld [vmem:[%s314 + $0x13e0] sm:$0xff]
        %v960 = vld [vmem:[%s314 + $0x13e8] sm:$0xff]
        %v961 = vld [vmem:[%s314 + $0x13f0] sm:$0xff]
        %v962 = vld [vmem:[%s314 + $0x13f8] sm:$0xff]
        %v963 = vld [vmem:[%s314 + $0x1400] sm:$0xff]
        %v964 = vld [vmem:[%s314 + $0x1408] sm:$0xff]
        %v965 = vld [vmem:[%s314 + $0x1410] sm:$0xff]
        %v966 = vld [vmem:[%s314 + $0x1418] sm:$0xff]
        %v967 = vld [vmem:[%s314 + $0x1420] sm:$0xff]
        %v968 = vld [vmem:[%s314 + $0x1428] sm:$0xff]
        %v969 = vld [vmem:[%s314 + $0x1430] sm:$0xff]
        %v970 = vld [vmem:[%s314 + $0x1438] sm:$0xff]
        %v971 = vld [vmem:[%s314 + $0x1440] sm:$0xff]
        %v972 = vld [vmem:[%s314 + $0x1448] sm:$0xff]
        %v973 = vld [vmem:[%s314 + $0x1450] sm:$0xff]
        %v974 = vld [vmem:[%s314 + $0x1458] sm:$0xff]
        %v975 = vld [vmem:[%s314 + $0x1460] sm:$0xff]
        %v976 = vld [vmem:[%s314 + $0x1468] sm:$0xff]
        %v977 = vld [vmem:[%s314 + $0x1470] sm:$0xff]
        %v978 = vld [vmem:[%s314 + $0x1478] sm:$0xff]
        %v979 = vld [vmem:[%s314 + $0x1480] sm:$0xff]
        %v980 = vld [vmem:[%s314 + $0x1488] sm:$0xff]
        %v981 = vld [vmem:[%s314 + $0x1490] sm:$0xff]
        %v982 = vld [vmem:[%s314 + $0x1498] sm:$0xff]
        %v983 = vld [vmem:[%s314 + $0x14a0] sm:$0xff]
        %v984 = vld [vmem:[%s314 + $0x14a8] sm:$0xff]
        %v985 = vld [vmem:[%s314 + $0x14b0] sm:$0xff]
        %v986 = vld [vmem:[%s314 + $0x14b8] sm:$0xff]
        %v987 = vld [vmem:[%s314 + $0x14c0] sm:$0xff]
        %v988 = vld [vmem:[%s314 + $0x14c8] sm:$0xff]
        %v989 = vld [vmem:[%s314 + $0x14d0] sm:$0xff]
        %v990 = vld [vmem:[%s314 + $0x14d8] sm:$0xff]
        %v991 = vld [vmem:[%s314 + $0x14e0] sm:$0xff]
        %v992 = vld [vmem:[%s314 + $0x14e8] sm:$0xff]
        %v993 = vld [vmem:[%s314 + $0x14f0] sm:$0xff]
        %v994 = vld [vmem:[%s314 + $0x14f8] sm:$0xff]
        %v995 = vld [vmem:[%s314 + $0x1500] sm:$0xff]
        %v996 = vld [vmem:[%s314 + $0x1508] sm:$0xff]
        %v997 = vld [vmem:[%s314 + $0x1510] sm:$0xff]
        %v998 = vld [vmem:[%s314 + $0x1518] sm:$0xff]
        %v999 = vld [vmem:[%s314 + $0x1520] sm:$0xff]
        %v1000 = vld [vmem:[%s314 + $0x1528] sm:$0xff]
        %v1001 = vld [vmem:[%s314 + $0x1530] sm:$0xff]
        %v1002 = vld [vmem:[%s314 + $0x1538] sm:$0xff]
        %v1003 = vld [vmem:[%s314 + $0x1540] sm:$0xff]
        %v1004 = vld [vmem:[%s314 + $0x1548] sm:$0xff]
        %v1005 = vld [vmem:[%s314 + $0x1550] sm:$0xff]
        %v1006 = vld [vmem:[%s314 + $0x1558] sm:$0xff]
        %v1007 = vld [vmem:[%s314 + $0x1560] sm:$0xff]
        %v1008 = vld [vmem:[%s314 + $0x1568] sm:$0xff]
        %v1009 = vld [vmem:[%s314 + $0x1570] sm:$0xff]
        %v1010 = vld [vmem:[%s314 + $0x1578] sm:$0xff]
        %v1011 = vld [vmem:[%s314 + $0x1580] sm:$0xff]
        %v1012 = vld [vmem:[%s314 + $0x1588] sm:$0xff]
        %v1013 = vld [vmem:[%s314 + $0x1590] sm:$0xff]
        %v1014 = vld [vmem:[%s314 + $0x1598] sm:$0xff]
        %v1015 = vld [vmem:[%s314 + $0x15a0] sm:$0xff]
        %v1016 = vld [vmem:[%s314 + $0x15a8] sm:$0xff]
        %v1017 = vld [vmem:[%s314 + $0x15b0] sm:$0xff]
        %v1018 = vld [vmem:[%s314 + $0x15b8] sm:$0xff]
        %v1019 = vld [vmem:[%s314 + $0x15c0] sm:$0xff]
        %v1020 = vld [vmem:[%s314 + $0x15c8] sm:$0xff]
        %v1021 = vld [vmem:[%s314 + $0x15d0] sm:$0xff]
        %v1022 = vld [vmem:[%s314 + $0x15d8] sm:$0xff]
        %v1023 = vld [vmem:[%s314 + $0x15e0] sm:$0xff]
        %v1024 = vld [vmem:[%s314 + $0x15e8] sm:$0xff]
        %v1025 = vld [vmem:[%s314 + $0x15f0] sm:$0xff]
        %v1026 = vld [vmem:[%s314 + $0x15f8] sm:$0xff]
        %v1027 = vld [vmem:[%s314 + $0x1600] sm:$0xff]
        %v1028 = vld [vmem:[%s314 + $0x1608] sm:$0xff]
        %v1029 = vld [vmem:[%s314 + $0x1610] sm:$0xff]
        %v1030 = vld [vmem:[%s314 + $0x1618] sm:$0xff]
        %v1031 = vld [vmem:[%s314 + $0x1620] sm:$0xff]
        %v1032 = vld [vmem:[%s314 + $0x1628] sm:$0xff]
        %v1033 = vld [vmem:[%s314 + $0x1630] sm:$0xff]
        %v1034 = vld [vmem:[%s314 + $0x1638] sm:$0xff]
        %v1035 = vld [vmem:[%s314 + $0x1640] sm:$0xff]
        %v1036 = vld [vmem:[%s314 + $0x1648] sm:$0xff]
        %v1037 = vld [vmem:[%s314 + $0x1650] sm:$0xff]
        %v1038 = vld [vmem:[%s314 + $0x1658] sm:$0xff]
        %v1039 = vld [vmem:[%s314 + $0x1660] sm:$0xff]
        %v1040 = vld [vmem:[%s314 + $0x1668] sm:$0xff]
        %v1041 = vld [vmem:[%s314 + $0x1670] sm:$0xff]
        %v1042 = vld [vmem:[%s314 + $0x1678] sm:$0xff]
        %v1043 = vld [vmem:[%s314 + $0x1680] sm:$0xff]
        %v1044 = vld [vmem:[%s314 + $0x1688] sm:$0xff]
        %v1045 = vld [vmem:[%s314 + $0x1690] sm:$0xff]
        %v1046 = vld [vmem:[%s314 + $0x1698] sm:$0xff]
        %v1047 = vld [vmem:[%s314 + $0x16a0] sm:$0xff]
        %v1048 = vld [vmem:[%s314 + $0x16a8] sm:$0xff]
        %v1049 = vld [vmem:[%s314 + $0x16b0] sm:$0xff]
        %v1050 = vld [vmem:[%s314 + $0x16b8] sm:$0xff]
        %v1051 = vld [vmem:[%s314 + $0x16c0] sm:$0xff]
        %v1052 = vld [vmem:[%s314 + $0x16c8] sm:$0xff]
        %v1053 = vld [vmem:[%s314 + $0x16d0] sm:$0xff]
        %v1054 = vld [vmem:[%s314 + $0x16d8] sm:$0xff]
        %v1055 = vld [vmem:[%s314 + $0x16e0] sm:$0xff]
        %v1056 = vld [vmem:[%s314 + $0x16e8] sm:$0xff]
        %v1057 = vld [vmem:[%s314 + $0x16f0] sm:$0xff]
        %v1058 = vld [vmem:[%s314 + $0x16f8] sm:$0xff]
        %v1059 = vld [vmem:[%s314 + $0x1700] sm:$0xff]
        %v1060 = vld [vmem:[%s314 + $0x1708] sm:$0xff]
        %v1061 = vld [vmem:[%s314 + $0x1710] sm:$0xff]
        %v1062 = vld [vmem:[%s314 + $0x1718] sm:$0xff]
        %v1063 = vld [vmem:[%s314 + $0x1720] sm:$0xff]
        %v1064 = vld [vmem:[%s314 + $0x1728] sm:$0xff]
        %v1065 = vld [vmem:[%s314 + $0x1730] sm:$0xff]
        %v1066 = vld [vmem:[%s314 + $0x1738] sm:$0xff]
        %v1067 = vld [vmem:[%s314 + $0x1740] sm:$0xff]
        %v1068 = vld [vmem:[%s314 + $0x1748] sm:$0xff]
        %v1069 = vld [vmem:[%s314 + $0x1750] sm:$0xff]
        %v1070 = vld [vmem:[%s314 + $0x1758] sm:$0xff]
        %v1071 = vld [vmem:[%s314 + $0x1760] sm:$0xff]
        %v1072 = vld [vmem:[%s314 + $0x1768] sm:$0xff]
        %v1073 = vld [vmem:[%s314 + $0x1770] sm:$0xff]
        %v1074 = vld [vmem:[%s314 + $0x1778] sm:$0xff]
        %v1075 = vld [vmem:[%s314 + $0x1780] sm:$0xff]
        %v1076 = vld [vmem:[%s314 + $0x1788] sm:$0xff]
        %v1077 = vld [vmem:[%s314 + $0x1790] sm:$0xff]
        %v1078 = vld [vmem:[%s314 + $0x1798] sm:$0xff]
        %v1079 = vld [vmem:[%s314 + $0x17a0] sm:$0xff]
        %v1080 = vld [vmem:[%s314 + $0x17a8] sm:$0xff]
        %v1081 = vld [vmem:[%s314 + $0x17b0] sm:$0xff]
        %v1082 = vld [vmem:[%s314 + $0x17b8] sm:$0xff]
        %v1083 = vld [vmem:[%s314 + $0x17c0] sm:$0xff]
        %v1084 = vld [vmem:[%s314 + $0x17c8] sm:$0xff]
        %v1085 = vld [vmem:[%s314 + $0x17d0] sm:$0xff]
        %v1086 = vld [vmem:[%s314 + $0x17d8] sm:$0xff]
        %v1087 = vld [vmem:[%s314 + $0x17e0] sm:$0xff]
        %v1088 = vld [vmem:[%s314 + $0x17e8] sm:$0xff]
        %v1089 = vld [vmem:[%s314 + $0x17f0] sm:$0xff]
        %v1090 = vld [vmem:[%s314 + $0x17f8] sm:$0xff]
        %v1091 = vld [vmem:[%s314 + $0x1800] sm:$0xff]
        %v1092 = vld [vmem:[%s314 + $0x1808] sm:$0xff]
        %v1093 = vld [vmem:[%s314 + $0x1810] sm:$0xff]
        %v1094 = vld [vmem:[%s314 + $0x1818] sm:$0xff]
        %v1095 = vld [vmem:[%s314 + $0x1820] sm:$0xff]
        %v1096 = vld [vmem:[%s314 + $0x1828] sm:$0xff]
        %v1097 = vld [vmem:[%s314 + $0x1830] sm:$0xff]
        %v1098 = vld [vmem:[%s314 + $0x1838] sm:$0xff]
        %v1099 = vld [vmem:[%s314 + $0x1840] sm:$0xff]
        %v1100 = vld [vmem:[%s314 + $0x1848] sm:$0xff]
        %v1101 = vld [vmem:[%s314 + $0x1850] sm:$0xff]
        %v1102 = vld [vmem:[%s314 + $0x1858] sm:$0xff]
        %v1103 = vld [vmem:[%s314 + $0x1860] sm:$0xff]
        %v1104 = vld [vmem:[%s314 + $0x1868] sm:$0xff]
        %v1105 = vld [vmem:[%s314 + $0x1870] sm:$0xff]
        %v1106 = vld [vmem:[%s314 + $0x1878] sm:$0xff]
        %v1107 = vld [vmem:[%s314 + $0x1880] sm:$0xff]
        %v1108 = vld [vmem:[%s314 + $0x1888] sm:$0xff]
        %v1109 = vld [vmem:[%s314 + $0x1890] sm:$0xff]
        %v1110 = vld [vmem:[%s314 + $0x1898] sm:$0xff]
        %v1111 = vld [vmem:[%s314 + $0x18a0] sm:$0xff]
        %v1112 = vld [vmem:[%s314 + $0x18a8] sm:$0xff]
        %v1113 = vld [vmem:[%s314 + $0x18b0] sm:$0xff]
        %v1114 = vld [vmem:[%s314 + $0x18b8] sm:$0xff]
        %v1115 = vld [vmem:[%s314 + $0x18c0] sm:$0xff]
        %v1116 = vld [vmem:[%s314 + $0x18c8] sm:$0xff]
        %v1117 = vld [vmem:[%s314 + $0x18d0] sm:$0xff]
        %v1118 = vld [vmem:[%s314 + $0x18d8] sm:$0xff]
        %v1119 = vld [vmem:[%s314 + $0x18e0] sm:$0xff]
        %v1120 = vld [vmem:[%s314 + $0x18e8] sm:$0xff]
        %v1121 = vld [vmem:[%s314 + $0x18f0] sm:$0xff]
        %v1122 = vld [vmem:[%s314 + $0x18f8] sm:$0xff]
        %v1123 = vld [vmem:[%s314 + $0x1900] sm:$0xff]
        %v1124 = vld [vmem:[%s314 + $0x1908] sm:$0xff]
        %v1125 = vld [vmem:[%s314 + $0x1910] sm:$0xff]
        %v1126 = vld [vmem:[%s314 + $0x1918] sm:$0xff]
        %v1127 = vld [vmem:[%s314 + $0x1920] sm:$0xff]
        %v1128 = vld [vmem:[%s314 + $0x1928] sm:$0xff]
        %v1129 = vld [vmem:[%s314 + $0x1930] sm:$0xff]
        %v1130 = vld [vmem:[%s314 + $0x1938] sm:$0xff]
        %v1131 = vld [vmem:[%s314 + $0x1940] sm:$0xff]
        %v1132 = vld [vmem:[%s314 + $0x1948] sm:$0xff]
        %v1133 = vld [vmem:[%s314 + $0x1950] sm:$0xff]
        %v1134 = vld [vmem:[%s314 + $0x1958] sm:$0xff]
        %v1135 = vld [vmem:[%s314 + $0x1960] sm:$0xff]
        %v1136 = vld [vmem:[%s314 + $0x1968] sm:$0xff]
        %v1137 = vld [vmem:[%s314 + $0x1970] sm:$0xff]
        %v1138 = vld [vmem:[%s314 + $0x1978] sm:$0xff]
        %v1139 = vld [vmem:[%s314 + $0x1980] sm:$0xff]
        %v1140 = vld [vmem:[%s314 + $0x1988] sm:$0xff]
        %v1141 = vld [vmem:[%s314 + $0x1990] sm:$0xff]
        %v1142 = vld [vmem:[%s314 + $0x1998] sm:$0xff]
        %v1143 = vld [vmem:[%s314 + $0x19a0] sm:$0xff]
        %v1144 = vld [vmem:[%s314 + $0x19a8] sm:$0xff]
        %v1145 = vld [vmem:[%s314 + $0x19b0] sm:$0xff]
        %v1146 = vld [vmem:[%s314 + $0x19b8] sm:$0xff]
        %v1147 = vld [vmem:[%s314 + $0x19c0] sm:$0xff]
        %v1148 = vld [vmem:[%s314 + $0x19c8] sm:$0xff]
        %v1149 = vld [vmem:[%s314 + $0x19d0] sm:$0xff]
        %v1150 = vld [vmem:[%s314 + $0x19d8] sm:$0xff]
        %v1151 = vld [vmem:[%s314 + $0x19e0] sm:$0xff]
        %v1152 = vld [vmem:[%s314 + $0x19e8] sm:$0xff]
        %v1153 = vld [vmem:[%s314 + $0x19f0] sm:$0xff]
        %v1154 = vld [vmem:[%s314 + $0x19f8] sm:$0xff]
        %v1155 = vld [vmem:[%s314 + $0x1a00] sm:$0xff]
        %v1156 = vld [vmem:[%s314 + $0x1a08] sm:$0xff]
        %v1157 = vld [vmem:[%s314 + $0x1a10] sm:$0xff]
        %v1158 = vld [vmem:[%s314 + $0x1a18] sm:$0xff]
        %v1159 = vld [vmem:[%s314 + $0x1a20] sm:$0xff]
        %v1160 = vld [vmem:[%s314 + $0x1a28] sm:$0xff]
        %v1161 = vld [vmem:[%s314 + $0x1a30] sm:$0xff]
        %v1162 = vld [vmem:[%s314 + $0x1a38] sm:$0xff]
        %v1163 = vld [vmem:[%s314 + $0x1a40] sm:$0xff]
        %v1164 = vld [vmem:[%s314 + $0x1a48] sm:$0xff]
        %v1165 = vld [vmem:[%s314 + $0x1a50] sm:$0xff]
        %v1166 = vld [vmem:[%s314 + $0x1a58] sm:$0xff]
        %v1167 = vld [vmem:[%s314 + $0x1a60] sm:$0xff]
        %v1168 = vld [vmem:[%s314 + $0x1a68] sm:$0xff]
        %v1169 = vld [vmem:[%s314 + $0x1a70] sm:$0xff]
        %v1170 = vld [vmem:[%s314 + $0x1a78] sm:$0xff]
        %v1171 = vld [vmem:[%s314 + $0x1a80] sm:$0xff]
        %v1172 = vld [vmem:[%s314 + $0x1a88] sm:$0xff]
        %v1173 = vld [vmem:[%s314 + $0x1a90] sm:$0xff]
        %v1174 = vld [vmem:[%s314 + $0x1a98] sm:$0xff]
        %v1175 = vld [vmem:[%s314 + $0x1aa0] sm:$0xff]
        %v1176 = vld [vmem:[%s314 + $0x1aa8] sm:$0xff]
        %v1177 = vld [vmem:[%s314 + $0x1ab0] sm:$0xff]
        %v1178 = vld [vmem:[%s314 + $0x1ab8] sm:$0xff]
        %v1179 = vld [vmem:[%s314 + $0x1ac0] sm:$0xff]
        %v1180 = vld [vmem:[%s314 + $0x1ac8] sm:$0xff]
        %v1181 = vld [vmem:[%s314 + $0x1ad0] sm:$0xff]
        %v1182 = vld [vmem:[%s314 + $0x1ad8] sm:$0xff]
        %v1183 = vld [vmem:[%s314 + $0x1ae0] sm:$0xff]
        %v1184 = vld [vmem:[%s314 + $0x1ae8] sm:$0xff]
        %v1185 = vld [vmem:[%s314 + $0x1af0] sm:$0xff]
        %v1186 = vld [vmem:[%s314 + $0x1af8] sm:$0xff]
        %v1187 = vld [vmem:[%s314 + $0x1b00] sm:$0xff]
        %v1188 = vld [vmem:[%s314 + $0x1b08] sm:$0xff]
        %v1189 = vld [vmem:[%s314 + $0x1b10] sm:$0xff]
        %v1190 = vld [vmem:[%s314 + $0x1b18] sm:$0xff]
        %v1191 = vld [vmem:[%s314 + $0x1b20] sm:$0xff]
        %v1192 = vld [vmem:[%s314 + $0x1b28] sm:$0xff]
        %v1193 = vld [vmem:[%s314 + $0x1b30] sm:$0xff]
        %v1194 = vld [vmem:[%s314 + $0x1b38] sm:$0xff]
        %v1195 = vld [vmem:[%s314 + $0x1b40] sm:$0xff]
        %v1196 = vld [vmem:[%s314 + $0x1b48] sm:$0xff]
        %v1197 = vld [vmem:[%s314 + $0x1b50] sm:$0xff]
        %v1198 = vld [vmem:[%s314 + $0x1b58] sm:$0xff]
        %v1199 = vld [vmem:[%s314 + $0x1b60] sm:$0xff]
        %v1200 = vld [vmem:[%s314 + $0x1b68] sm:$0xff]
        %v1201 = vld [vmem:[%s314 + $0x1b70] sm:$0xff]
        %v1202 = vld [vmem:[%s314 + $0x1b78] sm:$0xff]
        %v1203 = vld [vmem:[%s314 + $0x1b80] sm:$0xff]
        %v1204 = vld [vmem:[%s314 + $0x1b88] sm:$0xff]
        %v1205 = vld [vmem:[%s314 + $0x1b90] sm:$0xff]
        %v1206 = vld [vmem:[%s314 + $0x1b98] sm:$0xff]
        %v1207 = vld [vmem:[%s314 + $0x1ba0] sm:$0xff]
        %v1208 = vld [vmem:[%s314 + $0x1ba8] sm:$0xff]
        %v1209 = vld [vmem:[%s314 + $0x1bb0] sm:$0xff]
        %v1210 = vld [vmem:[%s314 + $0x1bb8] sm:$0xff]
        %v1211 = vld [vmem:[%s314 + $0x1bc0] sm:$0xff]
        %v1212 = vld [vmem:[%s314 + $0x1bc8] sm:$0xff]
        %v1213 = vld [vmem:[%s314 + $0x1bd0] sm:$0xff]
        %v1214 = vld [vmem:[%s314 + $0x1bd8] sm:$0xff]
        %v1215 = vld [vmem:[%s314 + $0x1be0] sm:$0xff]
        %v1216 = vld [vmem:[%s314 + $0x1be8] sm:$0xff]
        %v1217 = vld [vmem:[%s314 + $0x1bf0] sm:$0xff]
        %v1218 = vld [vmem:[%s314 + $0x1bf8] sm:$0xff]
        %v1219 = vld [vmem:[%s314 + $0x1c00] sm:$0xff]
        %v1220 = vld [vmem:[%s314 + $0x1c08] sm:$0xff]
        %v1221 = vld [vmem:[%s314 + $0x1c10] sm:$0xff]
        %v1222 = vld [vmem:[%s314 + $0x1c18] sm:$0xff]
        %v1223 = vld [vmem:[%s314 + $0x1c20] sm:$0xff]
        %v1224 = vld [vmem:[%s314 + $0x1c28] sm:$0xff]
        %v1225 = vld [vmem:[%s314 + $0x1c30] sm:$0xff]
        %v1226 = vld [vmem:[%s314 + $0x1c38] sm:$0xff]
        %v1227 = vld [vmem:[%s314 + $0x1c40] sm:$0xff]
        %v1228 = vld [vmem:[%s314 + $0x1c48] sm:$0xff]
        %v1229 = vld [vmem:[%s314 + $0x1c50] sm:$0xff]
        %v1230 = vld [vmem:[%s314 + $0x1c58] sm:$0xff]
        %v1231 = vld [vmem:[%s314 + $0x1c60] sm:$0xff]
        %v1232 = vld [vmem:[%s314 + $0x1c68] sm:$0xff]
        %v1233 = vld [vmem:[%s314 + $0x1c70] sm:$0xff]
        %v1234 = vld [vmem:[%s314 + $0x1c78] sm:$0xff]
        %v1235 = vld [vmem:[%s314 + $0x1c80] sm:$0xff]
        %v1236 = vld [vmem:[%s314 + $0x1c88] sm:$0xff]
        %v1237 = vld [vmem:[%s314 + $0x1c90] sm:$0xff]
        %v1238 = vld [vmem:[%s314 + $0x1c98] sm:$0xff]
        %v1239 = vld [vmem:[%s314 + $0x1ca0] sm:$0xff]
        %v1240 = vld [vmem:[%s314 + $0x1ca8] sm:$0xff]
        %v1241 = vld [vmem:[%s314 + $0x1cb0] sm:$0xff]
        %v1242 = vld [vmem:[%s314 + $0x1cb8] sm:$0xff]
        %v1243 = vld [vmem:[%s314 + $0x1cc0] sm:$0xff]
        %v1244 = vld [vmem:[%s314 + $0x1cc8] sm:$0xff]
        %v1245 = vld [vmem:[%s314 + $0x1cd0] sm:$0xff]
        %v1246 = vld [vmem:[%s314 + $0x1cd8] sm:$0xff]
        %v1247 = vld [vmem:[%s314 + $0x1ce0] sm:$0xff]
        %v1248 = vld [vmem:[%s314 + $0x1ce8] sm:$0xff]
        %v1249 = vld [vmem:[%s314 + $0x1cf0] sm:$0xff]
        %v1250 = vld [vmem:[%s314 + $0x1cf8] sm:$0xff]
        %v1251 = vld [vmem:[%s314 + $0x1d00] sm:$0xff]
        %v1252 = vld [vmem:[%s314 + $0x1d08] sm:$0xff]
        %v1253 = vld [vmem:[%s314 + $0x1d10] sm:$0xff]
        %v1254 = vld [vmem:[%s314 + $0x1d18] sm:$0xff]
        %v1255 = vld [vmem:[%s314 + $0x1d20] sm:$0xff]
        %v1256 = vld [vmem:[%s314 + $0x1d28] sm:$0xff]
        %v1257 = vld [vmem:[%s314 + $0x1d30] sm:$0xff]
        %v1258 = vld [vmem:[%s314 + $0x1d38] sm:$0xff]
        %v1259 = vld [vmem:[%s314 + $0x1d40] sm:$0xff]
        %v1260 = vld [vmem:[%s314 + $0x1d48] sm:$0xff]
        %v1261 = vld [vmem:[%s314 + $0x1d50] sm:$0xff]
        %v1262 = vld [vmem:[%s314 + $0x1d58] sm:$0xff]
        %v1263 = vld [vmem:[%s314 + $0x1d60] sm:$0xff]
        %v1264 = vld [vmem:[%s314 + $0x1d68] sm:$0xff]
        %v1265 = vld [vmem:[%s314 + $0x1d70] sm:$0xff]
        %v1266 = vld [vmem:[%s314 + $0x1d78] sm:$0xff]
        %v1267 = vld [vmem:[%s314 + $0x1d80] sm:$0xff]
        %v1268 = vld [vmem:[%s314 + $0x1d88] sm:$0xff]
        %v1269 = vld [vmem:[%s314 + $0x1d90] sm:$0xff]
        %v1270 = vld [vmem:[%s314 + $0x1d98] sm:$0xff]
        %v1271 = vld [vmem:[%s314 + $0x1da0] sm:$0xff]
        %v1272 = vld [vmem:[%s314 + $0x1da8] sm:$0xff]
        %v1273 = vld [vmem:[%s314 + $0x1db0] sm:$0xff]
        %v1274 = vld [vmem:[%s314 + $0x1db8] sm:$0xff]
        %v1275 = vld [vmem:[%s314 + $0x1dc0] sm:$0xff]
        %v1276 = vld [vmem:[%s314 + $0x1dc8] sm:$0xff]
        %v1277 = vld [vmem:[%s314 + $0x1dd0] sm:$0xff]
        %v1278 = vld [vmem:[%s314 + $0x1dd8] sm:$0xff]
        %v1279 = vld [vmem:[%s314 + $0x1de0] sm:$0xff]
        %v1280 = vld [vmem:[%s314 + $0x1de8] sm:$0xff]
        %v1281 = vld [vmem:[%s314 + $0x1df0] sm:$0xff]
        %v1282 = vld [vmem:[%s314 + $0x1df8] sm:$0xff]
        %v1283 = vld [vmem:[%s314 + $0x1e00] sm:$0xff]
        %v1284 = vld [vmem:[%s314 + $0x1e08] sm:$0xff]
        %v1285 = vld [vmem:[%s314 + $0x1e10] sm:$0xff]
        %v1286 = vld [vmem:[%s314 + $0x1e18] sm:$0xff]
        %v1287 = vld [vmem:[%s314 + $0x1e20] sm:$0xff]
        %v1288 = vld [vmem:[%s314 + $0x1e28] sm:$0xff]
        %v1289 = vld [vmem:[%s314 + $0x1e30] sm:$0xff]
        %v1290 = vld [vmem:[%s314 + $0x1e38] sm:$0xff]
        %v1291 = vld [vmem:[%s314 + $0x1e40] sm:$0xff]
        %v1292 = vld [vmem:[%s314 + $0x1e48] sm:$0xff]
        %v1293 = vld [vmem:[%s314 + $0x1e50] sm:$0xff]
        %v1294 = vld [vmem:[%s314 + $0x1e58] sm:$0xff]
        %v1295 = vld [vmem:[%s314 + $0x1e60] sm:$0xff]
        %v1296 = vld [vmem:[%s314 + $0x1e68] sm:$0xff]
        %v1297 = vld [vmem:[%s314 + $0x1e70] sm:$0xff]
        %v1298 = vld [vmem:[%s314 + $0x1e78] sm:$0xff]
        %v1299 = vld [vmem:[%s314 + $0x1e80] sm:$0xff]
        %v1300 = vld [vmem:[%s314 + $0x1e88] sm:$0xff]
        %v1301 = vld [vmem:[%s314 + $0x1e90] sm:$0xff]
        %v1302 = vld [vmem:[%s314 + $0x1e98] sm:$0xff]
        %v1303 = vld [vmem:[%s314 + $0x1ea0] sm:$0xff]
        %v1304 = vld [vmem:[%s314 + $0x1ea8] sm:$0xff]
        %v1305 = vld [vmem:[%s314 + $0x1eb0] sm:$0xff]
        %v1306 = vld [vmem:[%s314 + $0x1eb8] sm:$0xff]
        %v1307 = vld [vmem:[%s314 + $0x1ec0] sm:$0xff]
        %v1308 = vld [vmem:[%s314 + $0x1ec8] sm:$0xff]
        %v1309 = vld [vmem:[%s314 + $0x1ed0] sm:$0xff]
        %v1310 = vld [vmem:[%s314 + $0x1ed8] sm:$0xff]
        %v1311 = vld [vmem:[%s314 + $0x1ee0] sm:$0xff]
        %v1312 = vld [vmem:[%s314 + $0x1ee8] sm:$0xff]
        %v1313 = vld [vmem:[%s314 + $0x1ef0] sm:$0xff]
        %v1314 = vld [vmem:[%s314 + $0x1ef8] sm:$0xff]
        %v1315 = vld [vmem:[%s314 + $0x1f00] sm:$0xff]
        %v1316 = vld [vmem:[%s314 + $0x1f08] sm:$0xff]
        %v1317 = vld [vmem:[%s314 + $0x1f10] sm:$0xff]
        %v1318 = vld [vmem:[%s314 + $0x1f18] sm:$0xff]
        %v1319 = vld [vmem:[%s314 + $0x1f20] sm:$0xff]
        %v1320 = vld [vmem:[%s314 + $0x1f28] sm:$0xff]
        %v1321 = vld [vmem:[%s314 + $0x1f30] sm:$0xff]
        %v1322 = vld [vmem:[%s314 + $0x1f38] sm:$0xff]
        %v1323 = vld [vmem:[%s314 + $0x1f40] sm:$0xff]
        %v1324 = vld [vmem:[%s314 + $0x1f48] sm:$0xff]
        %v1325 = vld [vmem:[%s314 + $0x1f50] sm:$0xff]
        %v1326 = vld [vmem:[%s314 + $0x1f58] sm:$0xff]
        %v1327 = vld [vmem:[%s314 + $0x1f60] sm:$0xff]
        %v1328 = vld [vmem:[%s314 + $0x1f68] sm:$0xff]
        %v1329 = vld [vmem:[%s314 + $0x1f70] sm:$0xff]
        %v1330 = vld [vmem:[%s314 + $0x1f78] sm:$0xff]
        %v1331 = vld [vmem:[%s314 + $0x1f80] sm:$0xff]
        %v1332 = vld [vmem:[%s314 + $0x1f88] sm:$0xff]
        %v1333 = vld [vmem:[%s314 + $0x1f90] sm:$0xff]
        %v1334 = vld [vmem:[%s314 + $0x1f98] sm:$0xff]
        %v1335 = vld [vmem:[%s314 + $0x1fa0] sm:$0xff]
        %v1336 = vld [vmem:[%s314 + $0x1fa8] sm:$0xff]
        %v1337 = vld [vmem:[%s314 + $0x1fb0] sm:$0xff]
        %v1338 = vld [vmem:[%s314 + $0x1fb8] sm:$0xff]
        %v1339 = vld [vmem:[%s314 + $0x1fc0] sm:$0xff]
        %v1340 = vld [vmem:[%s314 + $0x1fc8] sm:$0xff]
        %v1341 = vld [vmem:[%s314 + $0x1fd0] sm:$0xff]
        %v1342 = vld [vmem:[%s314 + $0x1fd8] sm:$0xff]
        %v1343 = vld [vmem:[%s314 + $0x1fe0] sm:$0xff]
        %v1344 = vld [vmem:[%s314 + $0x1fe8] sm:$0xff]
        %v1345 = vld [vmem:[%s314 + $0x1ff0] sm:$0xff]
        %v1346 = vld [vmem:[%s314 + $0x1ff8] sm:$0xff]
        %v1347 = vld [vmem:[%s314 + $0x2000] sm:$0xff]
        %v1348 = vld [vmem:[%s314 + $0x2008] sm:$0xff]
        %v1349 = vld [vmem:[%s314 + $0x2010] sm:$0xff]
        %v1350 = vld [vmem:[%s314 + $0x2018] sm:$0xff]
        %v1351 = vld [vmem:[%s314 + $0x2020] sm:$0xff]
        %v1352 = vld [vmem:[%s314 + $0x2028] sm:$0xff]
        %v1353 = vld [vmem:[%s314 + $0x2030] sm:$0xff]
        %v1354 = vld [vmem:[%s314 + $0x2038] sm:$0xff]
        %v1355 = vld [vmem:[%s314 + $0x2040] sm:$0xff]
        %v1356 = vld [vmem:[%s314 + $0x2048] sm:$0xff]
        %v1357 = vld [vmem:[%s314 + $0x2050] sm:$0xff]
        %v1358 = vld [vmem:[%s314 + $0x2058] sm:$0xff]
        %v1359 = vld [vmem:[%s314 + $0x2060] sm:$0xff]
        %v1360 = vld [vmem:[%s314 + $0x2068] sm:$0xff]
        %v1361 = vld [vmem:[%s314 + $0x2070] sm:$0xff]
        %v1362 = vld [vmem:[%s314 + $0x2078] sm:$0xff]
        %v1363 = vld [vmem:[%s314 + $0x2080] sm:$0xff]
        %v1364 = vld [vmem:[%s314 + $0x2088] sm:$0xff]
        %v1365 = vld [vmem:[%s314 + $0x2090] sm:$0xff]
        %v1366 = vld [vmem:[%s314 + $0x2098] sm:$0xff]
        %v1367 = vld [vmem:[%s314 + $0x20a0] sm:$0xff]
        %v1368 = vld [vmem:[%s314 + $0x20a8] sm:$0xff]
        %v1369 = vld [vmem:[%s314 + $0x20b0] sm:$0xff]
        %v1370 = vld [vmem:[%s314 + $0x20b8] sm:$0xff]
        %v1371 = vld [vmem:[%s314 + $0x20c0] sm:$0xff]
        %v1372 = vld [vmem:[%s314 + $0x20c8] sm:$0xff]
        %v1373 = vld [vmem:[%s314 + $0x20d0] sm:$0xff]
        %v1374 = vld [vmem:[%s314 + $0x20d8] sm:$0xff]
        %v1375 = vld [vmem:[%s314 + $0x20e0] sm:$0xff]
        %v1376 = vld [vmem:[%s314 + $0x20e8] sm:$0xff]
        %v1377 = vld [vmem:[%s314 + $0x20f0] sm:$0xff]
        %v1378 = vld [vmem:[%s314 + $0x20f8] sm:$0xff]
        %v1379 = vld [vmem:[%s314 + $0x2100] sm:$0xff]
        %v1380 = vld [vmem:[%s314 + $0x2108] sm:$0xff]
        %v1381 = vld [vmem:[%s314 + $0x2110] sm:$0xff]
        %v1382 = vld [vmem:[%s314 + $0x2118] sm:$0xff]
        %v1383 = vld [vmem:[%s314 + $0x2120] sm:$0xff]
        %v1384 = vld [vmem:[%s314 + $0x2128] sm:$0xff]
        %v1385 = vld [vmem:[%s314 + $0x2130] sm:$0xff]
        %v1386 = vld [vmem:[%s314 + $0x2138] sm:$0xff]
        %v1387 = vld [vmem:[%s314 + $0x2140] sm:$0xff]
        %v1388 = vld [vmem:[%s314 + $0x2148] sm:$0xff]
        %v1389 = vld [vmem:[%s314 + $0x2150] sm:$0xff]
        %v1390 = vld [vmem:[%s314 + $0x2158] sm:$0xff]
        %v1391 = vld [vmem:[%s314 + $0x2160] sm:$0xff]
        %v1392 = vld [vmem:[%s314 + $0x2168] sm:$0xff]
        %v1393 = vld [vmem:[%s314 + $0x2170] sm:$0xff]
        %v1394 = vld [vmem:[%s314 + $0x2178] sm:$0xff]
        %v1395 = vld [vmem:[%s314 + $0x2180] sm:$0xff]
        %v1396 = vld [vmem:[%s314 + $0x2188] sm:$0xff]
        %v1397 = vld [vmem:[%s314 + $0x2190] sm:$0xff]
        %v1398 = vld [vmem:[%s314 + $0x2198] sm:$0xff]
        %v1399 = vld [vmem:[%s314 + $0x21a0] sm:$0xff]
        %v1400 = vld [vmem:[%s314 + $0x21a8] sm:$0xff]
        %v1401 = vld [vmem:[%s314 + $0x21b0] sm:$0xff]
        %v1402 = vld [vmem:[%s314 + $0x21b8] sm:$0xff]
        %v1403 = vld [vmem:[%s314 + $0x21c0] sm:$0xff]
        %v1404 = vld [vmem:[%s314 + $0x21c8] sm:$0xff]
        %v1405 = vld [vmem:[%s314 + $0x21d0] sm:$0xff]
        %v1406 = vld [vmem:[%s314 + $0x21d8] sm:$0xff]
        %v1407 = vld [vmem:[%s314 + $0x21e0] sm:$0xff]
        %v1408 = vld [vmem:[%s314 + $0x21e8] sm:$0xff]
        %v1409 = vld [vmem:[%s314 + $0x21f0] sm:$0xff]
        %v1410 = vld [vmem:[%s314 + $0x21f8] sm:$0xff]
        %v1411 = vld [vmem:[%s314 + $0x2200] sm:$0xff]
        %v1412 = vld [vmem:[%s314 + $0x2208] sm:$0xff]
        %v1413 = vld [vmem:[%s314 + $0x2210] sm:$0xff]
        %v1414 = vld [vmem:[%s314 + $0x2218] sm:$0xff]
        %v1415 = vld [vmem:[%s314 + $0x2220] sm:$0xff]
        %v1416 = vld [vmem:[%s314 + $0x2228] sm:$0xff]
        %v1417 = vld [vmem:[%s314 + $0x2230] sm:$0xff]
        %v1418 = vld [vmem:[%s314 + $0x2238] sm:$0xff]
        %v1419 = vld [vmem:[%s314 + $0x2240] sm:$0xff]
        %v1420 = vld [vmem:[%s314 + $0x2248] sm:$0xff]
        %v1421 = vld [vmem:[%s314 + $0x2250] sm:$0xff]
        %v1422 = vld [vmem:[%s314 + $0x2258] sm:$0xff]
        %v1423 = vld [vmem:[%s314 + $0x2260] sm:$0xff]
        %v1424 = vld [vmem:[%s314 + $0x2268] sm:$0xff]
        %v1425 = vld [vmem:[%s314 + $0x2270] sm:$0xff]
        %v1426 = vld [vmem:[%s314 + $0x2278] sm:$0xff]
        %v1427 = vld [vmem:[%s314 + $0x2280] sm:$0xff]
        %v1428 = vld [vmem:[%s314 + $0x2288] sm:$0xff]
        %v1429 = vld [vmem:[%s314 + $0x2290] sm:$0xff]
        %v1430 = vld [vmem:[%s314 + $0x2298] sm:$0xff]
        %v1431 = vld [vmem:[%s314 + $0x22a0] sm:$0xff]
        %v1432 = vld [vmem:[%s314 + $0x22a8] sm:$0xff]
        %v1433 = vld [vmem:[%s314 + $0x22b0] sm:$0xff]
        %v1434 = vld [vmem:[%s314 + $0x22b8] sm:$0xff]
        %v1435 = vld [vmem:[%s314 + $0x22c0] sm:$0xff]
        %v1436 = vld [vmem:[%s314 + $0x22c8] sm:$0xff]
        %v1437 = vld [vmem:[%s314 + $0x22d0] sm:$0xff]
        %v1438 = vld [vmem:[%s314 + $0x22d8] sm:$0xff]
        %v1439 = vld [vmem:[%s314 + $0x22e0] sm:$0xff]
        %v1440 = vld [vmem:[%s314 + $0x22e8] sm:$0xff]
        %v1441 = vld [vmem:[%s314 + $0x22f0] sm:$0xff]
        %v1442 = vld [vmem:[%s314 + $0x22f8] sm:$0xff]
        %v1443 = vld [vmem:[%s314 + $0x2300] sm:$0xff]
        %v1444 = vld [vmem:[%s314 + $0x2308] sm:$0xff]
        %v1445 = vld [vmem:[%s314 + $0x2310] sm:$0xff]
        %v1446 = vld [vmem:[%s314 + $0x2318] sm:$0xff]
        %v1447 = vld [vmem:[%s314 + $0x2320] sm:$0xff]
        %v1448 = vld [vmem:[%s314 + $0x2328] sm:$0xff]
        %v1449 = vld [vmem:[%s314 + $0x2330] sm:$0xff]
        %v1450 = vld [vmem:[%s314 + $0x2338] sm:$0xff]
        %v1451 = vld [vmem:[%s314 + $0x2340] sm:$0xff]
        %v1452 = vld [vmem:[%s314 + $0x2348] sm:$0xff]
        %v1453 = vld [vmem:[%s314 + $0x2350] sm:$0xff]
        %v1454 = vld [vmem:[%s314 + $0x2358] sm:$0xff]
        %v1455 = vld [vmem:[%s314 + $0x2360] sm:$0xff]
        %v1456 = vld [vmem:[%s314 + $0x2368] sm:$0xff]
        %v1457 = vld [vmem:[%s314 + $0x2370] sm:$0xff]
        %v1458 = vld [vmem:[%s314 + $0x2378] sm:$0xff]
        %v1459 = vld [vmem:[%s314 + $0x2380] sm:$0xff]
        %v1460 = vld [vmem:[%s314 + $0x2388] sm:$0xff]
        %v1461 = vld [vmem:[%s314 + $0x2390] sm:$0xff]
        %v1462 = vld [vmem:[%s314 + $0x2398] sm:$0xff]
        %v1463 = vld [vmem:[%s314 + $0x23a0] sm:$0xff]
        %v1464 = vld [vmem:[%s314 + $0x23a8] sm:$0xff]
        %v1465 = vld [vmem:[%s314 + $0x23b0] sm:$0xff]
        %v1466 = vld [vmem:[%s314 + $0x23b8] sm:$0xff]
        %v1467 = vld [vmem:[%s314 + $0x23c0] sm:$0xff]
        %v1468 = vld [vmem:[%s314 + $0x23c8] sm:$0xff]
        %v1469 = vld [vmem:[%s314 + $0x23d0] sm:$0xff]
        %v1470 = vld [vmem:[%s314 + $0x23d8] sm:$0xff]
        %v1471 = vld [vmem:[%s314 + $0x23e0] sm:$0xff]
        %v1472 = vld [vmem:[%s314 + $0x23e8] sm:$0xff]
        %v1473 = vld [vmem:[%s314 + $0x23f0] sm:$0xff]
        %v1474 = vld [vmem:[%s314 + $0x23f8] sm:$0xff]
        %v1475 = vld [vmem:[%s314 + $0x2400] sm:$0xff]
        %v1476 = vld [vmem:[%s314 + $0x2408] sm:$0xff]
        %v1477 = vld [vmem:[%s314 + $0x2410] sm:$0xff]
        %v1478 = vld [vmem:[%s314 + $0x2418] sm:$0xff]
        %v1479 = vld [vmem:[%s314 + $0x2420] sm:$0xff]
        %v1480 = vld [vmem:[%s314 + $0x2428] sm:$0xff]
        %v1481 = vld [vmem:[%s314 + $0x2430] sm:$0xff]
        %v1482 = vld [vmem:[%s314 + $0x2438] sm:$0xff]
        %v1483 = vld [vmem:[%s314 + $0x2440] sm:$0xff]
        %v1484 = vld [vmem:[%s314 + $0x2448] sm:$0xff]
        %v1485 = vld [vmem:[%s314 + $0x2450] sm:$0xff]
        %v1486 = vld [vmem:[%s314 + $0x2458] sm:$0xff]
        %v1487 = vld [vmem:[%s314 + $0x2460] sm:$0xff]
        %v1488 = vld [vmem:[%s314 + $0x2468] sm:$0xff]
        %v1489 = vld [vmem:[%s314 + $0x2470] sm:$0xff]
        %v1490 = vld [vmem:[%s314 + $0x2478] sm:$0xff]
        %v1491 = vld [vmem:[%s314 + $0x2480] sm:$0xff]
        %v1492 = vld [vmem:[%s314 + $0x2488] sm:$0xff]
        %v1493 = vld [vmem:[%s314 + $0x2490] sm:$0xff]
        %v1494 = vld [vmem:[%s314 + $0x2498] sm:$0xff]
        %v1495 = vld [vmem:[%s314 + $0x24a0] sm:$0xff]
        %v1496 = vld [vmem:[%s314 + $0x24a8] sm:$0xff]
        %v1497 = vld [vmem:[%s314 + $0x24b0] sm:$0xff]
        %v1498 = vld [vmem:[%s314 + $0x24b8] sm:$0xff]
        %v1499 = vld [vmem:[%s314 + $0x24c0] sm:$0xff]
        %v1500 = vld [vmem:[%s314 + $0x24c8] sm:$0xff]
        %v1501 = vld [vmem:[%s314 + $0x24d0] sm:$0xff]
        %v1502 = vld [vmem:[%s314 + $0x24d8] sm:$0xff]
        %v1503 = vld [vmem:[%s314 + $0x24e0] sm:$0xff]
        %v1504 = vld [vmem:[%s314 + $0x24e8] sm:$0xff]
        %v1505 = vld [vmem:[%s314 + $0x24f0] sm:$0xff]
        %v1506 = vld [vmem:[%s314 + $0x24f8] sm:$0xff]
        %v1507 = vld [vmem:[%s314 + $0x2500] sm:$0xff]
        %v1508 = vld [vmem:[%s314 + $0x2508] sm:$0xff]
        %v1509 = vld [vmem:[%s314 + $0x2510] sm:$0xff]
        %v1510 = vld [vmem:[%s314 + $0x2518] sm:$0xff]
        %v1511 = vld [vmem:[%s314 + $0x2520] sm:$0xff]
        %v1512 = vld [vmem:[%s314 + $0x2528] sm:$0xff]
        %v1513 = vld [vmem:[%s314 + $0x2530] sm:$0xff]
        %v1514 = vld [vmem:[%s314 + $0x2538] sm:$0xff]
        %v1515 = vld [vmem:[%s314 + $0x2540] sm:$0xff]
        %v1516 = vld [vmem:[%s314 + $0x2548] sm:$0xff]
        %v1517 = vld [vmem:[%s314 + $0x2550] sm:$0xff]
        %v1518 = vld [vmem:[%s314 + $0x2558] sm:$0xff]
        %v1519 = vld [vmem:[%s314 + $0x2560] sm:$0xff]
        %v1520 = vld [vmem:[%s314 + $0x2568] sm:$0xff]
        %v1521 = vld [vmem:[%s314 + $0x2570] sm:$0xff]
        %v1522 = vld [vmem:[%s314 + $0x2578] sm:$0xff]
        %v1523 = vld [vmem:[%s314 + $0x2580] sm:$0xff]
        %v1524 = vld [vmem:[%s314 + $0x2588] sm:$0xff]
        %v1525 = vld [vmem:[%s314 + $0x2590] sm:$0xff]
        %v1526 = vld [vmem:[%s314 + $0x2598] sm:$0xff]
        %v1527 = vld [vmem:[%s314 + $0x25a0] sm:$0xff]
        %v1528 = vld [vmem:[%s314 + $0x25a8] sm:$0xff]
        %v1529 = vld [vmem:[%s314 + $0x25b0] sm:$0xff]
        %v1530 = vld [vmem:[%s314 + $0x25b8] sm:$0xff]
        %v1531 = vld [vmem:[%s314 + $0x25c0] sm:$0xff]
        %v1532 = vld [vmem:[%s314 + $0x25c8] sm:$0xff]
        %v1533 = vld [vmem:[%s314 + $0x25d0] sm:$0xff]
        %v1534 = vld [vmem:[%s314 + $0x25d8] sm:$0xff]
        %v1535 = vld [vmem:[%s314 + $0x25e0] sm:$0xff]
        %v1536 = vld [vmem:[%s314 + $0x25e8] sm:$0xff]
        %v1537 = vld [vmem:[%s314 + $0x25f0] sm:$0xff]
        %v1538 = vld [vmem:[%s314 + $0x25f8] sm:$0xff]
        %v1539 = vunpack.c.l.s8.bf16 %v323
        %v1540 = vunpack.c.l.s8.bf16 %v324
        %v1541 = vunpack.c.l.s8.bf16 %v325
        %v1542 = vunpack.c.l.s8.bf16 %v326
        %v1543 = vunpack.c.l.s8.bf16 %v327
        %v1544 = vunpack.c.l.s8.bf16 %v328
        %v1545 = vunpack.c.l.s8.bf16 %v329
        %v1546 = vunpack.c.l.s8.bf16 %v330
        %v1547 = vunpack.c.h.s8.bf16 %v323
        %v1548 = vunpack.c.h.s8.bf16 %v324
        %v1549 = vunpack.c.h.s8.bf16 %v325
        %v1550 = vunpack.c.h.s8.bf16 %v326
        %v1551 = vunpack.c.h.s8.bf16 %v327
        %v1552 = vunpack.c.h.s8.bf16 %v328
        %v1553 = vunpack.c.h.s8.bf16 %v329
        %v1554 = vunpack.c.h.s8.bf16 %v330
        %v1555 = vunpack.c.l.s8.bf16 %v331
        %v1556 = vunpack.c.l.s8.bf16 %v332
        %v1557 = vunpack.c.l.s8.bf16 %v333
        %v1558 = vunpack.c.l.s8.bf16 %v334
        %v1559 = vunpack.c.l.s8.bf16 %v335
        %v1560 = vunpack.c.l.s8.bf16 %v336
        %v1561 = vunpack.c.l.s8.bf16 %v337
        %v1562 = vunpack.c.l.s8.bf16 %v338
        %v1563 = vunpack.c.h.s8.bf16 %v331
        %v1564 = vunpack.c.h.s8.bf16 %v332
        %v1565 = vunpack.c.h.s8.bf16 %v333
        %v1566 = vunpack.c.h.s8.bf16 %v334
        %v1567 = vunpack.c.h.s8.bf16 %v335
        %v1568 = vunpack.c.h.s8.bf16 %v336
        %v1569 = vunpack.c.h.s8.bf16 %v337
        %v1570 = vunpack.c.h.s8.bf16 %v338
        %v1571 = vunpack.c.l.s8.bf16 %v339
        %v1572 = vunpack.c.l.s8.bf16 %v340
        %v1573 = vunpack.c.l.s8.bf16 %v341
        %v1574 = vunpack.c.l.s8.bf16 %v342
        %v1575 = vunpack.c.l.s8.bf16 %v343
        %v1576 = vunpack.c.l.s8.bf16 %v344
        %v1577 = vunpack.c.l.s8.bf16 %v345
        %v1578 = vunpack.c.l.s8.bf16 %v346
        %v1579 = vunpack.c.h.s8.bf16 %v339
        %v1580 = vunpack.c.h.s8.bf16 %v340
        %v1581 = vunpack.c.h.s8.bf16 %v341
        %v1582 = vunpack.c.h.s8.bf16 %v342
        %v1583 = vunpack.c.h.s8.bf16 %v343
        %v1584 = vunpack.c.h.s8.bf16 %v344
        %v1585 = vunpack.c.h.s8.bf16 %v345
        %v1586 = vunpack.c.h.s8.bf16 %v346
        %v1587 = vunpack.c.l.s8.bf16 %v347
        %v1588 = vunpack.c.l.s8.bf16 %v348
        %v1589 = vunpack.c.l.s8.bf16 %v349
        %v1590 = vunpack.c.l.s8.bf16 %v350
        %v1591 = vunpack.c.l.s8.bf16 %v351
        %v1592 = vunpack.c.l.s8.bf16 %v352
        %v1593 = vunpack.c.l.s8.bf16 %v353
        %v1594 = vunpack.c.l.s8.bf16 %v354
        %v1595 = vunpack.c.h.s8.bf16 %v347
        %v1596 = vunpack.c.h.s8.bf16 %v348
        %v1597 = vunpack.c.h.s8.bf16 %v349
        %v1598 = vunpack.c.h.s8.bf16 %v350
        %v1599 = vunpack.c.h.s8.bf16 %v351
        %v1600 = vunpack.c.h.s8.bf16 %v352
        %v1601 = vunpack.c.h.s8.bf16 %v353
        %v1602 = vunpack.c.h.s8.bf16 %v354
        %v1603 = vunpack.c.l.s8.bf16 %v355
        %v1604 = vunpack.c.l.s8.bf16 %v356
        %v1605 = vunpack.c.l.s8.bf16 %v357
        %v1606 = vunpack.c.l.s8.bf16 %v358
        %v1607 = vunpack.c.l.s8.bf16 %v359
        %v1608 = vunpack.c.l.s8.bf16 %v360
        %v1609 = vunpack.c.l.s8.bf16 %v361
        %v1610 = vunpack.c.l.s8.bf16 %v362
        %v1611 = vunpack.c.h.s8.bf16 %v355
        %v1612 = vunpack.c.h.s8.bf16 %v356
        %v1613 = vunpack.c.h.s8.bf16 %v357
        %v1614 = vunpack.c.h.s8.bf16 %v358
        %v1615 = vunpack.c.h.s8.bf16 %v359
        %v1616 = vunpack.c.h.s8.bf16 %v360
        %v1617 = vunpack.c.h.s8.bf16 %v361
        %v1618 = vunpack.c.h.s8.bf16 %v362
        %v1619 = vunpack.c.l.s8.bf16 %v363
        %v1620 = vunpack.c.l.s8.bf16 %v364
        %v1621 = vunpack.c.l.s8.bf16 %v365
        %v1622 = vunpack.c.l.s8.bf16 %v366
        %v1623 = vunpack.c.l.s8.bf16 %v367
        %v1624 = vunpack.c.l.s8.bf16 %v368
        %v1625 = vunpack.c.l.s8.bf16 %v369
        %v1626 = vunpack.c.l.s8.bf16 %v370
        %v1627 = vunpack.c.h.s8.bf16 %v363
        %v1628 = vunpack.c.h.s8.bf16 %v364
        %v1629 = vunpack.c.h.s8.bf16 %v365
        %v1630 = vunpack.c.h.s8.bf16 %v366
        %v1631 = vunpack.c.h.s8.bf16 %v367
        %v1632 = vunpack.c.h.s8.bf16 %v368
        %v1633 = vunpack.c.h.s8.bf16 %v369
        %v1634 = vunpack.c.h.s8.bf16 %v370
        %v1635 = vunpack.c.l.s8.bf16 %v371
        %v1636 = vunpack.c.l.s8.bf16 %v372
        %v1637 = vunpack.c.l.s8.bf16 %v373
        %v1638 = vunpack.c.l.s8.bf16 %v374
        %v1639 = vunpack.c.l.s8.bf16 %v375
        %v1640 = vunpack.c.l.s8.bf16 %v376
        %v1641 = vunpack.c.l.s8.bf16 %v377
        %v1642 = vunpack.c.l.s8.bf16 %v378
        %v1643 = vunpack.c.h.s8.bf16 %v371
        %v1644 = vunpack.c.h.s8.bf16 %v372
        %v1645 = vunpack.c.h.s8.bf16 %v373
        %v1646 = vunpack.c.h.s8.bf16 %v374
        %v1647 = vunpack.c.h.s8.bf16 %v375
        %v1648 = vunpack.c.h.s8.bf16 %v376
        %v1649 = vunpack.c.h.s8.bf16 %v377
        %v1650 = vunpack.c.h.s8.bf16 %v378
        %v1651 = vunpack.c.l.s8.bf16 %v379
        %v1652 = vunpack.c.l.s8.bf16 %v380
        %v1653 = vunpack.c.l.s8.bf16 %v381
        %v1654 = vunpack.c.l.s8.bf16 %v382
        %v1655 = vunpack.c.l.s8.bf16 %v383
        %v1656 = vunpack.c.l.s8.bf16 %v384
        %v1657 = vunpack.c.l.s8.bf16 %v385
        %v1658 = vunpack.c.l.s8.bf16 %v386
        %v1659 = vunpack.c.h.s8.bf16 %v379
        %v1660 = vunpack.c.h.s8.bf16 %v380
        %v1661 = vunpack.c.h.s8.bf16 %v381
        %v1662 = vunpack.c.h.s8.bf16 %v382
        %v1663 = vunpack.c.h.s8.bf16 %v383
        %v1664 = vunpack.c.h.s8.bf16 %v384
        %v1665 = vunpack.c.h.s8.bf16 %v385
        %v1666 = vunpack.c.h.s8.bf16 %v386
        %v1667 = vunpack.c.l.s8.bf16 %v387
        %v1668 = vunpack.c.l.s8.bf16 %v388
        %v1669 = vunpack.c.l.s8.bf16 %v389
        %v1670 = vunpack.c.l.s8.bf16 %v390
        %v1671 = vunpack.c.l.s8.bf16 %v391
        %v1672 = vunpack.c.l.s8.bf16 %v392
        %v1673 = vunpack.c.l.s8.bf16 %v393
        %v1674 = vunpack.c.l.s8.bf16 %v394
        %v1675 = vunpack.c.h.s8.bf16 %v387
        %v1676 = vunpack.c.h.s8.bf16 %v388
        %v1677 = vunpack.c.h.s8.bf16 %v389
        %v1678 = vunpack.c.h.s8.bf16 %v390
        %v1679 = vunpack.c.h.s8.bf16 %v391
        %v1680 = vunpack.c.h.s8.bf16 %v392
        %v1681 = vunpack.c.h.s8.bf16 %v393
        %v1682 = vunpack.c.h.s8.bf16 %v394
        %v1683 = vunpack.c.l.s8.bf16 %v395
        %v1684 = vunpack.c.l.s8.bf16 %v396
        %v1685 = vunpack.c.l.s8.bf16 %v397
        %v1686 = vunpack.c.l.s8.bf16 %v398
        %v1687 = vunpack.c.l.s8.bf16 %v399
        %v1688 = vunpack.c.l.s8.bf16 %v400
        %v1689 = vunpack.c.l.s8.bf16 %v401
        %v1690 = vunpack.c.l.s8.bf16 %v402
        %v1691 = vunpack.c.h.s8.bf16 %v395
        %v1692 = vunpack.c.h.s8.bf16 %v396
        %v1693 = vunpack.c.h.s8.bf16 %v397
        %v1694 = vunpack.c.h.s8.bf16 %v398
        %v1695 = vunpack.c.h.s8.bf16 %v399
        %v1696 = vunpack.c.h.s8.bf16 %v400
        %v1697 = vunpack.c.h.s8.bf16 %v401
        %v1698 = vunpack.c.h.s8.bf16 %v402
        %v1699 = vunpack.c.l.s8.bf16 %v403
        %v1700 = vunpack.c.l.s8.bf16 %v404
        %v1701 = vunpack.c.l.s8.bf16 %v405
        %v1702 = vunpack.c.l.s8.bf16 %v406
        %v1703 = vunpack.c.l.s8.bf16 %v407
        %v1704 = vunpack.c.l.s8.bf16 %v408
        %v1705 = vunpack.c.l.s8.bf16 %v409
        %v1706 = vunpack.c.l.s8.bf16 %v410
        %v1707 = vunpack.c.h.s8.bf16 %v403
        %v1708 = vunpack.c.h.s8.bf16 %v404
        %v1709 = vunpack.c.h.s8.bf16 %v405
        %v1710 = vunpack.c.h.s8.bf16 %v406
        %v1711 = vunpack.c.h.s8.bf16 %v407
        %v1712 = vunpack.c.h.s8.bf16 %v408
        %v1713 = vunpack.c.h.s8.bf16 %v409
        %v1714 = vunpack.c.h.s8.bf16 %v410
        %v1715 = vunpack.c.l.s8.bf16 %v411
        %v1716 = vunpack.c.l.s8.bf16 %v412
        %v1717 = vunpack.c.l.s8.bf16 %v413
        %v1718 = vunpack.c.l.s8.bf16 %v414
        %v1719 = vunpack.c.l.s8.bf16 %v415
        %v1720 = vunpack.c.l.s8.bf16 %v416
        %v1721 = vunpack.c.l.s8.bf16 %v417
        %v1722 = vunpack.c.l.s8.bf16 %v418
        %v1723 = vunpack.c.h.s8.bf16 %v411
        %v1724 = vunpack.c.h.s8.bf16 %v412
        %v1725 = vunpack.c.h.s8.bf16 %v413
        %v1726 = vunpack.c.h.s8.bf16 %v414
        %v1727 = vunpack.c.h.s8.bf16 %v415
        %v1728 = vunpack.c.h.s8.bf16 %v416
        %v1729 = vunpack.c.h.s8.bf16 %v417
        %v1730 = vunpack.c.h.s8.bf16 %v418
        %v1731 = vunpack.c.l.s8.bf16 %v419
        %v1732 = vunpack.c.l.s8.bf16 %v420
        %v1733 = vunpack.c.l.s8.bf16 %v421
        %v1734 = vunpack.c.l.s8.bf16 %v422
        %v1735 = vunpack.c.l.s8.bf16 %v423
        %v1736 = vunpack.c.l.s8.bf16 %v424
        %v1737 = vunpack.c.l.s8.bf16 %v425
        %v1738 = vunpack.c.l.s8.bf16 %v426
        %v1739 = vunpack.c.h.s8.bf16 %v419
        %v1740 = vunpack.c.h.s8.bf16 %v420
        %v1741 = vunpack.c.h.s8.bf16 %v421
        %v1742 = vunpack.c.h.s8.bf16 %v422
        %v1743 = vunpack.c.h.s8.bf16 %v423
        %v1744 = vunpack.c.h.s8.bf16 %v424
        %v1745 = vunpack.c.h.s8.bf16 %v425
        %v1746 = vunpack.c.h.s8.bf16 %v426
        %v1747 = vunpack.c.l.s8.bf16 %v427
        %v1748 = vunpack.c.l.s8.bf16 %v428
        %v1749 = vunpack.c.l.s8.bf16 %v429
        %v1750 = vunpack.c.l.s8.bf16 %v430
        %v1751 = vunpack.c.l.s8.bf16 %v431
        %v1752 = vunpack.c.l.s8.bf16 %v432
        %v1753 = vunpack.c.l.s8.bf16 %v433
        %v1754 = vunpack.c.l.s8.bf16 %v434
        %v1755 = vunpack.c.h.s8.bf16 %v427
        %v1756 = vunpack.c.h.s8.bf16 %v428
        %v1757 = vunpack.c.h.s8.bf16 %v429
        %v1758 = vunpack.c.h.s8.bf16 %v430
        %v1759 = vunpack.c.h.s8.bf16 %v431
        %v1760 = vunpack.c.h.s8.bf16 %v432
        %v1761 = vunpack.c.h.s8.bf16 %v433
        %v1762 = vunpack.c.h.s8.bf16 %v434
        %v1763 = vunpack.c.l.s8.bf16 %v435
        %v1764 = vunpack.c.l.s8.bf16 %v436
        %v1765 = vunpack.c.l.s8.bf16 %v437
        %v1766 = vunpack.c.l.s8.bf16 %v438
        %v1767 = vunpack.c.l.s8.bf16 %v439
        %v1768 = vunpack.c.l.s8.bf16 %v440
        %v1769 = vunpack.c.l.s8.bf16 %v441
        %v1770 = vunpack.c.l.s8.bf16 %v442
        %v1771 = vunpack.c.h.s8.bf16 %v435
        %v1772 = vunpack.c.h.s8.bf16 %v436
        %v1773 = vunpack.c.h.s8.bf16 %v437
        %v1774 = vunpack.c.h.s8.bf16 %v438
        %v1775 = vunpack.c.h.s8.bf16 %v439
        %v1776 = vunpack.c.h.s8.bf16 %v440
        %v1777 = vunpack.c.h.s8.bf16 %v441
        %v1778 = vunpack.c.h.s8.bf16 %v442
        %v1779 = vunpack.c.l.s8.bf16 %v443
        %v1780 = vunpack.c.l.s8.bf16 %v444
        %v1781 = vunpack.c.l.s8.bf16 %v445
        %v1782 = vunpack.c.l.s8.bf16 %v446
        %v1783 = vunpack.c.l.s8.bf16 %v447
        %v1784 = vunpack.c.l.s8.bf16 %v448
        %v1785 = vunpack.c.l.s8.bf16 %v449
        %v1786 = vunpack.c.l.s8.bf16 %v450
        %v1787 = vunpack.c.h.s8.bf16 %v443
        %v1788 = vunpack.c.h.s8.bf16 %v444
        %v1789 = vunpack.c.h.s8.bf16 %v445
        %v1790 = vunpack.c.h.s8.bf16 %v446
        %v1791 = vunpack.c.h.s8.bf16 %v447
        %v1792 = vunpack.c.h.s8.bf16 %v448
        %v1793 = vunpack.c.h.s8.bf16 %v449
        %v1794 = vunpack.c.h.s8.bf16 %v450
        %v1795 = vunpack.c.l.s8.bf16 %v451
        %v1796 = vunpack.c.l.s8.bf16 %v452
        %v1797 = vunpack.c.l.s8.bf16 %v453
        %v1798 = vunpack.c.l.s8.bf16 %v454
        %v1799 = vunpack.c.l.s8.bf16 %v455
        %v1800 = vunpack.c.l.s8.bf16 %v456
        %v1801 = vunpack.c.l.s8.bf16 %v457
        %v1802 = vunpack.c.l.s8.bf16 %v458
        %v1803 = vunpack.c.h.s8.bf16 %v451
        %v1804 = vunpack.c.h.s8.bf16 %v452
        %v1805 = vunpack.c.h.s8.bf16 %v453
        %v1806 = vunpack.c.h.s8.bf16 %v454
        %v1807 = vunpack.c.h.s8.bf16 %v455
        %v1808 = vunpack.c.h.s8.bf16 %v456
        %v1809 = vunpack.c.h.s8.bf16 %v457
        %v1810 = vunpack.c.h.s8.bf16 %v458
        %v1811 = vunpack.c.l.s8.bf16 %v459
        %v1812 = vunpack.c.l.s8.bf16 %v460
        %v1813 = vunpack.c.l.s8.bf16 %v461
        %v1814 = vunpack.c.l.s8.bf16 %v462
        %v1815 = vunpack.c.l.s8.bf16 %v463
        %v1816 = vunpack.c.l.s8.bf16 %v464
        %v1817 = vunpack.c.l.s8.bf16 %v465
        %v1818 = vunpack.c.l.s8.bf16 %v466
        %v1819 = vunpack.c.h.s8.bf16 %v459
        %v1820 = vunpack.c.h.s8.bf16 %v460
        %v1821 = vunpack.c.h.s8.bf16 %v461
        %v1822 = vunpack.c.h.s8.bf16 %v462
        %v1823 = vunpack.c.h.s8.bf16 %v463
        %v1824 = vunpack.c.h.s8.bf16 %v464
        %v1825 = vunpack.c.h.s8.bf16 %v465
        %v1826 = vunpack.c.h.s8.bf16 %v466
        %v1827 = vunpack.c.l.s8.bf16 %v467
        %v1828 = vunpack.c.l.s8.bf16 %v468
        %v1829 = vunpack.c.l.s8.bf16 %v469
        %v1830 = vunpack.c.l.s8.bf16 %v470
        %v1831 = vunpack.c.l.s8.bf16 %v471
        %v1832 = vunpack.c.l.s8.bf16 %v472
        %v1833 = vunpack.c.l.s8.bf16 %v473
        %v1834 = vunpack.c.l.s8.bf16 %v474
        %v1835 = vunpack.c.h.s8.bf16 %v467
        %v1836 = vunpack.c.h.s8.bf16 %v468
        %v1837 = vunpack.c.h.s8.bf16 %v469
        %v1838 = vunpack.c.h.s8.bf16 %v470
        %v1839 = vunpack.c.h.s8.bf16 %v471
        %v1840 = vunpack.c.h.s8.bf16 %v472
        %v1841 = vunpack.c.h.s8.bf16 %v473
        %v1842 = vunpack.c.h.s8.bf16 %v474
        %v1843 = vunpack.c.l.s8.bf16 %v475
        %v1844 = vunpack.c.l.s8.bf16 %v476
        %v1845 = vunpack.c.l.s8.bf16 %v477
        %v1846 = vunpack.c.l.s8.bf16 %v478
        %v1847 = vunpack.c.l.s8.bf16 %v479
        %v1848 = vunpack.c.l.s8.bf16 %v480
        %v1849 = vunpack.c.l.s8.bf16 %v481
        %v1850 = vunpack.c.l.s8.bf16 %v482
        %v1851 = vunpack.c.h.s8.bf16 %v475
        %v1852 = vunpack.c.h.s8.bf16 %v476
        %v1853 = vunpack.c.h.s8.bf16 %v477
        %v1854 = vunpack.c.h.s8.bf16 %v478
        %v1855 = vunpack.c.h.s8.bf16 %v479
        %v1856 = vunpack.c.h.s8.bf16 %v480
        %v1857 = vunpack.c.h.s8.bf16 %v481
        %v1858 = vunpack.c.h.s8.bf16 %v482
        %v1859 = vunpack.c.l.s8.bf16 %v483
        %v1860 = vunpack.c.l.s8.bf16 %v484
        %v1861 = vunpack.c.l.s8.bf16 %v485
        %v1862 = vunpack.c.l.s8.bf16 %v486
        %v1863 = vunpack.c.l.s8.bf16 %v487
        %v1864 = vunpack.c.l.s8.bf16 %v488
        %v1865 = vunpack.c.l.s8.bf16 %v489
        %v1866 = vunpack.c.l.s8.bf16 %v490
        %v1867 = vunpack.c.h.s8.bf16 %v483
        %v1868 = vunpack.c.h.s8.bf16 %v484
        %v1869 = vunpack.c.h.s8.bf16 %v485
        %v1870 = vunpack.c.h.s8.bf16 %v486
        %v1871 = vunpack.c.h.s8.bf16 %v487
        %v1872 = vunpack.c.h.s8.bf16 %v488
        %v1873 = vunpack.c.h.s8.bf16 %v489
        %v1874 = vunpack.c.h.s8.bf16 %v490
        %v1875 = vunpack.c.l.s8.bf16 %v491
        %v1876 = vunpack.c.l.s8.bf16 %v492
        %v1877 = vunpack.c.l.s8.bf16 %v493
        %v1878 = vunpack.c.l.s8.bf16 %v494
        %v1879 = vunpack.c.l.s8.bf16 %v495
        %v1880 = vunpack.c.l.s8.bf16 %v496
        %v1881 = vunpack.c.l.s8.bf16 %v497
        %v1882 = vunpack.c.l.s8.bf16 %v498
        %v1883 = vunpack.c.h.s8.bf16 %v491
        %v1884 = vunpack.c.h.s8.bf16 %v492
        %v1885 = vunpack.c.h.s8.bf16 %v493
        %v1886 = vunpack.c.h.s8.bf16 %v494
        %v1887 = vunpack.c.h.s8.bf16 %v495
        %v1888 = vunpack.c.h.s8.bf16 %v496
        %v1889 = vunpack.c.h.s8.bf16 %v497
        %v1890 = vunpack.c.h.s8.bf16 %v498
        %v1891 = vunpack.c.l.s8.bf16 %v499
        %v1892 = vunpack.c.l.s8.bf16 %v500
        %v1893 = vunpack.c.l.s8.bf16 %v501
        %v1894 = vunpack.c.l.s8.bf16 %v502
        %v1895 = vunpack.c.l.s8.bf16 %v503
        %v1896 = vunpack.c.l.s8.bf16 %v504
        %v1897 = vunpack.c.l.s8.bf16 %v505
        %v1898 = vunpack.c.l.s8.bf16 %v506
        %v1899 = vunpack.c.h.s8.bf16 %v499
        %v1900 = vunpack.c.h.s8.bf16 %v500
        %v1901 = vunpack.c.h.s8.bf16 %v501
        %v1902 = vunpack.c.h.s8.bf16 %v502
        %v1903 = vunpack.c.h.s8.bf16 %v503
        %v1904 = vunpack.c.h.s8.bf16 %v504
        %v1905 = vunpack.c.h.s8.bf16 %v505
        %v1906 = vunpack.c.h.s8.bf16 %v506
        %v1907 = vunpack.c.l.s8.bf16 %v507
        %v1908 = vunpack.c.l.s8.bf16 %v508
        %v1909 = vunpack.c.l.s8.bf16 %v509
        %v1910 = vunpack.c.l.s8.bf16 %v510
        %v1911 = vunpack.c.l.s8.bf16 %v511
        %v1912 = vunpack.c.l.s8.bf16 %v512
        %v1913 = vunpack.c.l.s8.bf16 %v513
        %v1914 = vunpack.c.l.s8.bf16 %v514
        %v1915 = vunpack.c.h.s8.bf16 %v507
        %v1916 = vunpack.c.h.s8.bf16 %v508
        %v1917 = vunpack.c.h.s8.bf16 %v509
        %v1918 = vunpack.c.h.s8.bf16 %v510
        %v1919 = vunpack.c.h.s8.bf16 %v511
        %v1920 = vunpack.c.h.s8.bf16 %v512
        %v1921 = vunpack.c.h.s8.bf16 %v513
        %v1922 = vunpack.c.h.s8.bf16 %v514
        %v1923 = vunpack.c.l.s8.bf16 %v515
        %v1924 = vunpack.c.l.s8.bf16 %v516
        %v1925 = vunpack.c.l.s8.bf16 %v517
        %v1926 = vunpack.c.l.s8.bf16 %v518
        %v1927 = vunpack.c.l.s8.bf16 %v519
        %v1928 = vunpack.c.l.s8.bf16 %v520
        %v1929 = vunpack.c.l.s8.bf16 %v521
        %v1930 = vunpack.c.l.s8.bf16 %v522
        %v1931 = vunpack.c.h.s8.bf16 %v515
        %v1932 = vunpack.c.h.s8.bf16 %v516
        %v1933 = vunpack.c.h.s8.bf16 %v517
        %v1934 = vunpack.c.h.s8.bf16 %v518
        %v1935 = vunpack.c.h.s8.bf16 %v519
        %v1936 = vunpack.c.h.s8.bf16 %v520
        %v1937 = vunpack.c.h.s8.bf16 %v521
        %v1938 = vunpack.c.h.s8.bf16 %v522
        %v1939 = vunpack.c.l.s8.bf16 %v523
        %v1940 = vunpack.c.l.s8.bf16 %v524
        %v1941 = vunpack.c.l.s8.bf16 %v525
        %v1942 = vunpack.c.l.s8.bf16 %v526
        %v1943 = vunpack.c.l.s8.bf16 %v527
        %v1944 = vunpack.c.l.s8.bf16 %v528
        %v1945 = vunpack.c.l.s8.bf16 %v529
        %v1946 = vunpack.c.l.s8.bf16 %v530
        %v1947 = vunpack.c.h.s8.bf16 %v523
        %v1948 = vunpack.c.h.s8.bf16 %v524
        %v1949 = vunpack.c.h.s8.bf16 %v525
        %v1950 = vunpack.c.h.s8.bf16 %v526
        %v1951 = vunpack.c.h.s8.bf16 %v527
        %v1952 = vunpack.c.h.s8.bf16 %v528
        %v1953 = vunpack.c.h.s8.bf16 %v529
        %v1954 = vunpack.c.h.s8.bf16 %v530
        %v1955 = vunpack.c.l.s8.bf16 %v531
        %v1956 = vunpack.c.l.s8.bf16 %v532
        %v1957 = vunpack.c.l.s8.bf16 %v533
        %v1958 = vunpack.c.l.s8.bf16 %v534
        %v1959 = vunpack.c.l.s8.bf16 %v535
        %v1960 = vunpack.c.l.s8.bf16 %v536
        %v1961 = vunpack.c.l.s8.bf16 %v537
        %v1962 = vunpack.c.l.s8.bf16 %v538
        %v1963 = vunpack.c.h.s8.bf16 %v531
        %v1964 = vunpack.c.h.s8.bf16 %v532
        %v1965 = vunpack.c.h.s8.bf16 %v533
        %v1966 = vunpack.c.h.s8.bf16 %v534
        %v1967 = vunpack.c.h.s8.bf16 %v535
        %v1968 = vunpack.c.h.s8.bf16 %v536
        %v1969 = vunpack.c.h.s8.bf16 %v537
        %v1970 = vunpack.c.h.s8.bf16 %v538
        %v1971 = vunpack.c.l.s8.bf16 %v539
        %v1972 = vunpack.c.l.s8.bf16 %v540
        %v1973 = vunpack.c.l.s8.bf16 %v541
        %v1974 = vunpack.c.l.s8.bf16 %v542
        %v1975 = vunpack.c.l.s8.bf16 %v543
        %v1976 = vunpack.c.l.s8.bf16 %v544
        %v1977 = vunpack.c.l.s8.bf16 %v545
        %v1978 = vunpack.c.l.s8.bf16 %v546
        %v1979 = vunpack.c.h.s8.bf16 %v539
        %v1980 = vunpack.c.h.s8.bf16 %v540
        %v1981 = vunpack.c.h.s8.bf16 %v541
        %v1982 = vunpack.c.h.s8.bf16 %v542
        %v1983 = vunpack.c.h.s8.bf16 %v543
        %v1984 = vunpack.c.h.s8.bf16 %v544
        %v1985 = vunpack.c.h.s8.bf16 %v545
        %v1986 = vunpack.c.h.s8.bf16 %v546
        %v1987 = vunpack.c.l.s8.bf16 %v547
        %v1988 = vunpack.c.l.s8.bf16 %v548
        %v1989 = vunpack.c.l.s8.bf16 %v549
        %v1990 = vunpack.c.l.s8.bf16 %v550
        %v1991 = vunpack.c.l.s8.bf16 %v551
        %v1992 = vunpack.c.l.s8.bf16 %v552
        %v1993 = vunpack.c.l.s8.bf16 %v553
        %v1994 = vunpack.c.l.s8.bf16 %v554
        %v1995 = vunpack.c.h.s8.bf16 %v547
        %v1996 = vunpack.c.h.s8.bf16 %v548
        %v1997 = vunpack.c.h.s8.bf16 %v549
        %v1998 = vunpack.c.h.s8.bf16 %v550
        %v1999 = vunpack.c.h.s8.bf16 %v551
        %v2000 = vunpack.c.h.s8.bf16 %v552
        %v2001 = vunpack.c.h.s8.bf16 %v553
        %v2002 = vunpack.c.h.s8.bf16 %v554
        %v2003 = vunpack.c.l.s8.bf16 %v555
        %v2004 = vunpack.c.l.s8.bf16 %v556
        %v2005 = vunpack.c.l.s8.bf16 %v557
        %v2006 = vunpack.c.l.s8.bf16 %v558
        %v2007 = vunpack.c.l.s8.bf16 %v559
        %v2008 = vunpack.c.l.s8.bf16 %v560
        %v2009 = vunpack.c.l.s8.bf16 %v561
        %v2010 = vunpack.c.l.s8.bf16 %v562
        %v2011 = vunpack.c.h.s8.bf16 %v555
        %v2012 = vunpack.c.h.s8.bf16 %v556
        %v2013 = vunpack.c.h.s8.bf16 %v557
        %v2014 = vunpack.c.h.s8.bf16 %v558
        %v2015 = vunpack.c.h.s8.bf16 %v559
        %v2016 = vunpack.c.h.s8.bf16 %v560
        %v2017 = vunpack.c.h.s8.bf16 %v561
        %v2018 = vunpack.c.h.s8.bf16 %v562
        %v2019 = vunpack.c.l.s8.bf16 %v563
        %v2020 = vunpack.c.l.s8.bf16 %v564
        %v2021 = vunpack.c.l.s8.bf16 %v565
        %v2022 = vunpack.c.l.s8.bf16 %v566
        %v2023 = vunpack.c.l.s8.bf16 %v567
        %v2024 = vunpack.c.l.s8.bf16 %v568
        %v2025 = vunpack.c.l.s8.bf16 %v569
        %v2026 = vunpack.c.l.s8.bf16 %v570
        %v2027 = vunpack.c.h.s8.bf16 %v563
        %v2028 = vunpack.c.h.s8.bf16 %v564
        %v2029 = vunpack.c.h.s8.bf16 %v565
        %v2030 = vunpack.c.h.s8.bf16 %v566
        %v2031 = vunpack.c.h.s8.bf16 %v567
        %v2032 = vunpack.c.h.s8.bf16 %v568
        %v2033 = vunpack.c.h.s8.bf16 %v569
        %v2034 = vunpack.c.h.s8.bf16 %v570
        %v2035 = vunpack.c.l.s8.bf16 %v571
        %v2036 = vunpack.c.l.s8.bf16 %v572
        %v2037 = vunpack.c.l.s8.bf16 %v573
        %v2038 = vunpack.c.l.s8.bf16 %v574
        %v2039 = vunpack.c.l.s8.bf16 %v575
        %v2040 = vunpack.c.l.s8.bf16 %v576
        %v2041 = vunpack.c.l.s8.bf16 %v577
        %v2042 = vunpack.c.l.s8.bf16 %v578
        %v2043 = vunpack.c.h.s8.bf16 %v571
        %v2044 = vunpack.c.h.s8.bf16 %v572
        %v2045 = vunpack.c.h.s8.bf16 %v573
        %v2046 = vunpack.c.h.s8.bf16 %v574
        %v2047 = vunpack.c.h.s8.bf16 %v575
        %v2048 = vunpack.c.h.s8.bf16 %v576
        %v2049 = vunpack.c.h.s8.bf16 %v577
        %v2050 = vunpack.c.h.s8.bf16 %v578
        %v2051 = vunpack.c.l.s8.bf16 %v579
        %v2052 = vunpack.c.l.s8.bf16 %v580
        %v2053 = vunpack.c.l.s8.bf16 %v581
        %v2054 = vunpack.c.l.s8.bf16 %v582
        %v2055 = vunpack.c.l.s8.bf16 %v583
        %v2056 = vunpack.c.l.s8.bf16 %v584
        %v2057 = vunpack.c.l.s8.bf16 %v585
        %v2058 = vunpack.c.l.s8.bf16 %v586
        %v2059 = vunpack.c.h.s8.bf16 %v579
        %v2060 = vunpack.c.h.s8.bf16 %v580
        %v2061 = vunpack.c.h.s8.bf16 %v581
        %v2062 = vunpack.c.h.s8.bf16 %v582
        %v2063 = vunpack.c.h.s8.bf16 %v583
        %v2064 = vunpack.c.h.s8.bf16 %v584
        %v2065 = vunpack.c.h.s8.bf16 %v585
        %v2066 = vunpack.c.h.s8.bf16 %v586
        %v2067 = vunpack.c.l.s8.bf16 %v587
        %v2068 = vunpack.c.l.s8.bf16 %v588
        %v2069 = vunpack.c.l.s8.bf16 %v589
        %v2070 = vunpack.c.l.s8.bf16 %v590
        %v2071 = vunpack.c.l.s8.bf16 %v591
        %v2072 = vunpack.c.l.s8.bf16 %v592
        %v2073 = vunpack.c.l.s8.bf16 %v593
        %v2074 = vunpack.c.l.s8.bf16 %v594
        %v2075 = vunpack.c.h.s8.bf16 %v587
        %v2076 = vunpack.c.h.s8.bf16 %v588
        %v2077 = vunpack.c.h.s8.bf16 %v589
        %v2078 = vunpack.c.h.s8.bf16 %v590
        %v2079 = vunpack.c.h.s8.bf16 %v591
        %v2080 = vunpack.c.h.s8.bf16 %v592
        %v2081 = vunpack.c.h.s8.bf16 %v593
        %v2082 = vunpack.c.h.s8.bf16 %v594
        %v2083 = vunpack.c.l.s8.bf16 %v595
        %v2084 = vunpack.c.l.s8.bf16 %v596
        %v2085 = vunpack.c.l.s8.bf16 %v597
        %v2086 = vunpack.c.l.s8.bf16 %v598
        %v2087 = vunpack.c.l.s8.bf16 %v599
        %v2088 = vunpack.c.l.s8.bf16 %v600
        %v2089 = vunpack.c.l.s8.bf16 %v601
        %v2090 = vunpack.c.l.s8.bf16 %v602
        %v2091 = vunpack.c.h.s8.bf16 %v595
        %v2092 = vunpack.c.h.s8.bf16 %v596
        %v2093 = vunpack.c.h.s8.bf16 %v597
        %v2094 = vunpack.c.h.s8.bf16 %v598
        %v2095 = vunpack.c.h.s8.bf16 %v599
        %v2096 = vunpack.c.h.s8.bf16 %v600
        %v2097 = vunpack.c.h.s8.bf16 %v601
        %v2098 = vunpack.c.h.s8.bf16 %v602
        %v2099 = vunpack.c.l.s8.bf16 %v603
        %v2100 = vunpack.c.l.s8.bf16 %v604
        %v2101 = vunpack.c.l.s8.bf16 %v605
        %v2102 = vunpack.c.l.s8.bf16 %v606
        %v2103 = vunpack.c.l.s8.bf16 %v607
        %v2104 = vunpack.c.l.s8.bf16 %v608
        %v2105 = vunpack.c.l.s8.bf16 %v609
        %v2106 = vunpack.c.l.s8.bf16 %v610
        %v2107 = vunpack.c.h.s8.bf16 %v603
        %v2108 = vunpack.c.h.s8.bf16 %v604
        %v2109 = vunpack.c.h.s8.bf16 %v605
        %v2110 = vunpack.c.h.s8.bf16 %v606
        %v2111 = vunpack.c.h.s8.bf16 %v607
        %v2112 = vunpack.c.h.s8.bf16 %v608
        %v2113 = vunpack.c.h.s8.bf16 %v609
        %v2114 = vunpack.c.h.s8.bf16 %v610
        %v2115 = vunpack.c.l.s8.bf16 %v611
        %v2116 = vunpack.c.l.s8.bf16 %v612
        %v2117 = vunpack.c.l.s8.bf16 %v613
        %v2118 = vunpack.c.l.s8.bf16 %v614
        %v2119 = vunpack.c.l.s8.bf16 %v615
        %v2120 = vunpack.c.l.s8.bf16 %v616
        %v2121 = vunpack.c.l.s8.bf16 %v617
        %v2122 = vunpack.c.l.s8.bf16 %v618
        %v2123 = vunpack.c.h.s8.bf16 %v611
        %v2124 = vunpack.c.h.s8.bf16 %v612
        %v2125 = vunpack.c.h.s8.bf16 %v613
        %v2126 = vunpack.c.h.s8.bf16 %v614
        %v2127 = vunpack.c.h.s8.bf16 %v615
        %v2128 = vunpack.c.h.s8.bf16 %v616
        %v2129 = vunpack.c.h.s8.bf16 %v617
        %v2130 = vunpack.c.h.s8.bf16 %v618
        %v2131 = vunpack.c.l.s8.bf16 %v619
        %v2132 = vunpack.c.l.s8.bf16 %v620
        %v2133 = vunpack.c.l.s8.bf16 %v621
        %v2134 = vunpack.c.l.s8.bf16 %v622
        %v2135 = vunpack.c.l.s8.bf16 %v623
        %v2136 = vunpack.c.l.s8.bf16 %v624
        %v2137 = vunpack.c.l.s8.bf16 %v625
        %v2138 = vunpack.c.l.s8.bf16 %v626
        %v2139 = vunpack.c.h.s8.bf16 %v619
        %v2140 = vunpack.c.h.s8.bf16 %v620
        %v2141 = vunpack.c.h.s8.bf16 %v621
        %v2142 = vunpack.c.h.s8.bf16 %v622
        %v2143 = vunpack.c.h.s8.bf16 %v623
        %v2144 = vunpack.c.h.s8.bf16 %v624
        %v2145 = vunpack.c.h.s8.bf16 %v625
        %v2146 = vunpack.c.h.s8.bf16 %v626
        %v2147 = vunpack.c.l.s8.bf16 %v627
        %v2148 = vunpack.c.l.s8.bf16 %v628
        %v2149 = vunpack.c.l.s8.bf16 %v629
        %v2150 = vunpack.c.l.s8.bf16 %v630
        %v2151 = vunpack.c.l.s8.bf16 %v631
        %v2152 = vunpack.c.l.s8.bf16 %v632
        %v2153 = vunpack.c.l.s8.bf16 %v633
        %v2154 = vunpack.c.l.s8.bf16 %v634
        %v2155 = vunpack.c.h.s8.bf16 %v627
        %v2156 = vunpack.c.h.s8.bf16 %v628
        %v2157 = vunpack.c.h.s8.bf16 %v629
        %v2158 = vunpack.c.h.s8.bf16 %v630
        %v2159 = vunpack.c.h.s8.bf16 %v631
        %v2160 = vunpack.c.h.s8.bf16 %v632
        %v2161 = vunpack.c.h.s8.bf16 %v633
        %v2162 = vunpack.c.h.s8.bf16 %v634
        %v2163 = vunpack.c.l.s8.bf16 %v635
        %v2164 = vunpack.c.l.s8.bf16 %v636
        %v2165 = vunpack.c.l.s8.bf16 %v637
        %v2166 = vunpack.c.l.s8.bf16 %v638
        %v2167 = vunpack.c.l.s8.bf16 %v639
        %v2168 = vunpack.c.l.s8.bf16 %v640
        %v2169 = vunpack.c.l.s8.bf16 %v641
        %v2170 = vunpack.c.l.s8.bf16 %v642
        %v2171 = vunpack.c.h.s8.bf16 %v635
        %v2172 = vunpack.c.h.s8.bf16 %v636
        %v2173 = vunpack.c.h.s8.bf16 %v637
        %v2174 = vunpack.c.h.s8.bf16 %v638
        %v2175 = vunpack.c.h.s8.bf16 %v639
        %v2176 = vunpack.c.h.s8.bf16 %v640
        %v2177 = vunpack.c.h.s8.bf16 %v641
        %v2178 = vunpack.c.h.s8.bf16 %v642
        %v2179 = vunpack.c.l.s8.bf16 %v643
        %v2180 = vunpack.c.l.s8.bf16 %v644
        %v2181 = vunpack.c.l.s8.bf16 %v645
        %v2182 = vunpack.c.l.s8.bf16 %v646
        %v2183 = vunpack.c.l.s8.bf16 %v647
        %v2184 = vunpack.c.l.s8.bf16 %v648
        %v2185 = vunpack.c.l.s8.bf16 %v649
        %v2186 = vunpack.c.l.s8.bf16 %v650
        %v2187 = vunpack.c.h.s8.bf16 %v643
        %v2188 = vunpack.c.h.s8.bf16 %v644
        %v2189 = vunpack.c.h.s8.bf16 %v645
        %v2190 = vunpack.c.h.s8.bf16 %v646
        %v2191 = vunpack.c.h.s8.bf16 %v647
        %v2192 = vunpack.c.h.s8.bf16 %v648
        %v2193 = vunpack.c.h.s8.bf16 %v649
        %v2194 = vunpack.c.h.s8.bf16 %v650
        %v2195 = vunpack.c.l.s8.bf16 %v651
        %v2196 = vunpack.c.l.s8.bf16 %v652
        %v2197 = vunpack.c.l.s8.bf16 %v653
        %v2198 = vunpack.c.l.s8.bf16 %v654
        %v2199 = vunpack.c.l.s8.bf16 %v655
        %v2200 = vunpack.c.l.s8.bf16 %v656
        %v2201 = vunpack.c.l.s8.bf16 %v657
        %v2202 = vunpack.c.l.s8.bf16 %v658
        %v2203 = vunpack.c.h.s8.bf16 %v651
        %v2204 = vunpack.c.h.s8.bf16 %v652
        %v2205 = vunpack.c.h.s8.bf16 %v653
        %v2206 = vunpack.c.h.s8.bf16 %v654
        %v2207 = vunpack.c.h.s8.bf16 %v655
        %v2208 = vunpack.c.h.s8.bf16 %v656
        %v2209 = vunpack.c.h.s8.bf16 %v657
        %v2210 = vunpack.c.h.s8.bf16 %v658
        %v2211 = vunpack.c.l.s8.bf16 %v659
        %v2212 = vunpack.c.l.s8.bf16 %v660
        %v2213 = vunpack.c.l.s8.bf16 %v661
        %v2214 = vunpack.c.l.s8.bf16 %v662
        %v2215 = vunpack.c.l.s8.bf16 %v663
        %v2216 = vunpack.c.l.s8.bf16 %v664
        %v2217 = vunpack.c.l.s8.bf16 %v665
        %v2218 = vunpack.c.l.s8.bf16 %v666
        %v2219 = vunpack.c.h.s8.bf16 %v659
        %v2220 = vunpack.c.h.s8.bf16 %v660
        %v2221 = vunpack.c.h.s8.bf16 %v661
        %v2222 = vunpack.c.h.s8.bf16 %v662
        %v2223 = vunpack.c.h.s8.bf16 %v663
        %v2224 = vunpack.c.h.s8.bf16 %v664
        %v2225 = vunpack.c.h.s8.bf16 %v665
        %v2226 = vunpack.c.h.s8.bf16 %v666
        %v2227 = vunpack.c.l.s8.bf16 %v667
        %v2228 = vunpack.c.l.s8.bf16 %v668
        %v2229 = vunpack.c.l.s8.bf16 %v669
        %v2230 = vunpack.c.l.s8.bf16 %v670
        %v2231 = vunpack.c.l.s8.bf16 %v671
        %v2232 = vunpack.c.l.s8.bf16 %v672
        %v2233 = vunpack.c.l.s8.bf16 %v673
        %v2234 = vunpack.c.l.s8.bf16 %v674
        %v2235 = vunpack.c.h.s8.bf16 %v667
        %v2236 = vunpack.c.h.s8.bf16 %v668
        %v2237 = vunpack.c.h.s8.bf16 %v669
        %v2238 = vunpack.c.h.s8.bf16 %v670
        %v2239 = vunpack.c.h.s8.bf16 %v671
        %v2240 = vunpack.c.h.s8.bf16 %v672
        %v2241 = vunpack.c.h.s8.bf16 %v673
        %v2242 = vunpack.c.h.s8.bf16 %v674
        %v2243 = vunpack.c.l.s8.bf16 %v675
        %v2244 = vunpack.c.l.s8.bf16 %v676
        %v2245 = vunpack.c.l.s8.bf16 %v677
        %v2246 = vunpack.c.l.s8.bf16 %v678
        %v2247 = vunpack.c.l.s8.bf16 %v679
        %v2248 = vunpack.c.l.s8.bf16 %v680
        %v2249 = vunpack.c.l.s8.bf16 %v681
        %v2250 = vunpack.c.l.s8.bf16 %v682
        %v2251 = vunpack.c.h.s8.bf16 %v675
        %v2252 = vunpack.c.h.s8.bf16 %v676
        %v2253 = vunpack.c.h.s8.bf16 %v677
        %v2254 = vunpack.c.h.s8.bf16 %v678
        %v2255 = vunpack.c.h.s8.bf16 %v679
        %v2256 = vunpack.c.h.s8.bf16 %v680
        %v2257 = vunpack.c.h.s8.bf16 %v681
        %v2258 = vunpack.c.h.s8.bf16 %v682
        %v2259 = vunpack.c.l.s8.bf16 %v683
        %v2260 = vunpack.c.l.s8.bf16 %v684
        %v2261 = vunpack.c.l.s8.bf16 %v685
        %v2262 = vunpack.c.l.s8.bf16 %v686
        %v2263 = vunpack.c.l.s8.bf16 %v687
        %v2264 = vunpack.c.l.s8.bf16 %v688
        %v2265 = vunpack.c.l.s8.bf16 %v689
        %v2266 = vunpack.c.l.s8.bf16 %v690
        %v2267 = vunpack.c.h.s8.bf16 %v683
        %v2268 = vunpack.c.h.s8.bf16 %v684
        %v2269 = vunpack.c.h.s8.bf16 %v685
        %v2270 = vunpack.c.h.s8.bf16 %v686
        %v2271 = vunpack.c.h.s8.bf16 %v687
        %v2272 = vunpack.c.h.s8.bf16 %v688
        %v2273 = vunpack.c.h.s8.bf16 %v689
        %v2274 = vunpack.c.h.s8.bf16 %v690
        %v2275 = vunpack.c.l.s8.bf16 %v691
        %v2276 = vunpack.c.l.s8.bf16 %v692
        %v2277 = vunpack.c.l.s8.bf16 %v693
        %v2278 = vunpack.c.l.s8.bf16 %v694
        %v2279 = vunpack.c.l.s8.bf16 %v695
        %v2280 = vunpack.c.l.s8.bf16 %v696
        %v2281 = vunpack.c.l.s8.bf16 %v697
        %v2282 = vunpack.c.l.s8.bf16 %v698
        %v2283 = vunpack.c.h.s8.bf16 %v691
        %v2284 = vunpack.c.h.s8.bf16 %v692
        %v2285 = vunpack.c.h.s8.bf16 %v693
        %v2286 = vunpack.c.h.s8.bf16 %v694
        %v2287 = vunpack.c.h.s8.bf16 %v695
        %v2288 = vunpack.c.h.s8.bf16 %v696
        %v2289 = vunpack.c.h.s8.bf16 %v697
        %v2290 = vunpack.c.h.s8.bf16 %v698
        %v2291 = vunpack.c.l.s8.bf16 %v699
        %v2292 = vunpack.c.l.s8.bf16 %v700
        %v2293 = vunpack.c.l.s8.bf16 %v701
        %v2294 = vunpack.c.l.s8.bf16 %v702
        %v2295 = vunpack.c.l.s8.bf16 %v703
        %v2296 = vunpack.c.l.s8.bf16 %v704
        %v2297 = vunpack.c.l.s8.bf16 %v705
        %v2298 = vunpack.c.l.s8.bf16 %v706
        %v2299 = vunpack.c.h.s8.bf16 %v699
        %v2300 = vunpack.c.h.s8.bf16 %v700
        %v2301 = vunpack.c.h.s8.bf16 %v701
        %v2302 = vunpack.c.h.s8.bf16 %v702
        %v2303 = vunpack.c.h.s8.bf16 %v703
        %v2304 = vunpack.c.h.s8.bf16 %v704
        %v2305 = vunpack.c.h.s8.bf16 %v705
        %v2306 = vunpack.c.h.s8.bf16 %v706
        %v2307 = vunpack.c.l.s8.bf16 %v707
        %v2308 = vunpack.c.l.s8.bf16 %v708
        %v2309 = vunpack.c.l.s8.bf16 %v709
        %v2310 = vunpack.c.l.s8.bf16 %v710
        %v2311 = vunpack.c.l.s8.bf16 %v711
        %v2312 = vunpack.c.l.s8.bf16 %v712
        %v2313 = vunpack.c.l.s8.bf16 %v713
        %v2314 = vunpack.c.l.s8.bf16 %v714
        %v2315 = vunpack.c.h.s8.bf16 %v707
        %v2316 = vunpack.c.h.s8.bf16 %v708
        %v2317 = vunpack.c.h.s8.bf16 %v709
        %v2318 = vunpack.c.h.s8.bf16 %v710
        %v2319 = vunpack.c.h.s8.bf16 %v711
        %v2320 = vunpack.c.h.s8.bf16 %v712
        %v2321 = vunpack.c.h.s8.bf16 %v713
        %v2322 = vunpack.c.h.s8.bf16 %v714
        %v2323 = vunpack.c.l.s8.bf16 %v715
        %v2324 = vunpack.c.l.s8.bf16 %v716
        %v2325 = vunpack.c.l.s8.bf16 %v717
        %v2326 = vunpack.c.l.s8.bf16 %v718
        %v2327 = vunpack.c.l.s8.bf16 %v719
        %v2328 = vunpack.c.l.s8.bf16 %v720
        %v2329 = vunpack.c.l.s8.bf16 %v721
        %v2330 = vunpack.c.l.s8.bf16 %v722
        %v2331 = vunpack.c.h.s8.bf16 %v715
        %v2332 = vunpack.c.h.s8.bf16 %v716
        %v2333 = vunpack.c.h.s8.bf16 %v717
        %v2334 = vunpack.c.h.s8.bf16 %v718
        %v2335 = vunpack.c.h.s8.bf16 %v719
        %v2336 = vunpack.c.h.s8.bf16 %v720
        %v2337 = vunpack.c.h.s8.bf16 %v721
        %v2338 = vunpack.c.h.s8.bf16 %v722
        %v2339 = vunpack.c.l.s8.bf16 %v723
        %v2340 = vunpack.c.l.s8.bf16 %v724
        %v2341 = vunpack.c.l.s8.bf16 %v725
        %v2342 = vunpack.c.l.s8.bf16 %v726
        %v2343 = vunpack.c.l.s8.bf16 %v727
        %v2344 = vunpack.c.l.s8.bf16 %v728
        %v2345 = vunpack.c.l.s8.bf16 %v729
        %v2346 = vunpack.c.l.s8.bf16 %v730
        %v2347 = vunpack.c.h.s8.bf16 %v723
        %v2348 = vunpack.c.h.s8.bf16 %v724
        %v2349 = vunpack.c.h.s8.bf16 %v725
        %v2350 = vunpack.c.h.s8.bf16 %v726
        %v2351 = vunpack.c.h.s8.bf16 %v727
        %v2352 = vunpack.c.h.s8.bf16 %v728
        %v2353 = vunpack.c.h.s8.bf16 %v729
        %v2354 = vunpack.c.h.s8.bf16 %v730
        %v2355 = vunpack.c.l.s8.bf16 %v731
        %v2356 = vunpack.c.l.s8.bf16 %v732
        %v2357 = vunpack.c.l.s8.bf16 %v733
        %v2358 = vunpack.c.l.s8.bf16 %v734
        %v2359 = vunpack.c.l.s8.bf16 %v735
        %v2360 = vunpack.c.l.s8.bf16 %v736
        %v2361 = vunpack.c.l.s8.bf16 %v737
        %v2362 = vunpack.c.l.s8.bf16 %v738
        %v2363 = vunpack.c.h.s8.bf16 %v731
        %v2364 = vunpack.c.h.s8.bf16 %v732
        %v2365 = vunpack.c.h.s8.bf16 %v733
        %v2366 = vunpack.c.h.s8.bf16 %v734
        %v2367 = vunpack.c.h.s8.bf16 %v735
        %v2368 = vunpack.c.h.s8.bf16 %v736
        %v2369 = vunpack.c.h.s8.bf16 %v737
        %v2370 = vunpack.c.h.s8.bf16 %v738
        %v2371 = vunpack.c.l.s8.bf16 %v739
        %v2372 = vunpack.c.l.s8.bf16 %v740
        %v2373 = vunpack.c.l.s8.bf16 %v741
        %v2374 = vunpack.c.l.s8.bf16 %v742
        %v2375 = vunpack.c.l.s8.bf16 %v743
        %v2376 = vunpack.c.l.s8.bf16 %v744
        %v2377 = vunpack.c.l.s8.bf16 %v745
        %v2378 = vunpack.c.l.s8.bf16 %v746
        %v2379 = vunpack.c.h.s8.bf16 %v739
        %v2380 = vunpack.c.h.s8.bf16 %v740
        %v2381 = vunpack.c.h.s8.bf16 %v741
        %v2382 = vunpack.c.h.s8.bf16 %v742
        %v2383 = vunpack.c.h.s8.bf16 %v743
        %v2384 = vunpack.c.h.s8.bf16 %v744
        %v2385 = vunpack.c.h.s8.bf16 %v745
        %v2386 = vunpack.c.h.s8.bf16 %v746
        %v2387 = vunpack.c.l.s8.bf16 %v747
        %v2388 = vunpack.c.l.s8.bf16 %v748
        %v2389 = vunpack.c.l.s8.bf16 %v749
        %v2390 = vunpack.c.l.s8.bf16 %v750
        %v2391 = vunpack.c.l.s8.bf16 %v751
        %v2392 = vunpack.c.l.s8.bf16 %v752
        %v2393 = vunpack.c.l.s8.bf16 %v753
        %v2394 = vunpack.c.l.s8.bf16 %v754
        %v2395 = vunpack.c.h.s8.bf16 %v747
        %v2396 = vunpack.c.h.s8.bf16 %v748
        %v2397 = vunpack.c.h.s8.bf16 %v749
        %v2398 = vunpack.c.h.s8.bf16 %v750
        %v2399 = vunpack.c.h.s8.bf16 %v751
        %v2400 = vunpack.c.h.s8.bf16 %v752
        %v2401 = vunpack.c.h.s8.bf16 %v753
        %v2402 = vunpack.c.h.s8.bf16 %v754
        %v2403 = vunpack.c.l.s8.bf16 %v755
        %v2404 = vunpack.c.l.s8.bf16 %v756
        %v2405 = vunpack.c.l.s8.bf16 %v757
        %v2406 = vunpack.c.l.s8.bf16 %v758
        %v2407 = vunpack.c.l.s8.bf16 %v759
        %v2408 = vunpack.c.l.s8.bf16 %v760
        %v2409 = vunpack.c.l.s8.bf16 %v761
        %v2410 = vunpack.c.l.s8.bf16 %v762
        %v2411 = vunpack.c.h.s8.bf16 %v755
        %v2412 = vunpack.c.h.s8.bf16 %v756
        %v2413 = vunpack.c.h.s8.bf16 %v757
        %v2414 = vunpack.c.h.s8.bf16 %v758
        %v2415 = vunpack.c.h.s8.bf16 %v759
        %v2416 = vunpack.c.h.s8.bf16 %v760
        %v2417 = vunpack.c.h.s8.bf16 %v761
        %v2418 = vunpack.c.h.s8.bf16 %v762
        %v2419 = vunpack.c.l.s8.bf16 %v763
        %v2420 = vunpack.c.l.s8.bf16 %v764
        %v2421 = vunpack.c.l.s8.bf16 %v765
        %v2422 = vunpack.c.l.s8.bf16 %v766
        %v2423 = vunpack.c.l.s8.bf16 %v767
        %v2424 = vunpack.c.l.s8.bf16 %v768
        %v2425 = vunpack.c.l.s8.bf16 %v769
        %v2426 = vunpack.c.l.s8.bf16 %v770
        %v2427 = vunpack.c.h.s8.bf16 %v763
        %v2428 = vunpack.c.h.s8.bf16 %v764
        %v2429 = vunpack.c.h.s8.bf16 %v765
        %v2430 = vunpack.c.h.s8.bf16 %v766
        %v2431 = vunpack.c.h.s8.bf16 %v767
        %v2432 = vunpack.c.h.s8.bf16 %v768
        %v2433 = vunpack.c.h.s8.bf16 %v769
        %v2434 = vunpack.c.h.s8.bf16 %v770
        %v2435 = vunpack.c.l.s8.bf16 %v771
        %v2436 = vunpack.c.l.s8.bf16 %v772
        %v2437 = vunpack.c.l.s8.bf16 %v773
        %v2438 = vunpack.c.l.s8.bf16 %v774
        %v2439 = vunpack.c.l.s8.bf16 %v775
        %v2440 = vunpack.c.l.s8.bf16 %v776
        %v2441 = vunpack.c.l.s8.bf16 %v777
        %v2442 = vunpack.c.l.s8.bf16 %v778
        %v2443 = vunpack.c.h.s8.bf16 %v771
        %v2444 = vunpack.c.h.s8.bf16 %v772
        %v2445 = vunpack.c.h.s8.bf16 %v773
        %v2446 = vunpack.c.h.s8.bf16 %v774
        %v2447 = vunpack.c.h.s8.bf16 %v775
        %v2448 = vunpack.c.h.s8.bf16 %v776
        %v2449 = vunpack.c.h.s8.bf16 %v777
        %v2450 = vunpack.c.h.s8.bf16 %v778
        %v2451 = vunpack.c.l.s8.bf16 %v779
        %v2452 = vunpack.c.l.s8.bf16 %v780
        %v2453 = vunpack.c.l.s8.bf16 %v781
        %v2454 = vunpack.c.l.s8.bf16 %v782
        %v2455 = vunpack.c.l.s8.bf16 %v783
        %v2456 = vunpack.c.l.s8.bf16 %v784
        %v2457 = vunpack.c.l.s8.bf16 %v785
        %v2458 = vunpack.c.l.s8.bf16 %v786
        %v2459 = vunpack.c.h.s8.bf16 %v779
        %v2460 = vunpack.c.h.s8.bf16 %v780
        %v2461 = vunpack.c.h.s8.bf16 %v781
        %v2462 = vunpack.c.h.s8.bf16 %v782
        %v2463 = vunpack.c.h.s8.bf16 %v783
        %v2464 = vunpack.c.h.s8.bf16 %v784
        %v2465 = vunpack.c.h.s8.bf16 %v785
        %v2466 = vunpack.c.h.s8.bf16 %v786
        %v2467 = vunpack.c.l.s8.bf16 %v787
        %v2468 = vunpack.c.l.s8.bf16 %v788
        %v2469 = vunpack.c.l.s8.bf16 %v789
        %v2470 = vunpack.c.l.s8.bf16 %v790
        %v2471 = vunpack.c.l.s8.bf16 %v791
        %v2472 = vunpack.c.l.s8.bf16 %v792
        %v2473 = vunpack.c.l.s8.bf16 %v793
        %v2474 = vunpack.c.l.s8.bf16 %v794
        %v2475 = vunpack.c.h.s8.bf16 %v787
        %v2476 = vunpack.c.h.s8.bf16 %v788
        %v2477 = vunpack.c.h.s8.bf16 %v789
        %v2478 = vunpack.c.h.s8.bf16 %v790
        %v2479 = vunpack.c.h.s8.bf16 %v791
        %v2480 = vunpack.c.h.s8.bf16 %v792
        %v2481 = vunpack.c.h.s8.bf16 %v793
        %v2482 = vunpack.c.h.s8.bf16 %v794
        %v2483 = vunpack.c.l.s8.bf16 %v795
        %v2484 = vunpack.c.l.s8.bf16 %v796
        %v2485 = vunpack.c.l.s8.bf16 %v797
        %v2486 = vunpack.c.l.s8.bf16 %v798
        %v2487 = vunpack.c.l.s8.bf16 %v799
        %v2488 = vunpack.c.l.s8.bf16 %v800
        %v2489 = vunpack.c.l.s8.bf16 %v801
        %v2490 = vunpack.c.l.s8.bf16 %v802
        %v2491 = vunpack.c.h.s8.bf16 %v795
        %v2492 = vunpack.c.h.s8.bf16 %v796
        %v2493 = vunpack.c.h.s8.bf16 %v797
        %v2494 = vunpack.c.h.s8.bf16 %v798
        %v2495 = vunpack.c.h.s8.bf16 %v799
        %v2496 = vunpack.c.h.s8.bf16 %v800
        %v2497 = vunpack.c.h.s8.bf16 %v801
        %v2498 = vunpack.c.h.s8.bf16 %v802
        %v2499 = vunpack.c.l.s8.bf16 %v803
        %v2500 = vunpack.c.l.s8.bf16 %v804
        %v2501 = vunpack.c.l.s8.bf16 %v805
        %v2502 = vunpack.c.l.s8.bf16 %v806
        %v2503 = vunpack.c.l.s8.bf16 %v807
        %v2504 = vunpack.c.l.s8.bf16 %v808
        %v2505 = vunpack.c.l.s8.bf16 %v809
        %v2506 = vunpack.c.l.s8.bf16 %v810
        %v2507 = vunpack.c.h.s8.bf16 %v803
        %v2508 = vunpack.c.h.s8.bf16 %v804
        %v2509 = vunpack.c.h.s8.bf16 %v805
        %v2510 = vunpack.c.h.s8.bf16 %v806
        %v2511 = vunpack.c.h.s8.bf16 %v807
        %v2512 = vunpack.c.h.s8.bf16 %v808
        %v2513 = vunpack.c.h.s8.bf16 %v809
        %v2514 = vunpack.c.h.s8.bf16 %v810
        %v2515 = vunpack.c.l.s8.bf16 %v811
        %v2516 = vunpack.c.l.s8.bf16 %v812
        %v2517 = vunpack.c.l.s8.bf16 %v813
        %v2518 = vunpack.c.l.s8.bf16 %v814
        %v2519 = vunpack.c.l.s8.bf16 %v815
        %v2520 = vunpack.c.l.s8.bf16 %v816
        %v2521 = vunpack.c.l.s8.bf16 %v817
        %v2522 = vunpack.c.l.s8.bf16 %v818
        %v2523 = vunpack.c.h.s8.bf16 %v811
        %v2524 = vunpack.c.h.s8.bf16 %v812
        %v2525 = vunpack.c.h.s8.bf16 %v813
        %v2526 = vunpack.c.h.s8.bf16 %v814
        %v2527 = vunpack.c.h.s8.bf16 %v815
        %v2528 = vunpack.c.h.s8.bf16 %v816
        %v2529 = vunpack.c.h.s8.bf16 %v817
        %v2530 = vunpack.c.h.s8.bf16 %v818
        %v2531 = vunpack.c.l.s8.bf16 %v819
        %v2532 = vunpack.c.l.s8.bf16 %v820
        %v2533 = vunpack.c.l.s8.bf16 %v821
        %v2534 = vunpack.c.l.s8.bf16 %v822
        %v2535 = vunpack.c.l.s8.bf16 %v823
        %v2536 = vunpack.c.l.s8.bf16 %v824
        %v2537 = vunpack.c.l.s8.bf16 %v825
        %v2538 = vunpack.c.l.s8.bf16 %v826
        %v2539 = vunpack.c.h.s8.bf16 %v819
        %v2540 = vunpack.c.h.s8.bf16 %v820
        %v2541 = vunpack.c.h.s8.bf16 %v821
        %v2542 = vunpack.c.h.s8.bf16 %v822
        %v2543 = vunpack.c.h.s8.bf16 %v823
        %v2544 = vunpack.c.h.s8.bf16 %v824
        %v2545 = vunpack.c.h.s8.bf16 %v825
        %v2546 = vunpack.c.h.s8.bf16 %v826
        %v2547 = vunpack.c.l.s8.bf16 %v827
        %v2548 = vunpack.c.l.s8.bf16 %v828
        %v2549 = vunpack.c.l.s8.bf16 %v829
        %v2550 = vunpack.c.l.s8.bf16 %v830
        %v2551 = vunpack.c.l.s8.bf16 %v831
        %v2552 = vunpack.c.l.s8.bf16 %v832
        %v2553 = vunpack.c.l.s8.bf16 %v833
        %v2554 = vunpack.c.l.s8.bf16 %v834
        %v2555 = vunpack.c.h.s8.bf16 %v827
        %v2556 = vunpack.c.h.s8.bf16 %v828
        %v2557 = vunpack.c.h.s8.bf16 %v829
        %v2558 = vunpack.c.h.s8.bf16 %v830
        %v2559 = vunpack.c.h.s8.bf16 %v831
        %v2560 = vunpack.c.h.s8.bf16 %v832
        %v2561 = vunpack.c.h.s8.bf16 %v833
        %v2562 = vunpack.c.h.s8.bf16 %v834
        %v2563 = vunpack.c.l.s8.bf16 %v835
        %v2564 = vunpack.c.l.s8.bf16 %v836
        %v2565 = vunpack.c.l.s8.bf16 %v837
        %v2566 = vunpack.c.l.s8.bf16 %v838
        %v2567 = vunpack.c.l.s8.bf16 %v839
        %v2568 = vunpack.c.l.s8.bf16 %v840
        %v2569 = vunpack.c.l.s8.bf16 %v841
        %v2570 = vunpack.c.l.s8.bf16 %v842
        %v2571 = vunpack.c.h.s8.bf16 %v835
        %v2572 = vunpack.c.h.s8.bf16 %v836
        %v2573 = vunpack.c.h.s8.bf16 %v837
        %v2574 = vunpack.c.h.s8.bf16 %v838
        %v2575 = vunpack.c.h.s8.bf16 %v839
        %v2576 = vunpack.c.h.s8.bf16 %v840
        %v2577 = vunpack.c.h.s8.bf16 %v841
        %v2578 = vunpack.c.h.s8.bf16 %v842
        %v2579 = vunpack.c.l.s8.bf16 %v843
        %v2580 = vunpack.c.l.s8.bf16 %v844
        %v2581 = vunpack.c.l.s8.bf16 %v845
        %v2582 = vunpack.c.l.s8.bf16 %v846
        %v2583 = vunpack.c.l.s8.bf16 %v847
        %v2584 = vunpack.c.l.s8.bf16 %v848
        %v2585 = vunpack.c.l.s8.bf16 %v849
        %v2586 = vunpack.c.l.s8.bf16 %v850
        %v2587 = vunpack.c.h.s8.bf16 %v843
        %v2588 = vunpack.c.h.s8.bf16 %v844
        %v2589 = vunpack.c.h.s8.bf16 %v845
        %v2590 = vunpack.c.h.s8.bf16 %v846
        %v2591 = vunpack.c.h.s8.bf16 %v847
        %v2592 = vunpack.c.h.s8.bf16 %v848
        %v2593 = vunpack.c.h.s8.bf16 %v849
        %v2594 = vunpack.c.h.s8.bf16 %v850
        %v2595 = vunpack.c.l.s8.bf16 %v851
        %v2596 = vunpack.c.l.s8.bf16 %v852
        %v2597 = vunpack.c.l.s8.bf16 %v853
        %v2598 = vunpack.c.l.s8.bf16 %v854
        %v2599 = vunpack.c.l.s8.bf16 %v855
        %v2600 = vunpack.c.l.s8.bf16 %v856
        %v2601 = vunpack.c.l.s8.bf16 %v857
        %v2602 = vunpack.c.l.s8.bf16 %v858
        %v2603 = vunpack.c.h.s8.bf16 %v851
        %v2604 = vunpack.c.h.s8.bf16 %v852
        %v2605 = vunpack.c.h.s8.bf16 %v853
        %v2606 = vunpack.c.h.s8.bf16 %v854
        %v2607 = vunpack.c.h.s8.bf16 %v855
        %v2608 = vunpack.c.h.s8.bf16 %v856
        %v2609 = vunpack.c.h.s8.bf16 %v857
        %v2610 = vunpack.c.h.s8.bf16 %v858
        %v2611 = vunpack.c.l.s8.bf16 %v859
        %v2612 = vunpack.c.l.s8.bf16 %v860
        %v2613 = vunpack.c.l.s8.bf16 %v861
        %v2614 = vunpack.c.l.s8.bf16 %v862
        %v2615 = vunpack.c.l.s8.bf16 %v863
        %v2616 = vunpack.c.l.s8.bf16 %v864
        %v2617 = vunpack.c.l.s8.bf16 %v865
        %v2618 = vunpack.c.l.s8.bf16 %v866
        %v2619 = vunpack.c.h.s8.bf16 %v859
        %v2620 = vunpack.c.h.s8.bf16 %v860
        %v2621 = vunpack.c.h.s8.bf16 %v861
        %v2622 = vunpack.c.h.s8.bf16 %v862
        %v2623 = vunpack.c.h.s8.bf16 %v863
        %v2624 = vunpack.c.h.s8.bf16 %v864
        %v2625 = vunpack.c.h.s8.bf16 %v865
        %v2626 = vunpack.c.h.s8.bf16 %v866
        %v2627 = vunpack.c.l.s8.bf16 %v867
        %v2628 = vunpack.c.l.s8.bf16 %v868
        %v2629 = vunpack.c.l.s8.bf16 %v869
        %v2630 = vunpack.c.l.s8.bf16 %v870
        %v2631 = vunpack.c.l.s8.bf16 %v871
        %v2632 = vunpack.c.l.s8.bf16 %v872
        %v2633 = vunpack.c.l.s8.bf16 %v873
        %v2634 = vunpack.c.l.s8.bf16 %v874
        %v2635 = vunpack.c.h.s8.bf16 %v867
        %v2636 = vunpack.c.h.s8.bf16 %v868
        %v2637 = vunpack.c.h.s8.bf16 %v869
        %v2638 = vunpack.c.h.s8.bf16 %v870
        %v2639 = vunpack.c.h.s8.bf16 %v871
        %v2640 = vunpack.c.h.s8.bf16 %v872
        %v2641 = vunpack.c.h.s8.bf16 %v873
        %v2642 = vunpack.c.h.s8.bf16 %v874
        %v2643 = vunpack.c.l.s8.bf16 %v875
        %v2644 = vunpack.c.l.s8.bf16 %v876
        %v2645 = vunpack.c.l.s8.bf16 %v877
        %v2646 = vunpack.c.l.s8.bf16 %v878
        %v2647 = vunpack.c.l.s8.bf16 %v879
        %v2648 = vunpack.c.l.s8.bf16 %v880
        %v2649 = vunpack.c.l.s8.bf16 %v881
        %v2650 = vunpack.c.l.s8.bf16 %v882
        %v2651 = vunpack.c.h.s8.bf16 %v875
        %v2652 = vunpack.c.h.s8.bf16 %v876
        %v2653 = vunpack.c.h.s8.bf16 %v877
        %v2654 = vunpack.c.h.s8.bf16 %v878
        %v2655 = vunpack.c.h.s8.bf16 %v879
        %v2656 = vunpack.c.h.s8.bf16 %v880
        %v2657 = vunpack.c.h.s8.bf16 %v881
        %v2658 = vunpack.c.h.s8.bf16 %v882
        %v2659 = vunpack.c.l.s8.bf16 %v883
        %v2660 = vunpack.c.l.s8.bf16 %v884
        %v2661 = vunpack.c.l.s8.bf16 %v885
        %v2662 = vunpack.c.l.s8.bf16 %v886
        %v2663 = vunpack.c.l.s8.bf16 %v887
        %v2664 = vunpack.c.l.s8.bf16 %v888
        %v2665 = vunpack.c.l.s8.bf16 %v889
        %v2666 = vunpack.c.l.s8.bf16 %v890
        %v2667 = vunpack.c.h.s8.bf16 %v883
        %v2668 = vunpack.c.h.s8.bf16 %v884
        %v2669 = vunpack.c.h.s8.bf16 %v885
        %v2670 = vunpack.c.h.s8.bf16 %v886
        %v2671 = vunpack.c.h.s8.bf16 %v887
        %v2672 = vunpack.c.h.s8.bf16 %v888
        %v2673 = vunpack.c.h.s8.bf16 %v889
        %v2674 = vunpack.c.h.s8.bf16 %v890
        %v2675 = vunpack.c.l.s8.bf16 %v891
        %v2676 = vunpack.c.l.s8.bf16 %v892
        %v2677 = vunpack.c.l.s8.bf16 %v893
        %v2678 = vunpack.c.l.s8.bf16 %v894
        %v2679 = vunpack.c.l.s8.bf16 %v895
        %v2680 = vunpack.c.l.s8.bf16 %v896
        %v2681 = vunpack.c.l.s8.bf16 %v897
        %v2682 = vunpack.c.l.s8.bf16 %v898
        %v2683 = vunpack.c.h.s8.bf16 %v891
        %v2684 = vunpack.c.h.s8.bf16 %v892
        %v2685 = vunpack.c.h.s8.bf16 %v893
        %v2686 = vunpack.c.h.s8.bf16 %v894
        %v2687 = vunpack.c.h.s8.bf16 %v895
        %v2688 = vunpack.c.h.s8.bf16 %v896
        %v2689 = vunpack.c.h.s8.bf16 %v897
        %v2690 = vunpack.c.h.s8.bf16 %v898
        %v2691 = vunpack.c.l.s8.bf16 %v899
        %v2692 = vunpack.c.l.s8.bf16 %v900
        %v2693 = vunpack.c.l.s8.bf16 %v901
        %v2694 = vunpack.c.l.s8.bf16 %v902
        %v2695 = vunpack.c.l.s8.bf16 %v903
        %v2696 = vunpack.c.l.s8.bf16 %v904
        %v2697 = vunpack.c.l.s8.bf16 %v905
        %v2698 = vunpack.c.l.s8.bf16 %v906
        %v2699 = vunpack.c.h.s8.bf16 %v899
        %v2700 = vunpack.c.h.s8.bf16 %v900
        %v2701 = vunpack.c.h.s8.bf16 %v901
        %v2702 = vunpack.c.h.s8.bf16 %v902
        %v2703 = vunpack.c.h.s8.bf16 %v903
        %v2704 = vunpack.c.h.s8.bf16 %v904
        %v2705 = vunpack.c.h.s8.bf16 %v905
        %v2706 = vunpack.c.h.s8.bf16 %v906
        %v2707 = vunpack.c.l.s8.bf16 %v907
        %v2708 = vunpack.c.l.s8.bf16 %v908
        %v2709 = vunpack.c.l.s8.bf16 %v909
        %v2710 = vunpack.c.l.s8.bf16 %v910
        %v2711 = vunpack.c.l.s8.bf16 %v911
        %v2712 = vunpack.c.l.s8.bf16 %v912
        %v2713 = vunpack.c.l.s8.bf16 %v913
        %v2714 = vunpack.c.l.s8.bf16 %v914
        %v2715 = vunpack.c.h.s8.bf16 %v907
        %v2716 = vunpack.c.h.s8.bf16 %v908
        %v2717 = vunpack.c.h.s8.bf16 %v909
        %v2718 = vunpack.c.h.s8.bf16 %v910
        %v2719 = vunpack.c.h.s8.bf16 %v911
        %v2720 = vunpack.c.h.s8.bf16 %v912
        %v2721 = vunpack.c.h.s8.bf16 %v913
        %v2722 = vunpack.c.h.s8.bf16 %v914
        %v2723 = vunpack.c.l.s8.bf16 %v915
        %v2724 = vunpack.c.l.s8.bf16 %v916
        %v2725 = vunpack.c.l.s8.bf16 %v917
        %v2726 = vunpack.c.l.s8.bf16 %v918
        %v2727 = vunpack.c.l.s8.bf16 %v919
        %v2728 = vunpack.c.l.s8.bf16 %v920
        %v2729 = vunpack.c.l.s8.bf16 %v921
        %v2730 = vunpack.c.l.s8.bf16 %v922
        %v2731 = vunpack.c.h.s8.bf16 %v915
        %v2732 = vunpack.c.h.s8.bf16 %v916
        %v2733 = vunpack.c.h.s8.bf16 %v917
        %v2734 = vunpack.c.h.s8.bf16 %v918
        %v2735 = vunpack.c.h.s8.bf16 %v919
        %v2736 = vunpack.c.h.s8.bf16 %v920
        %v2737 = vunpack.c.h.s8.bf16 %v921
        %v2738 = vunpack.c.h.s8.bf16 %v922
        %v2739 = vunpack.c.l.s8.bf16 %v923
        %v2740 = vunpack.c.l.s8.bf16 %v924
        %v2741 = vunpack.c.l.s8.bf16 %v925
        %v2742 = vunpack.c.l.s8.bf16 %v926
        %v2743 = vunpack.c.l.s8.bf16 %v927
        %v2744 = vunpack.c.l.s8.bf16 %v928
        %v2745 = vunpack.c.l.s8.bf16 %v929
        %v2746 = vunpack.c.l.s8.bf16 %v930
        %v2747 = vunpack.c.h.s8.bf16 %v923
        %v2748 = vunpack.c.h.s8.bf16 %v924
        %v2749 = vunpack.c.h.s8.bf16 %v925
        %v2750 = vunpack.c.h.s8.bf16 %v926
        %v2751 = vunpack.c.h.s8.bf16 %v927
        %v2752 = vunpack.c.h.s8.bf16 %v928
        %v2753 = vunpack.c.h.s8.bf16 %v929
        %v2754 = vunpack.c.h.s8.bf16 %v930
        %v2755 = vunpack.c.l.s8.bf16 %v931
        %v2756 = vunpack.c.l.s8.bf16 %v932
        %v2757 = vunpack.c.l.s8.bf16 %v933
        %v2758 = vunpack.c.l.s8.bf16 %v934
        %v2759 = vunpack.c.l.s8.bf16 %v935
        %v2760 = vunpack.c.l.s8.bf16 %v936
        %v2761 = vunpack.c.l.s8.bf16 %v937
        %v2762 = vunpack.c.l.s8.bf16 %v938
        %v2763 = vunpack.c.h.s8.bf16 %v931
        %v2764 = vunpack.c.h.s8.bf16 %v932
        %v2765 = vunpack.c.h.s8.bf16 %v933
        %v2766 = vunpack.c.h.s8.bf16 %v934
        %v2767 = vunpack.c.h.s8.bf16 %v935
        %v2768 = vunpack.c.h.s8.bf16 %v936
        %v2769 = vunpack.c.h.s8.bf16 %v937
        %v2770 = vunpack.c.h.s8.bf16 %v938
        %v2771 = vunpack.c.l.s8.bf16 %v939
        %v2772 = vunpack.c.l.s8.bf16 %v940
        %v2773 = vunpack.c.l.s8.bf16 %v941
        %v2774 = vunpack.c.l.s8.bf16 %v942
        %v2775 = vunpack.c.l.s8.bf16 %v943
        %v2776 = vunpack.c.l.s8.bf16 %v944
        %v2777 = vunpack.c.l.s8.bf16 %v945
        %v2778 = vunpack.c.l.s8.bf16 %v946
        %v2779 = vunpack.c.h.s8.bf16 %v939
        %v2780 = vunpack.c.h.s8.bf16 %v940
        %v2781 = vunpack.c.h.s8.bf16 %v941
        %v2782 = vunpack.c.h.s8.bf16 %v942
        %v2783 = vunpack.c.h.s8.bf16 %v943
        %v2784 = vunpack.c.h.s8.bf16 %v944
        %v2785 = vunpack.c.h.s8.bf16 %v945
        %v2786 = vunpack.c.h.s8.bf16 %v946
        %v2787 = vunpack.c.l.s8.bf16 %v947
        %v2788 = vunpack.c.l.s8.bf16 %v948
        %v2789 = vunpack.c.l.s8.bf16 %v949
        %v2790 = vunpack.c.l.s8.bf16 %v950
        %v2791 = vunpack.c.l.s8.bf16 %v951
        %v2792 = vunpack.c.l.s8.bf16 %v952
        %v2793 = vunpack.c.l.s8.bf16 %v953
        %v2794 = vunpack.c.l.s8.bf16 %v954
        %v2795 = vunpack.c.h.s8.bf16 %v947
        %v2796 = vunpack.c.h.s8.bf16 %v948
        %v2797 = vunpack.c.h.s8.bf16 %v949
        %v2798 = vunpack.c.h.s8.bf16 %v950
        %v2799 = vunpack.c.h.s8.bf16 %v951
        %v2800 = vunpack.c.h.s8.bf16 %v952
        %v2801 = vunpack.c.h.s8.bf16 %v953
        %v2802 = vunpack.c.h.s8.bf16 %v954
        %v2803 = vunpack.c.l.s8.bf16 %v955
        %v2804 = vunpack.c.l.s8.bf16 %v956
        %v2805 = vunpack.c.l.s8.bf16 %v957
        %v2806 = vunpack.c.l.s8.bf16 %v958
        %v2807 = vunpack.c.l.s8.bf16 %v959
        %v2808 = vunpack.c.l.s8.bf16 %v960
        %v2809 = vunpack.c.l.s8.bf16 %v961
        %v2810 = vunpack.c.l.s8.bf16 %v962
        %v2811 = vunpack.c.h.s8.bf16 %v955
        %v2812 = vunpack.c.h.s8.bf16 %v956
        %v2813 = vunpack.c.h.s8.bf16 %v957
        %v2814 = vunpack.c.h.s8.bf16 %v958
        %v2815 = vunpack.c.h.s8.bf16 %v959
        %v2816 = vunpack.c.h.s8.bf16 %v960
        %v2817 = vunpack.c.h.s8.bf16 %v961
        %v2818 = vunpack.c.h.s8.bf16 %v962
        %v2819 = vunpack.c.l.s8.bf16 %v963
        %v2820 = vunpack.c.l.s8.bf16 %v964
        %v2821 = vunpack.c.l.s8.bf16 %v965
        %v2822 = vunpack.c.l.s8.bf16 %v966
        %v2823 = vunpack.c.l.s8.bf16 %v967
        %v2824 = vunpack.c.l.s8.bf16 %v968
        %v2825 = vunpack.c.l.s8.bf16 %v969
        %v2826 = vunpack.c.l.s8.bf16 %v970
        %v2827 = vunpack.c.h.s8.bf16 %v963
        %v2828 = vunpack.c.h.s8.bf16 %v964
        %v2829 = vunpack.c.h.s8.bf16 %v965
        %v2830 = vunpack.c.h.s8.bf16 %v966
        %v2831 = vunpack.c.h.s8.bf16 %v967
        %v2832 = vunpack.c.h.s8.bf16 %v968
        %v2833 = vunpack.c.h.s8.bf16 %v969
        %v2834 = vunpack.c.h.s8.bf16 %v970
        %v2835 = vunpack.c.l.s8.bf16 %v971
        %v2836 = vunpack.c.l.s8.bf16 %v972
        %v2837 = vunpack.c.l.s8.bf16 %v973
        %v2838 = vunpack.c.l.s8.bf16 %v974
        %v2839 = vunpack.c.l.s8.bf16 %v975
        %v2840 = vunpack.c.l.s8.bf16 %v976
        %v2841 = vunpack.c.l.s8.bf16 %v977
        %v2842 = vunpack.c.l.s8.bf16 %v978
        %v2843 = vunpack.c.h.s8.bf16 %v971
        %v2844 = vunpack.c.h.s8.bf16 %v972
        %v2845 = vunpack.c.h.s8.bf16 %v973
        %v2846 = vunpack.c.h.s8.bf16 %v974
        %v2847 = vunpack.c.h.s8.bf16 %v975
        %v2848 = vunpack.c.h.s8.bf16 %v976
        %v2849 = vunpack.c.h.s8.bf16 %v977
        %v2850 = vunpack.c.h.s8.bf16 %v978
        %v2851 = vunpack.c.l.s8.bf16 %v979
        %v2852 = vunpack.c.l.s8.bf16 %v980
        %v2853 = vunpack.c.l.s8.bf16 %v981
        %v2854 = vunpack.c.l.s8.bf16 %v982
        %v2855 = vunpack.c.l.s8.bf16 %v983
        %v2856 = vunpack.c.l.s8.bf16 %v984
        %v2857 = vunpack.c.l.s8.bf16 %v985
        %v2858 = vunpack.c.l.s8.bf16 %v986
        %v2859 = vunpack.c.h.s8.bf16 %v979
        %v2860 = vunpack.c.h.s8.bf16 %v980
        %v2861 = vunpack.c.h.s8.bf16 %v981
        %v2862 = vunpack.c.h.s8.bf16 %v982
        %v2863 = vunpack.c.h.s8.bf16 %v983
        %v2864 = vunpack.c.h.s8.bf16 %v984
        %v2865 = vunpack.c.h.s8.bf16 %v985
        %v2866 = vunpack.c.h.s8.bf16 %v986
        %v2867 = vunpack.c.l.s8.bf16 %v987
        %v2868 = vunpack.c.l.s8.bf16 %v988
        %v2869 = vunpack.c.l.s8.bf16 %v989
        %v2870 = vunpack.c.l.s8.bf16 %v990
        %v2871 = vunpack.c.l.s8.bf16 %v991
        %v2872 = vunpack.c.l.s8.bf16 %v992
        %v2873 = vunpack.c.l.s8.bf16 %v993
        %v2874 = vunpack.c.l.s8.bf16 %v994
        %v2875 = vunpack.c.h.s8.bf16 %v987
        %v2876 = vunpack.c.h.s8.bf16 %v988
        %v2877 = vunpack.c.h.s8.bf16 %v989
        %v2878 = vunpack.c.h.s8.bf16 %v990
        %v2879 = vunpack.c.h.s8.bf16 %v991
        %v2880 = vunpack.c.h.s8.bf16 %v992
        %v2881 = vunpack.c.h.s8.bf16 %v993
        %v2882 = vunpack.c.h.s8.bf16 %v994
        %v2883 = vunpack.c.l.s8.bf16 %v995
        %v2884 = vunpack.c.l.s8.bf16 %v996
        %v2885 = vunpack.c.l.s8.bf16 %v997
        %v2886 = vunpack.c.l.s8.bf16 %v998
        %v2887 = vunpack.c.l.s8.bf16 %v999
        %v2888 = vunpack.c.l.s8.bf16 %v1000
        %v2889 = vunpack.c.l.s8.bf16 %v1001
        %v2890 = vunpack.c.l.s8.bf16 %v1002
        %v2891 = vunpack.c.h.s8.bf16 %v995
        %v2892 = vunpack.c.h.s8.bf16 %v996
        %v2893 = vunpack.c.h.s8.bf16 %v997
        %v2894 = vunpack.c.h.s8.bf16 %v998
        %v2895 = vunpack.c.h.s8.bf16 %v999
        %v2896 = vunpack.c.h.s8.bf16 %v1000
        %v2897 = vunpack.c.h.s8.bf16 %v1001
        %v2898 = vunpack.c.h.s8.bf16 %v1002
        %v2899 = vunpack.c.l.s8.bf16 %v1003
        %v2900 = vunpack.c.l.s8.bf16 %v1004
        %v2901 = vunpack.c.l.s8.bf16 %v1005
        %v2902 = vunpack.c.l.s8.bf16 %v1006
        %v2903 = vunpack.c.l.s8.bf16 %v1007
        %v2904 = vunpack.c.l.s8.bf16 %v1008
        %v2905 = vunpack.c.l.s8.bf16 %v1009
        %v2906 = vunpack.c.l.s8.bf16 %v1010
        %v2907 = vunpack.c.h.s8.bf16 %v1003
        %v2908 = vunpack.c.h.s8.bf16 %v1004
        %v2909 = vunpack.c.h.s8.bf16 %v1005
        %v2910 = vunpack.c.h.s8.bf16 %v1006
        %v2911 = vunpack.c.h.s8.bf16 %v1007
        %v2912 = vunpack.c.h.s8.bf16 %v1008
        %v2913 = vunpack.c.h.s8.bf16 %v1009
        %v2914 = vunpack.c.h.s8.bf16 %v1010
        %v2915 = vunpack.c.l.s8.bf16 %v1011
        %v2916 = vunpack.c.l.s8.bf16 %v1012
        %v2917 = vunpack.c.l.s8.bf16 %v1013
        %v2918 = vunpack.c.l.s8.bf16 %v1014
        %v2919 = vunpack.c.l.s8.bf16 %v1015
        %v2920 = vunpack.c.l.s8.bf16 %v1016
        %v2921 = vunpack.c.l.s8.bf16 %v1017
        %v2922 = vunpack.c.l.s8.bf16 %v1018
        %v2923 = vunpack.c.h.s8.bf16 %v1011
        %v2924 = vunpack.c.h.s8.bf16 %v1012
        %v2925 = vunpack.c.h.s8.bf16 %v1013
        %v2926 = vunpack.c.h.s8.bf16 %v1014
        %v2927 = vunpack.c.h.s8.bf16 %v1015
        %v2928 = vunpack.c.h.s8.bf16 %v1016
        %v2929 = vunpack.c.h.s8.bf16 %v1017
        %v2930 = vunpack.c.h.s8.bf16 %v1018
        %v2931 = vunpack.c.l.s8.bf16 %v1019
        %v2932 = vunpack.c.l.s8.bf16 %v1020
        %v2933 = vunpack.c.l.s8.bf16 %v1021
        %v2934 = vunpack.c.l.s8.bf16 %v1022
        %v2935 = vunpack.c.l.s8.bf16 %v1023
        %v2936 = vunpack.c.l.s8.bf16 %v1024
        %v2937 = vunpack.c.l.s8.bf16 %v1025
        %v2938 = vunpack.c.l.s8.bf16 %v1026
        %v2939 = vunpack.c.h.s8.bf16 %v1019
        %v2940 = vunpack.c.h.s8.bf16 %v1020
        %v2941 = vunpack.c.h.s8.bf16 %v1021
        %v2942 = vunpack.c.h.s8.bf16 %v1022
        %v2943 = vunpack.c.h.s8.bf16 %v1023
        %v2944 = vunpack.c.h.s8.bf16 %v1024
        %v2945 = vunpack.c.h.s8.bf16 %v1025
        %v2946 = vunpack.c.h.s8.bf16 %v1026
        %v2947 = vunpack.c.l.s8.bf16 %v1027
        %v2948 = vunpack.c.l.s8.bf16 %v1028
        %v2949 = vunpack.c.l.s8.bf16 %v1029
        %v2950 = vunpack.c.l.s8.bf16 %v1030
        %v2951 = vunpack.c.l.s8.bf16 %v1031
        %v2952 = vunpack.c.l.s8.bf16 %v1032
        %v2953 = vunpack.c.l.s8.bf16 %v1033
        %v2954 = vunpack.c.l.s8.bf16 %v1034
        %v2955 = vunpack.c.h.s8.bf16 %v1027
        %v2956 = vunpack.c.h.s8.bf16 %v1028
        %v2957 = vunpack.c.h.s8.bf16 %v1029
        %v2958 = vunpack.c.h.s8.bf16 %v1030
        %v2959 = vunpack.c.h.s8.bf16 %v1031
        %v2960 = vunpack.c.h.s8.bf16 %v1032
        %v2961 = vunpack.c.h.s8.bf16 %v1033
        %v2962 = vunpack.c.h.s8.bf16 %v1034
        %v2963 = vunpack.c.l.s8.bf16 %v1035
        %v2964 = vunpack.c.l.s8.bf16 %v1036
        %v2965 = vunpack.c.l.s8.bf16 %v1037
        %v2966 = vunpack.c.l.s8.bf16 %v1038
        %v2967 = vunpack.c.l.s8.bf16 %v1039
        %v2968 = vunpack.c.l.s8.bf16 %v1040
        %v2969 = vunpack.c.l.s8.bf16 %v1041
        %v2970 = vunpack.c.l.s8.bf16 %v1042
        %v2971 = vunpack.c.h.s8.bf16 %v1035
        %v2972 = vunpack.c.h.s8.bf16 %v1036
        %v2973 = vunpack.c.h.s8.bf16 %v1037
        %v2974 = vunpack.c.h.s8.bf16 %v1038
        %v2975 = vunpack.c.h.s8.bf16 %v1039
        %v2976 = vunpack.c.h.s8.bf16 %v1040
        %v2977 = vunpack.c.h.s8.bf16 %v1041
        %v2978 = vunpack.c.h.s8.bf16 %v1042
        %v2979 = vunpack.c.l.s8.bf16 %v1043
        %v2980 = vunpack.c.l.s8.bf16 %v1044
        %v2981 = vunpack.c.l.s8.bf16 %v1045
        %v2982 = vunpack.c.l.s8.bf16 %v1046
        %v2983 = vunpack.c.l.s8.bf16 %v1047
        %v2984 = vunpack.c.l.s8.bf16 %v1048
        %v2985 = vunpack.c.l.s8.bf16 %v1049
        %v2986 = vunpack.c.l.s8.bf16 %v1050
        %v2987 = vunpack.c.h.s8.bf16 %v1043
        %v2988 = vunpack.c.h.s8.bf16 %v1044
        %v2989 = vunpack.c.h.s8.bf16 %v1045
        %v2990 = vunpack.c.h.s8.bf16 %v1046
        %v2991 = vunpack.c.h.s8.bf16 %v1047
        %v2992 = vunpack.c.h.s8.bf16 %v1048
        %v2993 = vunpack.c.h.s8.bf16 %v1049
        %v2994 = vunpack.c.h.s8.bf16 %v1050
        %v2995 = vunpack.c.l.s8.bf16 %v1051
        %v2996 = vunpack.c.l.s8.bf16 %v1052
        %v2997 = vunpack.c.l.s8.bf16 %v1053
        %v2998 = vunpack.c.l.s8.bf16 %v1054
        %v2999 = vunpack.c.l.s8.bf16 %v1055
        %v3000 = vunpack.c.l.s8.bf16 %v1056
        %v3001 = vunpack.c.l.s8.bf16 %v1057
        %v3002 = vunpack.c.l.s8.bf16 %v1058
        %v3003 = vunpack.c.h.s8.bf16 %v1051
        %v3004 = vunpack.c.h.s8.bf16 %v1052
        %v3005 = vunpack.c.h.s8.bf16 %v1053
        %v3006 = vunpack.c.h.s8.bf16 %v1054
        %v3007 = vunpack.c.h.s8.bf16 %v1055
        %v3008 = vunpack.c.h.s8.bf16 %v1056
        %v3009 = vunpack.c.h.s8.bf16 %v1057
        %v3010 = vunpack.c.h.s8.bf16 %v1058
        %v3011 = vunpack.c.l.s8.bf16 %v1059
        %v3012 = vunpack.c.l.s8.bf16 %v1060
        %v3013 = vunpack.c.l.s8.bf16 %v1061
        %v3014 = vunpack.c.l.s8.bf16 %v1062
        %v3015 = vunpack.c.l.s8.bf16 %v1063
        %v3016 = vunpack.c.l.s8.bf16 %v1064
        %v3017 = vunpack.c.l.s8.bf16 %v1065
        %v3018 = vunpack.c.l.s8.bf16 %v1066
        %v3019 = vunpack.c.h.s8.bf16 %v1059
        %v3020 = vunpack.c.h.s8.bf16 %v1060
        %v3021 = vunpack.c.h.s8.bf16 %v1061
        %v3022 = vunpack.c.h.s8.bf16 %v1062
        %v3023 = vunpack.c.h.s8.bf16 %v1063
        %v3024 = vunpack.c.h.s8.bf16 %v1064
        %v3025 = vunpack.c.h.s8.bf16 %v1065
        %v3026 = vunpack.c.h.s8.bf16 %v1066
        %v3027 = vunpack.c.l.s8.bf16 %v1067
        %v3028 = vunpack.c.l.s8.bf16 %v1068
        %v3029 = vunpack.c.l.s8.bf16 %v1069
        %v3030 = vunpack.c.l.s8.bf16 %v1070
        %v3031 = vunpack.c.l.s8.bf16 %v1071
        %v3032 = vunpack.c.l.s8.bf16 %v1072
        %v3033 = vunpack.c.l.s8.bf16 %v1073
        %v3034 = vunpack.c.l.s8.bf16 %v1074
        %v3035 = vunpack.c.h.s8.bf16 %v1067
        %v3036 = vunpack.c.h.s8.bf16 %v1068
        %v3037 = vunpack.c.h.s8.bf16 %v1069
        %v3038 = vunpack.c.h.s8.bf16 %v1070
        %v3039 = vunpack.c.h.s8.bf16 %v1071
        %v3040 = vunpack.c.h.s8.bf16 %v1072
        %v3041 = vunpack.c.h.s8.bf16 %v1073
        %v3042 = vunpack.c.h.s8.bf16 %v1074
        %v3043 = vunpack.c.l.s8.bf16 %v1075
        %v3044 = vunpack.c.l.s8.bf16 %v1076
        %v3045 = vunpack.c.l.s8.bf16 %v1077
        %v3046 = vunpack.c.l.s8.bf16 %v1078
        %v3047 = vunpack.c.l.s8.bf16 %v1079
        %v3048 = vunpack.c.l.s8.bf16 %v1080
        %v3049 = vunpack.c.l.s8.bf16 %v1081
        %v3050 = vunpack.c.l.s8.bf16 %v1082
        %v3051 = vunpack.c.h.s8.bf16 %v1075
        %v3052 = vunpack.c.h.s8.bf16 %v1076
        %v3053 = vunpack.c.h.s8.bf16 %v1077
        %v3054 = vunpack.c.h.s8.bf16 %v1078
        %v3055 = vunpack.c.h.s8.bf16 %v1079
        %v3056 = vunpack.c.h.s8.bf16 %v1080
        %v3057 = vunpack.c.h.s8.bf16 %v1081
        %v3058 = vunpack.c.h.s8.bf16 %v1082
        %v3059 = vunpack.c.l.s8.bf16 %v1083
        %v3060 = vunpack.c.l.s8.bf16 %v1084
        %v3061 = vunpack.c.l.s8.bf16 %v1085
        %v3062 = vunpack.c.l.s8.bf16 %v1086
        %v3063 = vunpack.c.l.s8.bf16 %v1087
        %v3064 = vunpack.c.l.s8.bf16 %v1088
        %v3065 = vunpack.c.l.s8.bf16 %v1089
        %v3066 = vunpack.c.l.s8.bf16 %v1090
        %v3067 = vunpack.c.h.s8.bf16 %v1083
        %v3068 = vunpack.c.h.s8.bf16 %v1084
        %v3069 = vunpack.c.h.s8.bf16 %v1085
        %v3070 = vunpack.c.h.s8.bf16 %v1086
        %v3071 = vunpack.c.h.s8.bf16 %v1087
        %v3072 = vunpack.c.h.s8.bf16 %v1088
        %v3073 = vunpack.c.h.s8.bf16 %v1089
        %v3074 = vunpack.c.h.s8.bf16 %v1090
        %v3075 = vunpack.c.l.s8.bf16 %v1091
        %v3076 = vunpack.c.l.s8.bf16 %v1092
        %v3077 = vunpack.c.l.s8.bf16 %v1093
        %v3078 = vunpack.c.l.s8.bf16 %v1094
        %v3079 = vunpack.c.l.s8.bf16 %v1095
        %v3080 = vunpack.c.l.s8.bf16 %v1096
        %v3081 = vunpack.c.l.s8.bf16 %v1097
        %v3082 = vunpack.c.l.s8.bf16 %v1098
        %v3083 = vunpack.c.h.s8.bf16 %v1091
        %v3084 = vunpack.c.h.s8.bf16 %v1092
        %v3085 = vunpack.c.h.s8.bf16 %v1093
        %v3086 = vunpack.c.h.s8.bf16 %v1094
        %v3087 = vunpack.c.h.s8.bf16 %v1095
        %v3088 = vunpack.c.h.s8.bf16 %v1096
        %v3089 = vunpack.c.h.s8.bf16 %v1097
        %v3090 = vunpack.c.h.s8.bf16 %v1098
        %v3091 = vunpack.c.l.s8.bf16 %v1099
        %v3092 = vunpack.c.l.s8.bf16 %v1100
        %v3093 = vunpack.c.l.s8.bf16 %v1101
        %v3094 = vunpack.c.l.s8.bf16 %v1102
        %v3095 = vunpack.c.l.s8.bf16 %v1103
        %v3096 = vunpack.c.l.s8.bf16 %v1104
        %v3097 = vunpack.c.l.s8.bf16 %v1105
        %v3098 = vunpack.c.l.s8.bf16 %v1106
        %v3099 = vunpack.c.h.s8.bf16 %v1099
        %v3100 = vunpack.c.h.s8.bf16 %v1100
        %v3101 = vunpack.c.h.s8.bf16 %v1101
        %v3102 = vunpack.c.h.s8.bf16 %v1102
        %v3103 = vunpack.c.h.s8.bf16 %v1103
        %v3104 = vunpack.c.h.s8.bf16 %v1104
        %v3105 = vunpack.c.h.s8.bf16 %v1105
        %v3106 = vunpack.c.h.s8.bf16 %v1106
        %v3107 = vunpack.c.l.s8.bf16 %v1107
        %v3108 = vunpack.c.l.s8.bf16 %v1108
        %v3109 = vunpack.c.l.s8.bf16 %v1109
        %v3110 = vunpack.c.l.s8.bf16 %v1110
        %v3111 = vunpack.c.l.s8.bf16 %v1111
        %v3112 = vunpack.c.l.s8.bf16 %v1112
        %v3113 = vunpack.c.l.s8.bf16 %v1113
        %v3114 = vunpack.c.l.s8.bf16 %v1114
        %v3115 = vunpack.c.h.s8.bf16 %v1107
        %v3116 = vunpack.c.h.s8.bf16 %v1108
        %v3117 = vunpack.c.h.s8.bf16 %v1109
        %v3118 = vunpack.c.h.s8.bf16 %v1110
        %v3119 = vunpack.c.h.s8.bf16 %v1111
        %v3120 = vunpack.c.h.s8.bf16 %v1112
        %v3121 = vunpack.c.h.s8.bf16 %v1113
        %v3122 = vunpack.c.h.s8.bf16 %v1114
        %v3123 = vunpack.c.l.s8.bf16 %v1115
        %v3124 = vunpack.c.l.s8.bf16 %v1116
        %v3125 = vunpack.c.l.s8.bf16 %v1117
        %v3126 = vunpack.c.l.s8.bf16 %v1118
        %v3127 = vunpack.c.l.s8.bf16 %v1119
        %v3128 = vunpack.c.l.s8.bf16 %v1120
        %v3129 = vunpack.c.l.s8.bf16 %v1121
        %v3130 = vunpack.c.l.s8.bf16 %v1122
        %v3131 = vunpack.c.h.s8.bf16 %v1115
        %v3132 = vunpack.c.h.s8.bf16 %v1116
        %v3133 = vunpack.c.h.s8.bf16 %v1117
        %v3134 = vunpack.c.h.s8.bf16 %v1118
        %v3135 = vunpack.c.h.s8.bf16 %v1119
        %v3136 = vunpack.c.h.s8.bf16 %v1120
        %v3137 = vunpack.c.h.s8.bf16 %v1121
        %v3138 = vunpack.c.h.s8.bf16 %v1122
        %v3139 = vunpack.c.l.s8.bf16 %v1123
        %v3140 = vunpack.c.l.s8.bf16 %v1124
        %v3141 = vunpack.c.l.s8.bf16 %v1125
        %v3142 = vunpack.c.l.s8.bf16 %v1126
        %v3143 = vunpack.c.l.s8.bf16 %v1127
        %v3144 = vunpack.c.l.s8.bf16 %v1128
        %v3145 = vunpack.c.l.s8.bf16 %v1129
        %v3146 = vunpack.c.l.s8.bf16 %v1130
        %v3147 = vunpack.c.h.s8.bf16 %v1123
        %v3148 = vunpack.c.h.s8.bf16 %v1124
        %v3149 = vunpack.c.h.s8.bf16 %v1125
        %v3150 = vunpack.c.h.s8.bf16 %v1126
        %v3151 = vunpack.c.h.s8.bf16 %v1127
        %v3152 = vunpack.c.h.s8.bf16 %v1128
        %v3153 = vunpack.c.h.s8.bf16 %v1129
        %v3154 = vunpack.c.h.s8.bf16 %v1130
        %v3155 = vunpack.c.l.s8.bf16 %v1131
        %v3156 = vunpack.c.l.s8.bf16 %v1132
        %v3157 = vunpack.c.l.s8.bf16 %v1133
        %v3158 = vunpack.c.l.s8.bf16 %v1134
        %v3159 = vunpack.c.l.s8.bf16 %v1135
        %v3160 = vunpack.c.l.s8.bf16 %v1136
        %v3161 = vunpack.c.l.s8.bf16 %v1137
        %v3162 = vunpack.c.l.s8.bf16 %v1138
        %v3163 = vunpack.c.h.s8.bf16 %v1131
        %v3164 = vunpack.c.h.s8.bf16 %v1132
        %v3165 = vunpack.c.h.s8.bf16 %v1133
        %v3166 = vunpack.c.h.s8.bf16 %v1134
        %v3167 = vunpack.c.h.s8.bf16 %v1135
        %v3168 = vunpack.c.h.s8.bf16 %v1136
        %v3169 = vunpack.c.h.s8.bf16 %v1137
        %v3170 = vunpack.c.h.s8.bf16 %v1138
        %v3171 = vunpack.c.l.s8.bf16 %v1139
        %v3172 = vunpack.c.l.s8.bf16 %v1140
        %v3173 = vunpack.c.l.s8.bf16 %v1141
        %v3174 = vunpack.c.l.s8.bf16 %v1142
        %v3175 = vunpack.c.l.s8.bf16 %v1143
        %v3176 = vunpack.c.l.s8.bf16 %v1144
        %v3177 = vunpack.c.l.s8.bf16 %v1145
        %v3178 = vunpack.c.l.s8.bf16 %v1146
        %v3179 = vunpack.c.h.s8.bf16 %v1139
        %v3180 = vunpack.c.h.s8.bf16 %v1140
        %v3181 = vunpack.c.h.s8.bf16 %v1141
        %v3182 = vunpack.c.h.s8.bf16 %v1142
        %v3183 = vunpack.c.h.s8.bf16 %v1143
        %v3184 = vunpack.c.h.s8.bf16 %v1144
        %v3185 = vunpack.c.h.s8.bf16 %v1145
        %v3186 = vunpack.c.h.s8.bf16 %v1146
        %v3187 = vunpack.c.l.s8.bf16 %v1147
        %v3188 = vunpack.c.l.s8.bf16 %v1148
        %v3189 = vunpack.c.l.s8.bf16 %v1149
        %v3190 = vunpack.c.l.s8.bf16 %v1150
        %v3191 = vunpack.c.l.s8.bf16 %v1151
        %v3192 = vunpack.c.l.s8.bf16 %v1152
        %v3193 = vunpack.c.l.s8.bf16 %v1153
        %v3194 = vunpack.c.l.s8.bf16 %v1154
        %v3195 = vunpack.c.h.s8.bf16 %v1147
        %v3196 = vunpack.c.h.s8.bf16 %v1148
        %v3197 = vunpack.c.h.s8.bf16 %v1149
        %v3198 = vunpack.c.h.s8.bf16 %v1150
        %v3199 = vunpack.c.h.s8.bf16 %v1151
        %v3200 = vunpack.c.h.s8.bf16 %v1152
        %v3201 = vunpack.c.h.s8.bf16 %v1153
        %v3202 = vunpack.c.h.s8.bf16 %v1154
        %v3203 = vunpack.c.l.s8.bf16 %v1155
        %v3204 = vunpack.c.l.s8.bf16 %v1156
        %v3205 = vunpack.c.l.s8.bf16 %v1157
        %v3206 = vunpack.c.l.s8.bf16 %v1158
        %v3207 = vunpack.c.l.s8.bf16 %v1159
        %v3208 = vunpack.c.l.s8.bf16 %v1160
        %v3209 = vunpack.c.l.s8.bf16 %v1161
        %v3210 = vunpack.c.l.s8.bf16 %v1162
        %v3211 = vunpack.c.h.s8.bf16 %v1155
        %v3212 = vunpack.c.h.s8.bf16 %v1156
        %v3213 = vunpack.c.h.s8.bf16 %v1157
        %v3214 = vunpack.c.h.s8.bf16 %v1158
        %v3215 = vunpack.c.h.s8.bf16 %v1159
        %v3216 = vunpack.c.h.s8.bf16 %v1160
        %v3217 = vunpack.c.h.s8.bf16 %v1161
        %v3218 = vunpack.c.h.s8.bf16 %v1162
        %v3219 = vunpack.c.l.s8.bf16 %v1163
        %v3220 = vunpack.c.l.s8.bf16 %v1164
        %v3221 = vunpack.c.l.s8.bf16 %v1165
        %v3222 = vunpack.c.l.s8.bf16 %v1166
        %v3223 = vunpack.c.l.s8.bf16 %v1167
        %v3224 = vunpack.c.l.s8.bf16 %v1168
        %v3225 = vunpack.c.l.s8.bf16 %v1169
        %v3226 = vunpack.c.l.s8.bf16 %v1170
        %v3227 = vunpack.c.h.s8.bf16 %v1163
        %v3228 = vunpack.c.h.s8.bf16 %v1164
        %v3229 = vunpack.c.h.s8.bf16 %v1165
        %v3230 = vunpack.c.h.s8.bf16 %v1166
        %v3231 = vunpack.c.h.s8.bf16 %v1167
        %v3232 = vunpack.c.h.s8.bf16 %v1168
        %v3233 = vunpack.c.h.s8.bf16 %v1169
        %v3234 = vunpack.c.h.s8.bf16 %v1170
        %v3235 = vunpack.c.l.s8.bf16 %v1171
        %v3236 = vunpack.c.l.s8.bf16 %v1172
        %v3237 = vunpack.c.l.s8.bf16 %v1173
        %v3238 = vunpack.c.l.s8.bf16 %v1174
        %v3239 = vunpack.c.l.s8.bf16 %v1175
        %v3240 = vunpack.c.l.s8.bf16 %v1176
        %v3241 = vunpack.c.l.s8.bf16 %v1177
        %v3242 = vunpack.c.l.s8.bf16 %v1178
        %v3243 = vunpack.c.h.s8.bf16 %v1171
        %v3244 = vunpack.c.h.s8.bf16 %v1172
        %v3245 = vunpack.c.h.s8.bf16 %v1173
        %v3246 = vunpack.c.h.s8.bf16 %v1174
        %v3247 = vunpack.c.h.s8.bf16 %v1175
        %v3248 = vunpack.c.h.s8.bf16 %v1176
        %v3249 = vunpack.c.h.s8.bf16 %v1177
        %v3250 = vunpack.c.h.s8.bf16 %v1178
        %v3251 = vunpack.c.l.s8.bf16 %v1179
        %v3252 = vunpack.c.l.s8.bf16 %v1180
        %v3253 = vunpack.c.l.s8.bf16 %v1181
        %v3254 = vunpack.c.l.s8.bf16 %v1182
        %v3255 = vunpack.c.l.s8.bf16 %v1183
        %v3256 = vunpack.c.l.s8.bf16 %v1184
        %v3257 = vunpack.c.l.s8.bf16 %v1185
        %v3258 = vunpack.c.l.s8.bf16 %v1186
        %v3259 = vunpack.c.h.s8.bf16 %v1179
        %v3260 = vunpack.c.h.s8.bf16 %v1180
        %v3261 = vunpack.c.h.s8.bf16 %v1181
        %v3262 = vunpack.c.h.s8.bf16 %v1182
        %v3263 = vunpack.c.h.s8.bf16 %v1183
        %v3264 = vunpack.c.h.s8.bf16 %v1184
        %v3265 = vunpack.c.h.s8.bf16 %v1185
        %v3266 = vunpack.c.h.s8.bf16 %v1186
        %v3267 = vunpack.c.l.s8.bf16 %v1187
        %v3268 = vunpack.c.l.s8.bf16 %v1188
        %v3269 = vunpack.c.l.s8.bf16 %v1189
        %v3270 = vunpack.c.l.s8.bf16 %v1190
        %v3271 = vunpack.c.l.s8.bf16 %v1191
        %v3272 = vunpack.c.l.s8.bf16 %v1192
        %v3273 = vunpack.c.l.s8.bf16 %v1193
        %v3274 = vunpack.c.l.s8.bf16 %v1194
        %v3275 = vunpack.c.h.s8.bf16 %v1187
        %v3276 = vunpack.c.h.s8.bf16 %v1188
        %v3277 = vunpack.c.h.s8.bf16 %v1189
        %v3278 = vunpack.c.h.s8.bf16 %v1190
        %v3279 = vunpack.c.h.s8.bf16 %v1191
        %v3280 = vunpack.c.h.s8.bf16 %v1192
        %v3281 = vunpack.c.h.s8.bf16 %v1193
        %v3282 = vunpack.c.h.s8.bf16 %v1194
        %v3283 = vunpack.c.l.s8.bf16 %v1195
        %v3284 = vunpack.c.l.s8.bf16 %v1196
        %v3285 = vunpack.c.l.s8.bf16 %v1197
        %v3286 = vunpack.c.l.s8.bf16 %v1198
        %v3287 = vunpack.c.l.s8.bf16 %v1199
        %v3288 = vunpack.c.l.s8.bf16 %v1200
        %v3289 = vunpack.c.l.s8.bf16 %v1201
        %v3290 = vunpack.c.l.s8.bf16 %v1202
        %v3291 = vunpack.c.h.s8.bf16 %v1195
        %v3292 = vunpack.c.h.s8.bf16 %v1196
        %v3293 = vunpack.c.h.s8.bf16 %v1197
        %v3294 = vunpack.c.h.s8.bf16 %v1198
        %v3295 = vunpack.c.h.s8.bf16 %v1199
        %v3296 = vunpack.c.h.s8.bf16 %v1200
        %v3297 = vunpack.c.h.s8.bf16 %v1201
        %v3298 = vunpack.c.h.s8.bf16 %v1202
        %v3299 = vunpack.c.l.s8.bf16 %v1203
        %v3300 = vunpack.c.l.s8.bf16 %v1204
        %v3301 = vunpack.c.l.s8.bf16 %v1205
        %v3302 = vunpack.c.l.s8.bf16 %v1206
        %v3303 = vunpack.c.l.s8.bf16 %v1207
        %v3304 = vunpack.c.l.s8.bf16 %v1208
        %v3305 = vunpack.c.l.s8.bf16 %v1209
        %v3306 = vunpack.c.l.s8.bf16 %v1210
        %v3307 = vunpack.c.h.s8.bf16 %v1203
        %v3308 = vunpack.c.h.s8.bf16 %v1204
        %v3309 = vunpack.c.h.s8.bf16 %v1205
        %v3310 = vunpack.c.h.s8.bf16 %v1206
        %v3311 = vunpack.c.h.s8.bf16 %v1207
        %v3312 = vunpack.c.h.s8.bf16 %v1208
        %v3313 = vunpack.c.h.s8.bf16 %v1209
        %v3314 = vunpack.c.h.s8.bf16 %v1210
        %v3315 = vunpack.c.l.s8.bf16 %v1211
        %v3316 = vunpack.c.l.s8.bf16 %v1212
        %v3317 = vunpack.c.l.s8.bf16 %v1213
        %v3318 = vunpack.c.l.s8.bf16 %v1214
        %v3319 = vunpack.c.l.s8.bf16 %v1215
        %v3320 = vunpack.c.l.s8.bf16 %v1216
        %v3321 = vunpack.c.l.s8.bf16 %v1217
        %v3322 = vunpack.c.l.s8.bf16 %v1218
        %v3323 = vunpack.c.h.s8.bf16 %v1211
        %v3324 = vunpack.c.h.s8.bf16 %v1212
        %v3325 = vunpack.c.h.s8.bf16 %v1213
        %v3326 = vunpack.c.h.s8.bf16 %v1214
        %v3327 = vunpack.c.h.s8.bf16 %v1215
        %v3328 = vunpack.c.h.s8.bf16 %v1216
        %v3329 = vunpack.c.h.s8.bf16 %v1217
        %v3330 = vunpack.c.h.s8.bf16 %v1218
        %v3331 = vunpack.c.l.s8.bf16 %v1219
        %v3332 = vunpack.c.l.s8.bf16 %v1220
        %v3333 = vunpack.c.l.s8.bf16 %v1221
        %v3334 = vunpack.c.l.s8.bf16 %v1222
        %v3335 = vunpack.c.l.s8.bf16 %v1223
        %v3336 = vunpack.c.l.s8.bf16 %v1224
        %v3337 = vunpack.c.l.s8.bf16 %v1225
        %v3338 = vunpack.c.l.s8.bf16 %v1226
        %v3339 = vunpack.c.h.s8.bf16 %v1219
        %v3340 = vunpack.c.h.s8.bf16 %v1220
        %v3341 = vunpack.c.h.s8.bf16 %v1221
        %v3342 = vunpack.c.h.s8.bf16 %v1222
        %v3343 = vunpack.c.h.s8.bf16 %v1223
        %v3344 = vunpack.c.h.s8.bf16 %v1224
        %v3345 = vunpack.c.h.s8.bf16 %v1225
        %v3346 = vunpack.c.h.s8.bf16 %v1226
        %v3347 = vunpack.c.l.s8.bf16 %v1227
        %v3348 = vunpack.c.l.s8.bf16 %v1228
        %v3349 = vunpack.c.l.s8.bf16 %v1229
        %v3350 = vunpack.c.l.s8.bf16 %v1230
        %v3351 = vunpack.c.l.s8.bf16 %v1231
        %v3352 = vunpack.c.l.s8.bf16 %v1232
        %v3353 = vunpack.c.l.s8.bf16 %v1233
        %v3354 = vunpack.c.l.s8.bf16 %v1234
        %v3355 = vunpack.c.h.s8.bf16 %v1227
        %v3356 = vunpack.c.h.s8.bf16 %v1228
        %v3357 = vunpack.c.h.s8.bf16 %v1229
        %v3358 = vunpack.c.h.s8.bf16 %v1230
        %v3359 = vunpack.c.h.s8.bf16 %v1231
        %v3360 = vunpack.c.h.s8.bf16 %v1232
        %v3361 = vunpack.c.h.s8.bf16 %v1233
        %v3362 = vunpack.c.h.s8.bf16 %v1234
        %v3363 = vunpack.c.l.s8.bf16 %v1235
        %v3364 = vunpack.c.l.s8.bf16 %v1236
        %v3365 = vunpack.c.l.s8.bf16 %v1237
        %v3366 = vunpack.c.l.s8.bf16 %v1238
        %v3367 = vunpack.c.l.s8.bf16 %v1239
        %v3368 = vunpack.c.l.s8.bf16 %v1240
        %v3369 = vunpack.c.l.s8.bf16 %v1241
        %v3370 = vunpack.c.l.s8.bf16 %v1242
        %v3371 = vunpack.c.h.s8.bf16 %v1235
        %v3372 = vunpack.c.h.s8.bf16 %v1236
        %v3373 = vunpack.c.h.s8.bf16 %v1237
        %v3374 = vunpack.c.h.s8.bf16 %v1238
        %v3375 = vunpack.c.h.s8.bf16 %v1239
        %v3376 = vunpack.c.h.s8.bf16 %v1240
        %v3377 = vunpack.c.h.s8.bf16 %v1241
        %v3378 = vunpack.c.h.s8.bf16 %v1242
        %v3379 = vunpack.c.l.s8.bf16 %v1243
        %v3380 = vunpack.c.l.s8.bf16 %v1244
        %v3381 = vunpack.c.l.s8.bf16 %v1245
        %v3382 = vunpack.c.l.s8.bf16 %v1246
        %v3383 = vunpack.c.l.s8.bf16 %v1247
        %v3384 = vunpack.c.l.s8.bf16 %v1248
        %v3385 = vunpack.c.l.s8.bf16 %v1249
        %v3386 = vunpack.c.l.s8.bf16 %v1250
        %v3387 = vunpack.c.h.s8.bf16 %v1243
        %v3388 = vunpack.c.h.s8.bf16 %v1244
        %v3389 = vunpack.c.h.s8.bf16 %v1245
        %v3390 = vunpack.c.h.s8.bf16 %v1246
        %v3391 = vunpack.c.h.s8.bf16 %v1247
        %v3392 = vunpack.c.h.s8.bf16 %v1248
        %v3393 = vunpack.c.h.s8.bf16 %v1249
        %v3394 = vunpack.c.h.s8.bf16 %v1250
        %v3395 = vunpack.c.l.s8.bf16 %v1251
        %v3396 = vunpack.c.l.s8.bf16 %v1252
        %v3397 = vunpack.c.l.s8.bf16 %v1253
        %v3398 = vunpack.c.l.s8.bf16 %v1254
        %v3399 = vunpack.c.l.s8.bf16 %v1255
        %v3400 = vunpack.c.l.s8.bf16 %v1256
        %v3401 = vunpack.c.l.s8.bf16 %v1257
        %v3402 = vunpack.c.l.s8.bf16 %v1258
        %v3403 = vunpack.c.h.s8.bf16 %v1251
        %v3404 = vunpack.c.h.s8.bf16 %v1252
        %v3405 = vunpack.c.h.s8.bf16 %v1253
        %v3406 = vunpack.c.h.s8.bf16 %v1254
        %v3407 = vunpack.c.h.s8.bf16 %v1255
        %v3408 = vunpack.c.h.s8.bf16 %v1256
        %v3409 = vunpack.c.h.s8.bf16 %v1257
        %v3410 = vunpack.c.h.s8.bf16 %v1258
        %v3411 = vunpack.c.l.s8.bf16 %v1259
        %v3412 = vunpack.c.l.s8.bf16 %v1260
        %v3413 = vunpack.c.l.s8.bf16 %v1261
        %v3414 = vunpack.c.l.s8.bf16 %v1262
        %v3415 = vunpack.c.l.s8.bf16 %v1263
        %v3416 = vunpack.c.l.s8.bf16 %v1264
        %v3417 = vunpack.c.l.s8.bf16 %v1265
        %v3418 = vunpack.c.l.s8.bf16 %v1266
        %v3419 = vunpack.c.h.s8.bf16 %v1259
        %v3420 = vunpack.c.h.s8.bf16 %v1260
        %v3421 = vunpack.c.h.s8.bf16 %v1261
        %v3422 = vunpack.c.h.s8.bf16 %v1262
        %v3423 = vunpack.c.h.s8.bf16 %v1263
        %v3424 = vunpack.c.h.s8.bf16 %v1264
        %v3425 = vunpack.c.h.s8.bf16 %v1265
        %v3426 = vunpack.c.h.s8.bf16 %v1266
        %v3427 = vunpack.c.l.s8.bf16 %v1267
        %v3428 = vunpack.c.l.s8.bf16 %v1268
        %v3429 = vunpack.c.l.s8.bf16 %v1269
        %v3430 = vunpack.c.l.s8.bf16 %v1270
        %v3431 = vunpack.c.l.s8.bf16 %v1271
        %v3432 = vunpack.c.l.s8.bf16 %v1272
        %v3433 = vunpack.c.l.s8.bf16 %v1273
        %v3434 = vunpack.c.l.s8.bf16 %v1274
        %v3435 = vunpack.c.h.s8.bf16 %v1267
        %v3436 = vunpack.c.h.s8.bf16 %v1268
        %v3437 = vunpack.c.h.s8.bf16 %v1269
        %v3438 = vunpack.c.h.s8.bf16 %v1270
        %v3439 = vunpack.c.h.s8.bf16 %v1271
        %v3440 = vunpack.c.h.s8.bf16 %v1272
        %v3441 = vunpack.c.h.s8.bf16 %v1273
        %v3442 = vunpack.c.h.s8.bf16 %v1274
        %v3443 = vunpack.c.l.s8.bf16 %v1275
        %v3444 = vunpack.c.l.s8.bf16 %v1276
        %v3445 = vunpack.c.l.s8.bf16 %v1277
        %v3446 = vunpack.c.l.s8.bf16 %v1278
        %v3447 = vunpack.c.l.s8.bf16 %v1279
        %v3448 = vunpack.c.l.s8.bf16 %v1280
        %v3449 = vunpack.c.l.s8.bf16 %v1281
        %v3450 = vunpack.c.l.s8.bf16 %v1282
        %v3451 = vunpack.c.h.s8.bf16 %v1275
        %v3452 = vunpack.c.h.s8.bf16 %v1276
        %v3453 = vunpack.c.h.s8.bf16 %v1277
        %v3454 = vunpack.c.h.s8.bf16 %v1278
        %v3455 = vunpack.c.h.s8.bf16 %v1279
        %v3456 = vunpack.c.h.s8.bf16 %v1280
        %v3457 = vunpack.c.h.s8.bf16 %v1281
        %v3458 = vunpack.c.h.s8.bf16 %v1282
        %v3459 = vunpack.c.l.s8.bf16 %v1283
        %v3460 = vunpack.c.l.s8.bf16 %v1284
        %v3461 = vunpack.c.l.s8.bf16 %v1285
        %v3462 = vunpack.c.l.s8.bf16 %v1286
        %v3463 = vunpack.c.l.s8.bf16 %v1287
        %v3464 = vunpack.c.l.s8.bf16 %v1288
        %v3465 = vunpack.c.l.s8.bf16 %v1289
        %v3466 = vunpack.c.l.s8.bf16 %v1290
        %v3467 = vunpack.c.h.s8.bf16 %v1283
        %v3468 = vunpack.c.h.s8.bf16 %v1284
        %v3469 = vunpack.c.h.s8.bf16 %v1285
        %v3470 = vunpack.c.h.s8.bf16 %v1286
        %v3471 = vunpack.c.h.s8.bf16 %v1287
        %v3472 = vunpack.c.h.s8.bf16 %v1288
        %v3473 = vunpack.c.h.s8.bf16 %v1289
        %v3474 = vunpack.c.h.s8.bf16 %v1290
        %v3475 = vunpack.c.l.s8.bf16 %v1291
        %v3476 = vunpack.c.l.s8.bf16 %v1292
        %v3477 = vunpack.c.l.s8.bf16 %v1293
        %v3478 = vunpack.c.l.s8.bf16 %v1294
        %v3479 = vunpack.c.l.s8.bf16 %v1295
        %v3480 = vunpack.c.l.s8.bf16 %v1296
        %v3481 = vunpack.c.l.s8.bf16 %v1297
        %v3482 = vunpack.c.l.s8.bf16 %v1298
        %v3483 = vunpack.c.h.s8.bf16 %v1291
        %v3484 = vunpack.c.h.s8.bf16 %v1292
        %v3485 = vunpack.c.h.s8.bf16 %v1293
        %v3486 = vunpack.c.h.s8.bf16 %v1294
        %v3487 = vunpack.c.h.s8.bf16 %v1295
        %v3488 = vunpack.c.h.s8.bf16 %v1296
        %v3489 = vunpack.c.h.s8.bf16 %v1297
        %v3490 = vunpack.c.h.s8.bf16 %v1298
        %v3491 = vunpack.c.l.s8.bf16 %v1299
        %v3492 = vunpack.c.l.s8.bf16 %v1300
        %v3493 = vunpack.c.l.s8.bf16 %v1301
        %v3494 = vunpack.c.l.s8.bf16 %v1302
        %v3495 = vunpack.c.l.s8.bf16 %v1303
        %v3496 = vunpack.c.l.s8.bf16 %v1304
        %v3497 = vunpack.c.l.s8.bf16 %v1305
        %v3498 = vunpack.c.l.s8.bf16 %v1306
        %v3499 = vunpack.c.h.s8.bf16 %v1299
        %v3500 = vunpack.c.h.s8.bf16 %v1300
        %v3501 = vunpack.c.h.s8.bf16 %v1301
        %v3502 = vunpack.c.h.s8.bf16 %v1302
        %v3503 = vunpack.c.h.s8.bf16 %v1303
        %v3504 = vunpack.c.h.s8.bf16 %v1304
        %v3505 = vunpack.c.h.s8.bf16 %v1305
        %v3506 = vunpack.c.h.s8.bf16 %v1306
        %v3507 = vunpack.c.l.s8.bf16 %v1307
        %v3508 = vunpack.c.l.s8.bf16 %v1308
        %v3509 = vunpack.c.l.s8.bf16 %v1309
        %v3510 = vunpack.c.l.s8.bf16 %v1310
        %v3511 = vunpack.c.l.s8.bf16 %v1311
        %v3512 = vunpack.c.l.s8.bf16 %v1312
        %v3513 = vunpack.c.l.s8.bf16 %v1313
        %v3514 = vunpack.c.l.s8.bf16 %v1314
        %v3515 = vunpack.c.h.s8.bf16 %v1307
        %v3516 = vunpack.c.h.s8.bf16 %v1308
        %v3517 = vunpack.c.h.s8.bf16 %v1309
        %v3518 = vunpack.c.h.s8.bf16 %v1310
        %v3519 = vunpack.c.h.s8.bf16 %v1311
        %v3520 = vunpack.c.h.s8.bf16 %v1312
        %v3521 = vunpack.c.h.s8.bf16 %v1313
        %v3522 = vunpack.c.h.s8.bf16 %v1314
        %v3523 = vunpack.c.l.s8.bf16 %v1315
        %v3524 = vunpack.c.l.s8.bf16 %v1316
        %v3525 = vunpack.c.l.s8.bf16 %v1317
        %v3526 = vunpack.c.l.s8.bf16 %v1318
        %v3527 = vunpack.c.l.s8.bf16 %v1319
        %v3528 = vunpack.c.l.s8.bf16 %v1320
        %v3529 = vunpack.c.l.s8.bf16 %v1321
        %v3530 = vunpack.c.l.s8.bf16 %v1322
        %v3531 = vunpack.c.h.s8.bf16 %v1315
        %v3532 = vunpack.c.h.s8.bf16 %v1316
        %v3533 = vunpack.c.h.s8.bf16 %v1317
        %v3534 = vunpack.c.h.s8.bf16 %v1318
        %v3535 = vunpack.c.h.s8.bf16 %v1319
        %v3536 = vunpack.c.h.s8.bf16 %v1320
        %v3537 = vunpack.c.h.s8.bf16 %v1321
        %v3538 = vunpack.c.h.s8.bf16 %v1322
        %v3539 = vunpack.c.l.s8.bf16 %v1323
        %v3540 = vunpack.c.l.s8.bf16 %v1324
        %v3541 = vunpack.c.l.s8.bf16 %v1325
        %v3542 = vunpack.c.l.s8.bf16 %v1326
        %v3543 = vunpack.c.l.s8.bf16 %v1327
        %v3544 = vunpack.c.l.s8.bf16 %v1328
        %v3545 = vunpack.c.l.s8.bf16 %v1329
        %v3546 = vunpack.c.l.s8.bf16 %v1330
        %v3547 = vunpack.c.h.s8.bf16 %v1323
        %v3548 = vunpack.c.h.s8.bf16 %v1324
        %v3549 = vunpack.c.h.s8.bf16 %v1325
        %v3550 = vunpack.c.h.s8.bf16 %v1326
        %v3551 = vunpack.c.h.s8.bf16 %v1327
        %v3552 = vunpack.c.h.s8.bf16 %v1328
        %v3553 = vunpack.c.h.s8.bf16 %v1329
        %v3554 = vunpack.c.h.s8.bf16 %v1330
        %v3555 = vunpack.c.l.s8.bf16 %v1331
        %v3556 = vunpack.c.l.s8.bf16 %v1332
        %v3557 = vunpack.c.l.s8.bf16 %v1333
        %v3558 = vunpack.c.l.s8.bf16 %v1334
        %v3559 = vunpack.c.l.s8.bf16 %v1335
        %v3560 = vunpack.c.l.s8.bf16 %v1336
        %v3561 = vunpack.c.l.s8.bf16 %v1337
        %v3562 = vunpack.c.l.s8.bf16 %v1338
        %v3563 = vunpack.c.h.s8.bf16 %v1331
        %v3564 = vunpack.c.h.s8.bf16 %v1332
        %v3565 = vunpack.c.h.s8.bf16 %v1333
        %v3566 = vunpack.c.h.s8.bf16 %v1334
        %v3567 = vunpack.c.h.s8.bf16 %v1335
        %v3568 = vunpack.c.h.s8.bf16 %v1336
        %v3569 = vunpack.c.h.s8.bf16 %v1337
        %v3570 = vunpack.c.h.s8.bf16 %v1338
        %v3571 = vunpack.c.l.s8.bf16 %v1339
        %v3572 = vunpack.c.l.s8.bf16 %v1340
        %v3573 = vunpack.c.l.s8.bf16 %v1341
        %v3574 = vunpack.c.l.s8.bf16 %v1342
        %v3575 = vunpack.c.l.s8.bf16 %v1343
        %v3576 = vunpack.c.l.s8.bf16 %v1344
        %v3577 = vunpack.c.l.s8.bf16 %v1345
        %v3578 = vunpack.c.l.s8.bf16 %v1346
        %v3579 = vunpack.c.h.s8.bf16 %v1339
        %v3580 = vunpack.c.h.s8.bf16 %v1340
        %v3581 = vunpack.c.h.s8.bf16 %v1341
        %v3582 = vunpack.c.h.s8.bf16 %v1342
        %v3583 = vunpack.c.h.s8.bf16 %v1343
        %v3584 = vunpack.c.h.s8.bf16 %v1344
        %v3585 = vunpack.c.h.s8.bf16 %v1345
        %v3586 = vunpack.c.h.s8.bf16 %v1346
        %v3587 = vunpack.c.l.s8.bf16 %v1347
        %v3588 = vunpack.c.l.s8.bf16 %v1348
        %v3589 = vunpack.c.l.s8.bf16 %v1349
        %v3590 = vunpack.c.l.s8.bf16 %v1350
        %v3591 = vunpack.c.l.s8.bf16 %v1351
        %v3592 = vunpack.c.l.s8.bf16 %v1352
        %v3593 = vunpack.c.l.s8.bf16 %v1353
        %v3594 = vunpack.c.l.s8.bf16 %v1354
        %v3595 = vunpack.c.h.s8.bf16 %v1347
        %v3596 = vunpack.c.h.s8.bf16 %v1348
        %v3597 = vunpack.c.h.s8.bf16 %v1349
        %v3598 = vunpack.c.h.s8.bf16 %v1350
        %v3599 = vunpack.c.h.s8.bf16 %v1351
        %v3600 = vunpack.c.h.s8.bf16 %v1352
        %v3601 = vunpack.c.h.s8.bf16 %v1353
        %v3602 = vunpack.c.h.s8.bf16 %v1354
        %v3603 = vunpack.c.l.s8.bf16 %v1355
        %v3604 = vunpack.c.l.s8.bf16 %v1356
        %v3605 = vunpack.c.l.s8.bf16 %v1357
        %v3606 = vunpack.c.l.s8.bf16 %v1358
        %v3607 = vunpack.c.l.s8.bf16 %v1359
        %v3608 = vunpack.c.l.s8.bf16 %v1360
        %v3609 = vunpack.c.l.s8.bf16 %v1361
        %v3610 = vunpack.c.l.s8.bf16 %v1362
        %v3611 = vunpack.c.h.s8.bf16 %v1355
        %v3612 = vunpack.c.h.s8.bf16 %v1356
        %v3613 = vunpack.c.h.s8.bf16 %v1357
        %v3614 = vunpack.c.h.s8.bf16 %v1358
        %v3615 = vunpack.c.h.s8.bf16 %v1359
        %v3616 = vunpack.c.h.s8.bf16 %v1360
        %v3617 = vunpack.c.h.s8.bf16 %v1361
        %v3618 = vunpack.c.h.s8.bf16 %v1362
        %v3619 = vunpack.c.l.s8.bf16 %v1363
        %v3620 = vunpack.c.l.s8.bf16 %v1364
        %v3621 = vunpack.c.l.s8.bf16 %v1365
        %v3622 = vunpack.c.l.s8.bf16 %v1366
        %v3623 = vunpack.c.l.s8.bf16 %v1367
        %v3624 = vunpack.c.l.s8.bf16 %v1368
        %v3625 = vunpack.c.l.s8.bf16 %v1369
        %v3626 = vunpack.c.l.s8.bf16 %v1370
        %v3627 = vunpack.c.h.s8.bf16 %v1363
        %v3628 = vunpack.c.h.s8.bf16 %v1364
        %v3629 = vunpack.c.h.s8.bf16 %v1365
        %v3630 = vunpack.c.h.s8.bf16 %v1366
        %v3631 = vunpack.c.h.s8.bf16 %v1367
        %v3632 = vunpack.c.h.s8.bf16 %v1368
        %v3633 = vunpack.c.h.s8.bf16 %v1369
        %v3634 = vunpack.c.h.s8.bf16 %v1370
        %v3635 = vunpack.c.l.s8.bf16 %v1371
        %v3636 = vunpack.c.l.s8.bf16 %v1372
        %v3637 = vunpack.c.l.s8.bf16 %v1373
        %v3638 = vunpack.c.l.s8.bf16 %v1374
        %v3639 = vunpack.c.l.s8.bf16 %v1375
        %v3640 = vunpack.c.l.s8.bf16 %v1376
        %v3641 = vunpack.c.l.s8.bf16 %v1377
        %v3642 = vunpack.c.l.s8.bf16 %v1378
        %v3643 = vunpack.c.h.s8.bf16 %v1371
        %v3644 = vunpack.c.h.s8.bf16 %v1372
        %v3645 = vunpack.c.h.s8.bf16 %v1373
        %v3646 = vunpack.c.h.s8.bf16 %v1374
        %v3647 = vunpack.c.h.s8.bf16 %v1375
        %v3648 = vunpack.c.h.s8.bf16 %v1376
        %v3649 = vunpack.c.h.s8.bf16 %v1377
        %v3650 = vunpack.c.h.s8.bf16 %v1378
        %v3651 = vunpack.c.l.s8.bf16 %v1379
        %v3652 = vunpack.c.l.s8.bf16 %v1380
        %v3653 = vunpack.c.l.s8.bf16 %v1381
        %v3654 = vunpack.c.l.s8.bf16 %v1382
        %v3655 = vunpack.c.l.s8.bf16 %v1383
        %v3656 = vunpack.c.l.s8.bf16 %v1384
        %v3657 = vunpack.c.l.s8.bf16 %v1385
        %v3658 = vunpack.c.l.s8.bf16 %v1386
        %v3659 = vunpack.c.h.s8.bf16 %v1379
        %v3660 = vunpack.c.h.s8.bf16 %v1380
        %v3661 = vunpack.c.h.s8.bf16 %v1381
        %v3662 = vunpack.c.h.s8.bf16 %v1382
        %v3663 = vunpack.c.h.s8.bf16 %v1383
        %v3664 = vunpack.c.h.s8.bf16 %v1384
        %v3665 = vunpack.c.h.s8.bf16 %v1385
        %v3666 = vunpack.c.h.s8.bf16 %v1386
        %v3667 = vunpack.c.l.s8.bf16 %v1387
        %v3668 = vunpack.c.l.s8.bf16 %v1388
        %v3669 = vunpack.c.l.s8.bf16 %v1389
        %v3670 = vunpack.c.l.s8.bf16 %v1390
        %v3671 = vunpack.c.l.s8.bf16 %v1391
        %v3672 = vunpack.c.l.s8.bf16 %v1392
        %v3673 = vunpack.c.l.s8.bf16 %v1393
        %v3674 = vunpack.c.l.s8.bf16 %v1394
        %v3675 = vunpack.c.h.s8.bf16 %v1387
        %v3676 = vunpack.c.h.s8.bf16 %v1388
        %v3677 = vunpack.c.h.s8.bf16 %v1389
        %v3678 = vunpack.c.h.s8.bf16 %v1390
        %v3679 = vunpack.c.h.s8.bf16 %v1391
        %v3680 = vunpack.c.h.s8.bf16 %v1392
        %v3681 = vunpack.c.h.s8.bf16 %v1393
        %v3682 = vunpack.c.h.s8.bf16 %v1394
        %v3683 = vunpack.c.l.s8.bf16 %v1395
        %v3684 = vunpack.c.l.s8.bf16 %v1396
        %v3685 = vunpack.c.l.s8.bf16 %v1397
        %v3686 = vunpack.c.l.s8.bf16 %v1398
        %v3687 = vunpack.c.l.s8.bf16 %v1399
        %v3688 = vunpack.c.l.s8.bf16 %v1400
        %v3689 = vunpack.c.l.s8.bf16 %v1401
        %v3690 = vunpack.c.l.s8.bf16 %v1402
        %v3691 = vunpack.c.h.s8.bf16 %v1395
        %v3692 = vunpack.c.h.s8.bf16 %v1396
        %v3693 = vunpack.c.h.s8.bf16 %v1397
        %v3694 = vunpack.c.h.s8.bf16 %v1398
        %v3695 = vunpack.c.h.s8.bf16 %v1399
        %v3696 = vunpack.c.h.s8.bf16 %v1400
        %v3697 = vunpack.c.h.s8.bf16 %v1401
        %v3698 = vunpack.c.h.s8.bf16 %v1402
        %v3699 = vunpack.c.l.s8.bf16 %v1403
        %v3700 = vunpack.c.l.s8.bf16 %v1404
        %v3701 = vunpack.c.l.s8.bf16 %v1405
        %v3702 = vunpack.c.l.s8.bf16 %v1406
        %v3703 = vunpack.c.l.s8.bf16 %v1407
        %v3704 = vunpack.c.l.s8.bf16 %v1408
        %v3705 = vunpack.c.l.s8.bf16 %v1409
        %v3706 = vunpack.c.l.s8.bf16 %v1410
        %v3707 = vunpack.c.h.s8.bf16 %v1403
        %v3708 = vunpack.c.h.s8.bf16 %v1404
        %v3709 = vunpack.c.h.s8.bf16 %v1405
        %v3710 = vunpack.c.h.s8.bf16 %v1406
        %v3711 = vunpack.c.h.s8.bf16 %v1407
        %v3712 = vunpack.c.h.s8.bf16 %v1408
        %v3713 = vunpack.c.h.s8.bf16 %v1409
        %v3714 = vunpack.c.h.s8.bf16 %v1410
        %v3715 = vunpack.c.l.s8.bf16 %v1411
        %v3716 = vunpack.c.l.s8.bf16 %v1412
        %v3717 = vunpack.c.l.s8.bf16 %v1413
        %v3718 = vunpack.c.l.s8.bf16 %v1414
        %v3719 = vunpack.c.l.s8.bf16 %v1415
        %v3720 = vunpack.c.l.s8.bf16 %v1416
        %v3721 = vunpack.c.l.s8.bf16 %v1417
        %v3722 = vunpack.c.l.s8.bf16 %v1418
        %v3723 = vunpack.c.h.s8.bf16 %v1411
        %v3724 = vunpack.c.h.s8.bf16 %v1412
        %v3725 = vunpack.c.h.s8.bf16 %v1413
        %v3726 = vunpack.c.h.s8.bf16 %v1414
        %v3727 = vunpack.c.h.s8.bf16 %v1415
        %v3728 = vunpack.c.h.s8.bf16 %v1416
        %v3729 = vunpack.c.h.s8.bf16 %v1417
        %v3730 = vunpack.c.h.s8.bf16 %v1418
        %v3731 = vunpack.c.l.s8.bf16 %v1419
        %v3732 = vunpack.c.l.s8.bf16 %v1420
        %v3733 = vunpack.c.l.s8.bf16 %v1421
        %v3734 = vunpack.c.l.s8.bf16 %v1422
        %v3735 = vunpack.c.l.s8.bf16 %v1423
        %v3736 = vunpack.c.l.s8.bf16 %v1424
        %v3737 = vunpack.c.l.s8.bf16 %v1425
        %v3738 = vunpack.c.l.s8.bf16 %v1426
        %v3739 = vunpack.c.h.s8.bf16 %v1419
        %v3740 = vunpack.c.h.s8.bf16 %v1420
        %v3741 = vunpack.c.h.s8.bf16 %v1421
        %v3742 = vunpack.c.h.s8.bf16 %v1422
        %v3743 = vunpack.c.h.s8.bf16 %v1423
        %v3744 = vunpack.c.h.s8.bf16 %v1424
        %v3745 = vunpack.c.h.s8.bf16 %v1425
        %v3746 = vunpack.c.h.s8.bf16 %v1426
        %v3747 = vunpack.c.l.s8.bf16 %v1427
        %v3748 = vunpack.c.l.s8.bf16 %v1428
        %v3749 = vunpack.c.l.s8.bf16 %v1429
        %v3750 = vunpack.c.l.s8.bf16 %v1430
        %v3751 = vunpack.c.l.s8.bf16 %v1431
        %v3752 = vunpack.c.l.s8.bf16 %v1432
        %v3753 = vunpack.c.l.s8.bf16 %v1433
        %v3754 = vunpack.c.l.s8.bf16 %v1434
        %v3755 = vunpack.c.h.s8.bf16 %v1427
        %v3756 = vunpack.c.h.s8.bf16 %v1428
        %v3757 = vunpack.c.h.s8.bf16 %v1429
        %v3758 = vunpack.c.h.s8.bf16 %v1430
        %v3759 = vunpack.c.h.s8.bf16 %v1431
        %v3760 = vunpack.c.h.s8.bf16 %v1432
        %v3761 = vunpack.c.h.s8.bf16 %v1433
        %v3762 = vunpack.c.h.s8.bf16 %v1434
        %v3763 = vunpack.c.l.s8.bf16 %v1435
        %v3764 = vunpack.c.l.s8.bf16 %v1436
        %v3765 = vunpack.c.l.s8.bf16 %v1437
        %v3766 = vunpack.c.l.s8.bf16 %v1438
        %v3767 = vunpack.c.l.s8.bf16 %v1439
        %v3768 = vunpack.c.l.s8.bf16 %v1440
        %v3769 = vunpack.c.l.s8.bf16 %v1441
        %v3770 = vunpack.c.l.s8.bf16 %v1442
        %v3771 = vunpack.c.h.s8.bf16 %v1435
        %v3772 = vunpack.c.h.s8.bf16 %v1436
        %v3773 = vunpack.c.h.s8.bf16 %v1437
        %v3774 = vunpack.c.h.s8.bf16 %v1438
        %v3775 = vunpack.c.h.s8.bf16 %v1439
        %v3776 = vunpack.c.h.s8.bf16 %v1440
        %v3777 = vunpack.c.h.s8.bf16 %v1441
        %v3778 = vunpack.c.h.s8.bf16 %v1442
        %v3779 = vunpack.c.l.s8.bf16 %v1443
        %v3780 = vunpack.c.l.s8.bf16 %v1444
        %v3781 = vunpack.c.l.s8.bf16 %v1445
        %v3782 = vunpack.c.l.s8.bf16 %v1446
        %v3783 = vunpack.c.l.s8.bf16 %v1447
        %v3784 = vunpack.c.l.s8.bf16 %v1448
        %v3785 = vunpack.c.l.s8.bf16 %v1449
        %v3786 = vunpack.c.l.s8.bf16 %v1450
        %v3787 = vunpack.c.h.s8.bf16 %v1443
        %v3788 = vunpack.c.h.s8.bf16 %v1444
        %v3789 = vunpack.c.h.s8.bf16 %v1445
        %v3790 = vunpack.c.h.s8.bf16 %v1446
        %v3791 = vunpack.c.h.s8.bf16 %v1447
        %v3792 = vunpack.c.h.s8.bf16 %v1448
        %v3793 = vunpack.c.h.s8.bf16 %v1449
        %v3794 = vunpack.c.h.s8.bf16 %v1450
        %v3795 = vunpack.c.l.s8.bf16 %v1451
        %v3796 = vunpack.c.l.s8.bf16 %v1452
        %v3797 = vunpack.c.l.s8.bf16 %v1453
        %v3798 = vunpack.c.l.s8.bf16 %v1454
        %v3799 = vunpack.c.l.s8.bf16 %v1455
        %v3800 = vunpack.c.l.s8.bf16 %v1456
        %v3801 = vunpack.c.l.s8.bf16 %v1457
        %v3802 = vunpack.c.l.s8.bf16 %v1458
        %v3803 = vunpack.c.h.s8.bf16 %v1451
        %v3804 = vunpack.c.h.s8.bf16 %v1452
        %v3805 = vunpack.c.h.s8.bf16 %v1453
        %v3806 = vunpack.c.h.s8.bf16 %v1454
        %v3807 = vunpack.c.h.s8.bf16 %v1455
        %v3808 = vunpack.c.h.s8.bf16 %v1456
        %v3809 = vunpack.c.h.s8.bf16 %v1457
        %v3810 = vunpack.c.h.s8.bf16 %v1458
        %v3811 = vunpack.c.l.s8.bf16 %v1459
        %v3812 = vunpack.c.l.s8.bf16 %v1460
        %v3813 = vunpack.c.l.s8.bf16 %v1461
        %v3814 = vunpack.c.l.s8.bf16 %v1462
        %v3815 = vunpack.c.l.s8.bf16 %v1463
        %v3816 = vunpack.c.l.s8.bf16 %v1464
        %v3817 = vunpack.c.l.s8.bf16 %v1465
        %v3818 = vunpack.c.l.s8.bf16 %v1466
        %v3819 = vunpack.c.h.s8.bf16 %v1459
        %v3820 = vunpack.c.h.s8.bf16 %v1460
        %v3821 = vunpack.c.h.s8.bf16 %v1461
        %v3822 = vunpack.c.h.s8.bf16 %v1462
        %v3823 = vunpack.c.h.s8.bf16 %v1463
        %v3824 = vunpack.c.h.s8.bf16 %v1464
        %v3825 = vunpack.c.h.s8.bf16 %v1465
        %v3826 = vunpack.c.h.s8.bf16 %v1466
        %v3827 = vunpack.c.l.s8.bf16 %v1467
        %v3828 = vunpack.c.l.s8.bf16 %v1468
        %v3829 = vunpack.c.l.s8.bf16 %v1469
        %v3830 = vunpack.c.l.s8.bf16 %v1470
        %v3831 = vunpack.c.l.s8.bf16 %v1471
        %v3832 = vunpack.c.l.s8.bf16 %v1472
        %v3833 = vunpack.c.l.s8.bf16 %v1473
        %v3834 = vunpack.c.l.s8.bf16 %v1474
        %v3835 = vunpack.c.h.s8.bf16 %v1467
        %v3836 = vunpack.c.h.s8.bf16 %v1468
        %v3837 = vunpack.c.h.s8.bf16 %v1469
        %v3838 = vunpack.c.h.s8.bf16 %v1470
        %v3839 = vunpack.c.h.s8.bf16 %v1471
        %v3840 = vunpack.c.h.s8.bf16 %v1472
        %v3841 = vunpack.c.h.s8.bf16 %v1473
        %v3842 = vunpack.c.h.s8.bf16 %v1474
        %v3843 = vunpack.c.l.s8.bf16 %v1475
        %v3844 = vunpack.c.l.s8.bf16 %v1476
        %v3845 = vunpack.c.l.s8.bf16 %v1477
        %v3846 = vunpack.c.l.s8.bf16 %v1478
        %v3847 = vunpack.c.l.s8.bf16 %v1479
        %v3848 = vunpack.c.l.s8.bf16 %v1480
        %v3849 = vunpack.c.l.s8.bf16 %v1481
        %v3850 = vunpack.c.l.s8.bf16 %v1482
        %v3851 = vunpack.c.h.s8.bf16 %v1475
        %v3852 = vunpack.c.h.s8.bf16 %v1476
        %v3853 = vunpack.c.h.s8.bf16 %v1477
        %v3854 = vunpack.c.h.s8.bf16 %v1478
        %v3855 = vunpack.c.h.s8.bf16 %v1479
        %v3856 = vunpack.c.h.s8.bf16 %v1480
        %v3857 = vunpack.c.h.s8.bf16 %v1481
        %v3858 = vunpack.c.h.s8.bf16 %v1482
        %v3859 = vunpack.c.l.s8.bf16 %v1483
        %v3860 = vunpack.c.l.s8.bf16 %v1484
        %v3861 = vunpack.c.l.s8.bf16 %v1485
        %v3862 = vunpack.c.l.s8.bf16 %v1486
        %v3863 = vunpack.c.l.s8.bf16 %v1487
        %v3864 = vunpack.c.l.s8.bf16 %v1488
        %v3865 = vunpack.c.l.s8.bf16 %v1489
        %v3866 = vunpack.c.l.s8.bf16 %v1490
        %v3867 = vunpack.c.h.s8.bf16 %v1483
        %v3868 = vunpack.c.h.s8.bf16 %v1484
        %v3869 = vunpack.c.h.s8.bf16 %v1485
        %v3870 = vunpack.c.h.s8.bf16 %v1486
        %v3871 = vunpack.c.h.s8.bf16 %v1487
        %v3872 = vunpack.c.h.s8.bf16 %v1488
        %v3873 = vunpack.c.h.s8.bf16 %v1489
        %v3874 = vunpack.c.h.s8.bf16 %v1490
        %v3875 = vunpack.c.l.s8.bf16 %v1491
        %v3876 = vunpack.c.l.s8.bf16 %v1492
        %v3877 = vunpack.c.l.s8.bf16 %v1493
        %v3878 = vunpack.c.l.s8.bf16 %v1494
        %v3879 = vunpack.c.l.s8.bf16 %v1495
        %v3880 = vunpack.c.l.s8.bf16 %v1496
        %v3881 = vunpack.c.l.s8.bf16 %v1497
        %v3882 = vunpack.c.l.s8.bf16 %v1498
        %v3883 = vunpack.c.h.s8.bf16 %v1491
        %v3884 = vunpack.c.h.s8.bf16 %v1492
        %v3885 = vunpack.c.h.s8.bf16 %v1493
        %v3886 = vunpack.c.h.s8.bf16 %v1494
        %v3887 = vunpack.c.h.s8.bf16 %v1495
        %v3888 = vunpack.c.h.s8.bf16 %v1496
        %v3889 = vunpack.c.h.s8.bf16 %v1497
        %v3890 = vunpack.c.h.s8.bf16 %v1498
        %v3891 = vunpack.c.l.s8.bf16 %v1499
        %v3892 = vunpack.c.l.s8.bf16 %v1500
        %v3893 = vunpack.c.l.s8.bf16 %v1501
        %v3894 = vunpack.c.l.s8.bf16 %v1502
        %v3895 = vunpack.c.l.s8.bf16 %v1503
        %v3896 = vunpack.c.l.s8.bf16 %v1504
        %v3897 = vunpack.c.l.s8.bf16 %v1505
        %v3898 = vunpack.c.l.s8.bf16 %v1506
        %v3899 = vunpack.c.h.s8.bf16 %v1499
        %v3900 = vunpack.c.h.s8.bf16 %v1500
        %v3901 = vunpack.c.h.s8.bf16 %v1501
        %v3902 = vunpack.c.h.s8.bf16 %v1502
        %v3903 = vunpack.c.h.s8.bf16 %v1503
        %v3904 = vunpack.c.h.s8.bf16 %v1504
        %v3905 = vunpack.c.h.s8.bf16 %v1505
        %v3906 = vunpack.c.h.s8.bf16 %v1506
        %v3907 = vunpack.c.l.s8.bf16 %v1507
        %v3908 = vunpack.c.l.s8.bf16 %v1508
        %v3909 = vunpack.c.l.s8.bf16 %v1509
        %v3910 = vunpack.c.l.s8.bf16 %v1510
        %v3911 = vunpack.c.l.s8.bf16 %v1511
        %v3912 = vunpack.c.l.s8.bf16 %v1512
        %v3913 = vunpack.c.l.s8.bf16 %v1513
        %v3914 = vunpack.c.l.s8.bf16 %v1514
        %v3915 = vunpack.c.h.s8.bf16 %v1507
        %v3916 = vunpack.c.h.s8.bf16 %v1508
        %v3917 = vunpack.c.h.s8.bf16 %v1509
        %v3918 = vunpack.c.h.s8.bf16 %v1510
        %v3919 = vunpack.c.h.s8.bf16 %v1511
        %v3920 = vunpack.c.h.s8.bf16 %v1512
        %v3921 = vunpack.c.h.s8.bf16 %v1513
        %v3922 = vunpack.c.h.s8.bf16 %v1514
        %v3923 = vunpack.c.l.s8.bf16 %v1515
        %v3924 = vunpack.c.l.s8.bf16 %v1516
        %v3925 = vunpack.c.l.s8.bf16 %v1517
        %v3926 = vunpack.c.l.s8.bf16 %v1518
        %v3927 = vunpack.c.l.s8.bf16 %v1519
        %v3928 = vunpack.c.l.s8.bf16 %v1520
        %v3929 = vunpack.c.l.s8.bf16 %v1521
        %v3930 = vunpack.c.l.s8.bf16 %v1522
        %v3931 = vunpack.c.h.s8.bf16 %v1515
        %v3932 = vunpack.c.h.s8.bf16 %v1516
        %v3933 = vunpack.c.h.s8.bf16 %v1517
        %v3934 = vunpack.c.h.s8.bf16 %v1518
        %v3935 = vunpack.c.h.s8.bf16 %v1519
        %v3936 = vunpack.c.h.s8.bf16 %v1520
        %v3937 = vunpack.c.h.s8.bf16 %v1521
        %v3938 = vunpack.c.h.s8.bf16 %v1522
        %v3939 = vunpack.c.l.s8.bf16 %v1523
        %v3940 = vunpack.c.l.s8.bf16 %v1524
        %v3941 = vunpack.c.l.s8.bf16 %v1525
        %v3942 = vunpack.c.l.s8.bf16 %v1526
        %v3943 = vunpack.c.l.s8.bf16 %v1527
        %v3944 = vunpack.c.l.s8.bf16 %v1528
        %v3945 = vunpack.c.l.s8.bf16 %v1529
        %v3946 = vunpack.c.l.s8.bf16 %v1530
        %v3947 = vunpack.c.h.s8.bf16 %v1523
        %v3948 = vunpack.c.h.s8.bf16 %v1524
        %v3949 = vunpack.c.h.s8.bf16 %v1525
        %v3950 = vunpack.c.h.s8.bf16 %v1526
        %v3951 = vunpack.c.h.s8.bf16 %v1527
        %v3952 = vunpack.c.h.s8.bf16 %v1528
        %v3953 = vunpack.c.h.s8.bf16 %v1529
        %v3954 = vunpack.c.h.s8.bf16 %v1530
        %v3955 = vunpack.c.l.s8.bf16 %v1531
        %v3956 = vunpack.c.l.s8.bf16 %v1532
        %v3957 = vunpack.c.l.s8.bf16 %v1533
        %v3958 = vunpack.c.l.s8.bf16 %v1534
        %v3959 = vunpack.c.l.s8.bf16 %v1535
        %v3960 = vunpack.c.l.s8.bf16 %v1536
        %v3961 = vunpack.c.l.s8.bf16 %v1537
        %v3962 = vunpack.c.l.s8.bf16 %v1538
        %v3963 = vunpack.c.h.s8.bf16 %v1531
        %v3964 = vunpack.c.h.s8.bf16 %v1532
        %v3965 = vunpack.c.h.s8.bf16 %v1533
        %v3966 = vunpack.c.h.s8.bf16 %v1534
        %v3967 = vunpack.c.h.s8.bf16 %v1535
        %v3968 = vunpack.c.h.s8.bf16 %v1536
        %v3969 = vunpack.c.h.s8.bf16 %v1537
        %v3970 = vunpack.c.h.s8.bf16 %v1538
        %v3971 = vld [vmem:[#allocation2] sm:$0xff]
        %v3972 = vld [vmem:[#allocation2 + $0x8] sm:$0xff]
        %v3973 = vld [vmem:[%s307] sm:$0xff]
        %v3974 = vld [vmem:[%s307 + $0x8] sm:$0xff]
        %v3975 = vld [vmem:[%s307 + $0x10] sm:$0xff]
        %v3976 = vld [vmem:[%s307 + $0x18] sm:$0xff]
        %v3977 = vld [vmem:[%s307 + $0x20] sm:$0x3f]
        %v3983 = vcombine.high %v3973, %v3973
        %v3985 = vunpack.c.l.s4 1966171168
        %v3986 = vunpack.c.0.s8 %v3985
        %v3987 = vlaneseq
        %v3988 = vshrl.u32 %v3987, 7
        %v3989 = vsub.s32 %v3986, %v3988
        %v3990 = vrot.slane %v3973, %v3989
        %v3992 = vunpack.c.l.s4 1966171168
        %v3993 = vunpack.c.0.s8 %v3992
        %v3994 = vlaneseq
        %v3995 = vshrl.u32 %v3994, 7
        %v3996 = vsub.s32 %v3993, %v3995
        %v3997 = vrot.slane %v3983, %v3996
        %v3998 = vcombine.high %v3990, %v3990
        %v3999 = vcombine.high %v3997, %v3997
        %v4001 = vunpack.c.l.s4 1966171168
        %v4002 = vunpack.c.0.s8 %v4001
        %v4003 = vlaneseq
        %v4004 = vshrl.u32 %v4003, 7
        %v4005 = vsub.s32 %v4002, %v4004
        %v4006 = vrot.slane %v3990, %v4005
        %v4008 = vunpack.c.l.s4 1966171168
        %v4009 = vunpack.c.0.s8 %v4008
        %v4010 = vlaneseq
        %v4011 = vshrl.u32 %v4010, 7
        %v4012 = vsub.s32 %v4009, %v4011
        %v4013 = vrot.slane %v3997, %v4012
        %v4015 = vunpack.c.l.s4 1966171168
        %v4016 = vunpack.c.0.s8 %v4015
        %v4017 = vlaneseq
        %v4018 = vshrl.u32 %v4017, 7
        %v4019 = vsub.s32 %v4016, %v4018
        %v4020 = vrot.slane %v3998, %v4019
        %v4022 = vunpack.c.l.s4 1966171168
        %v4023 = vunpack.c.0.s8 %v4022
        %v4024 = vlaneseq
        %v4025 = vshrl.u32 %v4024, 7
        %v4026 = vsub.s32 %v4023, %v4025
        %v4027 = vrot.slane %v3999, %v4026
        %v4028 = vcombine.high %v4006, %v4006
        %v4029 = vcombine.high %v4013, %v4013
        %v4030 = vcombine.high %v4020, %v4020
        %v4031 = vcombine.high %v4027, %v4027
        %v4032 = vcombine.high %v3974, %v3974
        %v4034 = vunpack.c.l.s4 1966171168
        %v4035 = vunpack.c.0.s8 %v4034
        %v4036 = vlaneseq
        %v4037 = vshrl.u32 %v4036, 7
        %v4038 = vsub.s32 %v4035, %v4037
        %v4039 = vrot.slane %v3974, %v4038
        %v4041 = vunpack.c.l.s4 1966171168
        %v4042 = vunpack.c.0.s8 %v4041
        %v4043 = vlaneseq
        %v4044 = vshrl.u32 %v4043, 7
        %v4045 = vsub.s32 %v4042, %v4044
        %v4046 = vrot.slane %v4032, %v4045
        %v4047 = vcombine.high %v4039, %v4039
        %v4048 = vcombine.high %v4046, %v4046
        %v4050 = vunpack.c.l.s4 1966171168
        %v4051 = vunpack.c.0.s8 %v4050
        %v4052 = vlaneseq
        %v4053 = vshrl.u32 %v4052, 7
        %v4054 = vsub.s32 %v4051, %v4053
        %v4055 = vrot.slane %v4039, %v4054
        %v4057 = vunpack.c.l.s4 1966171168
        %v4058 = vunpack.c.0.s8 %v4057
        %v4059 = vlaneseq
        %v4060 = vshrl.u32 %v4059, 7
        %v4061 = vsub.s32 %v4058, %v4060
        %v4062 = vrot.slane %v4046, %v4061
        %v4064 = vunpack.c.l.s4 1966171168
        %v4065 = vunpack.c.0.s8 %v4064
        %v4066 = vlaneseq
        %v4067 = vshrl.u32 %v4066, 7
        %v4068 = vsub.s32 %v4065, %v4067
        %v4069 = vrot.slane %v4047, %v4068
        %v4071 = vunpack.c.l.s4 1966171168
        %v4072 = vunpack.c.0.s8 %v4071
        %v4073 = vlaneseq
        %v4074 = vshrl.u32 %v4073, 7
        %v4075 = vsub.s32 %v4072, %v4074
        %v4076 = vrot.slane %v4048, %v4075
        %v4077 = vcombine.high %v4055, %v4055
        %v4078 = vcombine.high %v4062, %v4062
        %v4079 = vcombine.high %v4069, %v4069
        %v4080 = vcombine.high %v4076, %v4076
        %v4081 = vcombine.high %v3975, %v3975
        %v4083 = vunpack.c.l.s4 1966171168
        %v4084 = vunpack.c.0.s8 %v4083
        %v4085 = vlaneseq
        %v4086 = vshrl.u32 %v4085, 7
        %v4087 = vsub.s32 %v4084, %v4086
        %v4088 = vrot.slane %v3975, %v4087
        %v4090 = vunpack.c.l.s4 1966171168
        %v4091 = vunpack.c.0.s8 %v4090
        %v4092 = vlaneseq
        %v4093 = vshrl.u32 %v4092, 7
        %v4094 = vsub.s32 %v4091, %v4093
        %v4095 = vrot.slane %v4081, %v4094
        %v4096 = vcombine.high %v4088, %v4088
        %v4097 = vcombine.high %v4095, %v4095
        %v4099 = vunpack.c.l.s4 1966171168
        %v4100 = vunpack.c.0.s8 %v4099
        %v4101 = vlaneseq
        %v4102 = vshrl.u32 %v4101, 7
        %v4103 = vsub.s32 %v4100, %v4102
        %v4104 = vrot.slane %v4088, %v4103
        %v4106 = vunpack.c.l.s4 1966171168
        %v4107 = vunpack.c.0.s8 %v4106
        %v4108 = vlaneseq
        %v4109 = vshrl.u32 %v4108, 7
        %v4110 = vsub.s32 %v4107, %v4109
        %v4111 = vrot.slane %v4095, %v4110
        %v4113 = vunpack.c.l.s4 1966171168
        %v4114 = vunpack.c.0.s8 %v4113
        %v4115 = vlaneseq
        %v4116 = vshrl.u32 %v4115, 7
        %v4117 = vsub.s32 %v4114, %v4116
        %v4118 = vrot.slane %v4096, %v4117
        %v4120 = vunpack.c.l.s4 1966171168
        %v4121 = vunpack.c.0.s8 %v4120
        %v4122 = vlaneseq
        %v4123 = vshrl.u32 %v4122, 7
        %v4124 = vsub.s32 %v4121, %v4123
        %v4125 = vrot.slane %v4097, %v4124
        %v4126 = vcombine.high %v4104, %v4104
        %v4127 = vcombine.high %v4111, %v4111
        %v4128 = vcombine.high %v4118, %v4118
        %v4129 = vcombine.high %v4125, %v4125
        %v4130 = vcombine.high %v3976, %v3976
        %v4132 = vunpack.c.l.s4 1966171168
        %v4133 = vunpack.c.0.s8 %v4132
        %v4134 = vlaneseq
        %v4135 = vshrl.u32 %v4134, 7
        %v4136 = vsub.s32 %v4133, %v4135
        %v4137 = vrot.slane %v3976, %v4136
        %v4139 = vunpack.c.l.s4 1966171168
        %v4140 = vunpack.c.0.s8 %v4139
        %v4141 = vlaneseq
        %v4142 = vshrl.u32 %v4141, 7
        %v4143 = vsub.s32 %v4140, %v4142
        %v4144 = vrot.slane %v4130, %v4143
        %v4145 = vcombine.high %v4137, %v4137
        %v4146 = vcombine.high %v4144, %v4144
        %v4148 = vunpack.c.l.s4 1966171168
        %v4149 = vunpack.c.0.s8 %v4148
        %v4150 = vlaneseq
        %v4151 = vshrl.u32 %v4150, 7
        %v4152 = vsub.s32 %v4149, %v4151
        %v4153 = vrot.slane %v4137, %v4152
        %v4155 = vunpack.c.l.s4 1966171168
        %v4156 = vunpack.c.0.s8 %v4155
        %v4157 = vlaneseq
        %v4158 = vshrl.u32 %v4157, 7
        %v4159 = vsub.s32 %v4156, %v4158
        %v4160 = vrot.slane %v4144, %v4159
        %v4162 = vunpack.c.l.s4 1966171168
        %v4163 = vunpack.c.0.s8 %v4162
        %v4164 = vlaneseq
        %v4165 = vshrl.u32 %v4164, 7
        %v4166 = vsub.s32 %v4163, %v4165
        %v4167 = vrot.slane %v4145, %v4166
        %v4169 = vunpack.c.l.s4 1966171168
        %v4170 = vunpack.c.0.s8 %v4169
        %v4171 = vlaneseq
        %v4172 = vshrl.u32 %v4171, 7
        %v4173 = vsub.s32 %v4170, %v4172
        %v4174 = vrot.slane %v4146, %v4173
        %v4175 = vcombine.high %v4153, %v4153
        %v4176 = vcombine.high %v4160, %v4160
        %v4177 = vcombine.high %v4167, %v4167
        %v4178 = vcombine.high %v4174, %v4174
        %v4179 = vcombine.high %v3977, %v3977
        %v4181 = vunpack.c.l.s4 1966171168
        %v4182 = vunpack.c.0.s8 %v4181
        %v4183 = vlaneseq
        %v4184 = vshrl.u32 %v4183, 7
        %v4185 = vsub.s32 %v4182, %v4184
        %v4186 = vrot.slane %v3977, %v4185
        %v4188 = vunpack.c.l.s4 1966171168
        %v4189 = vunpack.c.0.s8 %v4188
        %v4190 = vlaneseq
        %v4191 = vshrl.u32 %v4190, 7
        %v4192 = vsub.s32 %v4189, %v4191
        %v4193 = vrot.slane %v4179, %v4192
        %v4194 = vcombine.high %v4186, %v4186
        %v4195 = vcombine.high %v4193, %v4193
        %v4197 = vunpack.c.l.s4 1966171168
        %v4198 = vunpack.c.0.s8 %v4197
        %v4199 = vlaneseq
        %v4200 = vshrl.u32 %v4199, 7
        %v4201 = vsub.s32 %v4198, %v4200
        %v4202 = vrot.slane %v4186, %v4201
        %v4204 = vunpack.c.l.s4 1966171168
        %v4205 = vunpack.c.0.s8 %v4204
        %v4206 = vlaneseq
        %v4207 = vshrl.u32 %v4206, 7
        %v4208 = vsub.s32 %v4205, %v4207
        %v4209 = vrot.slane %v4193, %v4208
        %v4211 = vunpack.c.l.s4 1966171168
        %v4212 = vunpack.c.0.s8 %v4211
        %v4213 = vlaneseq
        %v4214 = vshrl.u32 %v4213, 7
        %v4215 = vsub.s32 %v4212, %v4214
        %v4216 = vrot.slane %v4194, %v4215
        %v4218 = vunpack.c.l.s4 1966171168
        %v4219 = vunpack.c.0.s8 %v4218
        %v4220 = vlaneseq
        %v4221 = vshrl.u32 %v4220, 7
        %v4222 = vsub.s32 %v4219, %v4221
        %v4223 = vrot.slane %v4195, %v4222
        %v4224 = vcombine.high %v4202, %v4202
        %v4225 = vcombine.high %v4216, %v4216
        %4264 = vmatprep.subr.bf16.mxu0 %v1540
        %4265 = vmatpush1.bf16.msra.mxu0 %v1539
        %4266 = vmatprep.subr.bf16.mxu0 %v1548
        %4267 = vmatpush1.bf16.msra.mxu0 %v1547
        %4268 = vmatprep.subr.bf16.mxu0 %v1556
        %4269 = vmatpush1.bf16.msra.mxu0 %v1555
        %4270 = vmatprep.subr.bf16.mxu0 %v1564
        %4271 = vmatpush1.bf16.msra.mxu0 %v1563
        %4272 = vmatprep.subr.bf16.mxu0 %v1572
        %4273 = vmatpush1.bf16.msra.mxu0 %v1571
        %4274 = vmatprep.subr.bf16.mxu0 %v1580
        %4275 = vmatpush1.bf16.msra.mxu0 %v1579
        %4276 = vmatprep.subr.bf16.mxu0 %v1588
        %4277 = vmatpush1.bf16.msra.mxu0 %v1587
        %4278 = vmatprep.subr.bf16.mxu0 %v1596
        %4279 = vmatpush1.bf16.msra.mxu0 %v1595
        %4280 = vmatprep.subr.bf16.mxu0 %v1604
        %4281 = vmatpush1.bf16.msra.mxu0 %v1603
        %4282 = vmatprep.subr.bf16.mxu0 %v1612
        %4283 = vmatpush1.bf16.msra.mxu0 %v1611
        %4284 = vmatprep.subr.bf16.mxu0 %v1620
        %4285 = vmatpush1.bf16.msra.mxu0 %v1619
        %4286 = vmatprep.subr.bf16.mxu0 %v1628
        %4287 = vmatpush1.bf16.msra.mxu0 %v1627
        %4288 = vmatprep.subr.bf16.mxu0 %v1636
        %4289 = vmatpush1.bf16.msra.mxu0 %v1635
        %4290 = vmatprep.subr.bf16.mxu0 %v1644
        %4291 = vmatpush1.bf16.msra.mxu0 %v1643
        %4292 = vmatprep.subr.bf16.mxu0 %v1652
        %4293 = vmatpush1.bf16.msra.mxu0 %v1651
        %4294 = vmatprep.subr.bf16.mxu0 %v1660
        %4295 = vmatpush1.bf16.msra.mxu0 %v1659
        %4296 = vmatprep.mubr.bf16.mxu0 %v4020
        %4297 = vmatmul.mubr.bf16.gmra.mrb[0].mxu0 %v4006
        %v4298 = vpop.f32.mrb[0].mxu0
        %v4299 = vadd.f32 0.0, %v4298
        %v4300 = vpop.f32.mrb[0].mxu0
        %v4301 = vadd.f32 0.0, %v4300
        %v4302 = vpop.f32.mrb[0].mxu0
        %v4303 = vpop.f32.mrb[0].mxu0
        %4304 = vdwg.mxu0
        %4305 = vmatprep.subr.bf16.mxu0 %v1668
        %4306 = vmatpush1.bf16.msra.mxu0 %v1667
        %4307 = vmatprep.subr.bf16.mxu0 %v1676
        %4308 = vmatpush1.bf16.msra.mxu0 %v1675
        %4309 = vmatprep.subr.bf16.mxu0 %v1684
        %4310 = vmatpush1.bf16.msra.mxu0 %v1683
        %4311 = vmatprep.subr.bf16.mxu0 %v1692
        %4312 = vmatpush1.bf16.msra.mxu0 %v1691
        %4313 = vmatprep.subr.bf16.mxu0 %v1700
        %4314 = vmatpush1.bf16.msra.mxu0 %v1699
        %4315 = vmatprep.subr.bf16.mxu0 %v1708
        %4316 = vmatpush1.bf16.msra.mxu0 %v1707
        %4317 = vmatprep.subr.bf16.mxu0 %v1716
        %4318 = vmatpush1.bf16.msra.mxu0 %v1715
        %4319 = vmatprep.subr.bf16.mxu0 %v1724
        %4320 = vmatpush1.bf16.msra.mxu0 %v1723
        %4321 = vmatprep.subr.bf16.mxu0 %v1732
        %4322 = vmatpush1.bf16.msra.mxu0 %v1731
        %4323 = vmatprep.subr.bf16.mxu0 %v1740
        %4324 = vmatpush1.bf16.msra.mxu0 %v1739
        %4325 = vmatprep.subr.bf16.mxu0 %v1748
        %4326 = vmatpush1.bf16.msra.mxu0 %v1747
        %4327 = vmatprep.subr.bf16.mxu0 %v1756
        %4328 = vmatpush1.bf16.msra.mxu0 %v1755
        %4329 = vmatprep.subr.bf16.mxu0 %v1764
        %4330 = vmatpush1.bf16.msra.mxu0 %v1763
        %4331 = vmatprep.subr.bf16.mxu0 %v1772
        %4332 = vmatpush1.bf16.msra.mxu0 %v1771
        %4333 = vmatprep.subr.bf16.mxu0 %v1780
        %4334 = vmatpush1.bf16.msra.mxu0 %v1779
        %4335 = vmatprep.subr.bf16.mxu0 %v1788
        %4336 = vmatpush1.bf16.msra.mxu0 %v1787
        %4337 = vmatprep.mubr.bf16.mxu0 %v4030
        %4338 = vmatmul.mubr.bf16.gmra.mrb[0].mxu0 %v4028
        %v4339 = vpop.f32.mrb[0].mxu0
        %v4340 = vadd.f32 %v4299, %v4339
        %v4341 = vpop.f32.mrb[0].mxu0
        %v4342 = vadd.f32 %v4301, %v4341
        %v4343 = vpop.f32.mrb[0].mxu0
        %v4344 = vpop.f32.mrb[0].mxu0
        %4345 = vdwg.mxu0
        %4346 = vmatprep.subr.bf16.mxu0 %v1796
        %4347 = vmatpush1.bf16.msra.mxu0 %v1795
        %4348 = vmatprep.subr.bf16.mxu0 %v1804
        %4349 = vmatpush1.bf16.msra.mxu0 %v1803
        %4350 = vmatprep.subr.bf16.mxu0 %v1812
        %4351 = vmatpush1.bf16.msra.mxu0 %v1811
        %4352 = vmatprep.subr.bf16.mxu0 %v1820
        %4353 = vmatpush1.bf16.msra.mxu0 %v1819
        %4354 = vmatprep.subr.bf16.mxu0 %v1828
        %4355 = vmatpush1.bf16.msra.mxu0 %v1827
        %4356 = vmatprep.subr.bf16.mxu0 %v1836
        %4357 = vmatpush1.bf16.msra.mxu0 %v1835
        %4358 = vmatprep.subr.bf16.mxu0 %v1844
        %4359 = vmatpush1.bf16.msra.mxu0 %v1843
        %4360 = vmatprep.subr.bf16.mxu0 %v1852
        %4361 = vmatpush1.bf16.msra.mxu0 %v1851
        %4362 = vmatprep.subr.bf16.mxu0 %v1860
        %4363 = vmatpush1.bf16.msra.mxu0 %v1859
        %4364 = vmatprep.subr.bf16.mxu0 %v1868
        %4365 = vmatpush1.bf16.msra.mxu0 %v1867
        %4366 = vmatprep.subr.bf16.mxu0 %v1876
        %4367 = vmatpush1.bf16.msra.mxu0 %v1875
        %4368 = vmatprep.subr.bf16.mxu0 %v1884
        %4369 = vmatpush1.bf16.msra.mxu0 %v1883
        %4370 = vmatprep.subr.bf16.mxu0 %v1892
        %4371 = vmatpush1.bf16.msra.mxu0 %v1891
        %4372 = vmatprep.subr.bf16.mxu0 %v1900
        %4373 = vmatpush1.bf16.msra.mxu0 %v1899
        %4374 = vmatprep.subr.bf16.mxu0 %v1908
        %4375 = vmatpush1.bf16.msra.mxu0 %v1907
        %4376 = vmatprep.subr.bf16.mxu0 %v1916
        %4377 = vmatpush1.bf16.msra.mxu0 %v1915
        %4378 = vmatprep.mubr.bf16.mxu0 %v4027
        %4379 = vmatmul.mubr.bf16.gmra.mrb[0].mxu0 %v4013
        %v4380 = vpop.f32.mrb[0].mxu0
        %v4381 = vadd.f32 %v4340, %v4380
        %v4382 = vpop.f32.mrb[0].mxu0
        %v4383 = vadd.f32 %v4342, %v4382
        %v4384 = vpop.f32.mrb[0].mxu0
        %v4385 = vpop.f32.mrb[0].mxu0
        %4386 = vdwg.mxu0
        %4387 = vmatprep.subr.bf16.mxu0 %v1924
        %4388 = vmatpush1.bf16.msra.mxu0 %v1923
        %4389 = vmatprep.subr.bf16.mxu0 %v1932
        %4390 = vmatpush1.bf16.msra.mxu0 %v1931
        %4391 = vmatprep.subr.bf16.mxu0 %v1940
        %4392 = vmatpush1.bf16.msra.mxu0 %v1939
        %4393 = vmatprep.subr.bf16.mxu0 %v1948
        %4394 = vmatpush1.bf16.msra.mxu0 %v1947
        %4395 = vmatprep.subr.bf16.mxu0 %v1956
        %4396 = vmatpush1.bf16.msra.mxu0 %v1955
        %4397 = vmatprep.subr.bf16.mxu0 %v1964
        %4398 = vmatpush1.bf16.msra.mxu0 %v1963
        %4399 = vmatprep.subr.bf16.mxu0 %v1972
        %4400 = vmatpush1.bf16.msra.mxu0 %v1971
        %4401 = vmatprep.subr.bf16.mxu0 %v1980
        %4402 = vmatpush1.bf16.msra.mxu0 %v1979
        %4403 = vmatprep.subr.bf16.mxu0 %v1988
        %4404 = vmatpush1.bf16.msra.mxu0 %v1987
        %4405 = vmatprep.subr.bf16.mxu0 %v1996
        %4406 = vmatpush1.bf16.msra.mxu0 %v1995
        %4407 = vmatprep.subr.bf16.mxu0 %v2004
        %4408 = vmatpush1.bf16.msra.mxu0 %v2003
        %4409 = vmatprep.subr.bf16.mxu0 %v2012
        %4410 = vmatpush1.bf16.msra.mxu0 %v2011
        %4411 = vmatprep.subr.bf16.mxu0 %v2020
        %4412 = vmatpush1.bf16.msra.mxu0 %v2019
        %4413 = vmatprep.subr.bf16.mxu0 %v2028
        %4414 = vmatpush1.bf16.msra.mxu0 %v2027
        %4415 = vmatprep.subr.bf16.mxu0 %v2036
        %4416 = vmatpush1.bf16.msra.mxu0 %v2035
        %4417 = vmatprep.subr.bf16.mxu0 %v2044
        %4418 = vmatpush1.bf16.msra.mxu0 %v2043
        %4419 = vmatprep.mubr.bf16.mxu0 %v4031
        %4420 = vmatmul.mubr.bf16.gmra.mrb[0].mxu0 %v4029
        %v4421 = vpop.f32.mrb[0].mxu0
        %v4422 = vadd.f32 %v4381, %v4421
        %v4423 = vpop.f32.mrb[0].mxu0
        %v4424 = vadd.f32 %v4383, %v4423
        %v4425 = vpop.f32.mrb[0].mxu0
        %v4426 = vpop.f32.mrb[0].mxu0
        %4427 = vdwg.mxu0
        %4428 = vmatprep.subr.bf16.mxu0 %v2052
        %4429 = vmatpush1.bf16.msra.mxu0 %v2051
        %4430 = vmatprep.subr.bf16.mxu0 %v2060
        %4431 = vmatpush1.bf16.msra.mxu0 %v2059
        %4432 = vmatprep.subr.bf16.mxu0 %v2068
        %4433 = vmatpush1.bf16.msra.mxu0 %v2067
        %4434 = vmatprep.subr.bf16.mxu0 %v2076
        %4435 = vmatpush1.bf16.msra.mxu0 %v2075
        %4436 = vmatprep.subr.bf16.mxu0 %v2084
        %4437 = vmatpush1.bf16.msra.mxu0 %v2083
        %4438 = vmatprep.subr.bf16.mxu0 %v2092
        %4439 = vmatpush1.bf16.msra.mxu0 %v2091
        %4440 = vmatprep.subr.bf16.mxu0 %v2100
        %4441 = vmatpush1.bf16.msra.mxu0 %v2099
        %4442 = vmatprep.subr.bf16.mxu0 %v2108
        %4443 = vmatpush1.bf16.msra.mxu0 %v2107
        %4444 = vmatprep.subr.bf16.mxu0 %v2116
        %4445 = vmatpush1.bf16.msra.mxu0 %v2115
        %4446 = vmatprep.subr.bf16.mxu0 %v2124
        %4447 = vmatpush1.bf16.msra.mxu0 %v2123
        %4448 = vmatprep.subr.bf16.mxu0 %v2132
        %4449 = vmatpush1.bf16.msra.mxu0 %v2131
        %4450 = vmatprep.subr.bf16.mxu0 %v2140
        %4451 = vmatpush1.bf16.msra.mxu0 %v2139
        %4452 = vmatprep.subr.bf16.mxu0 %v2148
        %4453 = vmatpush1.bf16.msra.mxu0 %v2147
        %4454 = vmatprep.subr.bf16.mxu0 %v2156
        %4455 = vmatpush1.bf16.msra.mxu0 %v2155
        %4456 = vmatprep.subr.bf16.mxu0 %v2164
        %4457 = vmatpush1.bf16.msra.mxu0 %v2163
        %4458 = vmatprep.subr.bf16.mxu0 %v2172
        %4459 = vmatpush1.bf16.msra.mxu0 %v2171
        %4460 = vmatprep.mubr.bf16.mxu0 %v4069
        %4461 = vmatmul.mubr.bf16.gmra.mrb[0].mxu0 %v4055
        %v4462 = vpop.f32.mrb[0].mxu0
        %v4463 = vadd.f32 %v4422, %v4462
        %v4464 = vpop.f32.mrb[0].mxu0
        %v4465 = vadd.f32 %v4424, %v4464
        %v4466 = vpop.f32.mrb[0].mxu0
        %v4467 = vpop.f32.mrb[0].mxu0
        %4468 = vdwg.mxu0
        %4469 = vmatprep.subr.bf16.mxu0 %v2180
        %4470 = vmatpush1.bf16.msra.mxu0 %v2179
        %4471 = vmatprep.subr.bf16.mxu0 %v2188
        %4472 = vmatpush1.bf16.msra.mxu0 %v2187
        %4473 = vmatprep.subr.bf16.mxu0 %v2196
        %4474 = vmatpush1.bf16.msra.mxu0 %v2195
        %4475 = vmatprep.subr.bf16.mxu0 %v2204
        %4476 = vmatpush1.bf16.msra.mxu0 %v2203
        %4477 = vmatprep.subr.bf16.mxu0 %v2212
        %4478 = vmatpush1.bf16.msra.mxu0 %v2211
        %4479 = vmatprep.subr.bf16.mxu0 %v2220
        %4480 = vmatpush1.bf16.msra.mxu0 %v2219
        %4481 = vmatprep.subr.bf16.mxu0 %v2228
        %4482 = vmatpush1.bf16.msra.mxu0 %v2227
        %4483 = vmatprep.subr.bf16.mxu0 %v2236
        %4484 = vmatpush1.bf16.msra.mxu0 %v2235
        %4485 = vmatprep.subr.bf16.mxu0 %v2244
        %4486 = vmatpush1.bf16.msra.mxu0 %v2243
        %4487 = vmatprep.subr.bf16.mxu0 %v2252
        %4488 = vmatpush1.bf16.msra.mxu0 %v2251
        %4489 = vmatprep.subr.bf16.mxu0 %v2260
        %4490 = vmatpush1.bf16.msra.mxu0 %v2259
        %4491 = vmatprep.subr.bf16.mxu0 %v2268
        %4492 = vmatpush1.bf16.msra.mxu0 %v2267
        %4493 = vmatprep.subr.bf16.mxu0 %v2276
        %4494 = vmatpush1.bf16.msra.mxu0 %v2275
        %4495 = vmatprep.subr.bf16.mxu0 %v2284
        %4496 = vmatpush1.bf16.msra.mxu0 %v2283
        %4497 = vmatprep.subr.bf16.mxu0 %v2292
        %4498 = vmatpush1.bf16.msra.mxu0 %v2291
        %4499 = vmatprep.subr.bf16.mxu0 %v2300
        %4500 = vmatpush1.bf16.msra.mxu0 %v2299
        %4501 = vmatprep.mubr.bf16.mxu0 %v4079
        %4502 = vmatmul.mubr.bf16.gmra.mrb[0].mxu0 %v4077
        %v4503 = vpop.f32.mrb[0].mxu0
        %v4504 = vadd.f32 %v4463, %v4503
        %v4505 = vpop.f32.mrb[0].mxu0
        %v4506 = vadd.f32 %v4465, %v4505
        %v4507 = vpop.f32.mrb[0].mxu0
        %v4508 = vpop.f32.mrb[0].mxu0
        %4509 = vdwg.mxu0
        %4510 = vmatprep.subr.bf16.mxu0 %v2308
        %4511 = vmatpush1.bf16.msra.mxu0 %v2307
        %4512 = vmatprep.subr.bf16.mxu0 %v2316
        %4513 = vmatpush1.bf16.msra.mxu0 %v2315
        %4514 = vmatprep.subr.bf16.mxu0 %v2324
        %4515 = vmatpush1.bf16.msra.mxu0 %v2323
        %4516 = vmatprep.subr.bf16.mxu0 %v2332
        %4517 = vmatpush1.bf16.msra.mxu0 %v2331
        %4518 = vmatprep.subr.bf16.mxu0 %v2340
        %4519 = vmatpush1.bf16.msra.mxu0 %v2339
        %4520 = vmatprep.subr.bf16.mxu0 %v2348
        %4521 = vmatpush1.bf16.msra.mxu0 %v2347
        %4522 = vmatprep.subr.bf16.mxu0 %v2356
        %4523 = vmatpush1.bf16.msra.mxu0 %v2355
        %4524 = vmatprep.subr.bf16.mxu0 %v2364
        %4525 = vmatpush1.bf16.msra.mxu0 %v2363
        %4526 = vmatprep.subr.bf16.mxu0 %v2372
        %4527 = vmatpush1.bf16.msra.mxu0 %v2371
        %4528 = vmatprep.subr.bf16.mxu0 %v2380
        %4529 = vmatpush1.bf16.msra.mxu0 %v2379
        %4530 = vmatprep.subr.bf16.mxu0 %v2388
        %4531 = vmatpush1.bf16.msra.mxu0 %v2387
        %4532 = vmatprep.subr.bf16.mxu0 %v2396
        %4533 = vmatpush1.bf16.msra.mxu0 %v2395
        %4534 = vmatprep.subr.bf16.mxu0 %v2404
        %4535 = vmatpush1.bf16.msra.mxu0 %v2403
        %4536 = vmatprep.subr.bf16.mxu0 %v2412
        %4537 = vmatpush1.bf16.msra.mxu0 %v2411
        %4538 = vmatprep.subr.bf16.mxu0 %v2420
        %4539 = vmatpush1.bf16.msra.mxu0 %v2419
        %4540 = vmatprep.subr.bf16.mxu0 %v2428
        %4541 = vmatpush1.bf16.msra.mxu0 %v2427
        %4542 = vmatprep.mubr.bf16.mxu0 %v4076
        %4543 = vmatmul.mubr.bf16.gmra.mrb[0].mxu0 %v4062
        %v4544 = vpop.f32.mrb[0].mxu0
        %v4545 = vadd.f32 %v4504, %v4544
        %v4546 = vpop.f32.mrb[0].mxu0
        %v4547 = vadd.f32 %v4506, %v4546
        %v4548 = vpop.f32.mrb[0].mxu0
        %v4549 = vpop.f32.mrb[0].mxu0
        %4550 = vdwg.mxu0
        %4551 = vmatprep.subr.bf16.mxu0 %v2436
        %4552 = vmatpush1.bf16.msra.mxu0 %v2435
        %4553 = vmatprep.subr.bf16.mxu0 %v2444
        %4554 = vmatpush1.bf16.msra.mxu0 %v2443
        %4555 = vmatprep.subr.bf16.mxu0 %v2452
        %4556 = vmatpush1.bf16.msra.mxu0 %v2451
        %4557 = vmatprep.subr.bf16.mxu0 %v2460
        %4558 = vmatpush1.bf16.msra.mxu0 %v2459
        %4559 = vmatprep.subr.bf16.mxu0 %v2468
        %4560 = vmatpush1.bf16.msra.mxu0 %v2467
        %4561 = vmatprep.subr.bf16.mxu0 %v2476
        %4562 = vmatpush1.bf16.msra.mxu0 %v2475
        %4563 = vmatprep.subr.bf16.mxu0 %v2484
        %4564 = vmatpush1.bf16.msra.mxu0 %v2483
        %4565 = vmatprep.subr.bf16.mxu0 %v2492
        %4566 = vmatpush1.bf16.msra.mxu0 %v2491
        %4567 = vmatprep.subr.bf16.mxu0 %v2500
        %4568 = vmatpush1.bf16.msra.mxu0 %v2499
        %4569 = vmatprep.subr.bf16.mxu0 %v2508
        %4570 = vmatpush1.bf16.msra.mxu0 %v2507
        %4571 = vmatprep.subr.bf16.mxu0 %v2516
        %4572 = vmatpush1.bf16.msra.mxu0 %v2515
        %4573 = vmatprep.subr.bf16.mxu0 %v2524
        %4574 = vmatpush1.bf16.msra.mxu0 %v2523
        %4575 = vmatprep.subr.bf16.mxu0 %v2532
        %4576 = vmatpush1.bf16.msra.mxu0 %v2531
        %4577 = vmatprep.subr.bf16.mxu0 %v2540
        %4578 = vmatpush1.bf16.msra.mxu0 %v2539
        %4579 = vmatprep.subr.bf16.mxu0 %v2548
        %4580 = vmatpush1.bf16.msra.mxu0 %v2547
        %4581 = vmatprep.subr.bf16.mxu0 %v2556
        %4582 = vmatpush1.bf16.msra.mxu0 %v2555
        %4583 = vmatprep.mubr.bf16.mxu0 %v4080
        %4584 = vmatmul.mubr.bf16.gmra.mrb[0].mxu0 %v4078
        %v4585 = vpop.f32.mrb[0].mxu0
        %v4586 = vadd.f32 %v4545, %v4585
        %v4587 = vpop.f32.mrb[0].mxu0
        %v4588 = vadd.f32 %v4547, %v4587
        %v4589 = vpop.f32.mrb[0].mxu0
        %v4590 = vpop.f32.mrb[0].mxu0
        %4591 = vdwg.mxu0
        %4592 = vmatprep.subr.bf16.mxu0 %v2564
        %4593 = vmatpush1.bf16.msra.mxu0 %v2563
        %4594 = vmatprep.subr.bf16.mxu0 %v2572
        %4595 = vmatpush1.bf16.msra.mxu0 %v2571
        %4596 = vmatprep.subr.bf16.mxu0 %v2580
        %4597 = vmatpush1.bf16.msra.mxu0 %v2579
        %4598 = vmatprep.subr.bf16.mxu0 %v2588
        %4599 = vmatpush1.bf16.msra.mxu0 %v2587
        %4600 = vmatprep.subr.bf16.mxu0 %v2596
        %4601 = vmatpush1.bf16.msra.mxu0 %v2595
        %4602 = vmatprep.subr.bf16.mxu0 %v2604
        %4603 = vmatpush1.bf16.msra.mxu0 %v2603
        %4604 = vmatprep.subr.bf16.mxu0 %v2612
        %4605 = vmatpush1.bf16.msra.mxu0 %v2611
        %4606 = vmatprep.subr.bf16.mxu0 %v2620
        %4607 = vmatpush1.bf16.msra.mxu0 %v2619
        %4608 = vmatprep.subr.bf16.mxu0 %v2628
        %4609 = vmatpush1.bf16.msra.mxu0 %v2627
        %4610 = vmatprep.subr.bf16.mxu0 %v2636
        %4611 = vmatpush1.bf16.msra.mxu0 %v2635
        %4612 = vmatprep.subr.bf16.mxu0 %v2644
        %4613 = vmatpush1.bf16.msra.mxu0 %v2643
        %4614 = vmatprep.subr.bf16.mxu0 %v2652
        %4615 = vmatpush1.bf16.msra.mxu0 %v2651
        %4616 = vmatprep.subr.bf16.mxu0 %v2660
        %4617 = vmatpush1.bf16.msra.mxu0 %v2659
        %4618 = vmatprep.subr.bf16.mxu0 %v2668
        %4619 = vmatpush1.bf16.msra.mxu0 %v2667
        %4620 = vmatprep.subr.bf16.mxu0 %v2676
        %4621 = vmatpush1.bf16.msra.mxu0 %v2675
        %4622 = vmatprep.subr.bf16.mxu0 %v2684
        %4623 = vmatpush1.bf16.msra.mxu0 %v2683
        %4624 = vmatprep.mubr.bf16.mxu0 %v4118
        %4625 = vmatmul.mubr.bf16.gmra.mrb[0].mxu0 %v4104
        %v4626 = vpop.f32.mrb[0].mxu0
        %v4627 = vadd.f32 %v4586, %v4626
        %v4628 = vpop.f32.mrb[0].mxu0
        %v4629 = vadd.f32 %v4588, %v4628
        %v4630 = vpop.f32.mrb[0].mxu0
        %v4631 = vpop.f32.mrb[0].mxu0
        %4632 = vdwg.mxu0
        %4633 = vmatprep.subr.bf16.mxu0 %v2692
        %4634 = vmatpush1.bf16.msra.mxu0 %v2691
        %4635 = vmatprep.subr.bf16.mxu0 %v2700
        %4636 = vmatpush1.bf16.msra.mxu0 %v2699
        %4637 = vmatprep.subr.bf16.mxu0 %v2708
        %4638 = vmatpush1.bf16.msra.mxu0 %v2707
        %4639 = vmatprep.subr.bf16.mxu0 %v2716
        %4640 = vmatpush1.bf16.msra.mxu0 %v2715
        %4641 = vmatprep.subr.bf16.mxu0 %v2724
        %4642 = vmatpush1.bf16.msra.mxu0 %v2723
        %4643 = vmatprep.subr.bf16.mxu0 %v2732
        %4644 = vmatpush1.bf16.msra.mxu0 %v2731
        %4645 = vmatprep.subr.bf16.mxu0 %v2740
        %4646 = vmatpush1.bf16.msra.mxu0 %v2739
        %4647 = vmatprep.subr.bf16.mxu0 %v2748
        %4648 = vmatpush1.bf16.msra.mxu0 %v2747
        %4649 = vmatprep.subr.bf16.mxu0 %v2756
        %4650 = vmatpush1.bf16.msra.mxu0 %v2755
        %4651 = vmatprep.subr.bf16.mxu0 %v2764
        %4652 = vmatpush1.bf16.msra.mxu0 %v2763
        %4653 = vmatprep.subr.bf16.mxu0 %v2772
        %4654 = vmatpush1.bf16.msra.mxu0 %v2771
        %4655 = vmatprep.subr.bf16.mxu0 %v2780
        %4656 = vmatpush1.bf16.msra.mxu0 %v2779
        %4657 = vmatprep.subr.bf16.mxu0 %v2788
        %4658 = vmatpush1.bf16.msra.mxu0 %v2787
        %4659 = vmatprep.subr.bf16.mxu0 %v2796
        %4660 = vmatpush1.bf16.msra.mxu0 %v2795
        %4661 = vmatprep.subr.bf16.mxu0 %v2804
        %4662 = vmatpush1.bf16.msra.mxu0 %v2803
        %4663 = vmatprep.subr.bf16.mxu0 %v2812
        %4664 = vmatpush1.bf16.msra.mxu0 %v2811
        %4665 = vmatprep.mubr.bf16.mxu0 %v4128
        %4666 = vmatmul.mubr.bf16.gmra.mrb[0].mxu0 %v4126
        %v4667 = vpop.f32.mrb[0].mxu0
        %v4668 = vadd.f32 %v4627, %v4667
        %v4669 = vpop.f32.mrb[0].mxu0
        %v4670 = vadd.f32 %v4629, %v4669
        %v4671 = vpop.f32.mrb[0].mxu0
        %v4672 = vpop.f32.mrb[0].mxu0
        %4673 = vdwg.mxu0
        %4674 = vmatprep.subr.bf16.mxu0 %v2820
        %4675 = vmatpush1.bf16.msra.mxu0 %v2819
        %4676 = vmatprep.subr.bf16.mxu0 %v2828
        %4677 = vmatpush1.bf16.msra.mxu0 %v2827
        %4678 = vmatprep.subr.bf16.mxu0 %v2836
        %4679 = vmatpush1.bf16.msra.mxu0 %v2835
        %4680 = vmatprep.subr.bf16.mxu0 %v2844
        %4681 = vmatpush1.bf16.msra.mxu0 %v2843
        %4682 = vmatprep.subr.bf16.mxu0 %v2852
        %4683 = vmatpush1.bf16.msra.mxu0 %v2851
        %4684 = vmatprep.subr.bf16.mxu0 %v2860
        %4685 = vmatpush1.bf16.msra.mxu0 %v2859
        %4686 = vmatprep.subr.bf16.mxu0 %v2868
        %4687 = vmatpush1.bf16.msra.mxu0 %v2867
        %4688 = vmatprep.subr.bf16.mxu0 %v2876
        %4689 = vmatpush1.bf16.msra.mxu0 %v2875
        %4690 = vmatprep.subr.bf16.mxu0 %v2884
        %4691 = vmatpush1.bf16.msra.mxu0 %v2883
        %4692 = vmatprep.subr.bf16.mxu0 %v2892
        %4693 = vmatpush1.bf16.msra.mxu0 %v2891
        %4694 = vmatprep.subr.bf16.mxu0 %v2900
        %4695 = vmatpush1.bf16.msra.mxu0 %v2899
        %4696 = vmatprep.subr.bf16.mxu0 %v2908
        %4697 = vmatpush1.bf16.msra.mxu0 %v2907
        %4698 = vmatprep.subr.bf16.mxu0 %v2916
        %4699 = vmatpush1.bf16.msra.mxu0 %v2915
        %4700 = vmatprep.subr.bf16.mxu0 %v2924
        %4701 = vmatpush1.bf16.msra.mxu0 %v2923
        %4702 = vmatprep.subr.bf16.mxu0 %v2932
        %4703 = vmatpush1.bf16.msra.mxu0 %v2931
        %4704 = vmatprep.subr.bf16.mxu0 %v2940
        %4705 = vmatpush1.bf16.msra.mxu0 %v2939
        %4706 = vmatprep.mubr.bf16.mxu0 %v4125
        %4707 = vmatmul.mubr.bf16.gmra.mrb[0].mxu0 %v4111
        %v4708 = vpop.f32.mrb[0].mxu0
        %v4709 = vadd.f32 %v4668, %v4708
        %v4710 = vpop.f32.mrb[0].mxu0
        %v4711 = vadd.f32 %v4670, %v4710
        %v4712 = vpop.f32.mrb[0].mxu0
        %v4713 = vpop.f32.mrb[0].mxu0
        %4714 = vdwg.mxu0
        %4715 = vmatprep.subr.bf16.mxu0 %v2948
        %4716 = vmatpush1.bf16.msra.mxu0 %v2947
        %4717 = vmatprep.subr.bf16.mxu0 %v2956
        %4718 = vmatpush1.bf16.msra.mxu0 %v2955
        %4719 = vmatprep.subr.bf16.mxu0 %v2964
        %4720 = vmatpush1.bf16.msra.mxu0 %v2963
        %4721 = vmatprep.subr.bf16.mxu0 %v2972
        %4722 = vmatpush1.bf16.msra.mxu0 %v2971
        %4723 = vmatprep.subr.bf16.mxu0 %v2980
        %4724 = vmatpush1.bf16.msra.mxu0 %v2979
        %4725 = vmatprep.subr.bf16.mxu0 %v2988
        %4726 = vmatpush1.bf16.msra.mxu0 %v2987
        %4727 = vmatprep.subr.bf16.mxu0 %v2996
        %4728 = vmatpush1.bf16.msra.mxu0 %v2995
        %4729 = vmatprep.subr.bf16.mxu0 %v3004
        %4730 = vmatpush1.bf16.msra.mxu0 %v3003
        %4731 = vmatprep.subr.bf16.mxu0 %v3012
        %4732 = vmatpush1.bf16.msra.mxu0 %v3011
        %4733 = vmatprep.subr.bf16.mxu0 %v3020
        %4734 = vmatpush1.bf16.msra.mxu0 %v3019
        %4735 = vmatprep.subr.bf16.mxu0 %v3028
        %4736 = vmatpush1.bf16.msra.mxu0 %v3027
        %4737 = vmatprep.subr.bf16.mxu0 %v3036
        %4738 = vmatpush1.bf16.msra.mxu0 %v3035
        %4739 = vmatprep.subr.bf16.mxu0 %v3044
        %4740 = vmatpush1.bf16.msra.mxu0 %v3043
        %4741 = vmatprep.subr.bf16.mxu0 %v3052
        %4742 = vmatpush1.bf16.msra.mxu0 %v3051
        %4743 = vmatprep.subr.bf16.mxu0 %v3060
        %4744 = vmatpush1.bf16.msra.mxu0 %v3059
        %4745 = vmatprep.subr.bf16.mxu0 %v3068
        %4746 = vmatpush1.bf16.msra.mxu0 %v3067
        %4747 = vmatprep.mubr.bf16.mxu0 %v4129
        %4748 = vmatmul.mubr.bf16.gmra.mrb[0].mxu0 %v4127
        %v4749 = vpop.f32.mrb[0].mxu0
        %v4750 = vadd.f32 %v4709, %v4749
        %v4751 = vpop.f32.mrb[0].mxu0
        %v4752 = vadd.f32 %v4711, %v4751
        %v4753 = vpop.f32.mrb[0].mxu0
        %v4754 = vpop.f32.mrb[0].mxu0
        %4755 = vdwg.mxu0
        %4756 = vmatprep.subr.bf16.mxu0 %v3076
        %4757 = vmatpush1.bf16.msra.mxu0 %v3075
        %4758 = vmatprep.subr.bf16.mxu0 %v3084
        %4759 = vmatpush1.bf16.msra.mxu0 %v3083
        %4760 = vmatprep.subr.bf16.mxu0 %v3092
        %4761 = vmatpush1.bf16.msra.mxu0 %v3091
        %4762 = vmatprep.subr.bf16.mxu0 %v3100
        %4763 = vmatpush1.bf16.msra.mxu0 %v3099
        %4764 = vmatprep.subr.bf16.mxu0 %v3108
        %4765 = vmatpush1.bf16.msra.mxu0 %v3107
        %4766 = vmatprep.subr.bf16.mxu0 %v3116
        %4767 = vmatpush1.bf16.msra.mxu0 %v3115
        %4768 = vmatprep.subr.bf16.mxu0 %v3124
        %4769 = vmatpush1.bf16.msra.mxu0 %v3123
        %4770 = vmatprep.subr.bf16.mxu0 %v3132
        %4771 = vmatpush1.bf16.msra.mxu0 %v3131
        %4772 = vmatprep.subr.bf16.mxu0 %v3140
        %4773 = vmatpush1.bf16.msra.mxu0 %v3139
        %4774 = vmatprep.subr.bf16.mxu0 %v3148
        %4775 = vmatpush1.bf16.msra.mxu0 %v3147
        %4776 = vmatprep.subr.bf16.mxu0 %v3156
        %4777 = vmatpush1.bf16.msra.mxu0 %v3155
        %4778 = vmatprep.subr.bf16.mxu0 %v3164
        %4779 = vmatpush1.bf16.msra.mxu0 %v3163
        %4780 = vmatprep.subr.bf16.mxu0 %v3172
        %4781 = vmatpush1.bf16.msra.mxu0 %v3171
        %4782 = vmatprep.subr.bf16.mxu0 %v3180
        %4783 = vmatpush1.bf16.msra.mxu0 %v3179
        %4784 = vmatprep.subr.bf16.mxu0 %v3188
        %4785 = vmatpush1.bf16.msra.mxu0 %v3187
        %4786 = vmatprep.subr.bf16.mxu0 %v3196
        %4787 = vmatpush1.bf16.msra.mxu0 %v3195
        %4788 = vmatprep.mubr.bf16.mxu0 %v4167
        %4789 = vmatmul.mubr.bf16.gmra.mrb[0].mxu0 %v4153
        %v4790 = vpop.f32.mrb[0].mxu0
        %v4791 = vadd.f32 %v4750, %v4790
        %v4792 = vpop.f32.mrb[0].mxu0
        %v4793 = vadd.f32 %v4752, %v4792
        %v4794 = vpop.f32.mrb[0].mxu0
        %v4795 = vpop.f32.mrb[0].mxu0
        %4796 = vdwg.mxu0
        %4797 = vmatprep.subr.bf16.mxu0 %v3204
        %4798 = vmatpush1.bf16.msra.mxu0 %v3203
        %4799 = vmatprep.subr.bf16.mxu0 %v3212
        %4800 = vmatpush1.bf16.msra.mxu0 %v3211
        %4801 = vmatprep.subr.bf16.mxu0 %v3220
        %4802 = vmatpush1.bf16.msra.mxu0 %v3219
        %4803 = vmatprep.subr.bf16.mxu0 %v3228
        %4804 = vmatpush1.bf16.msra.mxu0 %v3227
        %4805 = vmatprep.subr.bf16.mxu0 %v3236
        %4806 = vmatpush1.bf16.msra.mxu0 %v3235
        %4807 = vmatprep.subr.bf16.mxu0 %v3244
        %4808 = vmatpush1.bf16.msra.mxu0 %v3243
        %4809 = vmatprep.subr.bf16.mxu0 %v3252
        %4810 = vmatpush1.bf16.msra.mxu0 %v3251
        %4811 = vmatprep.subr.bf16.mxu0 %v3260
        %4812 = vmatpush1.bf16.msra.mxu0 %v3259
        %4813 = vmatprep.subr.bf16.mxu0 %v3268
        %4814 = vmatpush1.bf16.msra.mxu0 %v3267
        %4815 = vmatprep.subr.bf16.mxu0 %v3276
        %4816 = vmatpush1.bf16.msra.mxu0 %v3275
        %4817 = vmatprep.subr.bf16.mxu0 %v3284
        %4818 = vmatpush1.bf16.msra.mxu0 %v3283
        %4819 = vmatprep.subr.bf16.mxu0 %v3292
        %4820 = vmatpush1.bf16.msra.mxu0 %v3291
        %4821 = vmatprep.subr.bf16.mxu0 %v3300
        %4822 = vmatpush1.bf16.msra.mxu0 %v3299
        %4823 = vmatprep.subr.bf16.mxu0 %v3308
        %4824 = vmatpush1.bf16.msra.mxu0 %v3307
        %4825 = vmatprep.subr.bf16.mxu0 %v3316
        %4826 = vmatpush1.bf16.msra.mxu0 %v3315
        %4827 = vmatprep.subr.bf16.mxu0 %v3324
        %4828 = vmatpush1.bf16.msra.mxu0 %v3323
        %4829 = vmatprep.mubr.bf16.mxu0 %v4177
        %4830 = vmatmul.mubr.bf16.gmra.mrb[0].mxu0 %v4175
        %v4831 = vpop.f32.mrb[0].mxu0
        %v4832 = vadd.f32 %v4791, %v4831
        %v4833 = vpop.f32.mrb[0].mxu0
        %v4834 = vadd.f32 %v4793, %v4833
        %v4835 = vpop.f32.mrb[0].mxu0
        %v4836 = vpop.f32.mrb[0].mxu0
        %4837 = vdwg.mxu0
        %4838 = vmatprep.subr.bf16.mxu0 %v3332
        %4839 = vmatpush1.bf16.msra.mxu0 %v3331
        %4840 = vmatprep.subr.bf16.mxu0 %v3340
        %4841 = vmatpush1.bf16.msra.mxu0 %v3339
        %4842 = vmatprep.subr.bf16.mxu0 %v3348
        %4843 = vmatpush1.bf16.msra.mxu0 %v3347
        %4844 = vmatprep.subr.bf16.mxu0 %v3356
        %4845 = vmatpush1.bf16.msra.mxu0 %v3355
        %4846 = vmatprep.subr.bf16.mxu0 %v3364
        %4847 = vmatpush1.bf16.msra.mxu0 %v3363
        %4848 = vmatprep.subr.bf16.mxu0 %v3372
        %4849 = vmatpush1.bf16.msra.mxu0 %v3371
        %4850 = vmatprep.subr.bf16.mxu0 %v3380
        %4851 = vmatpush1.bf16.msra.mxu0 %v3379
        %4852 = vmatprep.subr.bf16.mxu0 %v3388
        %4853 = vmatpush1.bf16.msra.mxu0 %v3387
        %4854 = vmatprep.subr.bf16.mxu0 %v3396
        %4855 = vmatpush1.bf16.msra.mxu0 %v3395
        %4856 = vmatprep.subr.bf16.mxu0 %v3404
        %4857 = vmatpush1.bf16.msra.mxu0 %v3403
        %4858 = vmatprep.subr.bf16.mxu0 %v3412
        %4859 = vmatpush1.bf16.msra.mxu0 %v3411
        %4860 = vmatprep.subr.bf16.mxu0 %v3420
        %4861 = vmatpush1.bf16.msra.mxu0 %v3419
        %4862 = vmatprep.subr.bf16.mxu0 %v3428
        %4863 = vmatpush1.bf16.msra.mxu0 %v3427
        %4864 = vmatprep.subr.bf16.mxu0 %v3436
        %4865 = vmatpush1.bf16.msra.mxu0 %v3435
        %4866 = vmatprep.subr.bf16.mxu0 %v3444
        %4867 = vmatpush1.bf16.msra.mxu0 %v3443
        %4868 = vmatprep.subr.bf16.mxu0 %v3452
        %4869 = vmatpush1.bf16.msra.mxu0 %v3451
        %4870 = vmatprep.mubr.bf16.mxu0 %v4174
        %4871 = vmatmul.mubr.bf16.gmra.mrb[0].mxu0 %v4160
        %v4872 = vpop.f32.mrb[0].mxu0
        %v4873 = vadd.f32 %v4832, %v4872
        %v4874 = vpop.f32.mrb[0].mxu0
        %v4875 = vadd.f32 %v4834, %v4874
        %v4876 = vpop.f32.mrb[0].mxu0
        %v4877 = vpop.f32.mrb[0].mxu0
        %4878 = vdwg.mxu0
        %4879 = vmatprep.subr.bf16.mxu0 %v3460
        %4880 = vmatpush1.bf16.msra.mxu0 %v3459
        %4881 = vmatprep.subr.bf16.mxu0 %v3468
        %4882 = vmatpush1.bf16.msra.mxu0 %v3467
        %4883 = vmatprep.subr.bf16.mxu0 %v3476
        %4884 = vmatpush1.bf16.msra.mxu0 %v3475
        %4885 = vmatprep.subr.bf16.mxu0 %v3484
        %4886 = vmatpush1.bf16.msra.mxu0 %v3483
        %4887 = vmatprep.subr.bf16.mxu0 %v3492
        %4888 = vmatpush1.bf16.msra.mxu0 %v3491
        %4889 = vmatprep.subr.bf16.mxu0 %v3500
        %4890 = vmatpush1.bf16.msra.mxu0 %v3499
        %4891 = vmatprep.subr.bf16.mxu0 %v3508
        %4892 = vmatpush1.bf16.msra.mxu0 %v3507
        %4893 = vmatprep.subr.bf16.mxu0 %v3516
        %4894 = vmatpush1.bf16.msra.mxu0 %v3515
        %4895 = vmatprep.subr.bf16.mxu0 %v3524
        %4896 = vmatpush1.bf16.msra.mxu0 %v3523
        %4897 = vmatprep.subr.bf16.mxu0 %v3532
        %4898 = vmatpush1.bf16.msra.mxu0 %v3531
        %4899 = vmatprep.subr.bf16.mxu0 %v3540
        %4900 = vmatpush1.bf16.msra.mxu0 %v3539
        %4901 = vmatprep.subr.bf16.mxu0 %v3548
        %4902 = vmatpush1.bf16.msra.mxu0 %v3547
        %4903 = vmatprep.subr.bf16.mxu0 %v3556
        %4904 = vmatpush1.bf16.msra.mxu0 %v3555
        %4905 = vmatprep.subr.bf16.mxu0 %v3564
        %4906 = vmatpush1.bf16.msra.mxu0 %v3563
        %4907 = vmatprep.subr.bf16.mxu0 %v3572
        %4908 = vmatpush1.bf16.msra.mxu0 %v3571
        %4909 = vmatprep.subr.bf16.mxu0 %v3580
        %4910 = vmatpush1.bf16.msra.mxu0 %v3579
        %4911 = vmatprep.mubr.bf16.mxu0 %v4178
        %4912 = vmatmul.mubr.bf16.gmra.mrb[0].mxu0 %v4176
        %v4913 = vpop.f32.mrb[0].mxu0
        %v4914 = vadd.f32 %v4873, %v4913
        %v4915 = vpop.f32.mrb[0].mxu0
        %v4916 = vadd.f32 %v4875, %v4915
        %v4917 = vpop.f32.mrb[0].mxu0
        %v4918 = vpop.f32.mrb[0].mxu0
        %4919 = vdwg.mxu0
        %4920 = vmatprep.subr.bf16.mxu0 %v3588
        %4921 = vmatpush1.bf16.msra.mxu0 %v3587
        %4922 = vmatprep.subr.bf16.mxu0 %v3596
        %4923 = vmatpush1.bf16.msra.mxu0 %v3595
        %4924 = vmatprep.subr.bf16.mxu0 %v3604
        %4925 = vmatpush1.bf16.msra.mxu0 %v3603
        %4926 = vmatprep.subr.bf16.mxu0 %v3612
        %4927 = vmatpush1.bf16.msra.mxu0 %v3611
        %4928 = vmatprep.subr.bf16.mxu0 %v3620
        %4929 = vmatpush1.bf16.msra.mxu0 %v3619
        %4930 = vmatprep.subr.bf16.mxu0 %v3628
        %4931 = vmatpush1.bf16.msra.mxu0 %v3627
        %4932 = vmatprep.subr.bf16.mxu0 %v3636
        %4933 = vmatpush1.bf16.msra.mxu0 %v3635
        %4934 = vmatprep.subr.bf16.mxu0 %v3644
        %4935 = vmatpush1.bf16.msra.mxu0 %v3643
        %4936 = vmatprep.subr.bf16.mxu0 %v3652
        %4937 = vmatpush1.bf16.msra.mxu0 %v3651
        %4938 = vmatprep.subr.bf16.mxu0 %v3660
        %4939 = vmatpush1.bf16.msra.mxu0 %v3659
        %4940 = vmatprep.subr.bf16.mxu0 %v3668
        %4941 = vmatpush1.bf16.msra.mxu0 %v3667
        %4942 = vmatprep.subr.bf16.mxu0 %v3676
        %4943 = vmatpush1.bf16.msra.mxu0 %v3675
        %4944 = vmatprep.subr.bf16.mxu0 %v3684
        %4945 = vmatpush1.bf16.msra.mxu0 %v3683
        %4946 = vmatprep.subr.bf16.mxu0 %v3692
        %4947 = vmatpush1.bf16.msra.mxu0 %v3691
        %4948 = vmatprep.subr.bf16.mxu0 %v3700
        %4949 = vmatpush1.bf16.msra.mxu0 %v3699
        %4950 = vmatprep.subr.bf16.mxu0 %v3708
        %4951 = vmatpush1.bf16.msra.mxu0 %v3707
        %4952 = vmatprep.mubr.bf16.mxu0 %v4216
        %4953 = vmatmul.mubr.bf16.gmra.mrb[0].mxu0 %v4202
        %v4954 = vpop.f32.mrb[0].mxu0
        %v4955 = vadd.f32 %v4914, %v4954
        %v4956 = vpop.f32.mrb[0].mxu0
        %v4957 = vadd.f32 %v4916, %v4956
        %v4958 = vpop.f32.mrb[0].mxu0
        %v4959 = vpop.f32.mrb[0].mxu0
        %4960 = vdwg.mxu0
        %4961 = vmatprep.subr.bf16.mxu0 %v3716
        %4962 = vmatpush1.bf16.msra.mxu0 %v3715
        %4963 = vmatprep.subr.bf16.mxu0 %v3724
        %4964 = vmatpush1.bf16.msra.mxu0 %v3723
        %4965 = vmatprep.subr.bf16.mxu0 %v3732
        %4966 = vmatpush1.bf16.msra.mxu0 %v3731
        %4967 = vmatprep.subr.bf16.mxu0 %v3740
        %4968 = vmatpush1.bf16.msra.mxu0 %v3739
        %4969 = vmatprep.subr.bf16.mxu0 %v3748
        %4970 = vmatpush1.bf16.msra.mxu0 %v3747
        %4971 = vmatprep.subr.bf16.mxu0 %v3756
        %4972 = vmatpush1.bf16.msra.mxu0 %v3755
        %4973 = vmatprep.subr.bf16.mxu0 %v3764
        %4974 = vmatpush1.bf16.msra.mxu0 %v3763
        %4975 = vmatprep.subr.bf16.mxu0 %v3772
        %4976 = vmatpush1.bf16.msra.mxu0 %v3771
        %4977 = vmatprep.subr.bf16.mxu0 %v3780
        %4978 = vmatpush1.bf16.msra.mxu0 %v3779
        %4979 = vmatprep.subr.bf16.mxu0 %v3788
        %4980 = vmatpush1.bf16.msra.mxu0 %v3787
        %4981 = vmatprep.subr.bf16.mxu0 %v3796
        %4982 = vmatpush1.bf16.msra.mxu0 %v3795
        %4983 = vmatprep.subr.bf16.mxu0 %v3804
        %4984 = vmatpush1.bf16.msra.mxu0 %v3803
        %4985 = vmatprep.subr.bf16.mxu0 %v3812
        %4986 = vmatpush1.bf16.msra.mxu0 %v3811
        %4987 = vmatprep.subr.bf16.mxu0 %v3820
        %4988 = vmatpush1.bf16.msra.mxu0 %v3819
        %4989 = vmatprep.subr.bf16.mxu0 %v3828
        %4990 = vmatpush1.bf16.msra.mxu0 %v3827
        %4991 = vmatprep.subr.bf16.mxu0 %v3836
        %4992 = vmatpush1.bf16.msra.mxu0 %v3835
        %4993 = vmatprep.mubr.bf16.mxu0 %v4225
        %4994 = vmatmul.mubr.bf16.gmra.mrb[0].mxu0 %v4224
        %v4995 = vpop.f32.mrb[0].mxu0
        %v4996 = vadd.f32 %v4955, %v4995
        %v4997 = vpop.f32.mrb[0].mxu0
        %v4998 = vadd.f32 %v4957, %v4997
        %v4999 = vpop.f32.mrb[0].mxu0
        %v5000 = vpop.f32.mrb[0].mxu0
        %5001 = vdwg.mxu0
        %5002 = vmatprep.subr.bf16.mxu0 %v3844
        %5003 = vmatpush1.bf16.msra.mxu0 %v3843
        %5004 = vmatprep.subr.bf16.mxu0 %v3852
        %5005 = vmatpush1.bf16.msra.mxu0 %v3851
        %5006 = vmatprep.subr.bf16.mxu0 %v3860
        %5007 = vmatpush1.bf16.msra.mxu0 %v3859
        %5008 = vmatprep.subr.bf16.mxu0 %v3868
        %5009 = vmatpush1.bf16.msra.mxu0 %v3867
        %5010 = vmatprep.subr.bf16.mxu0 %v3876
        %5011 = vmatpush1.bf16.msra.mxu0 %v3875
        %5012 = vmatprep.subr.bf16.mxu0 %v3884
        %5013 = vmatpush1.bf16.msra.mxu0 %v3883
        %5014 = vmatprep.subr.bf16.mxu0 %v3892
        %5015 = vmatpush1.bf16.msra.mxu0 %v3891
        %5016 = vmatprep.subr.bf16.mxu0 %v3900
        %5017 = vmatpush1.bf16.msra.mxu0 %v3899
        %5018 = vmatprep.subr.bf16.mxu0 %v3908
        %5019 = vmatpush1.bf16.msra.mxu0 %v3907
        %5020 = vmatprep.subr.bf16.mxu0 %v3916
        %5021 = vmatpush1.bf16.msra.mxu0 %v3915
        %5022 = vmatprep.subr.bf16.mxu0 %v3924
        %5023 = vmatpush1.bf16.msra.mxu0 %v3923
        %5024 = vmatprep.subr.bf16.mxu0 %v3932
        %5025 = vmatpush1.bf16.msra.mxu0 %v3931
        %5026 = vmatprep.subr.bf16.mxu0 %v3940
        %5027 = vmatpush1.bf16.msra.mxu0 %v3939
        %5028 = vmatprep.subr.bf16.mxu0 %v3948
        %5029 = vmatpush1.bf16.msra.mxu0 %v3947
        %5030 = vmatprep.subr.bf16.mxu0 %v3956
        %5031 = vmatpush1.bf16.msra.mxu0 %v3955
        %5032 = vmatprep.subr.bf16.mxu0 %v3964
        %5033 = vmatpush1.bf16.msra.mxu0 %v3963
        %5034 = vmatprep.mubr.bf16.mxu0 %v4223
        %5035 = vmatmul.mubr.bf16.gmra.mrb[0].mxu0 %v4209
        %v5036 = vpop.f32.mrb[0].mxu0
        %v5037 = vadd.f32 %v4996, %v5036
        %v5038 = vpop.f32.mrb[0].mxu0
        %v5039 = vadd.f32 %v4998, %v5038
        %v5040 = vpop.f32.mrb[0].mxu0
        %v5041 = vpop.f32.mrb[0].mxu0
        %5042 = vdwg.mxu0
        %5043 = vmatprep.subr.bf16.mxu0 %v1542
        %5044 = vmatpush1.bf16.msra.mxu0 %v1541
        %5045 = vmatprep.subr.bf16.mxu0 %v1550
        %5046 = vmatpush1.bf16.msra.mxu0 %v1549
        %5047 = vmatprep.subr.bf16.mxu0 %v1558
        %5048 = vmatpush1.bf16.msra.mxu0 %v1557
        %5049 = vmatprep.subr.bf16.mxu0 %v1566
        %5050 = vmatpush1.bf16.msra.mxu0 %v1565
        %5051 = vmatprep.subr.bf16.mxu0 %v1574
        %5052 = vmatpush1.bf16.msra.mxu0 %v1573
        %5053 = vmatprep.subr.bf16.mxu0 %v1582
        %5054 = vmatpush1.bf16.msra.mxu0 %v1581
        %5055 = vmatprep.subr.bf16.mxu0 %v1590
        %5056 = vmatpush1.bf16.msra.mxu0 %v1589
        %5057 = vmatprep.subr.bf16.mxu0 %v1598
        %5058 = vmatpush1.bf16.msra.mxu0 %v1597
        %5059 = vmatprep.subr.bf16.mxu0 %v1606
        %5060 = vmatpush1.bf16.msra.mxu0 %v1605
        %5061 = vmatprep.subr.bf16.mxu0 %v1614
        %5062 = vmatpush1.bf16.msra.mxu0 %v1613
        %5063 = vmatprep.subr.bf16.mxu0 %v1622
        %5064 = vmatpush1.bf16.msra.mxu0 %v1621
        %5065 = vmatprep.subr.bf16.mxu0 %v1630
        %5066 = vmatpush1.bf16.msra.mxu0 %v1629
        %5067 = vmatprep.subr.bf16.mxu0 %v1638
        %5068 = vmatpush1.bf16.msra.mxu0 %v1637
        %5069 = vmatprep.subr.bf16.mxu0 %v1646
        %5070 = vmatpush1.bf16.msra.mxu0 %v1645
        %5071 = vmatprep.subr.bf16.mxu0 %v1654
        %5072 = vmatpush1.bf16.msra.mxu0 %v1653
        %5073 = vmatprep.subr.bf16.mxu0 %v1662
        %5074 = vmatpush1.bf16.msra.mxu0 %v1661
        %5075 = vmatprep.mubr.bf16.mxu0 %v4020
        %5076 = vmatmul.mubr.bf16.gmra.mrb[0].mxu0 %v4006
        %v5077 = vpop.f32.mrb[0].mxu0
        %v5078 = vadd.f32 0.0, %v5077
        %v5079 = vpop.f32.mrb[0].mxu0
        %v5080 = vadd.f32 0.0, %v5079
        %v5081 = vpop.f32.mrb[0].mxu0
        %v5082 = vpop.f32.mrb[0].mxu0
        %5083 = vdwg.mxu0
        %5084 = vmatprep.subr.bf16.mxu0 %v1670
        %5085 = vmatpush1.bf16.msra.mxu0 %v1669
        %5086 = vmatprep.subr.bf16.mxu0 %v1678
        %5087 = vmatpush1.bf16.msra.mxu0 %v1677
        %5088 = vmatprep.subr.bf16.mxu0 %v1686
        %5089 = vmatpush1.bf16.msra.mxu0 %v1685
        %5090 = vmatprep.subr.bf16.mxu0 %v1694
        %5091 = vmatpush1.bf16.msra.mxu0 %v1693
        %5092 = vmatprep.subr.bf16.mxu0 %v1702
        %5093 = vmatpush1.bf16.msra.mxu0 %v1701
        %5094 = vmatprep.subr.bf16.mxu0 %v1710
        %5095 = vmatpush1.bf16.msra.mxu0 %v1709
        %5096 = vmatprep.subr.bf16.mxu0 %v1718
        %5097 = vmatpush1.bf16.msra.mxu0 %v1717
        %5098 = vmatprep.subr.bf16.mxu0 %v1726
        %5099 = vmatpush1.bf16.msra.mxu0 %v1725
        %5100 = vmatprep.subr.bf16.mxu0 %v1734
        %5101 = vmatpush1.bf16.msra.mxu0 %v1733
        %5102 = vmatprep.subr.bf16.mxu0 %v1742
        %5103 = vmatpush1.bf16.msra.mxu0 %v1741
        %5104 = vmatprep.subr.bf16.mxu0 %v1750
        %5105 = vmatpush1.bf16.msra.mxu0 %v1749
        %5106 = vmatprep.subr.bf16.mxu0 %v1758
        %5107 = vmatpush1.bf16.msra.mxu0 %v1757
        %5108 = vmatprep.subr.bf16.mxu0 %v1766
        %5109 = vmatpush1.bf16.msra.mxu0 %v1765
        %5110 = vmatprep.subr.bf16.mxu0 %v1774
        %5111 = vmatpush1.bf16.msra.mxu0 %v1773
        %5112 = vmatprep.subr.bf16.mxu0 %v1782
        %5113 = vmatpush1.bf16.msra.mxu0 %v1781
        %5114 = vmatprep.subr.bf16.mxu0 %v1790
        %5115 = vmatpush1.bf16.msra.mxu0 %v1789
        %5116 = vmatprep.mubr.bf16.mxu0 %v4030
        %5117 = vmatmul.mubr.bf16.gmra.mrb[0].mxu0 %v4028
        %v5118 = vpop.f32.mrb[0].mxu0
        %v5119 = vadd.f32 %v5078, %v5118
        %v5120 = vpop.f32.mrb[0].mxu0
        %v5121 = vadd.f32 %v5080, %v5120
        %v5122 = vpop.f32.mrb[0].mxu0
        %v5123 = vpop.f32.mrb[0].mxu0
        %5124 = vdwg.mxu0
        %5125 = vmatprep.subr.bf16.mxu0 %v1798
        %5126 = vmatpush1.bf16.msra.mxu0 %v1797
        %5127 = vmatprep.subr.bf16.mxu0 %v1806
        %5128 = vmatpush1.bf16.msra.mxu0 %v1805
        %5129 = vmatprep.subr.bf16.mxu0 %v1814
        %5130 = vmatpush1.bf16.msra.mxu0 %v1813
        %5131 = vmatprep.subr.bf16.mxu0 %v1822
        %5132 = vmatpush1.bf16.msra.mxu0 %v1821
        %5133 = vmatprep.subr.bf16.mxu0 %v1830
        %5134 = vmatpush1.bf16.msra.mxu0 %v1829
        %5135 = vmatprep.subr.bf16.mxu0 %v1838
        %5136 = vmatpush1.bf16.msra.mxu0 %v1837
        %5137 = vmatprep.subr.bf16.mxu0 %v1846
        %5138 = vmatpush1.bf16.msra.mxu0 %v1845
        %5139 = vmatprep.subr.bf16.mxu0 %v1854
        %5140 = vmatpush1.bf16.msra.mxu0 %v1853
        %5141 = vmatprep.subr.bf16.mxu0 %v1862
        %5142 = vmatpush1.bf16.msra.mxu0 %v1861
        %5143 = vmatprep.subr.bf16.mxu0 %v1870
        %5144 = vmatpush1.bf16.msra.mxu0 %v1869
        %5145 = vmatprep.subr.bf16.mxu0 %v1878
        %5146 = vmatpush1.bf16.msra.mxu0 %v1877
        %5147 = vmatprep.subr.bf16.mxu0 %v1886
        %5148 = vmatpush1.bf16.msra.mxu0 %v1885
        %5149 = vmatprep.subr.bf16.mxu0 %v1894
        %5150 = vmatpush1.bf16.msra.mxu0 %v1893
        %5151 = vmatprep.subr.bf16.mxu0 %v1902
        %5152 = vmatpush1.bf16.msra.mxu0 %v1901
        %5153 = vmatprep.subr.bf16.mxu0 %v1910
        %5154 = vmatpush1.bf16.msra.mxu0 %v1909
        %5155 = vmatprep.subr.bf16.mxu0 %v1918
        %5156 = vmatpush1.bf16.msra.mxu0 %v1917
        %5157 = vmatprep.mubr.bf16.mxu0 %v4027
        %5158 = vmatmul.mubr.bf16.gmra.mrb[0].mxu0 %v4013
        %v5159 = vpop.f32.mrb[0].mxu0
        %v5160 = vadd.f32 %v5119, %v5159
        %v5161 = vpop.f32.mrb[0].mxu0
        %v5162 = vadd.f32 %v5121, %v5161
        %v5163 = vpop.f32.mrb[0].mxu0
        %v5164 = vpop.f32.mrb[0].mxu0
        %5165 = vdwg.mxu0
        %5166 = vmatprep.subr.bf16.mxu0 %v1926
        %5167 = vmatpush1.bf16.msra.mxu0 %v1925
        %5168 = vmatprep.subr.bf16.mxu0 %v1934
        %5169 = vmatpush1.bf16.msra.mxu0 %v1933
        %5170 = vmatprep.subr.bf16.mxu0 %v1942
        %5171 = vmatpush1.bf16.msra.mxu0 %v1941
        %5172 = vmatprep.subr.bf16.mxu0 %v1950
        %5173 = vmatpush1.bf16.msra.mxu0 %v1949
        %5174 = vmatprep.subr.bf16.mxu0 %v1958
        %5175 = vmatpush1.bf16.msra.mxu0 %v1957
        %5176 = vmatprep.subr.bf16.mxu0 %v1966
        %5177 = vmatpush1.bf16.msra.mxu0 %v1965
        %5178 = vmatprep.subr.bf16.mxu0 %v1974
        %5179 = vmatpush1.bf16.msra.mxu0 %v1973
        %5180 = vmatprep.subr.bf16.mxu0 %v1982
        %5181 = vmatpush1.bf16.msra.mxu0 %v1981
        %5182 = vmatprep.subr.bf16.mxu0 %v1990
        %5183 = vmatpush1.bf16.msra.mxu0 %v1989
        %5184 = vmatprep.subr.bf16.mxu0 %v1998
        %5185 = vmatpush1.bf16.msra.mxu0 %v1997
        %5186 = vmatprep.subr.bf16.mxu0 %v2006
        %5187 = vmatpush1.bf16.msra.mxu0 %v2005
        %5188 = vmatprep.subr.bf16.mxu0 %v2014
        %5189 = vmatpush1.bf16.msra.mxu0 %v2013
        %5190 = vmatprep.subr.bf16.mxu0 %v2022
        %5191 = vmatpush1.bf16.msra.mxu0 %v2021
        %5192 = vmatprep.subr.bf16.mxu0 %v2030
        %5193 = vmatpush1.bf16.msra.mxu0 %v2029
        %5194 = vmatprep.subr.bf16.mxu0 %v2038
        %5195 = vmatpush1.bf16.msra.mxu0 %v2037
        %5196 = vmatprep.subr.bf16.mxu0 %v2046
        %5197 = vmatpush1.bf16.msra.mxu0 %v2045
        %5198 = vmatprep.mubr.bf16.mxu0 %v4031
        %5199 = vmatmul.mubr.bf16.gmra.mrb[0].mxu0 %v4029
        %v5200 = vpop.f32.mrb[0].mxu0
        %v5201 = vadd.f32 %v5160, %v5200
        %v5202 = vpop.f32.mrb[0].mxu0
        %v5203 = vadd.f32 %v5162, %v5202
        %v5204 = vpop.f32.mrb[0].mxu0
        %v5205 = vpop.f32.mrb[0].mxu0
        %5206 = vdwg.mxu0
        %5207 = vmatprep.subr.bf16.mxu0 %v2054
        %5208 = vmatpush1.bf16.msra.mxu0 %v2053
        %5209 = vmatprep.subr.bf16.mxu0 %v2062
        %5210 = vmatpush1.bf16.msra.mxu0 %v2061
        %5211 = vmatprep.subr.bf16.mxu0 %v2070
        %5212 = vmatpush1.bf16.msra.mxu0 %v2069
        %5213 = vmatprep.subr.bf16.mxu0 %v2078
        %5214 = vmatpush1.bf16.msra.mxu0 %v2077
        %5215 = vmatprep.subr.bf16.mxu0 %v2086
        %5216 = vmatpush1.bf16.msra.mxu0 %v2085
        %5217 = vmatprep.subr.bf16.mxu0 %v2094
        %5218 = vmatpush1.bf16.msra.mxu0 %v2093
        %5219 = vmatprep.subr.bf16.mxu0 %v2102
        %5220 = vmatpush1.bf16.msra.mxu0 %v2101
        %5221 = vmatprep.subr.bf16.mxu0 %v2110
        %5222 = vmatpush1.bf16.msra.mxu0 %v2109
        %5223 = vmatprep.subr.bf16.mxu0 %v2118
        %5224 = vmatpush1.bf16.msra.mxu0 %v2117
        %5225 = vmatprep.subr.bf16.mxu0 %v2126
        %5226 = vmatpush1.bf16.msra.mxu0 %v2125
        %5227 = vmatprep.subr.bf16.mxu0 %v2134
        %5228 = vmatpush1.bf16.msra.mxu0 %v2133
        %5229 = vmatprep.subr.bf16.mxu0 %v2142
        %5230 = vmatpush1.bf16.msra.mxu0 %v2141
        %5231 = vmatprep.subr.bf16.mxu0 %v2150
        %5232 = vmatpush1.bf16.msra.mxu0 %v2149
        %5233 = vmatprep.subr.bf16.mxu0 %v2158
        %5234 = vmatpush1.bf16.msra.mxu0 %v2157
        %5235 = vmatprep.subr.bf16.mxu0 %v2166
        %5236 = vmatpush1.bf16.msra.mxu0 %v2165
        %5237 = vmatprep.subr.bf16.mxu0 %v2174
        %5238 = vmatpush1.bf16.msra.mxu0 %v2173
        %5239 = vmatprep.mubr.bf16.mxu0 %v4069
        %5240 = vmatmul.mubr.bf16.gmra.mrb[0].mxu0 %v4055
        %v5241 = vpop.f32.mrb[0].mxu0
        %v5242 = vadd.f32 %v5201, %v5241
        %v5243 = vpop.f32.mrb[0].mxu0
        %v5244 = vadd.f32 %v5203, %v5243
        %v5245 = vpop.f32.mrb[0].mxu0
        %v5246 = vpop.f32.mrb[0].mxu0
        %5247 = vdwg.mxu0
        %5248 = vmatprep.subr.bf16.mxu0 %v2182
        %5249 = vmatpush1.bf16.msra.mxu0 %v2181
        %5250 = vmatprep.subr.bf16.mxu0 %v2190
        %5251 = vmatpush1.bf16.msra.mxu0 %v2189
        %5252 = vmatprep.subr.bf16.mxu0 %v2198
        %5253 = vmatpush1.bf16.msra.mxu0 %v2197
        %5254 = vmatprep.subr.bf16.mxu0 %v2206
        %5255 = vmatpush1.bf16.msra.mxu0 %v2205
        %5256 = vmatprep.subr.bf16.mxu0 %v2214
        %5257 = vmatpush1.bf16.msra.mxu0 %v2213
        %5258 = vmatprep.subr.bf16.mxu0 %v2222
        %5259 = vmatpush1.bf16.msra.mxu0 %v2221
        %5260 = vmatprep.subr.bf16.mxu0 %v2230
        %5261 = vmatpush1.bf16.msra.mxu0 %v2229
        %5262 = vmatprep.subr.bf16.mxu0 %v2238
        %5263 = vmatpush1.bf16.msra.mxu0 %v2237
        %5264 = vmatprep.subr.bf16.mxu0 %v2246
        %5265 = vmatpush1.bf16.msra.mxu0 %v2245
        %5266 = vmatprep.subr.bf16.mxu0 %v2254
        %5267 = vmatpush1.bf16.msra.mxu0 %v2253
        %5268 = vmatprep.subr.bf16.mxu0 %v2262
        %5269 = vmatpush1.bf16.msra.mxu0 %v2261
        %5270 = vmatprep.subr.bf16.mxu0 %v2270
        %5271 = vmatpush1.bf16.msra.mxu0 %v2269
        %5272 = vmatprep.subr.bf16.mxu0 %v2278
        %5273 = vmatpush1.bf16.msra.mxu0 %v2277
        %5274 = vmatprep.subr.bf16.mxu0 %v2286
        %5275 = vmatpush1.bf16.msra.mxu0 %v2285
        %5276 = vmatprep.subr.bf16.mxu0 %v2294
        %5277 = vmatpush1.bf16.msra.mxu0 %v2293
        %5278 = vmatprep.subr.bf16.mxu0 %v2302
        %5279 = vmatpush1.bf16.msra.mxu0 %v2301
        %5280 = vmatprep.mubr.bf16.mxu0 %v4079
        %5281 = vmatmul.mubr.bf16.gmra.mrb[0].mxu0 %v4077
        %v5282 = vpop.f32.mrb[0].mxu0
        %v5283 = vadd.f32 %v5242, %v5282
        %v5284 = vpop.f32.mrb[0].mxu0
        %v5285 = vadd.f32 %v5244, %v5284
        %v5286 = vpop.f32.mrb[0].mxu0
        %v5287 = vpop.f32.mrb[0].mxu0
        %5288 = vdwg.mxu0
        %5289 = vmatprep.subr.bf16.mxu0 %v2310
        %5290 = vmatpush1.bf16.msra.mxu0 %v2309
        %5291 = vmatprep.subr.bf16.mxu0 %v2318
        %5292 = vmatpush1.bf16.msra.mxu0 %v2317
        %5293 = vmatprep.subr.bf16.mxu0 %v2326
        %5294 = vmatpush1.bf16.msra.mxu0 %v2325
        %5295 = vmatprep.subr.bf16.mxu0 %v2334
        %5296 = vmatpush1.bf16.msra.mxu0 %v2333
        %5297 = vmatprep.subr.bf16.mxu0 %v2342
        %5298 = vmatpush1.bf16.msra.mxu0 %v2341
        %5299 = vmatprep.subr.bf16.mxu0 %v2350
        %5300 = vmatpush1.bf16.msra.mxu0 %v2349
        %5301 = vmatprep.subr.bf16.mxu0 %v2358
        %5302 = vmatpush1.bf16.msra.mxu0 %v2357
        %5303 = vmatprep.subr.bf16.mxu0 %v2366
        %5304 = vmatpush1.bf16.msra.mxu0 %v2365
        %5305 = vmatprep.subr.bf16.mxu0 %v2374
        %5306 = vmatpush1.bf16.msra.mxu0 %v2373
        %5307 = vmatprep.subr.bf16.mxu0 %v2382
        %5308 = vmatpush1.bf16.msra.mxu0 %v2381
        %5309 = vmatprep.subr.bf16.mxu0 %v2390
        %5310 = vmatpush1.bf16.msra.mxu0 %v2389
        %5311 = vmatprep.subr.bf16.mxu0 %v2398
        %5312 = vmatpush1.bf16.msra.mxu0 %v2397
        %5313 = vmatprep.subr.bf16.mxu0 %v2406
        %5314 = vmatpush1.bf16.msra.mxu0 %v2405
        %5315 = vmatprep.subr.bf16.mxu0 %v2414
        %5316 = vmatpush1.bf16.msra.mxu0 %v2413
        %5317 = vmatprep.subr.bf16.mxu0 %v2422
        %5318 = vmatpush1.bf16.msra.mxu0 %v2421
        %5319 = vmatprep.subr.bf16.mxu0 %v2430
        %5320 = vmatpush1.bf16.msra.mxu0 %v2429
        %5321 = vmatprep.mubr.bf16.mxu0 %v4076
        %5322 = vmatmul.mubr.bf16.gmra.mrb[0].mxu0 %v4062
        %v5323 = vpop.f32.mrb[0].mxu0
        %v5324 = vadd.f32 %v5283, %v5323
        %v5325 = vpop.f32.mrb[0].mxu0
        %v5326 = vadd.f32 %v5285, %v5325
        %v5327 = vpop.f32.mrb[0].mxu0
        %v5328 = vpop.f32.mrb[0].mxu0
        %5329 = vdwg.mxu0
        %5330 = vmatprep.subr.bf16.mxu0 %v2438
        %5331 = vmatpush1.bf16.msra.mxu0 %v2437
        %5332 = vmatprep.subr.bf16.mxu0 %v2446
        %5333 = vmatpush1.bf16.msra.mxu0 %v2445
        %5334 = vmatprep.subr.bf16.mxu0 %v2454
        %5335 = vmatpush1.bf16.msra.mxu0 %v2453
        %5336 = vmatprep.subr.bf16.mxu0 %v2462
        %5337 = vmatpush1.bf16.msra.mxu0 %v2461
        %5338 = vmatprep.subr.bf16.mxu0 %v2470
        %5339 = vmatpush1.bf16.msra.mxu0 %v2469
        %5340 = vmatprep.subr.bf16.mxu0 %v2478
        %5341 = vmatpush1.bf16.msra.mxu0 %v2477
        %5342 = vmatprep.subr.bf16.mxu0 %v2486
        %5343 = vmatpush1.bf16.msra.mxu0 %v2485
        %5344 = vmatprep.subr.bf16.mxu0 %v2494
        %5345 = vmatpush1.bf16.msra.mxu0 %v2493
        %5346 = vmatprep.subr.bf16.mxu0 %v2502
        %5347 = vmatpush1.bf16.msra.mxu0 %v2501
        %5348 = vmatprep.subr.bf16.mxu0 %v2510
        %5349 = vmatpush1.bf16.msra.mxu0 %v2509
        %5350 = vmatprep.subr.bf16.mxu0 %v2518
        %5351 = vmatpush1.bf16.msra.mxu0 %v2517
        %5352 = vmatprep.subr.bf16.mxu0 %v2526
        %5353 = vmatpush1.bf16.msra.mxu0 %v2525
        %5354 = vmatprep.subr.bf16.mxu0 %v2534
        %5355 = vmatpush1.bf16.msra.mxu0 %v2533
        %5356 = vmatprep.subr.bf16.mxu0 %v2542
        %5357 = vmatpush1.bf16.msra.mxu0 %v2541
        %5358 = vmatprep.subr.bf16.mxu0 %v2550
        %5359 = vmatpush1.bf16.msra.mxu0 %v2549
        %5360 = vmatprep.subr.bf16.mxu0 %v2558
        %5361 = vmatpush1.bf16.msra.mxu0 %v2557
        %5362 = vmatprep.mubr.bf16.mxu0 %v4080
        %5363 = vmatmul.mubr.bf16.gmra.mrb[0].mxu0 %v4078
        %v5364 = vpop.f32.mrb[0].mxu0
        %v5365 = vadd.f32 %v5324, %v5364
        %v5366 = vpop.f32.mrb[0].mxu0
        %v5367 = vadd.f32 %v5326, %v5366
        %v5368 = vpop.f32.mrb[0].mxu0
        %v5369 = vpop.f32.mrb[0].mxu0
        %5370 = vdwg.mxu0
        %5371 = vmatprep.subr.bf16.mxu0 %v2566
        %5372 = vmatpush1.bf16.msra.mxu0 %v2565
        %5373 = vmatprep.subr.bf16.mxu0 %v2574
        %5374 = vmatpush1.bf16.msra.mxu0 %v2573
        %5375 = vmatprep.subr.bf16.mxu0 %v2582
        %5376 = vmatpush1.bf16.msra.mxu0 %v2581
        %5377 = vmatprep.subr.bf16.mxu0 %v2590
        %5378 = vmatpush1.bf16.msra.mxu0 %v2589
        %5379 = vmatprep.subr.bf16.mxu0 %v2598
        %5380 = vmatpush1.bf16.msra.mxu0 %v2597
        %5381 = vmatprep.subr.bf16.mxu0 %v2606
        %5382 = vmatpush1.bf16.msra.mxu0 %v2605
        %5383 = vmatprep.subr.bf16.mxu0 %v2614
        %5384 = vmatpush1.bf16.msra.mxu0 %v2613
        %5385 = vmatprep.subr.bf16.mxu0 %v2622
        %5386 = vmatpush1.bf16.msra.mxu0 %v2621
        %5387 = vmatprep.subr.bf16.mxu0 %v2630
        %5388 = vmatpush1.bf16.msra.mxu0 %v2629
        %5389 = vmatprep.subr.bf16.mxu0 %v2638
        %5390 = vmatpush1.bf16.msra.mxu0 %v2637
        %5391 = vmatprep.subr.bf16.mxu0 %v2646
        %5392 = vmatpush1.bf16.msra.mxu0 %v2645
        %5393 = vmatprep.subr.bf16.mxu0 %v2654
        %5394 = vmatpush1.bf16.msra.mxu0 %v2653
        %5395 = vmatprep.subr.bf16.mxu0 %v2662
        %5396 = vmatpush1.bf16.msra.mxu0 %v2661
        %5397 = vmatprep.subr.bf16.mxu0 %v2670
        %5398 = vmatpush1.bf16.msra.mxu0 %v2669
        %5399 = vmatprep.subr.bf16.mxu0 %v2678
        %5400 = vmatpush1.bf16.msra.mxu0 %v2677
        %5401 = vmatprep.subr.bf16.mxu0 %v2686
        %5402 = vmatpush1.bf16.msra.mxu0 %v2685
        %5403 = vmatprep.mubr.bf16.mxu0 %v4118
        %5404 = vmatmul.mubr.bf16.gmra.mrb[0].mxu0 %v4104
        %v5405 = vpop.f32.mrb[0].mxu0
        %v5406 = vadd.f32 %v5365, %v5405
        %v5407 = vpop.f32.mrb[0].mxu0
        %v5408 = vadd.f32 %v5367, %v5407
        %v5409 = vpop.f32.mrb[0].mxu0
        %v5410 = vpop.f32.mrb[0].mxu0
        %5411 = vdwg.mxu0
        %5412 = vmatprep.subr.bf16.mxu0 %v2694
        %5413 = vmatpush1.bf16.msra.mxu0 %v2693
        %5414 = vmatprep.subr.bf16.mxu0 %v2702
        %5415 = vmatpush1.bf16.msra.mxu0 %v2701
        %5416 = vmatprep.subr.bf16.mxu0 %v2710
        %5417 = vmatpush1.bf16.msra.mxu0 %v2709
        %5418 = vmatprep.subr.bf16.mxu0 %v2718
        %5419 = vmatpush1.bf16.msra.mxu0 %v2717
        %5420 = vmatprep.subr.bf16.mxu0 %v2726
        %5421 = vmatpush1.bf16.msra.mxu0 %v2725
        %5422 = vmatprep.subr.bf16.mxu0 %v2734
        %5423 = vmatpush1.bf16.msra.mxu0 %v2733
        %5424 = vmatprep.subr.bf16.mxu0 %v2742
        %5425 = vmatpush1.bf16.msra.mxu0 %v2741
        %5426 = vmatprep.subr.bf16.mxu0 %v2750
        %5427 = vmatpush1.bf16.msra.mxu0 %v2749
        %5428 = vmatprep.subr.bf16.mxu0 %v2758
        %5429 = vmatpush1.bf16.msra.mxu0 %v2757
        %5430 = vmatprep.subr.bf16.mxu0 %v2766
        %5431 = vmatpush1.bf16.msra.mxu0 %v2765
        %5432 = vmatprep.subr.bf16.mxu0 %v2774
        %5433 = vmatpush1.bf16.msra.mxu0 %v2773
        %5434 = vmatprep.subr.bf16.mxu0 %v2782
        %5435 = vmatpush1.bf16.msra.mxu0 %v2781
        %5436 = vmatprep.subr.bf16.mxu0 %v2790
        %5437 = vmatpush1.bf16.msra.mxu0 %v2789
        %5438 = vmatprep.subr.bf16.mxu0 %v2798
        %5439 = vmatpush1.bf16.msra.mxu0 %v2797
        %5440 = vmatprep.subr.bf16.mxu0 %v2806
        %5441 = vmatpush1.bf16.msra.mxu0 %v2805
        %5442 = vmatprep.subr.bf16.mxu0 %v2814
        %5443 = vmatpush1.bf16.msra.mxu0 %v2813
        %5444 = vmatprep.mubr.bf16.mxu0 %v4128
        %5445 = vmatmul.mubr.bf16.gmra.mrb[0].mxu0 %v4126
        %v5446 = vpop.f32.mrb[0].mxu0
        %v5447 = vadd.f32 %v5406, %v5446
        %v5448 = vpop.f32.mrb[0].mxu0
        %v5449 = vadd.f32 %v5408, %v5448
        %v5450 = vpop.f32.mrb[0].mxu0
        %v5451 = vpop.f32.mrb[0].mxu0
        %5452 = vdwg.mxu0
        %5453 = vmatprep.subr.bf16.mxu0 %v2822
        %5454 = vmatpush1.bf16.msra.mxu0 %v2821
        %5455 = vmatprep.subr.bf16.mxu0 %v2830
        %5456 = vmatpush1.bf16.msra.mxu0 %v2829
        %5457 = vmatprep.subr.bf16.mxu0 %v2838
        %5458 = vmatpush1.bf16.msra.mxu0 %v2837
        %5459 = vmatprep.subr.bf16.mxu0 %v2846
        %5460 = vmatpush1.bf16.msra.mxu0 %v2845
        %5461 = vmatprep.subr.bf16.mxu0 %v2854
        %5462 = vmatpush1.bf16.msra.mxu0 %v2853
        %5463 = vmatprep.subr.bf16.mxu0 %v2862
        %5464 = vmatpush1.bf16.msra.mxu0 %v2861
        %5465 = vmatprep.subr.bf16.mxu0 %v2870
        %5466 = vmatpush1.bf16.msra.mxu0 %v2869
        %5467 = vmatprep.subr.bf16.mxu0 %v2878
        %5468 = vmatpush1.bf16.msra.mxu0 %v2877
        %5469 = vmatprep.subr.bf16.mxu0 %v2886
        %5470 = vmatpush1.bf16.msra.mxu0 %v2885
        %5471 = vmatprep.subr.bf16.mxu0 %v2894
        %5472 = vmatpush1.bf16.msra.mxu0 %v2893
        %5473 = vmatprep.subr.bf16.mxu0 %v2902
        %5474 = vmatpush1.bf16.msra.mxu0 %v2901
        %5475 = vmatprep.subr.bf16.mxu0 %v2910
        %5476 = vmatpush1.bf16.msra.mxu0 %v2909
        %5477 = vmatprep.subr.bf16.mxu0 %v2918
        %5478 = vmatpush1.bf16.msra.mxu0 %v2917
        %5479 = vmatprep.subr.bf16.mxu0 %v2926
        %5480 = vmatpush1.bf16.msra.mxu0 %v2925
        %5481 = vmatprep.subr.bf16.mxu0 %v2934
        %5482 = vmatpush1.bf16.msra.mxu0 %v2933
        %5483 = vmatprep.subr.bf16.mxu0 %v2942
        %5484 = vmatpush1.bf16.msra.mxu0 %v2941
        %5485 = vmatprep.mubr.bf16.mxu0 %v4125
        %5486 = vmatmul.mubr.bf16.gmra.mrb[0].mxu0 %v4111
        %v5487 = vpop.f32.mrb[0].mxu0
        %v5488 = vadd.f32 %v5447, %v5487
        %v5489 = vpop.f32.mrb[0].mxu0
        %v5490 = vadd.f32 %v5449, %v5489
        %v5491 = vpop.f32.mrb[0].mxu0
        %v5492 = vpop.f32.mrb[0].mxu0
        %5493 = vdwg.mxu0
        %5494 = vmatprep.subr.bf16.mxu0 %v2950
        %5495 = vmatpush1.bf16.msra.mxu0 %v2949
        %5496 = vmatprep.subr.bf16.mxu0 %v2958
        %5497 = vmatpush1.bf16.msra.mxu0 %v2957
        %5498 = vmatprep.subr.bf16.mxu0 %v2966
        %5499 = vmatpush1.bf16.msra.mxu0 %v2965
        %5500 = vmatprep.subr.bf16.mxu0 %v2974
        %5501 = vmatpush1.bf16.msra.mxu0 %v2973
        %5502 = vmatprep.subr.bf16.mxu0 %v2982
        %5503 = vmatpush1.bf16.msra.mxu0 %v2981
        %5504 = vmatprep.subr.bf16.mxu0 %v2990
        %5505 = vmatpush1.bf16.msra.mxu0 %v2989
        %5506 = vmatprep.subr.bf16.mxu0 %v2998
        %5507 = vmatpush1.bf16.msra.mxu0 %v2997
        %5508 = vmatprep.subr.bf16.mxu0 %v3006
        %5509 = vmatpush1.bf16.msra.mxu0 %v3005
        %5510 = vmatprep.subr.bf16.mxu0 %v3014
        %5511 = vmatpush1.bf16.msra.mxu0 %v3013
        %5512 = vmatprep.subr.bf16.mxu0 %v3022
        %5513 = vmatpush1.bf16.msra.mxu0 %v3021
        %5514 = vmatprep.subr.bf16.mxu0 %v3030
        %5515 = vmatpush1.bf16.msra.mxu0 %v3029
        %5516 = vmatprep.subr.bf16.mxu0 %v3038
        %5517 = vmatpush1.bf16.msra.mxu0 %v3037
        %5518 = vmatprep.subr.bf16.mxu0 %v3046
        %5519 = vmatpush1.bf16.msra.mxu0 %v3045
        %5520 = vmatprep.subr.bf16.mxu0 %v3054
        %5521 = vmatpush1.bf16.msra.mxu0 %v3053
        %5522 = vmatprep.subr.bf16.mxu0 %v3062
        %5523 = vmatpush1.bf16.msra.mxu0 %v3061
        %5524 = vmatprep.subr.bf16.mxu0 %v3070
        %5525 = vmatpush1.bf16.msra.mxu0 %v3069
        %5526 = vmatprep.mubr.bf16.mxu0 %v4129
        %5527 = vmatmul.mubr.bf16.gmra.mrb[0].mxu0 %v4127
        %v5528 = vpop.f32.mrb[0].mxu0
        %v5529 = vadd.f32 %v5488, %v5528
        %v5530 = vpop.f32.mrb[0].mxu0
        %v5531 = vadd.f32 %v5490, %v5530
        %v5532 = vpop.f32.mrb[0].mxu0
        %v5533 = vpop.f32.mrb[0].mxu0
        %5534 = vdwg.mxu0
        %5535 = vmatprep.subr.bf16.mxu0 %v3078
        %5536 = vmatpush1.bf16.msra.mxu0 %v3077
        %5537 = vmatprep.subr.bf16.mxu0 %v3086
        %5538 = vmatpush1.bf16.msra.mxu0 %v3085
        %5539 = vmatprep.subr.bf16.mxu0 %v3094
        %5540 = vmatpush1.bf16.msra.mxu0 %v3093
        %5541 = vmatprep.subr.bf16.mxu0 %v3102
        %5542 = vmatpush1.bf16.msra.mxu0 %v3101
        %5543 = vmatprep.subr.bf16.mxu0 %v3110
        %5544 = vmatpush1.bf16.msra.mxu0 %v3109
        %5545 = vmatprep.subr.bf16.mxu0 %v3118
        %5546 = vmatpush1.bf16.msra.mxu0 %v3117
        %5547 = vmatprep.subr.bf16.mxu0 %v3126
        %5548 = vmatpush1.bf16.msra.mxu0 %v3125
        %5549 = vmatprep.subr.bf16.mxu0 %v3134
        %5550 = vmatpush1.bf16.msra.mxu0 %v3133
        %5551 = vmatprep.subr.bf16.mxu0 %v3142
        %5552 = vmatpush1.bf16.msra.mxu0 %v3141
        %5553 = vmatprep.subr.bf16.mxu0 %v3150
        %5554 = vmatpush1.bf16.msra.mxu0 %v3149
        %5555 = vmatprep.subr.bf16.mxu0 %v3158
        %5556 = vmatpush1.bf16.msra.mxu0 %v3157
        %5557 = vmatprep.subr.bf16.mxu0 %v3166
        %5558 = vmatpush1.bf16.msra.mxu0 %v3165
        %5559 = vmatprep.subr.bf16.mxu0 %v3174
        %5560 = vmatpush1.bf16.msra.mxu0 %v3173
        %5561 = vmatprep.subr.bf16.mxu0 %v3182
        %5562 = vmatpush1.bf16.msra.mxu0 %v3181
        %5563 = vmatprep.subr.bf16.mxu0 %v3190
        %5564 = vmatpush1.bf16.msra.mxu0 %v3189
        %5565 = vmatprep.subr.bf16.mxu0 %v3198
        %5566 = vmatpush1.bf16.msra.mxu0 %v3197
        %5567 = vmatprep.mubr.bf16.mxu0 %v4167
        %5568 = vmatmul.mubr.bf16.gmra.mrb[0].mxu0 %v4153
        %v5569 = vpop.f32.mrb[0].mxu0
        %v5570 = vadd.f32 %v5529, %v5569
        %v5571 = vpop.f32.mrb[0].mxu0
        %v5572 = vadd.f32 %v5531, %v5571
        %v5573 = vpop.f32.mrb[0].mxu0
        %v5574 = vpop.f32.mrb[0].mxu0
        %5575 = vdwg.mxu0
        %5576 = vmatprep.subr.bf16.mxu0 %v3206
        %5577 = vmatpush1.bf16.msra.mxu0 %v3205
        %5578 = vmatprep.subr.bf16.mxu0 %v3214
        %5579 = vmatpush1.bf16.msra.mxu0 %v3213
        %5580 = vmatprep.subr.bf16.mxu0 %v3222
        %5581 = vmatpush1.bf16.msra.mxu0 %v3221
        %5582 = vmatprep.subr.bf16.mxu0 %v3230
        %5583 = vmatpush1.bf16.msra.mxu0 %v3229
        %5584 = vmatprep.subr.bf16.mxu0 %v3238
        %5585 = vmatpush1.bf16.msra.mxu0 %v3237
        %5586 = vmatprep.subr.bf16.mxu0 %v3246
        %5587 = vmatpush1.bf16.msra.mxu0 %v3245
        %5588 = vmatprep.subr.bf16.mxu0 %v3254
        %5589 = vmatpush1.bf16.msra.mxu0 %v3253
        %5590 = vmatprep.subr.bf16.mxu0 %v3262
        %5591 = vmatpush1.bf16.msra.mxu0 %v3261
        %5592 = vmatprep.subr.bf16.mxu0 %v3270
        %5593 = vmatpush1.bf16.msra.mxu0 %v3269
        %5594 = vmatprep.subr.bf16.mxu0 %v3278
        %5595 = vmatpush1.bf16.msra.mxu0 %v3277
        %5596 = vmatprep.subr.bf16.mxu0 %v3286
        %5597 = vmatpush1.bf16.msra.mxu0 %v3285
        %5598 = vmatprep.subr.bf16.mxu0 %v3294
        %5599 = vmatpush1.bf16.msra.mxu0 %v3293
        %5600 = vmatprep.subr.bf16.mxu0 %v3302
        %5601 = vmatpush1.bf16.msra.mxu0 %v3301
        %5602 = vmatprep.subr.bf16.mxu0 %v3310
        %5603 = vmatpush1.bf16.msra.mxu0 %v3309
        %5604 = vmatprep.subr.bf16.mxu0 %v3318
        %5605 = vmatpush1.bf16.msra.mxu0 %v3317
        %5606 = vmatprep.subr.bf16.mxu0 %v3326
        %5607 = vmatpush1.bf16.msra.mxu0 %v3325
        %5608 = vmatprep.mubr.bf16.mxu0 %v4177
        %5609 = vmatmul.mubr.bf16.gmra.mrb[0].mxu0 %v4175
        %v5610 = vpop.f32.mrb[0].mxu0
        %v5611 = vadd.f32 %v5570, %v5610
        %v5612 = vpop.f32.mrb[0].mxu0
        %v5613 = vadd.f32 %v5572, %v5612
        %v5614 = vpop.f32.mrb[0].mxu0
        %v5615 = vpop.f32.mrb[0].mxu0
        %5616 = vdwg.mxu0
        %5617 = vmatprep.subr.bf16.mxu0 %v3334
        %5618 = vmatpush1.bf16.msra.mxu0 %v3333
        %5619 = vmatprep.subr.bf16.mxu0 %v3342
        %5620 = vmatpush1.bf16.msra.mxu0 %v3341
        %5621 = vmatprep.subr.bf16.mxu0 %v3350
        %5622 = vmatpush1.bf16.msra.mxu0 %v3349
        %5623 = vmatprep.subr.bf16.mxu0 %v3358
        %5624 = vmatpush1.bf16.msra.mxu0 %v3357
        %5625 = vmatprep.subr.bf16.mxu0 %v3366
        %5626 = vmatpush1.bf16.msra.mxu0 %v3365
        %5627 = vmatprep.subr.bf16.mxu0 %v3374
        %5628 = vmatpush1.bf16.msra.mxu0 %v3373
        %5629 = vmatprep.subr.bf16.mxu0 %v3382
        %5630 = vmatpush1.bf16.msra.mxu0 %v3381
        %5631 = vmatprep.subr.bf16.mxu0 %v3390
        %5632 = vmatpush1.bf16.msra.mxu0 %v3389
        %5633 = vmatprep.subr.bf16.mxu0 %v3398
        %5634 = vmatpush1.bf16.msra.mxu0 %v3397
        %5635 = vmatprep.subr.bf16.mxu0 %v3406
        %5636 = vmatpush1.bf16.msra.mxu0 %v3405
        %5637 = vmatprep.subr.bf16.mxu0 %v3414
        %5638 = vmatpush1.bf16.msra.mxu0 %v3413
        %5639 = vmatprep.subr.bf16.mxu0 %v3422
        %5640 = vmatpush1.bf16.msra.mxu0 %v3421
        %5641 = vmatprep.subr.bf16.mxu0 %v3430
        %5642 = vmatpush1.bf16.msra.mxu0 %v3429
        %5643 = vmatprep.subr.bf16.mxu0 %v3438
        %5644 = vmatpush1.bf16.msra.mxu0 %v3437
        %5645 = vmatprep.subr.bf16.mxu0 %v3446
        %5646 = vmatpush1.bf16.msra.mxu0 %v3445
        %5647 = vmatprep.subr.bf16.mxu0 %v3454
        %5648 = vmatpush1.bf16.msra.mxu0 %v3453
        %5649 = vmatprep.mubr.bf16.mxu0 %v4174
        %5650 = vmatmul.mubr.bf16.gmra.mrb[0].mxu0 %v4160
        %v5651 = vpop.f32.mrb[0].mxu0
        %v5652 = vadd.f32 %v5611, %v5651
        %v5653 = vpop.f32.mrb[0].mxu0
        %v5654 = vadd.f32 %v5613, %v5653
        %v5655 = vpop.f32.mrb[0].mxu0
        %v5656 = vpop.f32.mrb[0].mxu0
        %5657 = vdwg.mxu0
        %5658 = vmatprep.subr.bf16.mxu0 %v3462
        %5659 = vmatpush1.bf16.msra.mxu0 %v3461
        %5660 = vmatprep.subr.bf16.mxu0 %v3470
        %5661 = vmatpush1.bf16.msra.mxu0 %v3469
        %5662 = vmatprep.subr.bf16.mxu0 %v3478
        %5663 = vmatpush1.bf16.msra.mxu0 %v3477
        %5664 = vmatprep.subr.bf16.mxu0 %v3486
        %5665 = vmatpush1.bf16.msra.mxu0 %v3485
        %5666 = vmatprep.subr.bf16.mxu0 %v3494
        %5667 = vmatpush1.bf16.msra.mxu0 %v3493
        %5668 = vmatprep.subr.bf16.mxu0 %v3502
        %5669 = vmatpush1.bf16.msra.mxu0 %v3501
        %5670 = vmatprep.subr.bf16.mxu0 %v3510
        %5671 = vmatpush1.bf16.msra.mxu0 %v3509
        %5672 = vmatprep.subr.bf16.mxu0 %v3518
        %5673 = vmatpush1.bf16.msra.mxu0 %v3517
        %5674 = vmatprep.subr.bf16.mxu0 %v3526
        %5675 = vmatpush1.bf16.msra.mxu0 %v3525
        %5676 = vmatprep.subr.bf16.mxu0 %v3534
        %5677 = vmatpush1.bf16.msra.mxu0 %v3533
        %5678 = vmatprep.subr.bf16.mxu0 %v3542
        %5679 = vmatpush1.bf16.msra.mxu0 %v3541
        %5680 = vmatprep.subr.bf16.mxu0 %v3550
        %5681 = vmatpush1.bf16.msra.mxu0 %v3549
        %5682 = vmatprep.subr.bf16.mxu0 %v3558
        %5683 = vmatpush1.bf16.msra.mxu0 %v3557
        %5684 = vmatprep.subr.bf16.mxu0 %v3566
        %5685 = vmatpush1.bf16.msra.mxu0 %v3565
        %5686 = vmatprep.subr.bf16.mxu0 %v3574
        %5687 = vmatpush1.bf16.msra.mxu0 %v3573
        %5688 = vmatprep.subr.bf16.mxu0 %v3582
        %5689 = vmatpush1.bf16.msra.mxu0 %v3581
        %5690 = vmatprep.mubr.bf16.mxu0 %v4178
        %5691 = vmatmul.mubr.bf16.gmra.mrb[0].mxu0 %v4176
        %v5692 = vpop.f32.mrb[0].mxu0
        %v5693 = vadd.f32 %v5652, %v5692
        %v5694 = vpop.f32.mrb[0].mxu0
        %v5695 = vadd.f32 %v5654, %v5694
        %v5696 = vpop.f32.mrb[0].mxu0
        %v5697 = vpop.f32.mrb[0].mxu0
        %5698 = vdwg.mxu0
        %5699 = vmatprep.subr.bf16.mxu0 %v3590
        %5700 = vmatpush1.bf16.msra.mxu0 %v3589
        %5701 = vmatprep.subr.bf16.mxu0 %v3598
        %5702 = vmatpush1.bf16.msra.mxu0 %v3597
        %5703 = vmatprep.subr.bf16.mxu0 %v3606
        %5704 = vmatpush1.bf16.msra.mxu0 %v3605
        %5705 = vmatprep.subr.bf16.mxu0 %v3614
        %5706 = vmatpush1.bf16.msra.mxu0 %v3613
        %5707 = vmatprep.subr.bf16.mxu0 %v3622
        %5708 = vmatpush1.bf16.msra.mxu0 %v3621
        %5709 = vmatprep.subr.bf16.mxu0 %v3630
        %5710 = vmatpush1.bf16.msra.mxu0 %v3629
        %5711 = vmatprep.subr.bf16.mxu0 %v3638
        %5712 = vmatpush1.bf16.msra.mxu0 %v3637
        %5713 = vmatprep.subr.bf16.mxu0 %v3646
        %5714 = vmatpush1.bf16.msra.mxu0 %v3645
        %5715 = vmatprep.subr.bf16.mxu0 %v3654
        %5716 = vmatpush1.bf16.msra.mxu0 %v3653
        %5717 = vmatprep.subr.bf16.mxu0 %v3662
        %5718 = vmatpush1.bf16.msra.mxu0 %v3661
        %5719 = vmatprep.subr.bf16.mxu0 %v3670
        %5720 = vmatpush1.bf16.msra.mxu0 %v3669
        %5721 = vmatprep.subr.bf16.mxu0 %v3678
        %5722 = vmatpush1.bf16.msra.mxu0 %v3677
        %5723 = vmatprep.subr.bf16.mxu0 %v3686
        %5724 = vmatpush1.bf16.msra.mxu0 %v3685
        %5725 = vmatprep.subr.bf16.mxu0 %v3694
        %5726 = vmatpush1.bf16.msra.mxu0 %v3693
        %5727 = vmatprep.subr.bf16.mxu0 %v3702
        %5728 = vmatpush1.bf16.msra.mxu0 %v3701
        %5729 = vmatprep.subr.bf16.mxu0 %v3710
        %5730 = vmatpush1.bf16.msra.mxu0 %v3709
        %5731 = vmatprep.mubr.bf16.mxu0 %v4216
        %5732 = vmatmul.mubr.bf16.gmra.mrb[0].mxu0 %v4202
        %v5733 = vpop.f32.mrb[0].mxu0
        %v5734 = vadd.f32 %v5693, %v5733
        %v5735 = vpop.f32.mrb[0].mxu0
        %v5736 = vadd.f32 %v5695, %v5735
        %v5737 = vpop.f32.mrb[0].mxu0
        %v5738 = vpop.f32.mrb[0].mxu0
        %5739 = vdwg.mxu0
        %5740 = vmatprep.subr.bf16.mxu0 %v3718
        %5741 = vmatpush1.bf16.msra.mxu0 %v3717
        %5742 = vmatprep.subr.bf16.mxu0 %v3726
        %5743 = vmatpush1.bf16.msra.mxu0 %v3725
        %5744 = vmatprep.subr.bf16.mxu0 %v3734
        %5745 = vmatpush1.bf16.msra.mxu0 %v3733
        %5746 = vmatprep.subr.bf16.mxu0 %v3742
        %5747 = vmatpush1.bf16.msra.mxu0 %v3741
        %5748 = vmatprep.subr.bf16.mxu0 %v3750
        %5749 = vmatpush1.bf16.msra.mxu0 %v3749
        %5750 = vmatprep.subr.bf16.mxu0 %v3758
        %5751 = vmatpush1.bf16.msra.mxu0 %v3757
        %5752 = vmatprep.subr.bf16.mxu0 %v3766
        %5753 = vmatpush1.bf16.msra.mxu0 %v3765
        %5754 = vmatprep.subr.bf16.mxu0 %v3774
        %5755 = vmatpush1.bf16.msra.mxu0 %v3773
        %5756 = vmatprep.subr.bf16.mxu0 %v3782
        %5757 = vmatpush1.bf16.msra.mxu0 %v3781
        %5758 = vmatprep.subr.bf16.mxu0 %v3790
        %5759 = vmatpush1.bf16.msra.mxu0 %v3789
        %5760 = vmatprep.subr.bf16.mxu0 %v3798
        %5761 = vmatpush1.bf16.msra.mxu0 %v3797
        %5762 = vmatprep.subr.bf16.mxu0 %v3806
        %5763 = vmatpush1.bf16.msra.mxu0 %v3805
        %5764 = vmatprep.subr.bf16.mxu0 %v3814
        %5765 = vmatpush1.bf16.msra.mxu0 %v3813
        %5766 = vmatprep.subr.bf16.mxu0 %v3822
        %5767 = vmatpush1.bf16.msra.mxu0 %v3821
        %5768 = vmatprep.subr.bf16.mxu0 %v3830
        %5769 = vmatpush1.bf16.msra.mxu0 %v3829
        %5770 = vmatprep.subr.bf16.mxu0 %v3838
        %5771 = vmatpush1.bf16.msra.mxu0 %v3837
        %5772 = vmatprep.mubr.bf16.mxu0 %v4225
        %5773 = vmatmul.mubr.bf16.gmra.mrb[0].mxu0 %v4224
        %v5774 = vpop.f32.mrb[0].mxu0
        %v5775 = vadd.f32 %v5734, %v5774
        %v5776 = vpop.f32.mrb[0].mxu0
        %v5777 = vadd.f32 %v5736, %v5776
        %v5778 = vpop.f32.mrb[0].mxu0
        %v5779 = vpop.f32.mrb[0].mxu0
        %5780 = vdwg.mxu0
        %5781 = vmatprep.subr.bf16.mxu0 %v3846
        %5782 = vmatpush1.bf16.msra.mxu0 %v3845
        %5783 = vmatprep.subr.bf16.mxu0 %v3854
        %5784 = vmatpush1.bf16.msra.mxu0 %v3853
        %5785 = vmatprep.subr.bf16.mxu0 %v3862
        %5786 = vmatpush1.bf16.msra.mxu0 %v3861
        %5787 = vmatprep.subr.bf16.mxu0 %v3870
        %5788 = vmatpush1.bf16.msra.mxu0 %v3869
        %5789 = vmatprep.subr.bf16.mxu0 %v3878
        %5790 = vmatpush1.bf16.msra.mxu0 %v3877
        %5791 = vmatprep.subr.bf16.mxu0 %v3886
        %5792 = vmatpush1.bf16.msra.mxu0 %v3885
        %5793 = vmatprep.subr.bf16.mxu0 %v3894
        %5794 = vmatpush1.bf16.msra.mxu0 %v3893
        %5795 = vmatprep.subr.bf16.mxu0 %v3902
        %5796 = vmatpush1.bf16.msra.mxu0 %v3901
        %5797 = vmatprep.subr.bf16.mxu0 %v3910
        %5798 = vmatpush1.bf16.msra.mxu0 %v3909
        %5799 = vmatprep.subr.bf16.mxu0 %v3918
        %5800 = vmatpush1.bf16.msra.mxu0 %v3917
        %5801 = vmatprep.subr.bf16.mxu0 %v3926
        %5802 = vmatpush1.bf16.msra.mxu0 %v3925
        %5803 = vmatprep.subr.bf16.mxu0 %v3934
        %5804 = vmatpush1.bf16.msra.mxu0 %v3933
        %5805 = vmatprep.subr.bf16.mxu0 %v3942
        %5806 = vmatpush1.bf16.msra.mxu0 %v3941
        %5807 = vmatprep.subr.bf16.mxu0 %v3950
        %5808 = vmatpush1.bf16.msra.mxu0 %v3949
        %5809 = vmatprep.subr.bf16.mxu0 %v3958
        %5810 = vmatpush1.bf16.msra.mxu0 %v3957
        %5811 = vmatprep.subr.bf16.mxu0 %v3966
        %5812 = vmatpush1.bf16.msra.mxu0 %v3965
        %5813 = vmatprep.mubr.bf16.mxu0 %v4223
        %5814 = vmatmul.mubr.bf16.gmra.mrb[0].mxu0 %v4209
        %v5815 = vpop.f32.mrb[0].mxu0
        %v5816 = vadd.f32 %v5775, %v5815
        %v5817 = vpop.f32.mrb[0].mxu0
        %v5818 = vadd.f32 %v5777, %v5817
        %v5819 = vpop.f32.mrb[0].mxu0
        %v5820 = vpop.f32.mrb[0].mxu0
        %5821 = vdwg.mxu0
        %5822 = vmatprep.subr.bf16.mxu0 %v1544
        %5823 = vmatpush1.bf16.msra.mxu0 %v1543
        %5824 = vmatprep.subr.bf16.mxu0 %v1552
        %5825 = vmatpush1.bf16.msra.mxu0 %v1551
        %5826 = vmatprep.subr.bf16.mxu0 %v1560
        %5827 = vmatpush1.bf16.msra.mxu0 %v1559
        %5828 = vmatprep.subr.bf16.mxu0 %v1568
        %5829 = vmatpush1.bf16.msra.mxu0 %v1567
        %5830 = vmatprep.subr.bf16.mxu0 %v1576
        %5831 = vmatpush1.bf16.msra.mxu0 %v1575
        %5832 = vmatprep.subr.bf16.mxu0 %v1584
        %5833 = vmatpush1.bf16.msra.mxu0 %v1583
        %5834 = vmatprep.subr.bf16.mxu0 %v1592
        %5835 = vmatpush1.bf16.msra.mxu0 %v1591
        %5836 = vmatprep.subr.bf16.mxu0 %v1600
        %5837 = vmatpush1.bf16.msra.mxu0 %v1599
        %5838 = vmatprep.subr.bf16.mxu0 %v1608
        %5839 = vmatpush1.bf16.msra.mxu0 %v1607
        %5840 = vmatprep.subr.bf16.mxu0 %v1616
        %5841 = vmatpush1.bf16.msra.mxu0 %v1615
        %5842 = vmatprep.subr.bf16.mxu0 %v1624
        %5843 = vmatpush1.bf16.msra.mxu0 %v1623
        %5844 = vmatprep.subr.bf16.mxu0 %v1632
        %5845 = vmatpush1.bf16.msra.mxu0 %v1631
        %5846 = vmatprep.subr.bf16.mxu0 %v1640
        %5847 = vmatpush1.bf16.msra.mxu0 %v1639
        %5848 = vmatprep.subr.bf16.mxu0 %v1648
        %5849 = vmatpush1.bf16.msra.mxu0 %v1647
        %5850 = vmatprep.subr.bf16.mxu0 %v1656
        %5851 = vmatpush1.bf16.msra.mxu0 %v1655
        %5852 = vmatprep.subr.bf16.mxu0 %v1664
        %5853 = vmatpush1.bf16.msra.mxu0 %v1663
        %5854 = vmatprep.mubr.bf16.mxu0 %v4020
        %5855 = vmatmul.mubr.bf16.gmra.mrb[0].mxu0 %v4006
        %v5856 = vpop.f32.mrb[0].mxu0
        %v5857 = vadd.f32 0.0, %v5856
        %v5858 = vpop.f32.mrb[0].mxu0
        %v5859 = vadd.f32 0.0, %v5858
        %v5860 = vpop.f32.mrb[0].mxu0
        %v5861 = vpop.f32.mrb[0].mxu0
        %5862 = vdwg.mxu0
        %5863 = vmatprep.subr.bf16.mxu0 %v1672
        %5864 = vmatpush1.bf16.msra.mxu0 %v1671
        %5865 = vmatprep.subr.bf16.mxu0 %v1680
        %5866 = vmatpush1.bf16.msra.mxu0 %v1679
        %5867 = vmatprep.subr.bf16.mxu0 %v1688
        %5868 = vmatpush1.bf16.msra.mxu0 %v1687
        %5869 = vmatprep.subr.bf16.mxu0 %v1696
        %5870 = vmatpush1.bf16.msra.mxu0 %v1695
        %5871 = vmatprep.subr.bf16.mxu0 %v1704
        %5872 = vmatpush1.bf16.msra.mxu0 %v1703
        %5873 = vmatprep.subr.bf16.mxu0 %v1712
        %5874 = vmatpush1.bf16.msra.mxu0 %v1711
        %5875 = vmatprep.subr.bf16.mxu0 %v1720
        %5876 = vmatpush1.bf16.msra.mxu0 %v1719
        %5877 = vmatprep.subr.bf16.mxu0 %v1728
        %5878 = vmatpush1.bf16.msra.mxu0 %v1727
        %5879 = vmatprep.subr.bf16.mxu0 %v1736
        %5880 = vmatpush1.bf16.msra.mxu0 %v1735
        %5881 = vmatprep.subr.bf16.mxu0 %v1744
        %5882 = vmatpush1.bf16.msra.mxu0 %v1743
        %5883 = vmatprep.subr.bf16.mxu0 %v1752
        %5884 = vmatpush1.bf16.msra.mxu0 %v1751
        %5885 = vmatprep.subr.bf16.mxu0 %v1760
        %5886 = vmatpush1.bf16.msra.mxu0 %v1759
        %5887 = vmatprep.subr.bf16.mxu0 %v1768
        %5888 = vmatpush1.bf16.msra.mxu0 %v1767
        %5889 = vmatprep.subr.bf16.mxu0 %v1776
        %5890 = vmatpush1.bf16.msra.mxu0 %v1775
        %5891 = vmatprep.subr.bf16.mxu0 %v1784
        %5892 = vmatpush1.bf16.msra.mxu0 %v1783
        %5893 = vmatprep.subr.bf16.mxu0 %v1792
        %5894 = vmatpush1.bf16.msra.mxu0 %v1791
        %5895 = vmatprep.mubr.bf16.mxu0 %v4030
        %5896 = vmatmul.mubr.bf16.gmra.mrb[0].mxu0 %v4028
        %v5897 = vpop.f32.mrb[0].mxu0
        %v5898 = vadd.f32 %v5857, %v5897
        %v5899 = vpop.f32.mrb[0].mxu0
        %v5900 = vadd.f32 %v5859, %v5899
        %v5901 = vpop.f32.mrb[0].mxu0
        %v5902 = vpop.f32.mrb[0].mxu0
        %5903 = vdwg.mxu0
        %5904 = vmatprep.subr.bf16.mxu0 %v1800
        %5905 = vmatpush1.bf16.msra.mxu0 %v1799
        %5906 = vmatprep.subr.bf16.mxu0 %v1808
        %5907 = vmatpush1.bf16.msra.mxu0 %v1807
        %5908 = vmatprep.subr.bf16.mxu0 %v1816
        %5909 = vmatpush1.bf16.msra.mxu0 %v1815
        %5910 = vmatprep.subr.bf16.mxu0 %v1824
        %5911 = vmatpush1.bf16.msra.mxu0 %v1823
        %5912 = vmatprep.subr.bf16.mxu0 %v1832
        %5913 = vmatpush1.bf16.msra.mxu0 %v1831
        %5914 = vmatprep.subr.bf16.mxu0 %v1840
        %5915 = vmatpush1.bf16.msra.mxu0 %v1839
        %5916 = vmatprep.subr.bf16.mxu0 %v1848
        %5917 = vmatpush1.bf16.msra.mxu0 %v1847
        %5918 = vmatprep.subr.bf16.mxu0 %v1856
        %5919 = vmatpush1.bf16.msra.mxu0 %v1855
        %5920 = vmatprep.subr.bf16.mxu0 %v1864
        %5921 = vmatpush1.bf16.msra.mxu0 %v1863
        %5922 = vmatprep.subr.bf16.mxu0 %v1872
        %5923 = vmatpush1.bf16.msra.mxu0 %v1871
        %5924 = vmatprep.subr.bf16.mxu0 %v1880
        %5925 = vmatpush1.bf16.msra.mxu0 %v1879
        %5926 = vmatprep.subr.bf16.mxu0 %v1888
        %5927 = vmatpush1.bf16.msra.mxu0 %v1887
        %5928 = vmatprep.subr.bf16.mxu0 %v1896
        %5929 = vmatpush1.bf16.msra.mxu0 %v1895
        %5930 = vmatprep.subr.bf16.mxu0 %v1904
        %5931 = vmatpush1.bf16.msra.mxu0 %v1903
        %5932 = vmatprep.subr.bf16.mxu0 %v1912
        %5933 = vmatpush1.bf16.msra.mxu0 %v1911
        %5934 = vmatprep.subr.bf16.mxu0 %v1920
        %5935 = vmatpush1.bf16.msra.mxu0 %v1919
        %5936 = vmatprep.mubr.bf16.mxu0 %v4027
        %5937 = vmatmul.mubr.bf16.gmra.mrb[0].mxu0 %v4013
        %v5938 = vpop.f32.mrb[0].mxu0
        %v5939 = vadd.f32 %v5898, %v5938
        %v5940 = vpop.f32.mrb[0].mxu0
        %v5941 = vadd.f32 %v5900, %v5940
        %v5942 = vpop.f32.mrb[0].mxu0
        %v5943 = vpop.f32.mrb[0].mxu0
        %5944 = vdwg.mxu0
        %5945 = vmatprep.subr.bf16.mxu0 %v1928
        %5946 = vmatpush1.bf16.msra.mxu0 %v1927
        %5947 = vmatprep.subr.bf16.mxu0 %v1936
        %5948 = vmatpush1.bf16.msra.mxu0 %v1935
        %5949 = vmatprep.subr.bf16.mxu0 %v1944
        %5950 = vmatpush1.bf16.msra.mxu0 %v1943
        %5951 = vmatprep.subr.bf16.mxu0 %v1952
        %5952 = vmatpush1.bf16.msra.mxu0 %v1951
        %5953 = vmatprep.subr.bf16.mxu0 %v1960
        %5954 = vmatpush1.bf16.msra.mxu0 %v1959
        %5955 = vmatprep.subr.bf16.mxu0 %v1968
        %5956 = vmatpush1.bf16.msra.mxu0 %v1967
        %5957 = vmatprep.subr.bf16.mxu0 %v1976
        %5958 = vmatpush1.bf16.msra.mxu0 %v1975
        %5959 = vmatprep.subr.bf16.mxu0 %v1984
        %5960 = vmatpush1.bf16.msra.mxu0 %v1983
        %5961 = vmatprep.subr.bf16.mxu0 %v1992
        %5962 = vmatpush1.bf16.msra.mxu0 %v1991
        %5963 = vmatprep.subr.bf16.mxu0 %v2000
        %5964 = vmatpush1.bf16.msra.mxu0 %v1999
        %5965 = vmatprep.subr.bf16.mxu0 %v2008
        %5966 = vmatpush1.bf16.msra.mxu0 %v2007
        %5967 = vmatprep.subr.bf16.mxu0 %v2016
        %5968 = vmatpush1.bf16.msra.mxu0 %v2015
        %5969 = vmatprep.subr.bf16.mxu0 %v2024
        %5970 = vmatpush1.bf16.msra.mxu0 %v2023
        %5971 = vmatprep.subr.bf16.mxu0 %v2032
        %5972 = vmatpush1.bf16.msra.mxu0 %v2031
        %5973 = vmatprep.subr.bf16.mxu0 %v2040
        %5974 = vmatpush1.bf16.msra.mxu0 %v2039
        %5975 = vmatprep.subr.bf16.mxu0 %v2048
        %5976 = vmatpush1.bf16.msra.mxu0 %v2047
        %5977 = vmatprep.mubr.bf16.mxu0 %v4031
        %5978 = vmatmul.mubr.bf16.gmra.mrb[0].mxu0 %v4029
        %v5979 = vpop.f32.mrb[0].mxu0
        %v5980 = vadd.f32 %v5939, %v5979
        %v5981 = vpop.f32.mrb[0].mxu0
        %v5982 = vadd.f32 %v5941, %v5981
        %v5983 = vpop.f32.mrb[0].mxu0
        %v5984 = vpop.f32.mrb[0].mxu0
        %5985 = vdwg.mxu0
        %5986 = vmatprep.subr.bf16.mxu0 %v2056
        %5987 = vmatpush1.bf16.msra.mxu0 %v2055
        %5988 = vmatprep.subr.bf16.mxu0 %v2064
        %5989 = vmatpush1.bf16.msra.mxu0 %v2063
        %5990 = vmatprep.subr.bf16.mxu0 %v2072
        %5991 = vmatpush1.bf16.msra.mxu0 %v2071
        %5992 = vmatprep.subr.bf16.mxu0 %v2080
        %5993 = vmatpush1.bf16.msra.mxu0 %v2079
        %5994 = vmatprep.subr.bf16.mxu0 %v2088
        %5995 = vmatpush1.bf16.msra.mxu0 %v2087
        %5996 = vmatprep.subr.bf16.mxu0 %v2096
        %5997 = vmatpush1.bf16.msra.mxu0 %v2095
        %5998 = vmatprep.subr.bf16.mxu0 %v2104
        %5999 = vmatpush1.bf16.msra.mxu0 %v2103
        %6000 = vmatprep.subr.bf16.mxu0 %v2112
        %6001 = vmatpush1.bf16.msra.mxu0 %v2111
        %6002 = vmatprep.subr.bf16.mxu0 %v2120
        %6003 = vmatpush1.bf16.msra.mxu0 %v2119
        %6004 = vmatprep.subr.bf16.mxu0 %v2128
        %6005 = vmatpush1.bf16.msra.mxu0 %v2127
        %6006 = vmatprep.subr.bf16.mxu0 %v2136
        %6007 = vmatpush1.bf16.msra.mxu0 %v2135
        %6008 = vmatprep.subr.bf16.mxu0 %v2144
        %6009 = vmatpush1.bf16.msra.mxu0 %v2143
        %6010 = vmatprep.subr.bf16.mxu0 %v2152
        %6011 = vmatpush1.bf16.msra.mxu0 %v2151
        %6012 = vmatprep.subr.bf16.mxu0 %v2160
        %6013 = vmatpush1.bf16.msra.mxu0 %v2159
        %6014 = vmatprep.subr.bf16.mxu0 %v2168
        %6015 = vmatpush1.bf16.msra.mxu0 %v2167
        %6016 = vmatprep.subr.bf16.mxu0 %v2176
        %6017 = vmatpush1.bf16.msra.mxu0 %v2175
        %6018 = vmatprep.mubr.bf16.mxu0 %v4069
        %6019 = vmatmul.mubr.bf16.gmra.mrb[0].mxu0 %v4055
        %v6020 = vpop.f32.mrb[0].mxu0
        %v6021 = vadd.f32 %v5980, %v6020
        %v6022 = vpop.f32.mrb[0].mxu0
        %v6023 = vadd.f32 %v5982, %v6022
        %v6024 = vpop.f32.mrb[0].mxu0
        %v6025 = vpop.f32.mrb[0].mxu0
        %6026 = vdwg.mxu0
        %6027 = vmatprep.subr.bf16.mxu0 %v2184
        %6028 = vmatpush1.bf16.msra.mxu0 %v2183
        %6029 = vmatprep.subr.bf16.mxu0 %v2192
        %6030 = vmatpush1.bf16.msra.mxu0 %v2191
        %6031 = vmatprep.subr.bf16.mxu0 %v2200
        %6032 = vmatpush1.bf16.msra.mxu0 %v2199
        %6033 = vmatprep.subr.bf16.mxu0 %v2208
        %6034 = vmatpush1.bf16.msra.mxu0 %v2207
        %6035 = vmatprep.subr.bf16.mxu0 %v2216
        %6036 = vmatpush1.bf16.msra.mxu0 %v2215
        %6037 = vmatprep.subr.bf16.mxu0 %v2224
        %6038 = vmatpush1.bf16.msra.mxu0 %v2223
        %6039 = vmatprep.subr.bf16.mxu0 %v2232
        %6040 = vmatpush1.bf16.msra.mxu0 %v2231
        %6041 = vmatprep.subr.bf16.mxu0 %v2240
        %6042 = vmatpush1.bf16.msra.mxu0 %v2239
        %6043 = vmatprep.subr.bf16.mxu0 %v2248
        %6044 = vmatpush1.bf16.msra.mxu0 %v2247
        %6045 = vmatprep.subr.bf16.mxu0 %v2256
        %6046 = vmatpush1.bf16.msra.mxu0 %v2255
        %6047 = vmatprep.subr.bf16.mxu0 %v2264
        %6048 = vmatpush1.bf16.msra.mxu0 %v2263
        %6049 = vmatprep.subr.bf16.mxu0 %v2272
        %6050 = vmatpush1.bf16.msra.mxu0 %v2271
        %6051 = vmatprep.subr.bf16.mxu0 %v2280
        %6052 = vmatpush1.bf16.msra.mxu0 %v2279
        %6053 = vmatprep.subr.bf16.mxu0 %v2288
        %6054 = vmatpush1.bf16.msra.mxu0 %v2287
        %6055 = vmatprep.subr.bf16.mxu0 %v2296
        %6056 = vmatpush1.bf16.msra.mxu0 %v2295
        %6057 = vmatprep.subr.bf16.mxu0 %v2304
        %6058 = vmatpush1.bf16.msra.mxu0 %v2303
        %6059 = vmatprep.mubr.bf16.mxu0 %v4079
        %6060 = vmatmul.mubr.bf16.gmra.mrb[0].mxu0 %v4077
        %v6061 = vpop.f32.mrb[0].mxu0
        %v6062 = vadd.f32 %v6021, %v6061
        %v6063 = vpop.f32.mrb[0].mxu0
        %v6064 = vadd.f32 %v6023, %v6063
        %v6065 = vpop.f32.mrb[0].mxu0
        %v6066 = vpop.f32.mrb[0].mxu0
        %6067 = vdwg.mxu0
        %6068 = vmatprep.subr.bf16.mxu0 %v2312
        %6069 = vmatpush1.bf16.msra.mxu0 %v2311
        %6070 = vmatprep.subr.bf16.mxu0 %v2320
        %6071 = vmatpush1.bf16.msra.mxu0 %v2319
        %6072 = vmatprep.subr.bf16.mxu0 %v2328
        %6073 = vmatpush1.bf16.msra.mxu0 %v2327
        %6074 = vmatprep.subr.bf16.mxu0 %v2336
        %6075 = vmatpush1.bf16.msra.mxu0 %v2335
        %6076 = vmatprep.subr.bf16.mxu0 %v2344
        %6077 = vmatpush1.bf16.msra.mxu0 %v2343
        %6078 = vmatprep.subr.bf16.mxu0 %v2352
        %6079 = vmatpush1.bf16.msra.mxu0 %v2351
        %6080 = vmatprep.subr.bf16.mxu0 %v2360
        %6081 = vmatpush1.bf16.msra.mxu0 %v2359
        %6082 = vmatprep.subr.bf16.mxu0 %v2368
        %6083 = vmatpush1.bf16.msra.mxu0 %v2367
        %6084 = vmatprep.subr.bf16.mxu0 %v2376
        %6085 = vmatpush1.bf16.msra.mxu0 %v2375
        %6086 = vmatprep.subr.bf16.mxu0 %v2384
        %6087 = vmatpush1.bf16.msra.mxu0 %v2383
        %6088 = vmatprep.subr.bf16.mxu0 %v2392
        %6089 = vmatpush1.bf16.msra.mxu0 %v2391
        %6090 = vmatprep.subr.bf16.mxu0 %v2400
        %6091 = vmatpush1.bf16.msra.mxu0 %v2399
        %6092 = vmatprep.subr.bf16.mxu0 %v2408
        %6093 = vmatpush1.bf16.msra.mxu0 %v2407
        %6094 = vmatprep.subr.bf16.mxu0 %v2416
        %6095 = vmatpush1.bf16.msra.mxu0 %v2415
        %6096 = vmatprep.subr.bf16.mxu0 %v2424
        %6097 = vmatpush1.bf16.msra.mxu0 %v2423
        %6098 = vmatprep.subr.bf16.mxu0 %v2432
        %6099 = vmatpush1.bf16.msra.mxu0 %v2431
        %6100 = vmatprep.mubr.bf16.mxu0 %v4076
        %6101 = vmatmul.mubr.bf16.gmra.mrb[0].mxu0 %v4062
        %v6102 = vpop.f32.mrb[0].mxu0
        %v6103 = vadd.f32 %v6062, %v6102
        %v6104 = vpop.f32.mrb[0].mxu0
        %v6105 = vadd.f32 %v6064, %v6104
        %v6106 = vpop.f32.mrb[0].mxu0
        %v6107 = vpop.f32.mrb[0].mxu0
        %6108 = vdwg.mxu0
        %6109 = vmatprep.subr.bf16.mxu0 %v2440
        %6110 = vmatpush1.bf16.msra.mxu0 %v2439
        %6111 = vmatprep.subr.bf16.mxu0 %v2448
        %6112 = vmatpush1.bf16.msra.mxu0 %v2447
        %6113 = vmatprep.subr.bf16.mxu0 %v2456
        %6114 = vmatpush1.bf16.msra.mxu0 %v2455
        %6115 = vmatprep.subr.bf16.mxu0 %v2464
        %6116 = vmatpush1.bf16.msra.mxu0 %v2463
        %6117 = vmatprep.subr.bf16.mxu0 %v2472
        %6118 = vmatpush1.bf16.msra.mxu0 %v2471
        %6119 = vmatprep.subr.bf16.mxu0 %v2480
        %6120 = vmatpush1.bf16.msra.mxu0 %v2479
        %6121 = vmatprep.subr.bf16.mxu0 %v2488
        %6122 = vmatpush1.bf16.msra.mxu0 %v2487
        %6123 = vmatprep.subr.bf16.mxu0 %v2496
        %6124 = vmatpush1.bf16.msra.mxu0 %v2495
        %6125 = vmatprep.subr.bf16.mxu0 %v2504
        %6126 = vmatpush1.bf16.msra.mxu0 %v2503
        %6127 = vmatprep.subr.bf16.mxu0 %v2512
        %6128 = vmatpush1.bf16.msra.mxu0 %v2511
        %6129 = vmatprep.subr.bf16.mxu0 %v2520
        %6130 = vmatpush1.bf16.msra.mxu0 %v2519
        %6131 = vmatprep.subr.bf16.mxu0 %v2528
        %6132 = vmatpush1.bf16.msra.mxu0 %v2527
        %6133 = vmatprep.subr.bf16.mxu0 %v2536
        %6134 = vmatpush1.bf16.msra.mxu0 %v2535
        %6135 = vmatprep.subr.bf16.mxu0 %v2544
        %6136 = vmatpush1.bf16.msra.mxu0 %v2543
        %6137 = vmatprep.subr.bf16.mxu0 %v2552
        %6138 = vmatpush1.bf16.msra.mxu0 %v2551
        %6139 = vmatprep.subr.bf16.mxu0 %v2560
        %6140 = vmatpush1.bf16.msra.mxu0 %v2559
        %6141 = vmatprep.mubr.bf16.mxu0 %v4080
        %6142 = vmatmul.mubr.bf16.gmra.mrb[0].mxu0 %v4078
        %v6143 = vpop.f32.mrb[0].mxu0
        %v6144 = vadd.f32 %v6103, %v6143
        %v6145 = vpop.f32.mrb[0].mxu0
        %v6146 = vadd.f32 %v6105, %v6145
        %v6147 = vpop.f32.mrb[0].mxu0
        %v6148 = vpop.f32.mrb[0].mxu0
        %6149 = vdwg.mxu0
        %6150 = vmatprep.subr.bf16.mxu0 %v2568
        %6151 = vmatpush1.bf16.msra.mxu0 %v2567
        %6152 = vmatprep.subr.bf16.mxu0 %v2576
        %6153 = vmatpush1.bf16.msra.mxu0 %v2575
        %6154 = vmatprep.subr.bf16.mxu0 %v2584
        %6155 = vmatpush1.bf16.msra.mxu0 %v2583
        %6156 = vmatprep.subr.bf16.mxu0 %v2592
        %6157 = vmatpush1.bf16.msra.mxu0 %v2591
        %6158 = vmatprep.subr.bf16.mxu0 %v2600
        %6159 = vmatpush1.bf16.msra.mxu0 %v2599
        %6160 = vmatprep.subr.bf16.mxu0 %v2608
        %6161 = vmatpush1.bf16.msra.mxu0 %v2607
        %6162 = vmatprep.subr.bf16.mxu0 %v2616
        %6163 = vmatpush1.bf16.msra.mxu0 %v2615
        %6164 = vmatprep.subr.bf16.mxu0 %v2624
        %6165 = vmatpush1.bf16.msra.mxu0 %v2623
        %6166 = vmatprep.subr.bf16.mxu0 %v2632
        %6167 = vmatpush1.bf16.msra.mxu0 %v2631
        %6168 = vmatprep.subr.bf16.mxu0 %v2640
        %6169 = vmatpush1.bf16.msra.mxu0 %v2639
        %6170 = vmatprep.subr.bf16.mxu0 %v2648
        %6171 = vmatpush1.bf16.msra.mxu0 %v2647
        %6172 = vmatprep.subr.bf16.mxu0 %v2656
        %6173 = vmatpush1.bf16.msra.mxu0 %v2655
        %6174 = vmatprep.subr.bf16.mxu0 %v2664
        %6175 = vmatpush1.bf16.msra.mxu0 %v2663
        %6176 = vmatprep.subr.bf16.mxu0 %v2672
        %6177 = vmatpush1.bf16.msra.mxu0 %v2671
        %6178 = vmatprep.subr.bf16.mxu0 %v2680
        %6179 = vmatpush1.bf16.msra.mxu0 %v2679
        %6180 = vmatprep.subr.bf16.mxu0 %v2688
        %6181 = vmatpush1.bf16.msra.mxu0 %v2687
        %6182 = vmatprep.mubr.bf16.mxu0 %v4118
        %6183 = vmatmul.mubr.bf16.gmra.mrb[0].mxu0 %v4104
        %v6184 = vpop.f32.mrb[0].mxu0
        %v6185 = vadd.f32 %v6144, %v6184
        %v6186 = vpop.f32.mrb[0].mxu0
        %v6187 = vadd.f32 %v6146, %v6186
        %v6188 = vpop.f32.mrb[0].mxu0
        %v6189 = vpop.f32.mrb[0].mxu0
        %6190 = vdwg.mxu0
        %6191 = vmatprep.subr.bf16.mxu0 %v2696
        %6192 = vmatpush1.bf16.msra.mxu0 %v2695
        %6193 = vmatprep.subr.bf16.mxu0 %v2704
        %6194 = vmatpush1.bf16.msra.mxu0 %v2703
        %6195 = vmatprep.subr.bf16.mxu0 %v2712
        %6196 = vmatpush1.bf16.msra.mxu0 %v2711
        %6197 = vmatprep.subr.bf16.mxu0 %v2720
        %6198 = vmatpush1.bf16.msra.mxu0 %v2719
        %6199 = vmatprep.subr.bf16.mxu0 %v2728
        %6200 = vmatpush1.bf16.msra.mxu0 %v2727
        %6201 = vmatprep.subr.bf16.mxu0 %v2736
        %6202 = vmatpush1.bf16.msra.mxu0 %v2735
        %6203 = vmatprep.subr.bf16.mxu0 %v2744
        %6204 = vmatpush1.bf16.msra.mxu0 %v2743
        %6205 = vmatprep.subr.bf16.mxu0 %v2752
        %6206 = vmatpush1.bf16.msra.mxu0 %v2751
        %6207 = vmatprep.subr.bf16.mxu0 %v2760
        %6208 = vmatpush1.bf16.msra.mxu0 %v2759
        %6209 = vmatprep.subr.bf16.mxu0 %v2768
        %6210 = vmatpush1.bf16.msra.mxu0 %v2767
        %6211 = vmatprep.subr.bf16.mxu0 %v2776
        %6212 = vmatpush1.bf16.msra.mxu0 %v2775
        %6213 = vmatprep.subr.bf16.mxu0 %v2784
        %6214 = vmatpush1.bf16.msra.mxu0 %v2783
        %6215 = vmatprep.subr.bf16.mxu0 %v2792
        %6216 = vmatpush1.bf16.msra.mxu0 %v2791
        %6217 = vmatprep.subr.bf16.mxu0 %v2800
        %6218 = vmatpush1.bf16.msra.mxu0 %v2799
        %6219 = vmatprep.subr.bf16.mxu0 %v2808
        %6220 = vmatpush1.bf16.msra.mxu0 %v2807
        %6221 = vmatprep.subr.bf16.mxu0 %v2816
        %6222 = vmatpush1.bf16.msra.mxu0 %v2815
        %6223 = vmatprep.mubr.bf16.mxu0 %v4128
        %6224 = vmatmul.mubr.bf16.gmra.mrb[0].mxu0 %v4126
        %v6225 = vpop.f32.mrb[0].mxu0
        %v6226 = vadd.f32 %v6185, %v6225
        %v6227 = vpop.f32.mrb[0].mxu0
        %v6228 = vadd.f32 %v6187, %v6227
        %v6229 = vpop.f32.mrb[0].mxu0
        %v6230 = vpop.f32.mrb[0].mxu0
        %6231 = vdwg.mxu0
        %6232 = vmatprep.subr.bf16.mxu0 %v2824
        %6233 = vmatpush1.bf16.msra.mxu0 %v2823
        %6234 = vmatprep.subr.bf16.mxu0 %v2832
        %6235 = vmatpush1.bf16.msra.mxu0 %v2831
        %6236 = vmatprep.subr.bf16.mxu0 %v2840
        %6237 = vmatpush1.bf16.msra.mxu0 %v2839
        %6238 = vmatprep.subr.bf16.mxu0 %v2848
        %6239 = vmatpush1.bf16.msra.mxu0 %v2847
        %6240 = vmatprep.subr.bf16.mxu0 %v2856
        %6241 = vmatpush1.bf16.msra.mxu0 %v2855
        %6242 = vmatprep.subr.bf16.mxu0 %v2864
        %6243 = vmatpush1.bf16.msra.mxu0 %v2863
        %6244 = vmatprep.subr.bf16.mxu0 %v2872
        %6245 = vmatpush1.bf16.msra.mxu0 %v2871
        %6246 = vmatprep.subr.bf16.mxu0 %v2880
        %6247 = vmatpush1.bf16.msra.mxu0 %v2879
        %6248 = vmatprep.subr.bf16.mxu0 %v2888
        %6249 = vmatpush1.bf16.msra.mxu0 %v2887
        %6250 = vmatprep.subr.bf16.mxu0 %v2896
        %6251 = vmatpush1.bf16.msra.mxu0 %v2895
        %6252 = vmatprep.subr.bf16.mxu0 %v2904
        %6253 = vmatpush1.bf16.msra.mxu0 %v2903
        %6254 = vmatprep.subr.bf16.mxu0 %v2912
        %6255 = vmatpush1.bf16.msra.mxu0 %v2911
        %6256 = vmatprep.subr.bf16.mxu0 %v2920
        %6257 = vmatpush1.bf16.msra.mxu0 %v2919
        %6258 = vmatprep.subr.bf16.mxu0 %v2928
        %6259 = vmatpush1.bf16.msra.mxu0 %v2927
        %6260 = vmatprep.subr.bf16.mxu0 %v2936
        %6261 = vmatpush1.bf16.msra.mxu0 %v2935
        %6262 = vmatprep.subr.bf16.mxu0 %v2944
        %6263 = vmatpush1.bf16.msra.mxu0 %v2943
        %6264 = vmatprep.mubr.bf16.mxu0 %v4125
        %6265 = vmatmul.mubr.bf16.gmra.mrb[0].mxu0 %v4111
        %v6266 = vpop.f32.mrb[0].mxu0
        %v6267 = vadd.f32 %v6226, %v6266
        %v6268 = vpop.f32.mrb[0].mxu0
        %v6269 = vadd.f32 %v6228, %v6268
        %v6270 = vpop.f32.mrb[0].mxu0
        %v6271 = vpop.f32.mrb[0].mxu0
        %6272 = vdwg.mxu0
        %6273 = vmatprep.subr.bf16.mxu0 %v2952
        %6274 = vmatpush1.bf16.msra.mxu0 %v2951
        %6275 = vmatprep.subr.bf16.mxu0 %v2960
        %6276 = vmatpush1.bf16.msra.mxu0 %v2959
        %6277 = vmatprep.subr.bf16.mxu0 %v2968
        %6278 = vmatpush1.bf16.msra.mxu0 %v2967
        %6279 = vmatprep.subr.bf16.mxu0 %v2976
        %6280 = vmatpush1.bf16.msra.mxu0 %v2975
        %6281 = vmatprep.subr.bf16.mxu0 %v2984
        %6282 = vmatpush1.bf16.msra.mxu0 %v2983
        %6283 = vmatprep.subr.bf16.mxu0 %v2992
        %6284 = vmatpush1.bf16.msra.mxu0 %v2991
        %6285 = vmatprep.subr.bf16.mxu0 %v3000
        %6286 = vmatpush1.bf16.msra.mxu0 %v2999
        %6287 = vmatprep.subr.bf16.mxu0 %v3008
        %6288 = vmatpush1.bf16.msra.mxu0 %v3007
        %6289 = vmatprep.subr.bf16.mxu0 %v3016
        %6290 = vmatpush1.bf16.msra.mxu0 %v3015
        %6291 = vmatprep.subr.bf16.mxu0 %v3024
        %6292 = vmatpush1.bf16.msra.mxu0 %v3023
        %6293 = vmatprep.subr.bf16.mxu0 %v3032
        %6294 = vmatpush1.bf16.msra.mxu0 %v3031
        %6295 = vmatprep.subr.bf16.mxu0 %v3040
        %6296 = vmatpush1.bf16.msra.mxu0 %v3039
        %6297 = vmatprep.subr.bf16.mxu0 %v3048
        %6298 = vmatpush1.bf16.msra.mxu0 %v3047
        %6299 = vmatprep.subr.bf16.mxu0 %v3056
        %6300 = vmatpush1.bf16.msra.mxu0 %v3055
        %6301 = vmatprep.subr.bf16.mxu0 %v3064
        %6302 = vmatpush1.bf16.msra.mxu0 %v3063
        %6303 = vmatprep.subr.bf16.mxu0 %v3072
        %6304 = vmatpush1.bf16.msra.mxu0 %v3071
        %6305 = vmatprep.mubr.bf16.mxu0 %v4129
        %6306 = vmatmul.mubr.bf16.gmra.mrb[0].mxu0 %v4127
        %v6307 = vpop.f32.mrb[0].mxu0
        %v6308 = vadd.f32 %v6267, %v6307
        %v6309 = vpop.f32.mrb[0].mxu0
        %v6310 = vadd.f32 %v6269, %v6309
        %v6311 = vpop.f32.mrb[0].mxu0
        %v6312 = vpop.f32.mrb[0].mxu0
        %6313 = vdwg.mxu0
        %6314 = vmatprep.subr.bf16.mxu0 %v3080
        %6315 = vmatpush1.bf16.msra.mxu0 %v3079
        %6316 = vmatprep.subr.bf16.mxu0 %v3088
        %6317 = vmatpush1.bf16.msra.mxu0 %v3087
        %6318 = vmatprep.subr.bf16.mxu0 %v3096
        %6319 = vmatpush1.bf16.msra.mxu0 %v3095
        %6320 = vmatprep.subr.bf16.mxu0 %v3104
        %6321 = vmatpush1.bf16.msra.mxu0 %v3103
        %6322 = vmatprep.subr.bf16.mxu0 %v3112
        %6323 = vmatpush1.bf16.msra.mxu0 %v3111
        %6324 = vmatprep.subr.bf16.mxu0 %v3120
        %6325 = vmatpush1.bf16.msra.mxu0 %v3119
        %6326 = vmatprep.subr.bf16.mxu0 %v3128
        %6327 = vmatpush1.bf16.msra.mxu0 %v3127
        %6328 = vmatprep.subr.bf16.mxu0 %v3136
        %6329 = vmatpush1.bf16.msra.mxu0 %v3135
        %6330 = vmatprep.subr.bf16.mxu0 %v3144
        %6331 = vmatpush1.bf16.msra.mxu0 %v3143
        %6332 = vmatprep.subr.bf16.mxu0 %v3152
        %6333 = vmatpush1.bf16.msra.mxu0 %v3151
        %6334 = vmatprep.subr.bf16.mxu0 %v3160
        %6335 = vmatpush1.bf16.msra.mxu0 %v3159
        %6336 = vmatprep.subr.bf16.mxu0 %v3168
        %6337 = vmatpush1.bf16.msra.mxu0 %v3167
        %6338 = vmatprep.subr.bf16.mxu0 %v3176
        %6339 = vmatpush1.bf16.msra.mxu0 %v3175
        %6340 = vmatprep.subr.bf16.mxu0 %v3184
        %6341 = vmatpush1.bf16.msra.mxu0 %v3183
        %6342 = vmatprep.subr.bf16.mxu0 %v3192
        %6343 = vmatpush1.bf16.msra.mxu0 %v3191
        %6344 = vmatprep.subr.bf16.mxu0 %v3200
        %6345 = vmatpush1.bf16.msra.mxu0 %v3199
        %6346 = vmatprep.mubr.bf16.mxu0 %v4167
        %6347 = vmatmul.mubr.bf16.gmra.mrb[0].mxu0 %v4153
        %v6348 = vpop.f32.mrb[0].mxu0
        %v6349 = vadd.f32 %v6308, %v6348
        %v6350 = vpop.f32.mrb[0].mxu0
        %v6351 = vadd.f32 %v6310, %v6350
        %v6352 = vpop.f32.mrb[0].mxu0
        %v6353 = vpop.f32.mrb[0].mxu0
        %6354 = vdwg.mxu0
        %6355 = vmatprep.subr.bf16.mxu0 %v3208
        %6356 = vmatpush1.bf16.msra.mxu0 %v3207
        %6357 = vmatprep.subr.bf16.mxu0 %v3216
        %6358 = vmatpush1.bf16.msra.mxu0 %v3215
        %6359 = vmatprep.subr.bf16.mxu0 %v3224
        %6360 = vmatpush1.bf16.msra.mxu0 %v3223
        %6361 = vmatprep.subr.bf16.mxu0 %v3232
        %6362 = vmatpush1.bf16.msra.mxu0 %v3231
        %6363 = vmatprep.subr.bf16.mxu0 %v3240
        %6364 = vmatpush1.bf16.msra.mxu0 %v3239
        %6365 = vmatprep.subr.bf16.mxu0 %v3248
        %6366 = vmatpush1.bf16.msra.mxu0 %v3247
        %6367 = vmatprep.subr.bf16.mxu0 %v3256
        %6368 = vmatpush1.bf16.msra.mxu0 %v3255
        %6369 = vmatprep.subr.bf16.mxu0 %v3264
        %6370 = vmatpush1.bf16.msra.mxu0 %v3263
        %6371 = vmatprep.subr.bf16.mxu0 %v3272
        %6372 = vmatpush1.bf16.msra.mxu0 %v3271
        %6373 = vmatprep.subr.bf16.mxu0 %v3280
        %6374 = vmatpush1.bf16.msra.mxu0 %v3279
        %6375 = vmatprep.subr.bf16.mxu0 %v3288
        %6376 = vmatpush1.bf16.msra.mxu0 %v3287
        %6377 = vmatprep.subr.bf16.mxu0 %v3296
        %6378 = vmatpush1.bf16.msra.mxu0 %v3295
        %6379 = vmatprep.subr.bf16.mxu0 %v3304
        %6380 = vmatpush1.bf16.msra.mxu0 %v3303
        %6381 = vmatprep.subr.bf16.mxu0 %v3312
        %6382 = vmatpush1.bf16.msra.mxu0 %v3311
        %6383 = vmatprep.subr.bf16.mxu0 %v3320
        %6384 = vmatpush1.bf16.msra.mxu0 %v3319
        %6385 = vmatprep.subr.bf16.mxu0 %v3328
        %6386 = vmatpush1.bf16.msra.mxu0 %v3327
        %6387 = vmatprep.mubr.bf16.mxu0 %v4177
        %6388 = vmatmul.mubr.bf16.gmra.mrb[0].mxu0 %v4175
        %v6389 = vpop.f32.mrb[0].mxu0
        %v6390 = vadd.f32 %v6349, %v6389
        %v6391 = vpop.f32.mrb[0].mxu0
        %v6392 = vadd.f32 %v6351, %v6391
        %v6393 = vpop.f32.mrb[0].mxu0
        %v6394 = vpop.f32.mrb[0].mxu0
        %6395 = vdwg.mxu0
        %6396 = vmatprep.subr.bf16.mxu0 %v3336
        %6397 = vmatpush1.bf16.msra.mxu0 %v3335
        %6398 = vmatprep.subr.bf16.mxu0 %v3344
        %6399 = vmatpush1.bf16.msra.mxu0 %v3343
        %6400 = vmatprep.subr.bf16.mxu0 %v3352
        %6401 = vmatpush1.bf16.msra.mxu0 %v3351
        %6402 = vmatprep.subr.bf16.mxu0 %v3360
        %6403 = vmatpush1.bf16.msra.mxu0 %v3359
        %6404 = vmatprep.subr.bf16.mxu0 %v3368
        %6405 = vmatpush1.bf16.msra.mxu0 %v3367
        %6406 = vmatprep.subr.bf16.mxu0 %v3376
        %6407 = vmatpush1.bf16.msra.mxu0 %v3375
        %6408 = vmatprep.subr.bf16.mxu0 %v3384
        %6409 = vmatpush1.bf16.msra.mxu0 %v3383
        %6410 = vmatprep.subr.bf16.mxu0 %v3392
        %6411 = vmatpush1.bf16.msra.mxu0 %v3391
        %6412 = vmatprep.subr.bf16.mxu0 %v3400
        %6413 = vmatpush1.bf16.msra.mxu0 %v3399
        %6414 = vmatprep.subr.bf16.mxu0 %v3408
        %6415 = vmatpush1.bf16.msra.mxu0 %v3407
        %6416 = vmatprep.subr.bf16.mxu0 %v3416
        %6417 = vmatpush1.bf16.msra.mxu0 %v3415
        %6418 = vmatprep.subr.bf16.mxu0 %v3424
        %6419 = vmatpush1.bf16.msra.mxu0 %v3423
        %6420 = vmatprep.subr.bf16.mxu0 %v3432
        %6421 = vmatpush1.bf16.msra.mxu0 %v3431
        %6422 = vmatprep.subr.bf16.mxu0 %v3440
        %6423 = vmatpush1.bf16.msra.mxu0 %v3439
        %6424 = vmatprep.subr.bf16.mxu0 %v3448
        %6425 = vmatpush1.bf16.msra.mxu0 %v3447
        %6426 = vmatprep.subr.bf16.mxu0 %v3456
        %6427 = vmatpush1.bf16.msra.mxu0 %v3455
        %6428 = vmatprep.mubr.bf16.mxu0 %v4174
        %6429 = vmatmul.mubr.bf16.gmra.mrb[0].mxu0 %v4160
        %v6430 = vpop.f32.mrb[0].mxu0
        %v6431 = vadd.f32 %v6390, %v6430
        %v6432 = vpop.f32.mrb[0].mxu0
        %v6433 = vadd.f32 %v6392, %v6432
        %v6434 = vpop.f32.mrb[0].mxu0
        %v6435 = vpop.f32.mrb[0].mxu0
        %6436 = vdwg.mxu0
        %6437 = vmatprep.subr.bf16.mxu0 %v3464
        %6438 = vmatpush1.bf16.msra.mxu0 %v3463
        %6439 = vmatprep.subr.bf16.mxu0 %v3472
        %6440 = vmatpush1.bf16.msra.mxu0 %v3471
        %6441 = vmatprep.subr.bf16.mxu0 %v3480
        %6442 = vmatpush1.bf16.msra.mxu0 %v3479
        %6443 = vmatprep.subr.bf16.mxu0 %v3488
        %6444 = vmatpush1.bf16.msra.mxu0 %v3487
        %6445 = vmatprep.subr.bf16.mxu0 %v3496
        %6446 = vmatpush1.bf16.msra.mxu0 %v3495
        %6447 = vmatprep.subr.bf16.mxu0 %v3504
        %6448 = vmatpush1.bf16.msra.mxu0 %v3503
        %6449 = vmatprep.subr.bf16.mxu0 %v3512
        %6450 = vmatpush1.bf16.msra.mxu0 %v3511
        %6451 = vmatprep.subr.bf16.mxu0 %v3520
        %6452 = vmatpush1.bf16.msra.mxu0 %v3519
        %6453 = vmatprep.subr.bf16.mxu0 %v3528
        %6454 = vmatpush1.bf16.msra.mxu0 %v3527
        %6455 = vmatprep.subr.bf16.mxu0 %v3536
        %6456 = vmatpush1.bf16.msra.mxu0 %v3535
        %6457 = vmatprep.subr.bf16.mxu0 %v3544
        %6458 = vmatpush1.bf16.msra.mxu0 %v3543
        %6459 = vmatprep.subr.bf16.mxu0 %v3552
        %6460 = vmatpush1.bf16.msra.mxu0 %v3551
        %6461 = vmatprep.subr.bf16.mxu0 %v3560
        %6462 = vmatpush1.bf16.msra.mxu0 %v3559
        %6463 = vmatprep.subr.bf16.mxu0 %v3568
        %6464 = vmatpush1.bf16.msra.mxu0 %v3567
        %6465 = vmatprep.subr.bf16.mxu0 %v3576
        %6466 = vmatpush1.bf16.msra.mxu0 %v3575
        %6467 = vmatprep.subr.bf16.mxu0 %v3584
        %6468 = vmatpush1.bf16.msra.mxu0 %v3583
        %6469 = vmatprep.mubr.bf16.mxu0 %v4178
        %6470 = vmatmul.mubr.bf16.gmra.mrb[0].mxu0 %v4176
        %v6471 = vpop.f32.mrb[0].mxu0
        %v6472 = vadd.f32 %v6431, %v6471
        %v6473 = vpop.f32.mrb[0].mxu0
        %v6474 = vadd.f32 %v6433, %v6473
        %v6475 = vpop.f32.mrb[0].mxu0
        %v6476 = vpop.f32.mrb[0].mxu0
        %6477 = vdwg.mxu0
        %6478 = vmatprep.subr.bf16.mxu0 %v3592
        %6479 = vmatpush1.bf16.msra.mxu0 %v3591
        %6480 = vmatprep.subr.bf16.mxu0 %v3600
        %6481 = vmatpush1.bf16.msra.mxu0 %v3599
        %6482 = vmatprep.subr.bf16.mxu0 %v3608
        %6483 = vmatpush1.bf16.msra.mxu0 %v3607
        %6484 = vmatprep.subr.bf16.mxu0 %v3616
        %6485 = vmatpush1.bf16.msra.mxu0 %v3615
        %6486 = vmatprep.subr.bf16.mxu0 %v3624
        %6487 = vmatpush1.bf16.msra.mxu0 %v3623
        %6488 = vmatprep.subr.bf16.mxu0 %v3632
        %6489 = vmatpush1.bf16.msra.mxu0 %v3631
        %6490 = vmatprep.subr.bf16.mxu0 %v3640
        %6491 = vmatpush1.bf16.msra.mxu0 %v3639
        %6492 = vmatprep.subr.bf16.mxu0 %v3648
        %6493 = vmatpush1.bf16.msra.mxu0 %v3647
        %6494 = vmatprep.subr.bf16.mxu0 %v3656
        %6495 = vmatpush1.bf16.msra.mxu0 %v3655
        %6496 = vmatprep.subr.bf16.mxu0 %v3664
        %6497 = vmatpush1.bf16.msra.mxu0 %v3663
        %6498 = vmatprep.subr.bf16.mxu0 %v3672
        %6499 = vmatpush1.bf16.msra.mxu0 %v3671
        %6500 = vmatprep.subr.bf16.mxu0 %v3680
        %6501 = vmatpush1.bf16.msra.mxu0 %v3679
        %6502 = vmatprep.subr.bf16.mxu0 %v3688
        %6503 = vmatpush1.bf16.msra.mxu0 %v3687
        %6504 = vmatprep.subr.bf16.mxu0 %v3696
        %6505 = vmatpush1.bf16.msra.mxu0 %v3695
        %6506 = vmatprep.subr.bf16.mxu0 %v3704
        %6507 = vmatpush1.bf16.msra.mxu0 %v3703
        %6508 = vmatprep.subr.bf16.mxu0 %v3712
        %6509 = vmatpush1.bf16.msra.mxu0 %v3711
        %6510 = vmatprep.mubr.bf16.mxu0 %v4216
        %6511 = vmatmul.mubr.bf16.gmra.mrb[0].mxu0 %v4202
        %v6512 = vpop.f32.mrb[0].mxu0
        %v6513 = vadd.f32 %v6472, %v6512
        %v6514 = vpop.f32.mrb[0].mxu0
        %v6515 = vadd.f32 %v6474, %v6514
        %v6516 = vpop.f32.mrb[0].mxu0
        %v6517 = vpop.f32.mrb[0].mxu0
        %6518 = vdwg.mxu0
        %6519 = vmatprep.subr.bf16.mxu0 %v3720
        %6520 = vmatpush1.bf16.msra.mxu0 %v3719
        %6521 = vmatprep.subr.bf16.mxu0 %v3728
        %6522 = vmatpush1.bf16.msra.mxu0 %v3727
        %6523 = vmatprep.subr.bf16.mxu0 %v3736
        %6524 = vmatpush1.bf16.msra.mxu0 %v3735
        %6525 = vmatprep.subr.bf16.mxu0 %v3744
        %6526 = vmatpush1.bf16.msra.mxu0 %v3743
        %6527 = vmatprep.subr.bf16.mxu0 %v3752
        %6528 = vmatpush1.bf16.msra.mxu0 %v3751
        %6529 = vmatprep.subr.bf16.mxu0 %v3760
        %6530 = vmatpush1.bf16.msra.mxu0 %v3759
        %6531 = vmatprep.subr.bf16.mxu0 %v3768
        %6532 = vmatpush1.bf16.msra.mxu0 %v3767
        %6533 = vmatprep.subr.bf16.mxu0 %v3776
        %6534 = vmatpush1.bf16.msra.mxu0 %v3775
        %6535 = vmatprep.subr.bf16.mxu0 %v3784
        %6536 = vmatpush1.bf16.msra.mxu0 %v3783
        %6537 = vmatprep.subr.bf16.mxu0 %v3792
        %6538 = vmatpush1.bf16.msra.mxu0 %v3791
        %6539 = vmatprep.subr.bf16.mxu0 %v3800
        %6540 = vmatpush1.bf16.msra.mxu0 %v3799
        %6541 = vmatprep.subr.bf16.mxu0 %v3808
        %6542 = vmatpush1.bf16.msra.mxu0 %v3807
        %6543 = vmatprep.subr.bf16.mxu0 %v3816
        %6544 = vmatpush1.bf16.msra.mxu0 %v3815
        %6545 = vmatprep.subr.bf16.mxu0 %v3824
        %6546 = vmatpush1.bf16.msra.mxu0 %v3823
        %6547 = vmatprep.subr.bf16.mxu0 %v3832
        %6548 = vmatpush1.bf16.msra.mxu0 %v3831
        %6549 = vmatprep.subr.bf16.mxu0 %v3840
        %6550 = vmatpush1.bf16.msra.mxu0 %v3839
        %6551 = vmatprep.mubr.bf16.mxu0 %v4225
        %6552 = vmatmul.mubr.bf16.gmra.mrb[0].mxu0 %v4224
        %v6553 = vpop.f32.mrb[0].mxu0
        %v6554 = vadd.f32 %v6513, %v6553
        %v6555 = vpop.f32.mrb[0].mxu0
        %v6556 = vadd.f32 %v6515, %v6555
        %v6557 = vpop.f32.mrb[0].mxu0
        %v6558 = vpop.f32.mrb[0].mxu0
        %6559 = vdwg.mxu0
        %6560 = vmatprep.subr.bf16.mxu0 %v3848
        %6561 = vmatpush1.bf16.msra.mxu0 %v3847
        %6562 = vmatprep.subr.bf16.mxu0 %v3856
        %6563 = vmatpush1.bf16.msra.mxu0 %v3855
        %6564 = vmatprep.subr.bf16.mxu0 %v3864
        %6565 = vmatpush1.bf16.msra.mxu0 %v3863
        %6566 = vmatprep.subr.bf16.mxu0 %v3872
        %6567 = vmatpush1.bf16.msra.mxu0 %v3871
        %6568 = vmatprep.subr.bf16.mxu0 %v3880
        %6569 = vmatpush1.bf16.msra.mxu0 %v3879
        %6570 = vmatprep.subr.bf16.mxu0 %v3888
        %6571 = vmatpush1.bf16.msra.mxu0 %v3887
        %6572 = vmatprep.subr.bf16.mxu0 %v3896
        %6573 = vmatpush1.bf16.msra.mxu0 %v3895
        %6574 = vmatprep.subr.bf16.mxu0 %v3904
        %6575 = vmatpush1.bf16.msra.mxu0 %v3903
        %6576 = vmatprep.subr.bf16.mxu0 %v3912
        %6577 = vmatpush1.bf16.msra.mxu0 %v3911
        %6578 = vmatprep.subr.bf16.mxu0 %v3920
        %6579 = vmatpush1.bf16.msra.mxu0 %v3919
        %6580 = vmatprep.subr.bf16.mxu0 %v3928
        %6581 = vmatpush1.bf16.msra.mxu0 %v3927
        %6582 = vmatprep.subr.bf16.mxu0 %v3936
        %6583 = vmatpush1.bf16.msra.mxu0 %v3935
        %6584 = vmatprep.subr.bf16.mxu0 %v3944
        %6585 = vmatpush1.bf16.msra.mxu0 %v3943
        %6586 = vmatprep.subr.bf16.mxu0 %v3952
        %6587 = vmatpush1.bf16.msra.mxu0 %v3951
        %6588 = vmatprep.subr.bf16.mxu0 %v3960
        %6589 = vmatpush1.bf16.msra.mxu0 %v3959
        %6590 = vmatprep.subr.bf16.mxu0 %v3968
        %6591 = vmatpush1.bf16.msra.mxu0 %v3967
        %6592 = vmatprep.mubr.bf16.mxu0 %v4223
        %6593 = vmatmul.mubr.bf16.gmra.mrb[0].mxu0 %v4209
        %v6594 = vpop.f32.mrb[0].mxu0
        %v6595 = vadd.f32 %v6554, %v6594
        %v6596 = vpop.f32.mrb[0].mxu0
        %v6597 = vadd.f32 %v6556, %v6596
        %v6598 = vpop.f32.mrb[0].mxu0
        %v6599 = vpop.f32.mrb[0].mxu0
        %6600 = vdwg.mxu0
        %6601 = vmatprep.subr.bf16.mxu0 %v1546
        %6602 = vmatpush1.bf16.msra.mxu0 %v1545
        %6603 = vmatprep.subr.bf16.mxu0 %v1554
        %6604 = vmatpush1.bf16.msra.mxu0 %v1553
        %6605 = vmatprep.subr.bf16.mxu0 %v1562
        %6606 = vmatpush1.bf16.msra.mxu0 %v1561
        %6607 = vmatprep.subr.bf16.mxu0 %v1570
        %6608 = vmatpush1.bf16.msra.mxu0 %v1569
        %6609 = vmatprep.subr.bf16.mxu0 %v1578
        %6610 = vmatpush1.bf16.msra.mxu0 %v1577
        %6611 = vmatprep.subr.bf16.mxu0 %v1586
        %6612 = vmatpush1.bf16.msra.mxu0 %v1585
        %6613 = vmatprep.subr.bf16.mxu0 %v1594
        %6614 = vmatpush1.bf16.msra.mxu0 %v1593
        %6615 = vmatprep.subr.bf16.mxu0 %v1602
        %6616 = vmatpush1.bf16.msra.mxu0 %v1601
        %6617 = vmatprep.subr.bf16.mxu0 %v1610
        %6618 = vmatpush1.bf16.msra.mxu0 %v1609
        %6619 = vmatprep.subr.bf16.mxu0 %v1618
        %6620 = vmatpush1.bf16.msra.mxu0 %v1617
        %6621 = vmatprep.subr.bf16.mxu0 %v1626
        %6622 = vmatpush1.bf16.msra.mxu0 %v1625
        %6623 = vmatprep.subr.bf16.mxu0 %v1634
        %6624 = vmatpush1.bf16.msra.mxu0 %v1633
        %6625 = vmatprep.subr.bf16.mxu0 %v1642
        %6626 = vmatpush1.bf16.msra.mxu0 %v1641
        %6627 = vmatprep.subr.bf16.mxu0 %v1650
        %6628 = vmatpush1.bf16.msra.mxu0 %v1649
        %6629 = vmatprep.subr.bf16.mxu0 %v1658
        %6630 = vmatpush1.bf16.msra.mxu0 %v1657
        %6631 = vmatprep.subr.bf16.mxu0 %v1666
        %6632 = vmatpush1.bf16.msra.mxu0 %v1665
        %6633 = vmatprep.mubr.bf16.mxu0 %v4020
        %6634 = vmatmul.mubr.bf16.gmra.mrb[0].mxu0 %v4006
        %v6635 = vpop.f32.mrb[0].mxu0
        %v6636 = vadd.f32 0.0, %v6635
        %v6637 = vpop.f32.mrb[0].mxu0
        %v6638 = vadd.f32 0.0, %v6637
        %v6639 = vpop.f32.mrb[0].mxu0
        %v6640 = vpop.f32.mrb[0].mxu0
        %6641 = vdwg.mxu0
        %6642 = vmatprep.subr.bf16.mxu0 %v1674
        %6643 = vmatpush1.bf16.msra.mxu0 %v1673
        %6644 = vmatprep.subr.bf16.mxu0 %v1682
        %6645 = vmatpush1.bf16.msra.mxu0 %v1681
        %6646 = vmatprep.subr.bf16.mxu0 %v1690
        %6647 = vmatpush1.bf16.msra.mxu0 %v1689
        %6648 = vmatprep.subr.bf16.mxu0 %v1698
        %6649 = vmatpush1.bf16.msra.mxu0 %v1697
        %6650 = vmatprep.subr.bf16.mxu0 %v1706
        %6651 = vmatpush1.bf16.msra.mxu0 %v1705
        %6652 = vmatprep.subr.bf16.mxu0 %v1714
        %6653 = vmatpush1.bf16.msra.mxu0 %v1713
        %6654 = vmatprep.subr.bf16.mxu0 %v1722
        %6655 = vmatpush1.bf16.msra.mxu0 %v1721
        %6656 = vmatprep.subr.bf16.mxu0 %v1730
        %6657 = vmatpush1.bf16.msra.mxu0 %v1729
        %6658 = vmatprep.subr.bf16.mxu0 %v1738
        %6659 = vmatpush1.bf16.msra.mxu0 %v1737
        %6660 = vmatprep.subr.bf16.mxu0 %v1746
        %6661 = vmatpush1.bf16.msra.mxu0 %v1745
        %6662 = vmatprep.subr.bf16.mxu0 %v1754
        %6663 = vmatpush1.bf16.msra.mxu0 %v1753
        %6664 = vmatprep.subr.bf16.mxu0 %v1762
        %6665 = vmatpush1.bf16.msra.mxu0 %v1761
        %6666 = vmatprep.subr.bf16.mxu0 %v1770
        %6667 = vmatpush1.bf16.msra.mxu0 %v1769
        %6668 = vmatprep.subr.bf16.mxu0 %v1778
        %6669 = vmatpush1.bf16.msra.mxu0 %v1777
        %6670 = vmatprep.subr.bf16.mxu0 %v1786
        %6671 = vmatpush1.bf16.msra.mxu0 %v1785
        %6672 = vmatprep.subr.bf16.mxu0 %v1794
        %6673 = vmatpush1.bf16.msra.mxu0 %v1793
        %6674 = vmatprep.mubr.bf16.mxu0 %v4030
        %6675 = vmatmul.mubr.bf16.gmra.mrb[0].mxu0 %v4028
        %v6676 = vpop.f32.mrb[0].mxu0
        %v6677 = vadd.f32 %v6636, %v6676
        %v6678 = vpop.f32.mrb[0].mxu0
        %v6679 = vadd.f32 %v6638, %v6678
        %v6680 = vpop.f32.mrb[0].mxu0
        %v6681 = vpop.f32.mrb[0].mxu0
        %6682 = vdwg.mxu0
        %6683 = vmatprep.subr.bf16.mxu0 %v1802
        %6684 = vmatpush1.bf16.msra.mxu0 %v1801
        %6685 = vmatprep.subr.bf16.mxu0 %v1810
        %6686 = vmatpush1.bf16.msra.mxu0 %v1809
        %6687 = vmatprep.subr.bf16.mxu0 %v1818
        %6688 = vmatpush1.bf16.msra.mxu0 %v1817
        %6689 = vmatprep.subr.bf16.mxu0 %v1826
        %6690 = vmatpush1.bf16.msra.mxu0 %v1825
        %6691 = vmatprep.subr.bf16.mxu0 %v1834
        %6692 = vmatpush1.bf16.msra.mxu0 %v1833
        %6693 = vmatprep.subr.bf16.mxu0 %v1842
        %6694 = vmatpush1.bf16.msra.mxu0 %v1841
        %6695 = vmatprep.subr.bf16.mxu0 %v1850
        %6696 = vmatpush1.bf16.msra.mxu0 %v1849
        %6697 = vmatprep.subr.bf16.mxu0 %v1858
        %6698 = vmatpush1.bf16.msra.mxu0 %v1857
        %6699 = vmatprep.subr.bf16.mxu0 %v1866
        %6700 = vmatpush1.bf16.msra.mxu0 %v1865
        %6701 = vmatprep.subr.bf16.mxu0 %v1874
        %6702 = vmatpush1.bf16.msra.mxu0 %v1873
        %6703 = vmatprep.subr.bf16.mxu0 %v1882
        %6704 = vmatpush1.bf16.msra.mxu0 %v1881
        %6705 = vmatprep.subr.bf16.mxu0 %v1890
        %6706 = vmatpush1.bf16.msra.mxu0 %v1889
        %6707 = vmatprep.subr.bf16.mxu0 %v1898
        %6708 = vmatpush1.bf16.msra.mxu0 %v1897
        %6709 = vmatprep.subr.bf16.mxu0 %v1906
        %6710 = vmatpush1.bf16.msra.mxu0 %v1905
        %6711 = vmatprep.subr.bf16.mxu0 %v1914
        %6712 = vmatpush1.bf16.msra.mxu0 %v1913
        %6713 = vmatprep.subr.bf16.mxu0 %v1922
        %6714 = vmatpush1.bf16.msra.mxu0 %v1921
        %6715 = vmatprep.mubr.bf16.mxu0 %v4027
        %6716 = vmatmul.mubr.bf16.gmra.mrb[0].mxu0 %v4013
        %v6717 = vpop.f32.mrb[0].mxu0
        %v6718 = vadd.f32 %v6677, %v6717
        %v6719 = vpop.f32.mrb[0].mxu0
        %v6720 = vadd.f32 %v6679, %v6719
        %v6721 = vpop.f32.mrb[0].mxu0
        %v6722 = vpop.f32.mrb[0].mxu0
        %6723 = vdwg.mxu0
        %6724 = vmatprep.subr.bf16.mxu0 %v1930
        %6725 = vmatpush1.bf16.msra.mxu0 %v1929
        %6726 = vmatprep.subr.bf16.mxu0 %v1938
        %6727 = vmatpush1.bf16.msra.mxu0 %v1937
        %6728 = vmatprep.subr.bf16.mxu0 %v1946
        %6729 = vmatpush1.bf16.msra.mxu0 %v1945
        %6730 = vmatprep.subr.bf16.mxu0 %v1954
        %6731 = vmatpush1.bf16.msra.mxu0 %v1953
        %6732 = vmatprep.subr.bf16.mxu0 %v1962
        %6733 = vmatpush1.bf16.msra.mxu0 %v1961
        %6734 = vmatprep.subr.bf16.mxu0 %v1970
        %6735 = vmatpush1.bf16.msra.mxu0 %v1969
        %6736 = vmatprep.subr.bf16.mxu0 %v1978
        %6737 = vmatpush1.bf16.msra.mxu0 %v1977
        %6738 = vmatprep.subr.bf16.mxu0 %v1986
        %6739 = vmatpush1.bf16.msra.mxu0 %v1985
        %6740 = vmatprep.subr.bf16.mxu0 %v1994
        %6741 = vmatpush1.bf16.msra.mxu0 %v1993
        %6742 = vmatprep.subr.bf16.mxu0 %v2002
        %6743 = vmatpush1.bf16.msra.mxu0 %v2001
        %6744 = vmatprep.subr.bf16.mxu0 %v2010
        %6745 = vmatpush1.bf16.msra.mxu0 %v2009
        %6746 = vmatprep.subr.bf16.mxu0 %v2018
        %6747 = vmatpush1.bf16.msra.mxu0 %v2017
        %6748 = vmatprep.subr.bf16.mxu0 %v2026
        %6749 = vmatpush1.bf16.msra.mxu0 %v2025
        %6750 = vmatprep.subr.bf16.mxu0 %v2034
        %6751 = vmatpush1.bf16.msra.mxu0 %v2033
        %6752 = vmatprep.subr.bf16.mxu0 %v2042
        %6753 = vmatpush1.bf16.msra.mxu0 %v2041
        %6754 = vmatprep.subr.bf16.mxu0 %v2050
        %6755 = vmatpush1.bf16.msra.mxu0 %v2049
        %6756 = vmatprep.mubr.bf16.mxu0 %v4031
        %6757 = vmatmul.mubr.bf16.gmra.mrb[0].mxu0 %v4029
        %v6758 = vpop.f32.mrb[0].mxu0
        %v6759 = vadd.f32 %v6718, %v6758
        %v6760 = vpop.f32.mrb[0].mxu0
        %v6761 = vadd.f32 %v6720, %v6760
        %v6762 = vpop.f32.mrb[0].mxu0
        %v6763 = vpop.f32.mrb[0].mxu0
        %6764 = vdwg.mxu0
        %6765 = vmatprep.subr.bf16.mxu0 %v2058
        %6766 = vmatpush1.bf16.msra.mxu0 %v2057
        %6767 = vmatprep.subr.bf16.mxu0 %v2066
        %6768 = vmatpush1.bf16.msra.mxu0 %v2065
        %6769 = vmatprep.subr.bf16.mxu0 %v2074
        %6770 = vmatpush1.bf16.msra.mxu0 %v2073
        %6771 = vmatprep.subr.bf16.mxu0 %v2082
        %6772 = vmatpush1.bf16.msra.mxu0 %v2081
        %6773 = vmatprep.subr.bf16.mxu0 %v2090
        %6774 = vmatpush1.bf16.msra.mxu0 %v2089
        %6775 = vmatprep.subr.bf16.mxu0 %v2098
        %6776 = vmatpush1.bf16.msra.mxu0 %v2097
        %6777 = vmatprep.subr.bf16.mxu0 %v2106
        %6778 = vmatpush1.bf16.msra.mxu0 %v2105
        %6779 = vmatprep.subr.bf16.mxu0 %v2114
        %6780 = vmatpush1.bf16.msra.mxu0 %v2113
        %6781 = vmatprep.subr.bf16.mxu0 %v2122
        %6782 = vmatpush1.bf16.msra.mxu0 %v2121
        %6783 = vmatprep.subr.bf16.mxu0 %v2130
        %6784 = vmatpush1.bf16.msra.mxu0 %v2129
        %6785 = vmatprep.subr.bf16.mxu0 %v2138
        %6786 = vmatpush1.bf16.msra.mxu0 %v2137
        %6787 = vmatprep.subr.bf16.mxu0 %v2146
        %6788 = vmatpush1.bf16.msra.mxu0 %v2145
        %6789 = vmatprep.subr.bf16.mxu0 %v2154
        %6790 = vmatpush1.bf16.msra.mxu0 %v2153
        %6791 = vmatprep.subr.bf16.mxu0 %v2162
        %6792 = vmatpush1.bf16.msra.mxu0 %v2161
        %6793 = vmatprep.subr.bf16.mxu0 %v2170
        %6794 = vmatpush1.bf16.msra.mxu0 %v2169
        %6795 = vmatprep.subr.bf16.mxu0 %v2178
        %6796 = vmatpush1.bf16.msra.mxu0 %v2177
        %6797 = vmatprep.mubr.bf16.mxu0 %v4069
        %6798 = vmatmul.mubr.bf16.gmra.mrb[0].mxu0 %v4055
        %v6799 = vpop.f32.mrb[0].mxu0
        %v6800 = vadd.f32 %v6759, %v6799
        %v6801 = vpop.f32.mrb[0].mxu0
        %v6802 = vadd.f32 %v6761, %v6801
        %v6803 = vpop.f32.mrb[0].mxu0
        %v6804 = vpop.f32.mrb[0].mxu0
        %6805 = vdwg.mxu0
        %6806 = vmatprep.subr.bf16.mxu0 %v2186
        %6807 = vmatpush1.bf16.msra.mxu0 %v2185
        %6808 = vmatprep.subr.bf16.mxu0 %v2194
        %6809 = vmatpush1.bf16.msra.mxu0 %v2193
        %6810 = vmatprep.subr.bf16.mxu0 %v2202
        %6811 = vmatpush1.bf16.msra.mxu0 %v2201
        %6812 = vmatprep.subr.bf16.mxu0 %v2210
        %6813 = vmatpush1.bf16.msra.mxu0 %v2209
        %6814 = vmatprep.subr.bf16.mxu0 %v2218
        %6815 = vmatpush1.bf16.msra.mxu0 %v2217
        %6816 = vmatprep.subr.bf16.mxu0 %v2226
        %6817 = vmatpush1.bf16.msra.mxu0 %v2225
        %6818 = vmatprep.subr.bf16.mxu0 %v2234
        %6819 = vmatpush1.bf16.msra.mxu0 %v2233
        %6820 = vmatprep.subr.bf16.mxu0 %v2242
        %6821 = vmatpush1.bf16.msra.mxu0 %v2241
        %6822 = vmatprep.subr.bf16.mxu0 %v2250
        %6823 = vmatpush1.bf16.msra.mxu0 %v2249
        %6824 = vmatprep.subr.bf16.mxu0 %v2258
        %6825 = vmatpush1.bf16.msra.mxu0 %v2257
        %6826 = vmatprep.subr.bf16.mxu0 %v2266
        %6827 = vmatpush1.bf16.msra.mxu0 %v2265
        %6828 = vmatprep.subr.bf16.mxu0 %v2274
        %6829 = vmatpush1.bf16.msra.mxu0 %v2273
        %6830 = vmatprep.subr.bf16.mxu0 %v2282
        %6831 = vmatpush1.bf16.msra.mxu0 %v2281
        %6832 = vmatprep.subr.bf16.mxu0 %v2290
        %6833 = vmatpush1.bf16.msra.mxu0 %v2289
        %6834 = vmatprep.subr.bf16.mxu0 %v2298
        %6835 = vmatpush1.bf16.msra.mxu0 %v2297
        %6836 = vmatprep.subr.bf16.mxu0 %v2306
        %6837 = vmatpush1.bf16.msra.mxu0 %v2305
        %6838 = vmatprep.mubr.bf16.mxu0 %v4079
        %6839 = vmatmul.mubr.bf16.gmra.mrb[0].mxu0 %v4077
        %v6840 = vpop.f32.mrb[0].mxu0
        %v6841 = vadd.f32 %v6800, %v6840
        %v6842 = vpop.f32.mrb[0].mxu0
        %v6843 = vadd.f32 %v6802, %v6842
        %v6844 = vpop.f32.mrb[0].mxu0
        %v6845 = vpop.f32.mrb[0].mxu0
        %6846 = vdwg.mxu0
        %6847 = vmatprep.subr.bf16.mxu0 %v2314
        %6848 = vmatpush1.bf16.msra.mxu0 %v2313
        %6849 = vmatprep.subr.bf16.mxu0 %v2322
        %6850 = vmatpush1.bf16.msra.mxu0 %v2321
        %6851 = vmatprep.subr.bf16.mxu0 %v2330
        %6852 = vmatpush1.bf16.msra.mxu0 %v2329
        %6853 = vmatprep.subr.bf16.mxu0 %v2338
        %6854 = vmatpush1.bf16.msra.mxu0 %v2337
        %6855 = vmatprep.subr.bf16.mxu0 %v2346
        %6856 = vmatpush1.bf16.msra.mxu0 %v2345
        %6857 = vmatprep.subr.bf16.mxu0 %v2354
        %6858 = vmatpush1.bf16.msra.mxu0 %v2353
        %6859 = vmatprep.subr.bf16.mxu0 %v2362
        %6860 = vmatpush1.bf16.msra.mxu0 %v2361
        %6861 = vmatprep.subr.bf16.mxu0 %v2370
        %6862 = vmatpush1.bf16.msra.mxu0 %v2369
        %6863 = vmatprep.subr.bf16.mxu0 %v2378
        %6864 = vmatpush1.bf16.msra.mxu0 %v2377
        %6865 = vmatprep.subr.bf16.mxu0 %v2386
        %6866 = vmatpush1.bf16.msra.mxu0 %v2385
        %6867 = vmatprep.subr.bf16.mxu0 %v2394
        %6868 = vmatpush1.bf16.msra.mxu0 %v2393
        %6869 = vmatprep.subr.bf16.mxu0 %v2402
        %6870 = vmatpush1.bf16.msra.mxu0 %v2401
        %6871 = vmatprep.subr.bf16.mxu0 %v2410
        %6872 = vmatpush1.bf16.msra.mxu0 %v2409
        %6873 = vmatprep.subr.bf16.mxu0 %v2418
        %6874 = vmatpush1.bf16.msra.mxu0 %v2417
        %6875 = vmatprep.subr.bf16.mxu0 %v2426
        %6876 = vmatpush1.bf16.msra.mxu0 %v2425
        %6877 = vmatprep.subr.bf16.mxu0 %v2434
        %6878 = vmatpush1.bf16.msra.mxu0 %v2433
        %6879 = vmatprep.mubr.bf16.mxu0 %v4076
        %6880 = vmatmul.mubr.bf16.gmra.mrb[0].mxu0 %v4062
        %v6881 = vpop.f32.mrb[0].mxu0
        %v6882 = vadd.f32 %v6841, %v6881
        %v6883 = vpop.f32.mrb[0].mxu0
        %v6884 = vadd.f32 %v6843, %v6883
        %v6885 = vpop.f32.mrb[0].mxu0
        %v6886 = vpop.f32.mrb[0].mxu0
        %6887 = vdwg.mxu0
        %6888 = vmatprep.subr.bf16.mxu0 %v2442
        %6889 = vmatpush1.bf16.msra.mxu0 %v2441
        %6890 = vmatprep.subr.bf16.mxu0 %v2450
        %6891 = vmatpush1.bf16.msra.mxu0 %v2449
        %6892 = vmatprep.subr.bf16.mxu0 %v2458
        %6893 = vmatpush1.bf16.msra.mxu0 %v2457
        %6894 = vmatprep.subr.bf16.mxu0 %v2466
        %6895 = vmatpush1.bf16.msra.mxu0 %v2465
        %6896 = vmatprep.subr.bf16.mxu0 %v2474
        %6897 = vmatpush1.bf16.msra.mxu0 %v2473
        %6898 = vmatprep.subr.bf16.mxu0 %v2482
        %6899 = vmatpush1.bf16.msra.mxu0 %v2481
        %6900 = vmatprep.subr.bf16.mxu0 %v2490
        %6901 = vmatpush1.bf16.msra.mxu0 %v2489
        %6902 = vmatprep.subr.bf16.mxu0 %v2498
        %6903 = vmatpush1.bf16.msra.mxu0 %v2497
        %6904 = vmatprep.subr.bf16.mxu0 %v2506
        %6905 = vmatpush1.bf16.msra.mxu0 %v2505
        %6906 = vmatprep.subr.bf16.mxu0 %v2514
        %6907 = vmatpush1.bf16.msra.mxu0 %v2513
        %6908 = vmatprep.subr.bf16.mxu0 %v2522
        %6909 = vmatpush1.bf16.msra.mxu0 %v2521
        %6910 = vmatprep.subr.bf16.mxu0 %v2530
        %6911 = vmatpush1.bf16.msra.mxu0 %v2529
        %6912 = vmatprep.subr.bf16.mxu0 %v2538
        %6913 = vmatpush1.bf16.msra.mxu0 %v2537
        %6914 = vmatprep.subr.bf16.mxu0 %v2546
        %6915 = vmatpush1.bf16.msra.mxu0 %v2545
        %6916 = vmatprep.subr.bf16.mxu0 %v2554
        %6917 = vmatpush1.bf16.msra.mxu0 %v2553
        %6918 = vmatprep.subr.bf16.mxu0 %v2562
        %6919 = vmatpush1.bf16.msra.mxu0 %v2561
        %6920 = vmatprep.mubr.bf16.mxu0 %v4080
        %6921 = vmatmul.mubr.bf16.gmra.mrb[0].mxu0 %v4078
        %v6922 = vpop.f32.mrb[0].mxu0
        %v6923 = vadd.f32 %v6882, %v6922
        %v6924 = vpop.f32.mrb[0].mxu0
        %v6925 = vadd.f32 %v6884, %v6924
        %v6926 = vpop.f32.mrb[0].mxu0
        %v6927 = vpop.f32.mrb[0].mxu0
        %6928 = vdwg.mxu0
        %6929 = vmatprep.subr.bf16.mxu0 %v2570
        %6930 = vmatpush1.bf16.msra.mxu0 %v2569
        %6931 = vmatprep.subr.bf16.mxu0 %v2578
        %6932 = vmatpush1.bf16.msra.mxu0 %v2577
        %6933 = vmatprep.subr.bf16.mxu0 %v2586
        %6934 = vmatpush1.bf16.msra.mxu0 %v2585
        %6935 = vmatprep.subr.bf16.mxu0 %v2594
        %6936 = vmatpush1.bf16.msra.mxu0 %v2593
        %6937 = vmatprep.subr.bf16.mxu0 %v2602
        %6938 = vmatpush1.bf16.msra.mxu0 %v2601
        %6939 = vmatprep.subr.bf16.mxu0 %v2610
        %6940 = vmatpush1.bf16.msra.mxu0 %v2609
        %6941 = vmatprep.subr.bf16.mxu0 %v2618
        %6942 = vmatpush1.bf16.msra.mxu0 %v2617
        %6943 = vmatprep.subr.bf16.mxu0 %v2626
        %6944 = vmatpush1.bf16.msra.mxu0 %v2625
        %6945 = vmatprep.subr.bf16.mxu0 %v2634
        %6946 = vmatpush1.bf16.msra.mxu0 %v2633
        %6947 = vmatprep.subr.bf16.mxu0 %v2642
        %6948 = vmatpush1.bf16.msra.mxu0 %v2641
        %6949 = vmatprep.subr.bf16.mxu0 %v2650
        %6950 = vmatpush1.bf16.msra.mxu0 %v2649
        %6951 = vmatprep.subr.bf16.mxu0 %v2658
        %6952 = vmatpush1.bf16.msra.mxu0 %v2657
        %6953 = vmatprep.subr.bf16.mxu0 %v2666
        %6954 = vmatpush1.bf16.msra.mxu0 %v2665
        %6955 = vmatprep.subr.bf16.mxu0 %v2674
        %6956 = vmatpush1.bf16.msra.mxu0 %v2673
        %6957 = vmatprep.subr.bf16.mxu0 %v2682
        %6958 = vmatpush1.bf16.msra.mxu0 %v2681
        %6959 = vmatprep.subr.bf16.mxu0 %v2690
        %6960 = vmatpush1.bf16.msra.mxu0 %v2689
        %6961 = vmatprep.mubr.bf16.mxu0 %v4118
        %6962 = vmatmul.mubr.bf16.gmra.mrb[0].mxu0 %v4104
        %v6963 = vpop.f32.mrb[0].mxu0
        %v6964 = vadd.f32 %v6923, %v6963
        %v6965 = vpop.f32.mrb[0].mxu0
        %v6966 = vadd.f32 %v6925, %v6965
        %v6967 = vpop.f32.mrb[0].mxu0
        %v6968 = vpop.f32.mrb[0].mxu0
        %6969 = vdwg.mxu0
        %6970 = vmatprep.subr.bf16.mxu0 %v2698
        %6971 = vmatpush1.bf16.msra.mxu0 %v2697
        %6972 = vmatprep.subr.bf16.mxu0 %v2706
        %6973 = vmatpush1.bf16.msra.mxu0 %v2705
        %6974 = vmatprep.subr.bf16.mxu0 %v2714
        %6975 = vmatpush1.bf16.msra.mxu0 %v2713
        %6976 = vmatprep.subr.bf16.mxu0 %v2722
        %6977 = vmatpush1.bf16.msra.mxu0 %v2721
        %6978 = vmatprep.subr.bf16.mxu0 %v2730
        %6979 = vmatpush1.bf16.msra.mxu0 %v2729
        %6980 = vmatprep.subr.bf16.mxu0 %v2738
        %6981 = vmatpush1.bf16.msra.mxu0 %v2737
        %6982 = vmatprep.subr.bf16.mxu0 %v2746
        %6983 = vmatpush1.bf16.msra.mxu0 %v2745
        %6984 = vmatprep.subr.bf16.mxu0 %v2754
        %6985 = vmatpush1.bf16.msra.mxu0 %v2753
        %6986 = vmatprep.subr.bf16.mxu0 %v2762
        %6987 = vmatpush1.bf16.msra.mxu0 %v2761
        %6988 = vmatprep.subr.bf16.mxu0 %v2770
        %6989 = vmatpush1.bf16.msra.mxu0 %v2769
        %6990 = vmatprep.subr.bf16.mxu0 %v2778
        %6991 = vmatpush1.bf16.msra.mxu0 %v2777
        %6992 = vmatprep.subr.bf16.mxu0 %v2786
        %6993 = vmatpush1.bf16.msra.mxu0 %v2785
        %6994 = vmatprep.subr.bf16.mxu0 %v2794
        %6995 = vmatpush1.bf16.msra.mxu0 %v2793
        %6996 = vmatprep.subr.bf16.mxu0 %v2802
        %6997 = vmatpush1.bf16.msra.mxu0 %v2801
        %6998 = vmatprep.subr.bf16.mxu0 %v2810
        %6999 = vmatpush1.bf16.msra.mxu0 %v2809
        %7000 = vmatprep.subr.bf16.mxu0 %v2818
        %7001 = vmatpush1.bf16.msra.mxu0 %v2817
        %7002 = vmatprep.mubr.bf16.mxu0 %v4128
        %7003 = vmatmul.mubr.bf16.gmra.mrb[0].mxu0 %v4126
        %v7004 = vpop.f32.mrb[0].mxu0
        %v7005 = vadd.f32 %v6964, %v7004
        %v7006 = vpop.f32.mrb[0].mxu0
        %v7007 = vadd.f32 %v6966, %v7006
        %v7008 = vpop.f32.mrb[0].mxu0
        %v7009 = vpop.f32.mrb[0].mxu0
        %7010 = vdwg.mxu0
        %7011 = vmatprep.subr.bf16.mxu0 %v2826
        %7012 = vmatpush1.bf16.msra.mxu0 %v2825
        %7013 = vmatprep.subr.bf16.mxu0 %v2834
        %7014 = vmatpush1.bf16.msra.mxu0 %v2833
        %7015 = vmatprep.subr.bf16.mxu0 %v2842
        %7016 = vmatpush1.bf16.msra.mxu0 %v2841
        %7017 = vmatprep.subr.bf16.mxu0 %v2850
        %7018 = vmatpush1.bf16.msra.mxu0 %v2849
        %7019 = vmatprep.subr.bf16.mxu0 %v2858
        %7020 = vmatpush1.bf16.msra.mxu0 %v2857
        %7021 = vmatprep.subr.bf16.mxu0 %v2866
        %7022 = vmatpush1.bf16.msra.mxu0 %v2865
        %7023 = vmatprep.subr.bf16.mxu0 %v2874
        %7024 = vmatpush1.bf16.msra.mxu0 %v2873
        %7025 = vmatprep.subr.bf16.mxu0 %v2882
        %7026 = vmatpush1.bf16.msra.mxu0 %v2881
        %7027 = vmatprep.subr.bf16.mxu0 %v2890
        %7028 = vmatpush1.bf16.msra.mxu0 %v2889
        %7029 = vmatprep.subr.bf16.mxu0 %v2898
        %7030 = vmatpush1.bf16.msra.mxu0 %v2897
        %7031 = vmatprep.subr.bf16.mxu0 %v2906
        %7032 = vmatpush1.bf16.msra.mxu0 %v2905
        %7033 = vmatprep.subr.bf16.mxu0 %v2914
        %7034 = vmatpush1.bf16.msra.mxu0 %v2913
        %7035 = vmatprep.subr.bf16.mxu0 %v2922
        %7036 = vmatpush1.bf16.msra.mxu0 %v2921
        %7037 = vmatprep.subr.bf16.mxu0 %v2930
        %7038 = vmatpush1.bf16.msra.mxu0 %v2929
        %7039 = vmatprep.subr.bf16.mxu0 %v2938
        %7040 = vmatpush1.bf16.msra.mxu0 %v2937
        %7041 = vmatprep.subr.bf16.mxu0 %v2946
        %7042 = vmatpush1.bf16.msra.mxu0 %v2945
        %7043 = vmatprep.mubr.bf16.mxu0 %v4125
        %7044 = vmatmul.mubr.bf16.gmra.mrb[0].mxu0 %v4111
        %v7045 = vpop.f32.mrb[0].mxu0
        %v7046 = vadd.f32 %v7005, %v7045
        %v7047 = vpop.f32.mrb[0].mxu0
        %v7048 = vadd.f32 %v7007, %v7047
        %v7049 = vpop.f32.mrb[0].mxu0
        %v7050 = vpop.f32.mrb[0].mxu0
        %7051 = vdwg.mxu0
        %7052 = vmatprep.subr.bf16.mxu0 %v2954
        %7053 = vmatpush1.bf16.msra.mxu0 %v2953
        %7054 = vmatprep.subr.bf16.mxu0 %v2962
        %7055 = vmatpush1.bf16.msra.mxu0 %v2961
        %7056 = vmatprep.subr.bf16.mxu0 %v2970
        %7057 = vmatpush1.bf16.msra.mxu0 %v2969
        %7058 = vmatprep.subr.bf16.mxu0 %v2978
        %7059 = vmatpush1.bf16.msra.mxu0 %v2977
        %7060 = vmatprep.subr.bf16.mxu0 %v2986
        %7061 = vmatpush1.bf16.msra.mxu0 %v2985
        %7062 = vmatprep.subr.bf16.mxu0 %v2994
        %7063 = vmatpush1.bf16.msra.mxu0 %v2993
        %7064 = vmatprep.subr.bf16.mxu0 %v3002
        %7065 = vmatpush1.bf16.msra.mxu0 %v3001
        %7066 = vmatprep.subr.bf16.mxu0 %v3010
        %7067 = vmatpush1.bf16.msra.mxu0 %v3009
        %7068 = vmatprep.subr.bf16.mxu0 %v3018
        %7069 = vmatpush1.bf16.msra.mxu0 %v3017
        %7070 = vmatprep.subr.bf16.mxu0 %v3026
        %7071 = vmatpush1.bf16.msra.mxu0 %v3025
        %7072 = vmatprep.subr.bf16.mxu0 %v3034
        %7073 = vmatpush1.bf16.msra.mxu0 %v3033
        %7074 = vmatprep.subr.bf16.mxu0 %v3042
        %7075 = vmatpush1.bf16.msra.mxu0 %v3041
        %7076 = vmatprep.subr.bf16.mxu0 %v3050
        %7077 = vmatpush1.bf16.msra.mxu0 %v3049
        %7078 = vmatprep.subr.bf16.mxu0 %v3058
        %7079 = vmatpush1.bf16.msra.mxu0 %v3057
        %7080 = vmatprep.subr.bf16.mxu0 %v3066
        %7081 = vmatpush1.bf16.msra.mxu0 %v3065
        %7082 = vmatprep.subr.bf16.mxu0 %v3074
        %7083 = vmatpush1.bf16.msra.mxu0 %v3073
        %7084 = vmatprep.mubr.bf16.mxu0 %v4129
        %7085 = vmatmul.mubr.bf16.gmra.mrb[0].mxu0 %v4127
        %v7086 = vpop.f32.mrb[0].mxu0
        %v7087 = vadd.f32 %v7046, %v7086
        %v7088 = vpop.f32.mrb[0].mxu0
        %v7089 = vadd.f32 %v7048, %v7088
        %v7090 = vpop.f32.mrb[0].mxu0
        %v7091 = vpop.f32.mrb[0].mxu0
        %7092 = vdwg.mxu0
        %7093 = vmatprep.subr.bf16.mxu0 %v3082
        %7094 = vmatpush1.bf16.msra.mxu0 %v3081
        %7095 = vmatprep.subr.bf16.mxu0 %v3090
        %7096 = vmatpush1.bf16.msra.mxu0 %v3089
        %7097 = vmatprep.subr.bf16.mxu0 %v3098
        %7098 = vmatpush1.bf16.msra.mxu0 %v3097
        %7099 = vmatprep.subr.bf16.mxu0 %v3106
        %7100 = vmatpush1.bf16.msra.mxu0 %v3105
        %7101 = vmatprep.subr.bf16.mxu0 %v3114
        %7102 = vmatpush1.bf16.msra.mxu0 %v3113
        %7103 = vmatprep.subr.bf16.mxu0 %v3122
        %7104 = vmatpush1.bf16.msra.mxu0 %v3121
        %7105 = vmatprep.subr.bf16.mxu0 %v3130
        %7106 = vmatpush1.bf16.msra.mxu0 %v3129
        %7107 = vmatprep.subr.bf16.mxu0 %v3138
        %7108 = vmatpush1.bf16.msra.mxu0 %v3137
        %7109 = vmatprep.subr.bf16.mxu0 %v3146
        %7110 = vmatpush1.bf16.msra.mxu0 %v3145
        %7111 = vmatprep.subr.bf16.mxu0 %v3154
        %7112 = vmatpush1.bf16.msra.mxu0 %v3153
        %7113 = vmatprep.subr.bf16.mxu0 %v3162
        %7114 = vmatpush1.bf16.msra.mxu0 %v3161
        %7115 = vmatprep.subr.bf16.mxu0 %v3170
        %7116 = vmatpush1.bf16.msra.mxu0 %v3169
        %7117 = vmatprep.subr.bf16.mxu0 %v3178
        %7118 = vmatpush1.bf16.msra.mxu0 %v3177
        %7119 = vmatprep.subr.bf16.mxu0 %v3186
        %7120 = vmatpush1.bf16.msra.mxu0 %v3185
        %7121 = vmatprep.subr.bf16.mxu0 %v3194
        %7122 = vmatpush1.bf16.msra.mxu0 %v3193
        %7123 = vmatprep.subr.bf16.mxu0 %v3202
        %7124 = vmatpush1.bf16.msra.mxu0 %v3201
        %7125 = vmatprep.mubr.bf16.mxu0 %v4167
        %7126 = vmatmul.mubr.bf16.gmra.mrb[0].mxu0 %v4153
        %v7127 = vpop.f32.mrb[0].mxu0
        %v7128 = vadd.f32 %v7087, %v7127
        %v7129 = vpop.f32.mrb[0].mxu0
        %v7130 = vadd.f32 %v7089, %v7129
        %v7131 = vpop.f32.mrb[0].mxu0
        %v7132 = vpop.f32.mrb[0].mxu0
        %7133 = vdwg.mxu0
        %7134 = vmatprep.subr.bf16.mxu0 %v3210
        %7135 = vmatpush1.bf16.msra.mxu0 %v3209
        %7136 = vmatprep.subr.bf16.mxu0 %v3218
        %7137 = vmatpush1.bf16.msra.mxu0 %v3217
        %7138 = vmatprep.subr.bf16.mxu0 %v3226
        %7139 = vmatpush1.bf16.msra.mxu0 %v3225
        %7140 = vmatprep.subr.bf16.mxu0 %v3234
        %7141 = vmatpush1.bf16.msra.mxu0 %v3233
        %7142 = vmatprep.subr.bf16.mxu0 %v3242
        %7143 = vmatpush1.bf16.msra.mxu0 %v3241
        %7144 = vmatprep.subr.bf16.mxu0 %v3250
        %7145 = vmatpush1.bf16.msra.mxu0 %v3249
        %7146 = vmatprep.subr.bf16.mxu0 %v3258
        %7147 = vmatpush1.bf16.msra.mxu0 %v3257
        %7148 = vmatprep.subr.bf16.mxu0 %v3266
        %7149 = vmatpush1.bf16.msra.mxu0 %v3265
        %7150 = vmatprep.subr.bf16.mxu0 %v3274
        %7151 = vmatpush1.bf16.msra.mxu0 %v3273
        %7152 = vmatprep.subr.bf16.mxu0 %v3282
        %7153 = vmatpush1.bf16.msra.mxu0 %v3281
        %7154 = vmatprep.subr.bf16.mxu0 %v3290
        %7155 = vmatpush1.bf16.msra.mxu0 %v3289
        %7156 = vmatprep.subr.bf16.mxu0 %v3298
        %7157 = vmatpush1.bf16.msra.mxu0 %v3297
        %7158 = vmatprep.subr.bf16.mxu0 %v3306
        %7159 = vmatpush1.bf16.msra.mxu0 %v3305
        %7160 = vmatprep.subr.bf16.mxu0 %v3314
        %7161 = vmatpush1.bf16.msra.mxu0 %v3313
        %7162 = vmatprep.subr.bf16.mxu0 %v3322
        %7163 = vmatpush1.bf16.msra.mxu0 %v3321
        %7164 = vmatprep.subr.bf16.mxu0 %v3330
        %7165 = vmatpush1.bf16.msra.mxu0 %v3329
        %7166 = vmatprep.mubr.bf16.mxu0 %v4177
        %7167 = vmatmul.mubr.bf16.gmra.mrb[0].mxu0 %v4175
        %v7168 = vpop.f32.mrb[0].mxu0
        %v7169 = vadd.f32 %v7128, %v7168
        %v7170 = vpop.f32.mrb[0].mxu0
        %v7171 = vadd.f32 %v7130, %v7170
        %v7172 = vpop.f32.mrb[0].mxu0
        %v7173 = vpop.f32.mrb[0].mxu0
        %7174 = vdwg.mxu0
        %7175 = vmatprep.subr.bf16.mxu0 %v3338
        %7176 = vmatpush1.bf16.msra.mxu0 %v3337
        %7177 = vmatprep.subr.bf16.mxu0 %v3346
        %7178 = vmatpush1.bf16.msra.mxu0 %v3345
        %7179 = vmatprep.subr.bf16.mxu0 %v3354
        %7180 = vmatpush1.bf16.msra.mxu0 %v3353
        %7181 = vmatprep.subr.bf16.mxu0 %v3362
        %7182 = vmatpush1.bf16.msra.mxu0 %v3361
        %7183 = vmatprep.subr.bf16.mxu0 %v3370
        %7184 = vmatpush1.bf16.msra.mxu0 %v3369
        %7185 = vmatprep.subr.bf16.mxu0 %v3378
        %7186 = vmatpush1.bf16.msra.mxu0 %v3377
        %7187 = vmatprep.subr.bf16.mxu0 %v3386
        %7188 = vmatpush1.bf16.msra.mxu0 %v3385
        %7189 = vmatprep.subr.bf16.mxu0 %v3394
        %7190 = vmatpush1.bf16.msra.mxu0 %v3393
        %7191 = vmatprep.subr.bf16.mxu0 %v3402
        %7192 = vmatpush1.bf16.msra.mxu0 %v3401
        %7193 = vmatprep.subr.bf16.mxu0 %v3410
        %7194 = vmatpush1.bf16.msra.mxu0 %v3409
        %7195 = vmatprep.subr.bf16.mxu0 %v3418
        %7196 = vmatpush1.bf16.msra.mxu0 %v3417
        %7197 = vmatprep.subr.bf16.mxu0 %v3426
        %7198 = vmatpush1.bf16.msra.mxu0 %v3425
        %7199 = vmatprep.subr.bf16.mxu0 %v3434
        %7200 = vmatpush1.bf16.msra.mxu0 %v3433
        %7201 = vmatprep.subr.bf16.mxu0 %v3442
        %7202 = vmatpush1.bf16.msra.mxu0 %v3441
        %7203 = vmatprep.subr.bf16.mxu0 %v3450
        %7204 = vmatpush1.bf16.msra.mxu0 %v3449
        %7205 = vmatprep.subr.bf16.mxu0 %v3458
        %7206 = vmatpush1.bf16.msra.mxu0 %v3457
        %7207 = vmatprep.mubr.bf16.mxu0 %v4174
        %7208 = vmatmul.mubr.bf16.gmra.mrb[0].mxu0 %v4160
        %v7209 = vpop.f32.mrb[0].mxu0
        %v7210 = vadd.f32 %v7169, %v7209
        %v7211 = vpop.f32.mrb[0].mxu0
        %v7212 = vadd.f32 %v7171, %v7211
        %v7213 = vpop.f32.mrb[0].mxu0
        %v7214 = vpop.f32.mrb[0].mxu0
        %7215 = vdwg.mxu0
        %7216 = vmatprep.subr.bf16.mxu0 %v3466
        %7217 = vmatpush1.bf16.msra.mxu0 %v3465
        %7218 = vmatprep.subr.bf16.mxu0 %v3474
        %7219 = vmatpush1.bf16.msra.mxu0 %v3473
        %7220 = vmatprep.subr.bf16.mxu0 %v3482
        %7221 = vmatpush1.bf16.msra.mxu0 %v3481
        %7222 = vmatprep.subr.bf16.mxu0 %v3490
        %7223 = vmatpush1.bf16.msra.mxu0 %v3489
        %7224 = vmatprep.subr.bf16.mxu0 %v3498
        %7225 = vmatpush1.bf16.msra.mxu0 %v3497
        %7226 = vmatprep.subr.bf16.mxu0 %v3506
        %7227 = vmatpush1.bf16.msra.mxu0 %v3505
        %7228 = vmatprep.subr.bf16.mxu0 %v3514
        %7229 = vmatpush1.bf16.msra.mxu0 %v3513
        %7230 = vmatprep.subr.bf16.mxu0 %v3522
        %7231 = vmatpush1.bf16.msra.mxu0 %v3521
        %7232 = vmatprep.subr.bf16.mxu0 %v3530
        %7233 = vmatpush1.bf16.msra.mxu0 %v3529
        %7234 = vmatprep.subr.bf16.mxu0 %v3538
        %7235 = vmatpush1.bf16.msra.mxu0 %v3537
        %7236 = vmatprep.subr.bf16.mxu0 %v3546
        %7237 = vmatpush1.bf16.msra.mxu0 %v3545
        %7238 = vmatprep.subr.bf16.mxu0 %v3554
        %7239 = vmatpush1.bf16.msra.mxu0 %v3553
        %7240 = vmatprep.subr.bf16.mxu0 %v3562
        %7241 = vmatpush1.bf16.msra.mxu0 %v3561
        %7242 = vmatprep.subr.bf16.mxu0 %v3570
        %7243 = vmatpush1.bf16.msra.mxu0 %v3569
        %7244 = vmatprep.subr.bf16.mxu0 %v3578
        %7245 = vmatpush1.bf16.msra.mxu0 %v3577
        %7246 = vmatprep.subr.bf16.mxu0 %v3586
        %7247 = vmatpush1.bf16.msra.mxu0 %v3585
        %7248 = vmatprep.mubr.bf16.mxu0 %v4178
        %7249 = vmatmul.mubr.bf16.gmra.mrb[0].mxu0 %v4176
        %v7250 = vpop.f32.mrb[0].mxu0
        %v7251 = vadd.f32 %v7210, %v7250
        %v7252 = vpop.f32.mrb[0].mxu0
        %v7253 = vadd.f32 %v7212, %v7252
        %v7254 = vpop.f32.mrb[0].mxu0
        %v7255 = vpop.f32.mrb[0].mxu0
        %7256 = vdwg.mxu0
        %7257 = vmatprep.subr.bf16.mxu0 %v3594
        %7258 = vmatpush1.bf16.msra.mxu0 %v3593
        %7259 = vmatprep.subr.bf16.mxu0 %v3602
        %7260 = vmatpush1.bf16.msra.mxu0 %v3601
        %7261 = vmatprep.subr.bf16.mxu0 %v3610
        %7262 = vmatpush1.bf16.msra.mxu0 %v3609
        %7263 = vmatprep.subr.bf16.mxu0 %v3618
        %7264 = vmatpush1.bf16.msra.mxu0 %v3617
        %7265 = vmatprep.subr.bf16.mxu0 %v3626
        %7266 = vmatpush1.bf16.msra.mxu0 %v3625
        %7267 = vmatprep.subr.bf16.mxu0 %v3634
        %7268 = vmatpush1.bf16.msra.mxu0 %v3633
        %7269 = vmatprep.subr.bf16.mxu0 %v3642
        %7270 = vmatpush1.bf16.msra.mxu0 %v3641
        %7271 = vmatprep.subr.bf16.mxu0 %v3650
        %7272 = vmatpush1.bf16.msra.mxu0 %v3649
        %7273 = vmatprep.subr.bf16.mxu0 %v3658
        %7274 = vmatpush1.bf16.msra.mxu0 %v3657
        %7275 = vmatprep.subr.bf16.mxu0 %v3666
        %7276 = vmatpush1.bf16.msra.mxu0 %v3665
        %7277 = vmatprep.subr.bf16.mxu0 %v3674
        %7278 = vmatpush1.bf16.msra.mxu0 %v3673
        %7279 = vmatprep.subr.bf16.mxu0 %v3682
        %7280 = vmatpush1.bf16.msra.mxu0 %v3681
        %7281 = vmatprep.subr.bf16.mxu0 %v3690
        %7282 = vmatpush1.bf16.msra.mxu0 %v3689
        %7283 = vmatprep.subr.bf16.mxu0 %v3698
        %7284 = vmatpush1.bf16.msra.mxu0 %v3697
        %7285 = vmatprep.subr.bf16.mxu0 %v3706
        %7286 = vmatpush1.bf16.msra.mxu0 %v3705
        %7287 = vmatprep.subr.bf16.mxu0 %v3714
        %7288 = vmatpush1.bf16.msra.mxu0 %v3713
        %7289 = vmatprep.mubr.bf16.mxu0 %v4216
        %7290 = vmatmul.mubr.bf16.gmra.mrb[0].mxu0 %v4202
        %v7291 = vpop.f32.mrb[0].mxu0
        %v7292 = vadd.f32 %v7251, %v7291
        %v7293 = vpop.f32.mrb[0].mxu0
        %v7294 = vadd.f32 %v7253, %v7293
        %v7295 = vpop.f32.mrb[0].mxu0
        %v7296 = vpop.f32.mrb[0].mxu0
        %7297 = vdwg.mxu0
        %7298 = vmatprep.subr.bf16.mxu0 %v3722
        %7299 = vmatpush1.bf16.msra.mxu0 %v3721
        %7300 = vmatprep.subr.bf16.mxu0 %v3730
        %7301 = vmatpush1.bf16.msra.mxu0 %v3729
        %7302 = vmatprep.subr.bf16.mxu0 %v3738
        %7303 = vmatpush1.bf16.msra.mxu0 %v3737
        %7304 = vmatprep.subr.bf16.mxu0 %v3746
        %7305 = vmatpush1.bf16.msra.mxu0 %v3745
        %7306 = vmatprep.subr.bf16.mxu0 %v3754
        %7307 = vmatpush1.bf16.msra.mxu0 %v3753
        %7308 = vmatprep.subr.bf16.mxu0 %v3762
        %7309 = vmatpush1.bf16.msra.mxu0 %v3761
        %7310 = vmatprep.subr.bf16.mxu0 %v3770
        %7311 = vmatpush1.bf16.msra.mxu0 %v3769
        %7312 = vmatprep.subr.bf16.mxu0 %v3778
        %7313 = vmatpush1.bf16.msra.mxu0 %v3777
        %7314 = vmatprep.subr.bf16.mxu0 %v3786
        %7315 = vmatpush1.bf16.msra.mxu0 %v3785
        %7316 = vmatprep.subr.bf16.mxu0 %v3794
        %7317 = vmatpush1.bf16.msra.mxu0 %v3793
        %7318 = vmatprep.subr.bf16.mxu0 %v3802
        %7319 = vmatpush1.bf16.msra.mxu0 %v3801
        %7320 = vmatprep.subr.bf16.mxu0 %v3810
        %7321 = vmatpush1.bf16.msra.mxu0 %v3809
        %7322 = vmatprep.subr.bf16.mxu0 %v3818
        %7323 = vmatpush1.bf16.msra.mxu0 %v3817
        %7324 = vmatprep.subr.bf16.mxu0 %v3826
        %7325 = vmatpush1.bf16.msra.mxu0 %v3825
        %7326 = vmatprep.subr.bf16.mxu0 %v3834
        %7327 = vmatpush1.bf16.msra.mxu0 %v3833
        %7328 = vmatprep.subr.bf16.mxu0 %v3842
        %7329 = vmatpush1.bf16.msra.mxu0 %v3841
        %7330 = vmatprep.mubr.bf16.mxu0 %v4225
        %7331 = vmatmul.mubr.bf16.gmra.mrb[0].mxu0 %v4224
        %v7332 = vpop.f32.mrb[0].mxu0
        %v7333 = vadd.f32 %v7292, %v7332
        %v7334 = vpop.f32.mrb[0].mxu0
        %v7335 = vadd.f32 %v7294, %v7334
        %v7336 = vpop.f32.mrb[0].mxu0
        %v7337 = vpop.f32.mrb[0].mxu0
        %7338 = vdwg.mxu0
        %7339 = vmatprep.subr.bf16.mxu0 %v3850
        %7340 = vmatpush1.bf16.msra.mxu0 %v3849
        %7341 = vmatprep.subr.bf16.mxu0 %v3858
        %7342 = vmatpush1.bf16.msra.mxu0 %v3857
        %7343 = vmatprep.subr.bf16.mxu0 %v3866
        %7344 = vmatpush1.bf16.msra.mxu0 %v3865
        %7345 = vmatprep.subr.bf16.mxu0 %v3874
        %7346 = vmatpush1.bf16.msra.mxu0 %v3873
        %7347 = vmatprep.subr.bf16.mxu0 %v3882
        %7348 = vmatpush1.bf16.msra.mxu0 %v3881
        %7349 = vmatprep.subr.bf16.mxu0 %v3890
        %7350 = vmatpush1.bf16.msra.mxu0 %v3889
        %7351 = vmatprep.subr.bf16.mxu0 %v3898
        %7352 = vmatpush1.bf16.msra.mxu0 %v3897
        %7353 = vmatprep.subr.bf16.mxu0 %v3906
        %7354 = vmatpush1.bf16.msra.mxu0 %v3905
        %7355 = vmatprep.subr.bf16.mxu0 %v3914
        %7356 = vmatpush1.bf16.msra.mxu0 %v3913
        %7357 = vmatprep.subr.bf16.mxu0 %v3922
        %7358 = vmatpush1.bf16.msra.mxu0 %v3921
        %7359 = vmatprep.subr.bf16.mxu0 %v3930
        %7360 = vmatpush1.bf16.msra.mxu0 %v3929
        %7361 = vmatprep.subr.bf16.mxu0 %v3938
        %7362 = vmatpush1.bf16.msra.mxu0 %v3937
        %7363 = vmatprep.subr.bf16.mxu0 %v3946
        %7364 = vmatpush1.bf16.msra.mxu0 %v3945
        %7365 = vmatprep.subr.bf16.mxu0 %v3954
        %7366 = vmatpush1.bf16.msra.mxu0 %v3953
        %7367 = vmatprep.subr.bf16.mxu0 %v3962
        %7368 = vmatpush1.bf16.msra.mxu0 %v3961
        %7369 = vmatprep.subr.bf16.mxu0 %v3970
        %7370 = vmatpush1.bf16.msra.mxu0 %v3969
        %7371 = vmatprep.mubr.bf16.mxu0 %v4223
        %7372 = vmatmul.mubr.bf16.gmra.mrb[0].mxu0 %v4209
        %v7373 = vpop.f32.mrb[0].mxu0
        %v7374 = vadd.f32 %v7333, %v7373
        %v7375 = vpop.f32.mrb[0].mxu0
        %v7376 = vadd.f32 %v7335, %v7375
        %v7377 = vpop.f32.mrb[0].mxu0
        %v7378 = vpop.f32.mrb[0].mxu0
        %7379 = vdwg.mxu0
        %v7388 = vcombine.low %v5037, %v5039
        %v7389 = vcombine.low %v5816, %v5818
        %v7391 = vunpack.c.l.s4 1983009808
        %v7392 = vunpack.c.0.s8 %v7391
        %v7393 = vlaneseq
        %v7394 = vshrl.u32 %v7393, 7
        %v7395 = vsub.s32 %v7392, %v7394
        %v7396 = vrot.slane %v7388, %v7395
        %v7398 = vunpack.c.l.s4 1983009808
        %v7399 = vunpack.c.0.s8 %v7398
        %v7400 = vlaneseq
        %v7401 = vshrl.u32 %v7400, 7
        %v7402 = vsub.s32 %v7399, %v7401
        %v7403 = vrot.slane %v7389, %v7402
        %v7404 = vcombine.low %v7396, %v7403
        %v7405 = vcombine.low %v6595, %v6597
        %v7406 = vcombine.low %v7374, %v7376
        %v7408 = vunpack.c.l.s4 1983009808
        %v7409 = vunpack.c.0.s8 %v7408
        %v7410 = vlaneseq
        %v7411 = vshrl.u32 %v7410, 7
        %v7412 = vsub.s32 %v7409, %v7411
        %v7413 = vrot.slane %v7405, %v7412
        %v7415 = vunpack.c.l.s4 1983009808
        %v7416 = vunpack.c.0.s8 %v7415
        %v7417 = vlaneseq
        %v7418 = vshrl.u32 %v7417, 7
        %v7419 = vsub.s32 %v7416, %v7418
        %v7420 = vrot.slane %v7406, %v7419
        %v7421 = vcombine.low %v7413, %v7420
        %v7424 = vadd.f32 %v3971, %v7404
        %v7425 = vadd.f32 %v3972, %v7421
        %7426 = vst [vmem:[#allocation2] sm:$0xff] %v7424
        %7427 = vst [vmem:[#allocation2 + $0x8] sm:$0xff] %v7425
        %p7428 = scmp.eq.s32.totalorder %s20, 1
        // Predicated region
        $region57: #{wavimg_forward.1} parent=51 // pred_check
          %p7429 = pneg %p7428
        $region58: #{wavimg_forward.1} parent=51 // pred_check_branch
          %7431 = sbr.rel (%p7429) target = $region60
        $region59: #{wavimg_forward.1} parent=51 // pred_region
          %v7432 = vld [vmem:[#allocation2] sm:$0xff]
          %v7433 = vld [vmem:[#allocation2 + $0x8] sm:$0xff]
          %v7434 = vld [vmem:[%s2] sm:$0xff]
          %v7436 = vlaneseq
          %v7437 = vshrl.u32 %v7436, 7
          %v7438 = vsub.s32 0, %v7437
          %v7439 = vrot.slane %v7434, %v7438
          %v7440 = vlaneseq
          %v7441 = vshrl.u32 %v7440, 7
          %v7442 = vsub.s32 1, %v7441
          %v7443 = vrot.slane %v7434, %v7442
          %v7444 = vlaneseq
          %v7445 = vshrl.u32 %v7444, 7
          %v7446 = vsub.s32 2, %v7445
          %v7447 = vrot.slane %v7434, %v7446
          %v7448 = vlaneseq
          %v7449 = vshrl.u32 %v7448, 7
          %v7450 = vsub.s32 3, %v7449
          %v7451 = vrot.slane %v7434, %v7450
          %v7452 = vlaneseq
          %v7453 = vshrl.u32 %v7452, 7
          %v7454 = vsub.s32 4, %v7453
          %v7455 = vrot.slane %v7434, %v7454
          %v7456 = vlaneseq
          %v7457 = vshrl.u32 %v7456, 7
          %v7458 = vsub.s32 5, %v7457
          %v7459 = vrot.slane %v7434, %v7458
          %v7460 = vlaneseq
          %v7461 = vshrl.u32 %v7460, 7
          %v7462 = vsub.s32 6, %v7461
          %v7463 = vrot.slane %v7434, %v7462
          %v7464 = vlaneseq
          %v7465 = vshrl.u32 %v7464, 7
          %v7466 = vsub.s32 7, %v7465
          %v7467 = vrot.slane %v7434, %v7466
          %v7468 = vcombine.low %v7439, %v7443
          %v7469 = vcombine.low %v7447, %v7451
          %v7471 = vunpack.c.l.s4 1983009808
          %v7472 = vunpack.c.0.s8 %v7471
          %v7473 = vlaneseq
          %v7474 = vshrl.u32 %v7473, 7
          %v7475 = vsub.s32 %v7472, %v7474
          %v7476 = vrot.slane %v7468, %v7475
          %v7478 = vunpack.c.l.s4 1983009808
          %v7479 = vunpack.c.0.s8 %v7478
          %v7480 = vlaneseq
          %v7481 = vshrl.u32 %v7480, 7
          %v7482 = vsub.s32 %v7479, %v7481
          %v7483 = vrot.slane %v7469, %v7482
          %v7484 = vcombine.low %v7476, %v7483
          %v7485 = vcombine.low %v7455, %v7459
          %v7486 = vcombine.low %v7463, %v7467
          %v7488 = vunpack.c.l.s4 1983009808
          %v7489 = vunpack.c.0.s8 %v7488
          %v7490 = vlaneseq
          %v7491 = vshrl.u32 %v7490, 7
          %v7492 = vsub.s32 %v7489, %v7491
          %v7493 = vrot.slane %v7485, %v7492
          %v7495 = vunpack.c.l.s4 1983009808
          %v7496 = vunpack.c.0.s8 %v7495
          %v7497 = vlaneseq
          %v7498 = vshrl.u32 %v7497, 7
          %v7499 = vsub.s32 %v7496, %v7498
          %v7500 = vrot.slane %v7486, %v7499
          %v7501 = vcombine.low %v7493, %v7500
          %v7504 = vmul.f32 %v7432, %v7484
          %v7505 = vmul.f32 %v7433, %v7501
          %v7506 = vld [vmem:[%s3] sm:$0xff]
          %v7508 = vlaneseq
          %v7509 = vshrl.u32 %v7508, 7
          %v7510 = vsub.s32 0, %v7509
          %v7511 = vrot.slane %v7506, %v7510
          %v7512 = vlaneseq
          %v7513 = vshrl.u32 %v7512, 7
          %v7514 = vsub.s32 1, %v7513
          %v7515 = vrot.slane %v7506, %v7514
          %v7516 = vlaneseq
          %v7517 = vshrl.u32 %v7516, 7
          %v7518 = vsub.s32 2, %v7517
          %v7519 = vrot.slane %v7506, %v7518
          %v7520 = vlaneseq
          %v7521 = vshrl.u32 %v7520, 7
          %v7522 = vsub.s32 3, %v7521
          %v7523 = vrot.slane %v7506, %v7522
          %v7524 = vlaneseq
          %v7525 = vshrl.u32 %v7524, 7
          %v7526 = vsub.s32 4, %v7525
          %v7527 = vrot.slane %v7506, %v7526
          %v7528 = vlaneseq
          %v7529 = vshrl.u32 %v7528, 7
          %v7530 = vsub.s32 5, %v7529
          %v7531 = vrot.slane %v7506, %v7530
          %v7532 = vlaneseq
          %v7533 = vshrl.u32 %v7532, 7
          %v7534 = vsub.s32 6, %v7533
          %v7535 = vrot.slane %v7506, %v7534
          %v7536 = vlaneseq
          %v7537 = vshrl.u32 %v7536, 7
          %v7538 = vsub.s32 7, %v7537
          %v7539 = vrot.slane %v7506, %v7538
          %v7540 = vcombine.low %v7511, %v7515
          %v7541 = vcombine.low %v7519, %v7523
          %v7543 = vunpack.c.l.s4 1983009808
          %v7544 = vunpack.c.0.s8 %v7543
          %v7545 = vlaneseq
          %v7546 = vshrl.u32 %v7545, 7
          %v7547 = vsub.s32 %v7544, %v7546
          %v7548 = vrot.slane %v7540, %v7547
          %v7550 = vunpack.c.l.s4 1983009808
          %v7551 = vunpack.c.0.s8 %v7550
          %v7552 = vlaneseq
          %v7553 = vshrl.u32 %v7552, 7
          %v7554 = vsub.s32 %v7551, %v7553
          %v7555 = vrot.slane %v7541, %v7554
          %v7556 = vcombine.low %v7548, %v7555
          %v7557 = vcombine.low %v7527, %v7531
          %v7558 = vcombine.low %v7535, %v7539
          %v7560 = vunpack.c.l.s4 1983009808
          %v7561 = vunpack.c.0.s8 %v7560
          %v7562 = vlaneseq
          %v7563 = vshrl.u32 %v7562, 7
          %v7564 = vsub.s32 %v7561, %v7563
          %v7565 = vrot.slane %v7557, %v7564
          %v7567 = vunpack.c.l.s4 1983009808
          %v7568 = vunpack.c.0.s8 %v7567
          %v7569 = vlaneseq
          %v7570 = vshrl.u32 %v7569, 7
          %v7571 = vsub.s32 %v7568, %v7570
          %v7572 = vrot.slane %v7558, %v7571
          %v7573 = vcombine.low %v7565, %v7572
          %v7576 = vadd.f32 %v7504, %v7556
          %v7577 = vadd.f32 %v7505, %v7573
          %v7578 = vmax.f32 %v7576, 0.0
          %v7579 = vmax.f32 %v7577, 0.0
          %v7582 = vcombine.high %v7578, %v7578
          %v7584 = vunpack.c.l.s4 1983009808
          %v7585 = vunpack.c.0.s8 %v7584
          %v7586 = vlaneseq
          %v7587 = vshrl.u32 %v7586, 7
          %v7588 = vsub.s32 %v7585, %v7587
          %v7589 = vrot.slane %v7578, %v7588
          %v7591 = vunpack.c.l.s4 1983009808
          %v7592 = vunpack.c.0.s8 %v7591
          %v7593 = vlaneseq
          %v7594 = vshrl.u32 %v7593, 7
          %v7595 = vsub.s32 %v7592, %v7594
          %v7596 = vrot.slane %v7582, %v7595
          %v7597 = vcombine.high %v7589, %v7589
          %v7598 = vcombine.high %v7596, %v7596
          %v7599 = vcombine.high %v7579, %v7579
          %v7601 = vunpack.c.l.s4 1983009808
          %v7602 = vunpack.c.0.s8 %v7601
          %v7603 = vlaneseq
          %v7604 = vshrl.u32 %v7603, 7
          %v7605 = vsub.s32 %v7602, %v7604
          %v7606 = vrot.slane %v7579, %v7605
          %v7608 = vunpack.c.l.s4 1983009808
          %v7609 = vunpack.c.0.s8 %v7608
          %v7610 = vlaneseq
          %v7611 = vshrl.u32 %v7610, 7
          %v7612 = vsub.s32 %v7609, %v7611
          %v7613 = vrot.slane %v7599, %v7612
          %v7614 = vcombine.high %v7606, %v7606
          %v7615 = vcombine.high %v7613, %v7613
          %v7624 = vpack.c.bf16 %v7589, %v7589
          %v7625 = vpack.c.bf16 %v7597, %v7597
          %v7626 = vpack.c.bf16 %v7596, %v7596
          %v7627 = vpack.c.bf16 %v7598, %v7598
          %v7628 = vpack.c.bf16 %v7606, %v7606
          %v7629 = vpack.c.bf16 %v7614, %v7614
          %v7630 = vpack.c.bf16 %v7613, %v7613
          %v7631 = vpack.c.bf16 %v7615, %v7615
          %v7632 = vld [vmem:[%s4] sm:$0xf]
          %v7633 = vld [vmem:[%s4 + $0x4] sm:$0xf]
          %v7634 = vld [vmem:[%s4 + $0x8] sm:$0xf]
          %v7635 = vld [vmem:[%s4 + $0xc] sm:$0xf]
          %v7636 = vld [vmem:[%s4 + $0x10] sm:$0xf]
          %v7637 = vld [vmem:[%s4 + $0x14] sm:$0xf]
          %v7638 = vld [vmem:[%s4 + $0x18] sm:$0xf]
          %v7639 = vld [vmem:[%s4 + $0x1c] sm:$0xf]
          %v7640 = vld [vmem:[%s4 + $0x20] sm:$0xf]
          %v7641 = vld [vmem:[%s4 + $0x24] sm:$0xf]
          %v7642 = vld [vmem:[%s4 + $0x28] sm:$0xf]
          %v7643 = vld [vmem:[%s4 + $0x2c] sm:$0xf]
          %v7644 = vld [vmem:[%s4 + $0x30] sm:$0xf]
          %v7645 = vld [vmem:[%s4 + $0x34] sm:$0xf]
          %v7646 = vld [vmem:[%s4 + $0x38] sm:$0xf]
          %v7647 = vld [vmem:[%s4 + $0x3c] sm:$0xf]
          %v7648 = vld [vmem:[%s4 + $0x40] sm:$0xf]
          %v7649 = vld [vmem:[%s4 + $0x44] sm:$0xf]
          %v7650 = vld [vmem:[%s4 + $0x48] sm:$0xf]
          %v7651 = vld [vmem:[%s4 + $0x4c] sm:$0xf]
          %v7652 = vld [vmem:[%s4 + $0x50] sm:$0xf]
          %v7653 = vld [vmem:[%s4 + $0x54] sm:$0xf]
          %v7654 = vld [vmem:[%s4 + $0x58] sm:$0xf]
          %v7655 = vld [vmem:[%s4 + $0x5c] sm:$0xf]
          %v7656 = vld [vmem:[%s4 + $0x60] sm:$0xf]
          %v7657 = vld [vmem:[%s4 + $0x64] sm:$0xf]
          %v7658 = vld [vmem:[%s4 + $0x68] sm:$0xf]
          %v7659 = vld [vmem:[%s4 + $0x6c] sm:$0xf]
          %v7660 = vld [vmem:[%s4 + $0x70] sm:$0xf]
          %v7661 = vld [vmem:[%s4 + $0x74] sm:$0xf]
          %v7662 = vld [vmem:[%s4 + $0x78] sm:$0xf]
          %v7663 = vld [vmem:[%s4 + $0x7c] sm:$0xf]
          %v7664 = vld [vmem:[%s4 + $0x80] sm:$0xf]
          %v7665 = vld [vmem:[%s4 + $0x84] sm:$0xf]
          %v7666 = vld [vmem:[%s4 + $0x88] sm:$0xf]
          %v7667 = vld [vmem:[%s4 + $0x8c] sm:$0xf]
          %v7668 = vld [vmem:[%s4 + $0x90] sm:$0xf]
          %v7669 = vld [vmem:[%s4 + $0x94] sm:$0xf]
          %v7670 = vld [vmem:[%s4 + $0x98] sm:$0xf]
          %v7671 = vld [vmem:[%s4 + $0x9c] sm:$0xf]
          %v7672 = vld [vmem:[%s4 + $0xa0] sm:$0xf]
          %v7673 = vld [vmem:[%s4 + $0xa4] sm:$0xf]
          %v7674 = vld [vmem:[%s4 + $0xa8] sm:$0xf]
          %v7675 = vld [vmem:[%s4 + $0xac] sm:$0xf]
          %v7676 = vld [vmem:[%s4 + $0xb0] sm:$0xf]
          %v7677 = vld [vmem:[%s4 + $0xb4] sm:$0xf]
          %v7678 = vld [vmem:[%s4 + $0xb8] sm:$0xf]
          %v7679 = vld [vmem:[%s4 + $0xbc] sm:$0xf]
          %v7680 = vld [vmem:[%s4 + $0xc0] sm:$0xf]
          %v7681 = vld [vmem:[%s4 + $0xc4] sm:$0xf]
          %v7682 = vld [vmem:[%s4 + $0xc8] sm:$0xf]
          %v7683 = vld [vmem:[%s4 + $0xcc] sm:$0xf]
          %v7684 = vld [vmem:[%s4 + $0xd0] sm:$0xf]
          %v7685 = vld [vmem:[%s4 + $0xd4] sm:$0xf]
          %v7686 = vld [vmem:[%s4 + $0xd8] sm:$0xf]
          %v7687 = vld [vmem:[%s4 + $0xdc] sm:$0xf]
          %v7688 = vld [vmem:[%s4 + $0xe0] sm:$0xf]
          %v7689 = vld [vmem:[%s4 + $0xe4] sm:$0xf]
          %v7690 = vld [vmem:[%s4 + $0xe8] sm:$0xf]
          %v7691 = vld [vmem:[%s4 + $0xec] sm:$0xf]
          %v7692 = vld [vmem:[%s4 + $0xf0] sm:$0xf]
          %v7693 = vld [vmem:[%s4 + $0xf4] sm:$0xf]
          %v7694 = vld [vmem:[%s4 + $0xf8] sm:$0xf]
          %v7695 = vld [vmem:[%s4 + $0xfc] sm:$0xf]
          %v7696 = vld [vmem:[%s4 + $0x100] sm:$0xf]
          %v7697 = vld [vmem:[%s4 + $0x104] sm:$0xf]
          %v7698 = vld [vmem:[%s4 + $0x108] sm:$0xf]
          %v7699 = vld [vmem:[%s4 + $0x10c] sm:$0xf]
          %v7700 = vld [vmem:[%s4 + $0x110] sm:$0xf]
          %v7701 = vld [vmem:[%s4 + $0x114] sm:$0xf]
          %v7702 = vld [vmem:[%s4 + $0x118] sm:$0xf]
          %v7703 = vld [vmem:[%s4 + $0x11c] sm:$0xf]
          %v7704 = vld [vmem:[%s4 + $0x120] sm:$0xf]
          %v7705 = vld [vmem:[%s4 + $0x124] sm:$0xf]
          %v7706 = vld [vmem:[%s4 + $0x128] sm:$0xf]
          %v7707 = vld [vmem:[%s4 + $0x12c] sm:$0xf]
          %v7708 = vld [vmem:[%s4 + $0x130] sm:$0xf]
          %v7709 = vld [vmem:[%s4 + $0x134] sm:$0xf]
          %v7710 = vld [vmem:[%s4 + $0x138] sm:$0xf]
          %v7711 = vld [vmem:[%s4 + $0x13c] sm:$0xf]
          %v7712 = vld [vmem:[%s4 + $0x140] sm:$0xf]
          %v7713 = vld [vmem:[%s4 + $0x144] sm:$0xf]
          %v7714 = vld [vmem:[%s4 + $0x148] sm:$0xf]
          %v7715 = vld [vmem:[%s4 + $0x14c] sm:$0xf]
          %v7716 = vld [vmem:[%s4 + $0x150] sm:$0xf]
          %v7717 = vld [vmem:[%s4 + $0x154] sm:$0xf]
          %v7718 = vld [vmem:[%s4 + $0x158] sm:$0xf]
          %v7719 = vld [vmem:[%s4 + $0x15c] sm:$0xf]
          %v7720 = vld [vmem:[%s4 + $0x160] sm:$0xf]
          %v7721 = vld [vmem:[%s4 + $0x164] sm:$0xf]
          %v7722 = vld [vmem:[%s4 + $0x168] sm:$0xf]
          %v7723 = vld [vmem:[%s4 + $0x16c] sm:$0xf]
          %v7724 = vld [vmem:[%s4 + $0x170] sm:$0xf]
          %v7725 = vld [vmem:[%s4 + $0x174] sm:$0xf]
          %v7726 = vld [vmem:[%s4 + $0x178] sm:$0xf]
          %v7727 = vld [vmem:[%s4 + $0x17c] sm:$0xf]
          %v7728 = vld [vmem:[%s4 + $0x180] sm:$0xf]
          %v7729 = vld [vmem:[%s4 + $0x184] sm:$0xf]
          %v7730 = vld [vmem:[%s4 + $0x188] sm:$0xf]
          %v7731 = vld [vmem:[%s4 + $0x18c] sm:$0xf]
          %v7732 = vld [vmem:[%s4 + $0x190] sm:$0xf]
          %v7733 = vld [vmem:[%s4 + $0x194] sm:$0xf]
          %v7734 = vld [vmem:[%s4 + $0x198] sm:$0xf]
          %v7735 = vld [vmem:[%s4 + $0x19c] sm:$0xf]
          %v7736 = vld [vmem:[%s4 + $0x1a0] sm:$0xf]
          %v7737 = vld [vmem:[%s4 + $0x1a4] sm:$0xf]
          %v7738 = vld [vmem:[%s4 + $0x1a8] sm:$0xf]
          %v7739 = vld [vmem:[%s4 + $0x1ac] sm:$0xf]
          %v7740 = vld [vmem:[%s4 + $0x1b0] sm:$0xf]
          %v7741 = vld [vmem:[%s4 + $0x1b4] sm:$0xf]
          %v7742 = vld [vmem:[%s4 + $0x1b8] sm:$0xf]
          %v7743 = vld [vmem:[%s4 + $0x1bc] sm:$0xf]
          %v7744 = vld [vmem:[%s4 + $0x1c0] sm:$0xf]
          %v7745 = vld [vmem:[%s4 + $0x1c4] sm:$0xf]
          %v7746 = vld [vmem:[%s4 + $0x1c8] sm:$0xf]
          %v7747 = vld [vmem:[%s4 + $0x1cc] sm:$0xf]
          %v7748 = vld [vmem:[%s4 + $0x1d0] sm:$0xf]
          %v7749 = vld [vmem:[%s4 + $0x1d4] sm:$0xf]
          %v7750 = vld [vmem:[%s4 + $0x1d8] sm:$0xf]
          %v7751 = vld [vmem:[%s4 + $0x1dc] sm:$0xf]
          %v7752 = vld [vmem:[%s4 + $0x1e0] sm:$0xf]
          %v7753 = vld [vmem:[%s4 + $0x1e4] sm:$0xf]
          %v7754 = vld [vmem:[%s4 + $0x1e8] sm:$0xf]
          %v7755 = vld [vmem:[%s4 + $0x1ec] sm:$0xf]
          %v7756 = vld [vmem:[%s4 + $0x1f0] sm:$0xf]
          %v7757 = vld [vmem:[%s4 + $0x1f4] sm:$0xf]
          %v7758 = vld [vmem:[%s4 + $0x1f8] sm:$0xf]
          %v7759 = vld [vmem:[%s4 + $0x1fc] sm:$0xf]
          %v7760 = vld [vmem:[%s5] sm:$0x1]
          %v7762 = vlaneseq
          %v7763 = vshrl.u32 %v7762, 7
          %v7764 = vsub.s32 0, %v7763
          %v7765 = vrot.slane %v7760, %v7764
          %v7895 = vunpack.c.l.b16 %v7632
          %v7896 = vunpack.c.l.b16 %v7633
          %v7897 = vunpack.c.l.b16 %v7634
          %v7898 = vunpack.c.l.b16 %v7635
          %v7899 = vunpack.c.l.b16 %v7636
          %v7900 = vunpack.c.l.b16 %v7637
          %v7901 = vunpack.c.l.b16 %v7638
          %v7902 = vunpack.c.l.b16 %v7639
          %v7903 = vunpack.c.l.b16 %v7640
          %v7904 = vunpack.c.l.b16 %v7641
          %v7905 = vunpack.c.l.b16 %v7642
          %v7906 = vunpack.c.l.b16 %v7643
          %v7907 = vunpack.c.l.b16 %v7644
          %v7908 = vunpack.c.l.b16 %v7645
          %v7909 = vunpack.c.l.b16 %v7646
          %v7910 = vunpack.c.l.b16 %v7647
          %v7911 = vunpack.c.l.b16 %v7648
          %v7912 = vunpack.c.l.b16 %v7649
          %v7913 = vunpack.c.l.b16 %v7650
          %v7914 = vunpack.c.l.b16 %v7651
          %v7915 = vunpack.c.l.b16 %v7652
          %v7916 = vunpack.c.l.b16 %v7653
          %v7917 = vunpack.c.l.b16 %v7654
          %v7918 = vunpack.c.l.b16 %v7655
          %v7919 = vunpack.c.l.b16 %v7656
          %v7920 = vunpack.c.l.b16 %v7657
          %v7921 = vunpack.c.l.b16 %v7658
          %v7922 = vunpack.c.l.b16 %v7659
          %v7923 = vunpack.c.l.b16 %v7660
          %v7924 = vunpack.c.l.b16 %v7661
          %v7925 = vunpack.c.l.b16 %v7662
          %v7926 = vunpack.c.l.b16 %v7663
          %v7927 = vunpack.c.l.b16 %v7664
          %v7928 = vunpack.c.l.b16 %v7665
          %v7929 = vunpack.c.l.b16 %v7666
          %v7930 = vunpack.c.l.b16 %v7667
          %v7931 = vunpack.c.l.b16 %v7668
          %v7932 = vunpack.c.l.b16 %v7669
          %v7933 = vunpack.c.l.b16 %v7670
          %v7934 = vunpack.c.l.b16 %v7671
          %v7935 = vunpack.c.l.b16 %v7672
          %v7936 = vunpack.c.l.b16 %v7673
          %v7937 = vunpack.c.l.b16 %v7674
          %v7938 = vunpack.c.l.b16 %v7675
          %v7939 = vunpack.c.l.b16 %v7676
          %v7940 = vunpack.c.l.b16 %v7677
          %v7941 = vunpack.c.l.b16 %v7678
          %v7942 = vunpack.c.l.b16 %v7679
          %v7943 = vunpack.c.l.b16 %v7680
          %v7944 = vunpack.c.l.b16 %v7681
          %v7945 = vunpack.c.l.b16 %v7682
          %v7946 = vunpack.c.l.b16 %v7683
          %v7947 = vunpack.c.l.b16 %v7684
          %v7948 = vunpack.c.l.b16 %v7685
          %v7949 = vunpack.c.l.b16 %v7686
          %v7950 = vunpack.c.l.b16 %v7687
          %v7951 = vunpack.c.l.b16 %v7688
          %v7952 = vunpack.c.l.b16 %v7689
          %v7953 = vunpack.c.l.b16 %v7690
          %v7954 = vunpack.c.l.b16 %v7691
          %v7955 = vunpack.c.l.b16 %v7692
          %v7956 = vunpack.c.l.b16 %v7693
          %v7957 = vunpack.c.l.b16 %v7694
          %v7958 = vunpack.c.l.b16 %v7695
          %v7959 = vunpack.c.l.b16 %v7696
          %v7960 = vunpack.c.l.b16 %v7697
          %v7961 = vunpack.c.l.b16 %v7698
          %v7962 = vunpack.c.l.b16 %v7699
          %v7963 = vunpack.c.l.b16 %v7700
          %v7964 = vunpack.c.l.b16 %v7701
          %v7965 = vunpack.c.l.b16 %v7702
          %v7966 = vunpack.c.l.b16 %v7703
          %v7967 = vunpack.c.l.b16 %v7704
          %v7968 = vunpack.c.l.b16 %v7705
          %v7969 = vunpack.c.l.b16 %v7706
          %v7970 = vunpack.c.l.b16 %v7707
          %v7971 = vunpack.c.l.b16 %v7708
          %v7972 = vunpack.c.l.b16 %v7709
          %v7973 = vunpack.c.l.b16 %v7710
          %v7974 = vunpack.c.l.b16 %v7711
          %v7975 = vunpack.c.l.b16 %v7712
          %v7976 = vunpack.c.l.b16 %v7713
          %v7977 = vunpack.c.l.b16 %v7714
          %v7978 = vunpack.c.l.b16 %v7715
          %v7979 = vunpack.c.l.b16 %v7716
          %v7980 = vunpack.c.l.b16 %v7717
          %v7981 = vunpack.c.l.b16 %v7718
          %v7982 = vunpack.c.l.b16 %v7719
          %v7983 = vunpack.c.l.b16 %v7720
          %v7984 = vunpack.c.l.b16 %v7721
          %v7985 = vunpack.c.l.b16 %v7722
          %v7986 = vunpack.c.l.b16 %v7723
          %v7987 = vunpack.c.l.b16 %v7724
          %v7988 = vunpack.c.l.b16 %v7725
          %v7989 = vunpack.c.l.b16 %v7726
          %v7990 = vunpack.c.l.b16 %v7727
          %v7991 = vunpack.c.l.b16 %v7728
          %v7992 = vunpack.c.l.b16 %v7729
          %v7993 = vunpack.c.l.b16 %v7730
          %v7994 = vunpack.c.l.b16 %v7731
          %v7995 = vunpack.c.l.b16 %v7732
          %v7996 = vunpack.c.l.b16 %v7733
          %v7997 = vunpack.c.l.b16 %v7734
          %v7998 = vunpack.c.l.b16 %v7735
          %v7999 = vunpack.c.l.b16 %v7736
          %v8000 = vunpack.c.l.b16 %v7737
          %v8001 = vunpack.c.l.b16 %v7738
          %v8002 = vunpack.c.l.b16 %v7739
          %v8003 = vunpack.c.l.b16 %v7740
          %v8004 = vunpack.c.l.b16 %v7741
          %v8005 = vunpack.c.l.b16 %v7742
          %v8006 = vunpack.c.l.b16 %v7743
          %v8007 = vunpack.c.l.b16 %v7744
          %v8008 = vunpack.c.l.b16 %v7745
          %v8009 = vunpack.c.l.b16 %v7746
          %v8010 = vunpack.c.l.b16 %v7747
          %v8011 = vunpack.c.l.b16 %v7748
          %v8012 = vunpack.c.l.b16 %v7749
          %v8013 = vunpack.c.l.b16 %v7750
          %v8014 = vunpack.c.l.b16 %v7751
          %v8015 = vunpack.c.l.b16 %v7752
          %v8016 = vunpack.c.l.b16 %v7753
          %v8017 = vunpack.c.l.b16 %v7754
          %v8018 = vunpack.c.l.b16 %v7755
          %v8019 = vunpack.c.l.b16 %v7756
          %v8020 = vunpack.c.l.b16 %v7757
          %v8021 = vunpack.c.l.b16 %v7758
          %v8022 = vunpack.c.l.b16 %v7759
          %v8023 = vpack.c.b16 %v7896, %v7895
          %v8024 = vpack.c.b16 %v7898, %v7897
          %v8025 = vpack.c.b16 %v7900, %v7899
          %v8026 = vpack.c.b16 %v7902, %v7901
          %v8027 = vpack.c.b16 %v7904, %v7903
          %v8028 = vpack.c.b16 %v7906, %v7905
          %v8029 = vpack.c.b16 %v7908, %v7907
          %v8030 = vpack.c.b16 %v7910, %v7909
          %v8031 = vpack.c.b16 %v7912, %v7911
          %v8032 = vpack.c.b16 %v7914, %v7913
          %v8033 = vpack.c.b16 %v7916, %v7915
          %v8034 = vpack.c.b16 %v7918, %v7917
          %v8035 = vpack.c.b16 %v7920, %v7919
          %v8036 = vpack.c.b16 %v7922, %v7921
          %v8037 = vpack.c.b16 %v7924, %v7923
          %v8038 = vpack.c.b16 %v7926, %v7925
          %v8039 = vpack.c.b16 %v7928, %v7927
          %v8040 = vpack.c.b16 %v7930, %v7929
          %v8041 = vpack.c.b16 %v7932, %v7931
          %v8042 = vpack.c.b16 %v7934, %v7933
          %v8043 = vpack.c.b16 %v7936, %v7935
          %v8044 = vpack.c.b16 %v7938, %v7937
          %v8045 = vpack.c.b16 %v7940, %v7939
          %v8046 = vpack.c.b16 %v7942, %v7941
          %v8047 = vpack.c.b16 %v7944, %v7943
          %v8048 = vpack.c.b16 %v7946, %v7945
          %v8049 = vpack.c.b16 %v7948, %v7947
          %v8050 = vpack.c.b16 %v7950, %v7949
          %v8051 = vpack.c.b16 %v7952, %v7951
          %v8052 = vpack.c.b16 %v7954, %v7953
          %v8053 = vpack.c.b16 %v7956, %v7955
          %v8054 = vpack.c.b16 %v7958, %v7957
          %v8055 = vpack.c.b16 %v7960, %v7959
          %v8056 = vpack.c.b16 %v7962, %v7961
          %v8057 = vpack.c.b16 %v7964, %v7963
          %v8058 = vpack.c.b16 %v7966, %v7965
          %v8059 = vpack.c.b16 %v7968, %v7967
          %v8060 = vpack.c.b16 %v7970, %v7969
          %v8061 = vpack.c.b16 %v7972, %v7971
          %v8062 = vpack.c.b16 %v7974, %v7973
          %v8063 = vpack.c.b16 %v7976, %v7975
          %v8064 = vpack.c.b16 %v7978, %v7977
          %v8065 = vpack.c.b16 %v7980, %v7979
          %v8066 = vpack.c.b16 %v7982, %v7981
          %v8067 = vpack.c.b16 %v7984, %v7983
          %v8068 = vpack.c.b16 %v7986, %v7985
          %v8069 = vpack.c.b16 %v7988, %v7987
          %v8070 = vpack.c.b16 %v7990, %v7989
          %v8071 = vpack.c.b16 %v7992, %v7991
          %v8072 = vpack.c.b16 %v7994, %v7993
          %v8073 = vpack.c.b16 %v7996, %v7995
          %v8074 = vpack.c.b16 %v7998, %v7997
          %v8075 = vpack.c.b16 %v8000, %v7999
          %v8076 = vpack.c.b16 %v8002, %v8001
          %v8077 = vpack.c.b16 %v8004, %v8003
          %v8078 = vpack.c.b16 %v8006, %v8005
          %v8079 = vpack.c.b16 %v8008, %v8007
          %v8080 = vpack.c.b16 %v8010, %v8009
          %v8081 = vpack.c.b16 %v8012, %v8011
          %v8082 = vpack.c.b16 %v8014, %v8013
          %v8083 = vpack.c.b16 %v8016, %v8015
          %v8084 = vpack.c.b16 %v8018, %v8017
          %v8085 = vpack.c.b16 %v8020, %v8019
          %v8086 = vpack.c.b16 %v8022, %v8021
          %8151 = vmatprep.subr.bf16.mxu0 0
          %8152 = vmatpush1.bf16.msra.mxu0 %v8023
          %8153 = vmatprep.subr.bf16.mxu0 0
          %8154 = vmatpush1.bf16.msra.mxu0 %v8024
          %8155 = vmatprep.subr.bf16.mxu0 0
          %8156 = vmatpush1.bf16.msra.mxu0 %v8025
          %8157 = vmatprep.subr.bf16.mxu0 0
          %8158 = vmatpush1.bf16.msra.mxu0 %v8026
          %8159 = vmatprep.subr.bf16.mxu0 0
          %8160 = vmatpush1.bf16.msra.mxu0 %v8027
          %8161 = vmatprep.subr.bf16.mxu0 0
          %8162 = vmatpush1.bf16.msra.mxu0 %v8028
          %8163 = vmatprep.subr.bf16.mxu0 0
          %8164 = vmatpush1.bf16.msra.mxu0 %v8029
          %8165 = vmatprep.subr.bf16.mxu0 0
          %8166 = vmatpush1.bf16.msra.mxu0 %v8030
          %8167 = vmatprep.subr.bf16.mxu0 0
          %8168 = vmatpush1.bf16.msra.mxu0 %v8031
          %8169 = vmatprep.subr.bf16.mxu0 0
          %8170 = vmatpush1.bf16.msra.mxu0 %v8032
          %8171 = vmatprep.subr.bf16.mxu0 0
          %8172 = vmatpush1.bf16.msra.mxu0 %v8033
          %8173 = vmatprep.subr.bf16.mxu0 0
          %8174 = vmatpush1.bf16.msra.mxu0 %v8034
          %8175 = vmatprep.subr.bf16.mxu0 0
          %8176 = vmatpush1.bf16.msra.mxu0 %v8035
          %8177 = vmatprep.subr.bf16.mxu0 0
          %8178 = vmatpush1.bf16.msra.mxu0 %v8036
          %8179 = vmatprep.subr.bf16.mxu0 0
          %8180 = vmatpush1.bf16.msra.mxu0 %v8037
          %8181 = vmatprep.subr.bf16.mxu0 0
          %8182 = vmatpush1.bf16.msra.mxu0 %v8038
          %8183 = vmatprep.mubr.bf16.mxu0 %v7625
          %8184 = vmatmul.mubr.bf16.gmra.mrb[0].mxu0 %v7624
          %v8185 = vpop.f32.mrb[0].mxu0
          %v8186 = vadd.f32 %v7765, %v8185
          %v8187 = vpop.f32.mrb[0].mxu0
          %v8188 = vpop.f32.mrb[0].mxu0
          %v8189 = vpop.f32.mrb[0].mxu0
          %8190 = vdwg.mxu0
          %8191 = vmatprep.subr.bf16.mxu0 0
          %8192 = vmatpush1.bf16.msra.mxu0 %v8039
          %8193 = vmatprep.subr.bf16.mxu0 0
          %8194 = vmatpush1.bf16.msra.mxu0 %v8040
          %8195 = vmatprep.subr.bf16.mxu0 0
          %8196 = vmatpush1.bf16.msra.mxu0 %v8041
          %8197 = vmatprep.subr.bf16.mxu0 0
          %8198 = vmatpush1.bf16.msra.mxu0 %v8042
          %8199 = vmatprep.subr.bf16.mxu0 0
          %8200 = vmatpush1.bf16.msra.mxu0 %v8043
          %8201 = vmatprep.subr.bf16.mxu0 0
          %8202 = vmatpush1.bf16.msra.mxu0 %v8044
          %8203 = vmatprep.subr.bf16.mxu0 0
          %8204 = vmatpush1.bf16.msra.mxu0 %v8045
          %8205 = vmatprep.subr.bf16.mxu0 0
          %8206 = vmatpush1.bf16.msra.mxu0 %v8046
          %8207 = vmatprep.subr.bf16.mxu0 0
          %8208 = vmatpush1.bf16.msra.mxu0 %v8047
          %8209 = vmatprep.subr.bf16.mxu0 0
          %8210 = vmatpush1.bf16.msra.mxu0 %v8048
          %8211 = vmatprep.subr.bf16.mxu0 0
          %8212 = vmatpush1.bf16.msra.mxu0 %v8049
          %8213 = vmatprep.subr.bf16.mxu0 0
          %8214 = vmatpush1.bf16.msra.mxu0 %v8050
          %8215 = vmatprep.subr.bf16.mxu0 0
          %8216 = vmatpush1.bf16.msra.mxu0 %v8051
          %8217 = vmatprep.subr.bf16.mxu0 0
          %8218 = vmatpush1.bf16.msra.mxu0 %v8052
          %8219 = vmatprep.subr.bf16.mxu0 0
          %8220 = vmatpush1.bf16.msra.mxu0 %v8053
          %8221 = vmatprep.subr.bf16.mxu0 0
          %8222 = vmatpush1.bf16.msra.mxu0 %v8054
          %8223 = vmatprep.mubr.bf16.mxu0 %v7627
          %8224 = vmatmul.mubr.bf16.gmra.mrb[0].mxu0 %v7626
          %v8225 = vpop.f32.mrb[0].mxu0
          %v8226 = vadd.f32 %v8186, %v8225
          %v8227 = vpop.f32.mrb[0].mxu0
          %v8228 = vpop.f32.mrb[0].mxu0
          %v8229 = vpop.f32.mrb[0].mxu0
          %8230 = vdwg.mxu0
          %8231 = vmatprep.subr.bf16.mxu0 0
          %8232 = vmatpush1.bf16.msra.mxu0 %v8055
          %8233 = vmatprep.subr.bf16.mxu0 0
          %8234 = vmatpush1.bf16.msra.mxu0 %v8056
          %8235 = vmatprep.subr.bf16.mxu0 0
          %8236 = vmatpush1.bf16.msra.mxu0 %v8057
          %8237 = vmatprep.subr.bf16.mxu0 0
          %8238 = vmatpush1.bf16.msra.mxu0 %v8058
          %8239 = vmatprep.subr.bf16.mxu0 0
          %8240 = vmatpush1.bf16.msra.mxu0 %v8059
          %8241 = vmatprep.subr.bf16.mxu0 0
          %8242 = vmatpush1.bf16.msra.mxu0 %v8060
          %8243 = vmatprep.subr.bf16.mxu0 0
          %8244 = vmatpush1.bf16.msra.mxu0 %v8061
          %8245 = vmatprep.subr.bf16.mxu0 0
          %8246 = vmatpush1.bf16.msra.mxu0 %v8062
          %8247 = vmatprep.subr.bf16.mxu0 0
          %8248 = vmatpush1.bf16.msra.mxu0 %v8063
          %8249 = vmatprep.subr.bf16.mxu0 0
          %8250 = vmatpush1.bf16.msra.mxu0 %v8064
          %8251 = vmatprep.subr.bf16.mxu0 0
          %8252 = vmatpush1.bf16.msra.mxu0 %v8065
          %8253 = vmatprep.subr.bf16.mxu0 0
          %8254 = vmatpush1.bf16.msra.mxu0 %v8066
          %8255 = vmatprep.subr.bf16.mxu0 0
          %8256 = vmatpush1.bf16.msra.mxu0 %v8067
          %8257 = vmatprep.subr.bf16.mxu0 0
          %8258 = vmatpush1.bf16.msra.mxu0 %v8068
          %8259 = vmatprep.subr.bf16.mxu0 0
          %8260 = vmatpush1.bf16.msra.mxu0 %v8069
          %8261 = vmatprep.subr.bf16.mxu0 0
          %8262 = vmatpush1.bf16.msra.mxu0 %v8070
          %8263 = vmatprep.mubr.bf16.mxu0 %v7629
          %8264 = vmatmul.mubr.bf16.gmra.mrb[0].mxu0 %v7628
          %v8265 = vpop.f32.mrb[0].mxu0
          %v8266 = vadd.f32 %v8226, %v8265
          %v8267 = vpop.f32.mrb[0].mxu0
          %v8268 = vpop.f32.mrb[0].mxu0
          %v8269 = vpop.f32.mrb[0].mxu0
          %8270 = vdwg.mxu0
          %8271 = vmatprep.subr.bf16.mxu0 0
          %8272 = vmatpush1.bf16.msra.mxu0 %v8071
          %8273 = vmatprep.subr.bf16.mxu0 0
          %8274 = vmatpush1.bf16.msra.mxu0 %v8072
          %8275 = vmatprep.subr.bf16.mxu0 0
          %8276 = vmatpush1.bf16.msra.mxu0 %v8073
          %8277 = vmatprep.subr.bf16.mxu0 0
          %8278 = vmatpush1.bf16.msra.mxu0 %v8074
          %8279 = vmatprep.subr.bf16.mxu0 0
          %8280 = vmatpush1.bf16.msra.mxu0 %v8075
          %8281 = vmatprep.subr.bf16.mxu0 0
          %8282 = vmatpush1.bf16.msra.mxu0 %v8076
          %8283 = vmatprep.subr.bf16.mxu0 0
          %8284 = vmatpush1.bf16.msra.mxu0 %v8077
          %8285 = vmatprep.subr.bf16.mxu0 0
          %8286 = vmatpush1.bf16.msra.mxu0 %v8078
          %8287 = vmatprep.subr.bf16.mxu0 0
          %8288 = vmatpush1.bf16.msra.mxu0 %v8079
          %8289 = vmatprep.subr.bf16.mxu0 0
          %8290 = vmatpush1.bf16.msra.mxu0 %v8080
          %8291 = vmatprep.subr.bf16.mxu0 0
          %8292 = vmatpush1.bf16.msra.mxu0 %v8081
          %8293 = vmatprep.subr.bf16.mxu0 0
          %8294 = vmatpush1.bf16.msra.mxu0 %v8082
          %8295 = vmatprep.subr.bf16.mxu0 0
          %8296 = vmatpush1.bf16.msra.mxu0 %v8083
          %8297 = vmatprep.subr.bf16.mxu0 0
          %8298 = vmatpush1.bf16.msra.mxu0 %v8084
          %8299 = vmatprep.subr.bf16.mxu0 0
          %8300 = vmatpush1.bf16.msra.mxu0 %v8085
          %8301 = vmatprep.subr.bf16.mxu0 0
          %8302 = vmatpush1.bf16.msra.mxu0 %v8086
          %8303 = vmatprep.mubr.bf16.mxu0 %v7631
          %8304 = vmatmul.mubr.bf16.gmra.mrb[0].mxu0 %v7630
          %v8305 = vpop.f32.mrb[0].mxu0
          %v8306 = vadd.f32 %v8266, %v8305
          %v8307 = vpop.f32.mrb[0].mxu0
          %v8308 = vpop.f32.mrb[0].mxu0
          %v8309 = vpop.f32.mrb[0].mxu0
          %8310 = vdwg.mxu0
          %v8311 = vmax.f32 %v8306, 0.0
          %v8312 = vld [vmem:[%s6] sm:$0xff]
          %v8313 = vld [vmem:[%s6 + $0x8] sm:$0xff]
          %v8314 = vld [vmem:[%s6 + $0x10] sm:$0xff]
          %v8315 = vld [vmem:[%s6 + $0x18] sm:$0xff]
          %v8316 = vld [vmem:[%s6 + $0x20] sm:$0xff]
          %v8317 = vld [vmem:[%s6 + $0x28] sm:$0xff]
          %v8318 = vld [vmem:[%s6 + $0x30] sm:$0xff]
          %v8319 = vld [vmem:[%s6 + $0x38] sm:$0xff]
          %v8320 = vld [vmem:[%s6 + $0x40] sm:$0xff]
          %v8321 = vld [vmem:[%s6 + $0x48] sm:$0xff]
          %v8322 = vld [vmem:[%s6 + $0x50] sm:$0xff]
          %v8323 = vld [vmem:[%s6 + $0x58] sm:$0xff]
          %v8324 = vld [vmem:[%s6 + $0x60] sm:$0xff]
          %v8325 = vld [vmem:[%s6 + $0x68] sm:$0xff]
          %v8326 = vld [vmem:[%s6 + $0x70] sm:$0xff]
          %v8327 = vld [vmem:[%s6 + $0x78] sm:$0xff]
          %v8328 = vld [vmem:[%s7] sm:$0x1]
          %v8330 = vlaneseq
          %v8331 = vshrl.u32 %v8330, 7
          %v8332 = vsub.s32 0, %v8331
          %v8333 = vrot.slane %v8328, %v8332
          %8335 = vmatprep.subr.mxu0 0.0
          %8336 = vmatpush1.msra.mxu0 %v8312
          %8337 = vmatprep.subr.mxu0 0.0
          %8338 = vmatpush1.msra.mxu0 %v8313
          %8339 = vmatprep.subr.mxu0 0.0
          %8340 = vmatpush1.msra.mxu0 %v8314
          %8341 = vmatprep.subr.mxu0 0.0
          %8342 = vmatpush1.msra.mxu0 %v8315
          %8343 = vmatprep.subr.mxu0 0.0
          %8344 = vmatpush1.msra.mxu0 %v8316
          %8345 = vmatprep.subr.mxu0 0.0
          %8346 = vmatpush1.msra.mxu0 %v8317
          %8347 = vmatprep.subr.mxu0 0.0
          %8348 = vmatpush1.msra.mxu0 %v8318
          %8349 = vmatprep.subr.mxu0 0.0
          %8350 = vmatpush1.msra.mxu0 %v8319
          %8351 = vmatprep.subr.mxu0 0.0
          %8352 = vmatpush1.msra.mxu0 %v8320
          %8353 = vmatprep.subr.mxu0 0.0
          %8354 = vmatpush1.msra.mxu0 %v8321
          %8355 = vmatprep.subr.mxu0 0.0
          %8356 = vmatpush1.msra.mxu0 %v8322
          %8357 = vmatprep.subr.mxu0 0.0
          %8358 = vmatpush1.msra.mxu0 %v8323
          %8359 = vmatprep.subr.mxu0 0.0
          %8360 = vmatpush1.msra.mxu0 %v8324
          %8361 = vmatprep.subr.mxu0 0.0
          %8362 = vmatpush1.msra.mxu0 %v8325
          %8363 = vmatprep.subr.mxu0 0.0
          %8364 = vmatpush1.msra.mxu0 %v8326
          %8365 = vmatprep.subr.mxu0 0.0
          %8366 = vmatpush1.msra.mxu0 %v8327
          %8367 = vmatprep.subr.mxu0 0.0
          %8368 = vmatpush1.msra.mxu0 0.0
          %8369 = vmatprep.subr.mxu0 0.0
          %8370 = vmatpush1.msra.mxu0 0.0
          %8371 = vmatprep.subr.mxu0 0.0
          %8372 = vmatpush1.msra.mxu0 0.0
          %8373 = vmatprep.subr.mxu0 0.0
          %8374 = vmatpush1.msra.mxu0 0.0
          %8375 = vmatprep.subr.mxu0 0.0
          %8376 = vmatpush1.msra.mxu0 0.0
          %8377 = vmatprep.subr.mxu0 0.0
          %8378 = vmatpush1.msra.mxu0 0.0
          %8379 = vmatprep.subr.mxu0 0.0
          %8380 = vmatpush1.msra.mxu0 0.0
          %8381 = vmatprep.subr.mxu0 0.0
          %8382 = vmatpush1.msra.mxu0 0.0
          %8383 = vmatprep.subr.mxu0 0.0
          %8384 = vmatpush1.msra.mxu0 0.0
          %8385 = vmatprep.subr.mxu0 0.0
          %8386 = vmatpush1.msra.mxu0 0.0
          %8387 = vmatprep.subr.mxu0 0.0
          %8388 = vmatpush1.msra.mxu0 0.0
          %8389 = vmatprep.subr.mxu0 0.0
          %8390 = vmatpush1.msra.mxu0 0.0
          %8391 = vmatprep.subr.mxu0 0.0
          %8392 = vmatpush1.msra.mxu0 0.0
          %8393 = vmatprep.subr.mxu0 0.0
          %8394 = vmatpush1.msra.mxu0 0.0
          %8395 = vmatprep.subr.mxu0 0.0
          %8396 = vmatpush1.msra.mxu0 0.0
          %8397 = vmatprep.subr.mxu0 0.0
          %8398 = vmatpush1.msra.mxu0 0.0
          %8399 = vmatprep.mubr.f32.mxu0 0.0
          %8400 = vmatmul.mubr.f32.gmra.mrb[0].mxu0 %v8311
          %v8401 = vpop.f32.mrb[0].mxu0
          %v8402 = vadd.f32 %v8333, %v8401
          %v8403 = vpop.f32.mrb[0].mxu0
          %8404 = vdwg.mxu0
          %vm8405 = vcmask 1041408
          %v8406 = vsel %vm8405, %v8402, -inf
          %8407 = vmax.xlane.f32.xlu0 %v8406
          %v8408 = vpop.xlane.xlu0 %8407
          %v8409 = vsub.f32 %v8402, %v8408
          %v8410 = vmul.f32 %v8409, 1.442695
          %v8411 = vpow.pop %v8410
          %v8412 = vsel %vm8405, %v8411, 0.0
          %8413 = vadd.xlane.f32.xlu0 %v8412
          %v8414 = vpop.xlane.xlu0 %8413
          %v8415 = vrcp.pop %v8414
          %v8416 = vmul.f32 %v8411, %v8415
          %8417 = vst [vmem:[#allocation3] sm:$0x3] %v8416
        $region60: #{wavimg_forward.1} parent=51 // pred_fallthru
          _
        // Predicated region
        $region61: #{wavimg_forward.1} parent=51 // pred_check
          %p8418 = pneg %p211
        $region62: #{wavimg_forward.1} parent=51 // pred_check_branch
          %8420 = sbr.rel (%p8418) target = $region64
        $region63: #{wavimg_forward.1} parent=51 // pred_region
          %s8422 = ssub.s32 32, 32
          %8423 = vsyncadd [#allocation4], %s8422
          %s8425 = sshll.u32 [#allocation3], 4
          %s8426 = int_to_ptr.vmem [resolvable:$true] %s8425
          %8428 = dma.vmem_to_hbm [thread:$0]  %s8426, 32, %s8, [#allocation4]
        $region64: #{wavimg_forward.1} parent=51 // pred_fallthru
          _
        // Predicated region
        $region65: #{wavimg_forward.1} parent=51 // pred_check
          %p8429 = pneg %p211
        $region66: #{wavimg_forward.1} parent=51 // pred_check_branch
          %8431 = sbr.rel (%p8429) target = $region68
        $region67: #{wavimg_forward.1} parent=51 // pred_region
          %8432 = dma.done [#allocation4], 32
        $region68: #{wavimg_forward.1} parent=51 // pred_fallthru
          _
      $region52: #{wavimg_forward.1} parent=5 // pred_fallthru
        _
      %p8433 = scmp.le.s32.totalorder 2, %s15
      // Predicated region
      $region69: #{wavimg_forward.1} parent=5 // pred_check
        %p8434 = pneg %p8433
      $region70: #{wavimg_forward.1} parent=5 // pred_check_branch
        %8436 = sbr.rel (%p8434) target = $region72
      $region71: #{wavimg_forward.1} parent=5 // pred_region
        %s8437 = ssub.s32 %s15, 2
      $region72: #{wavimg_forward.1} parent=5 // pred_fallthru
        _
    $region6: #{wavimg_forward.1} parent=1 // loop_footer
      %s19 = sadd.s32 1, %s15
    $region7: #{wavimg_forward.1} parent=1 // loop_footer_branch
      %14 = sbr.rel target = $region3
    $region8: #{wavimg_forward.1} parent=1 // loop_exit
      _
    %8438 = vsyncpa [#allocation4], 1
    %s8439 = scalar_lea.sflag [#allocation4], 1
    %8440 = vsyncpa %s8439, 1

</llo_original>
